<compile_context>
chip_gen: v6e
topology: v6e:2x2x1
jax: 0.10.0
libtpu: 0.0.40
codegen_flags: <defaults>
</compile_context>

<pallas_src>
import functools

import jax
import jax.numpy as jnp
from jax.experimental import pallas as pl
from jax.experimental.pallas import tpu as pltpu

_HIGHEST = jax.lax.Precision.HIGHEST
_VMEM = pl.BlockSpec(memory_space=pltpu.MemorySpace.VMEM)


def _round_up(x, m):
    return ((x + m - 1) // m) * m


# ----------------------------------------------------------------------------
# In-kernel LSTM step (input projection + bias already applied)
# ----------------------------------------------------------------------------
def _lstm_step(gx, h, c, wh, He):
    """gx: (rows, 4He) precomputed x-gates (+bias); h/c: (rows, He); wh: (He, 4He).

    Gate column order is [i | f | o | g]: one sigmoid launch over the full gate
    block (g columns discarded) + one tanh launch on [3He:4He].
    """
    gates = gx + jnp.dot(h, wh, preferred_element_type=jnp.float32,
                         precision=_HIGHEST)
    sig = jax.nn.sigmoid(gates)                       # single full-width EUP launch
    g = jnp.tanh(gates[:, 3 * He:4 * He])
    i = sig[:, 0 * He:1 * He]
    f = sig[:, 1 * He:2 * He]
    o = sig[:, 2 * He:3 * He]
    c = f * c + i * g
    h = o * jnp.tanh(c)
    return h, c


# ----------------------------------------------------------------------------
# Kernels
# ----------------------------------------------------------------------------
def char_lstm_kernel(x_ref, wxf_ref, wxb_ref, wh_ref, b_ref, h_out_ref):
    """(Bi)directional char LSTM; only the FINAL hidden state is emitted.

    x_ref:     (T, bn, D)  time-major char embeddings (one batch block).
    wxf_ref:   (D, 4He)    input->gate weights, forward columns (bwd zeroed).
    wxb_ref:   (D, 4He)    input->gate weights, backward columns (fwd zeroed).
    wh_ref:    (He, 4He)   hidden->gate weights (block-diagonal over directions).
    b_ref:     (1, 4He)    fused bias (b_ih + b_hh, both directions).
    h_out_ref: (bn, He)    final hidden state [h_fwd | h_bwd].
    """
    T, bn, D = x_ref.shape
    He = h_out_ref.shape[1]

    # Hoisted input projection: one big lane-dense matmul per direction over all
    # T*bn rows, completely off the serial h-dependency chain.  Bias folded in
    # once (wxf's backward columns are zero, so adding b here covers both).
    x2 = x_ref[...].reshape(T * bn, D)
    gxf = jnp.dot(x2, wxf_ref[...], preferred_element_type=jnp.float32,
                  precision=_HIGHEST) + b_ref[...]
    gxb = jnp.dot(x2, wxb_ref[...], preferred_element_type=jnp.float32,
                  precision=_HIGHEST)
    wh = wh_ref[...]

    # Per-step fused gate pre-activations: forward columns come from x[t],
    # backward columns from x[T-1-t]; their column sets are disjoint so a plain
    # add assembles the fused row.  Independent of the recurrence.
    gx_steps = [gxf[t * bn:(t + 1) * bn, :]
                + gxb[(T - 1 - t) * bn:(T - t) * bn, :]
                for t in range(T)]

    h = jnp.zeros((bn, He), jnp.float32)
    c = jnp.zeros((bn, He), jnp.float32)
    # T is small & static -> fully unrolled.  TODO(synk): for large T switch to
    # lax.fori_loop(..., unroll=2..4) to bound code size / vreg live ranges.
    for t in range(T):
        h, c = _lstm_step(gx_steps[t], h, c, wh, He)
    h_out_ref[...] = h


def word_lstm_kernel(x_ref, wx_ref, wh_ref, b_ref, out_ref, *, bidirectional):
    """Word LSTMCell recurrence.  Both directions share the cell weights, so the
    backward pass rides as extra batch rows of the same recurrence.

    x_ref:   (T*Bp, D)      flattened time-major word features (Bp = padded B).
    wx_ref:  (D, 4He), wh_ref: (He, 4He), b_ref: (1, 4He).
    out_ref: (T, rows, 2He) rows = 2*Bp (forward rows then backward rows) or Bp;
             the last dim packs [h | c] for a lane-dense (64-wide) store.
    """
    T, rows = out_ref.shape[0], out_ref.shape[1]
    He = out_ref.shape[2] // 2
    Bp = x_ref.shape[0] // T

    # Hoisted input projection + bias: one lane-dense matmul over all rows.
    gxa = jnp.dot(x_ref[...], wx_ref[...], preferred_element_type=jnp.float32,
                  precision=_HIGHEST) + b_ref[...]
    wh = wh_ref[...]

    if bidirectional:
        # Row block t feeds the forward rows, row block T-1-t the backward rows
        # (sublane-aligned concat; independent of the recurrence).
        gx_steps = [jnp.concatenate(
            [gxa[t * Bp:(t + 1) * Bp, :],
             gxa[(T - 1 - t) * Bp:(T - t) * Bp, :]], axis=0)
            for t in range(T)]
    else:
        gx_steps = [gxa[t * Bp:(t + 1) * Bp, :] for t in range(T)]

    h = jnp.zeros((rows, He), jnp.float32)
    c = jnp.zeros((rows, He), jnp.float32)
    for t in range(T):
        h, c = _lstm_step(gx_steps[t], h, c, wh, He)
        out_ref[t] = jnp.concatenate([h, c], axis=-1)   # lane-dense packed store


# ----------------------------------------------------------------------------
# Wrappers around pallas_call
# ----------------------------------------------------------------------------
def char_lstm_final(x_tm, wx_f, wx_b, wh, b, *, block_n=256):
    """Fused (bi)directional char LSTM; returns the final hidden state (N, He).

    x_tm: (T, N, D) time-major.  The B*S axis is tiled with a "parallel" grid so
    independent char-words shard across TensorCores (v7x megacore) and VMEM
    residency stays bounded at production sizes.
    """
    T, N, D = x_tm.shape
    He, He4 = wh.shape
    bn = min(_round_up(N, 8), block_n)       # sublane-aligned batch block
    Np = _round_up(N, bn)
    if Np != N:
        x_tm = jnp.pad(x_tm, ((0, 0), (0, Np - N), (0, 0)))
    out = pl.pallas_call(
        char_lstm_kernel,
        grid=(Np // bn,),
        in_specs=[
            pl.BlockSpec((T, bn, D), lambda i: (0, i, 0)),
            pl.BlockSpec((D, He4), lambda i: (0, 0)),     # weights stay resident
            pl.BlockSpec((D, He4), lambda i: (0, 0)),
            pl.BlockSpec((He, He4), lambda i: (0, 0)),
            pl.BlockSpec((1, He4), lambda i: (0, 0)),
        ],
        out_specs=pl.BlockSpec((bn, He), lambda i: (i, 0)),
        out_shape=jax.ShapeDtypeStruct((Np, He), jnp.float32),
        compiler_params=pltpu.CompilerParams(
            dimension_semantics=("parallel",),
            vmem_limit_bytes=32 * 1024 * 1024),
    )(x_tm, wx_f, wx_b, wh, b.reshape(1, He4))
    return out[:N]


def word_lstm_seq(x_seq, wx, wh, b, *, bidirectional):
    """Word-level LSTMCell over the sentence.  Returns (hidden, cell), each
    (T, B, He*dirs), matching the PyTorch loop()/flip()/concat semantics."""
    T, B, D = x_seq.shape
    He, He4 = wh.shape
    Bp = _round_up(B, 8)          # sublane-aligned row blocks inside the kernel
    if Bp != B:
        x_seq = jnp.pad(x_seq, ((0, 0), (0, Bp - B), (0, 0)))
    rows = 2 * Bp if bidirectional else Bp
    kernel = functools.partial(word_lstm_kernel, bidirectional=bidirectional)
    out = pl.pallas_call(
        kernel,
        in_specs=[_VMEM, _VMEM, _VMEM, _VMEM],
        out_specs=_VMEM,
        out_shape=jax.ShapeDtypeStruct((T, rows, 2 * He), jnp.float32),
    )(x_seq.reshape(T * Bp, D), wx, wh, b.reshape(1, He4))
    h_f = out[:, :B, :He]
    c_f = out[:, :B, He:]
    if not bidirectional:
        return h_f, c_f
    h_b = out[:, Bp:Bp + B, :He][::-1]
    c_b = out[:, Bp:Bp + B, He:][::-1]
    hidden = jnp.concatenate([h_f, h_b], axis=-1)
    cell = jnp.concatenate([c_f, c_b], axis=-1)
    return hidden, cell


# ----------------------------------------------------------------------------
# Weight preparation (wrapper-side, traced JAX — runs once)
# ----------------------------------------------------------------------------
_GATE_PERM = (0, 1, 3, 2)   # PyTorch (i, f, g, o) -> kernel (i, f, o, g)


def _gate_blocks(w, H):
    return [w[..., k * H:(k + 1) * H] for k in _GATE_PERM]


def prep_unidir_lstm(w_ih, w_hh, b):
    """w_ih: (D, 4H), w_hh: (H, 4H), b = b_ih + b_hh: (4H,), PyTorch gate order.

    Returns Wx (D, 4H), Wh (H, 4H), b (4H,) in kernel gate order (i,f,o,g)."""
    H = w_hh.shape[0]
    return (jnp.concatenate(_gate_blocks(w_ih, H), axis=-1),
            jnp.concatenate(_gate_blocks(w_hh, H), axis=-1),
            jnp.concatenate(_gate_blocks(b, H), axis=-1))


def prep_bidir_char_lstm(wih_f, whh_f, b_f, wih_b, whh_b, b_b):
    """Fuse the two directions of the char nn.LSTM into one 'wide' cell.

    Fused gate layout (width 4He, He = 2H): [i_f i_b | f_f f_b | o_f o_b | g_f g_b];
    hidden/cell column layout is [h_fwd | h_bwd].  The two returned x-projection
    matrices have the other direction's columns zeroed so gxf[t] + gxb[T-1-t]
    assembles the fused gate row for step t inside the kernel.
    """
    D, H4 = wih_f.shape
    H = H4 // 4
    zx = jnp.zeros((D, H), jnp.float32)
    zh = jnp.zeros((H, H), jnp.float32)
    wxf_cols, wxb_cols, wh_cols, b_cols = [], [], [], []
    for k in _GATE_PERM:                                   # i, f, o, g
        cf = slice(k * H, (k + 1) * H)
        wxf_cols.append(jnp.concatenate([wih_f[:, cf], zx], axis=1))
        wxb_cols.append(jnp.concatenate([zx, wih_b[:, cf]], axis=1))
        wh_cols.append(jnp.concatenate(
            [jnp.concatenate([whh_f[:, cf], zh], axis=1),   # rows driven by h_fwd
             jnp.concatenate([zh, whh_b[:, cf]], axis=1)],  # rows driven by h_bwd
            axis=0))
        b_cols.append(jnp.concatenate([b_f[cf], b_b[cf]]))
    return (jnp.concatenate(wxf_cols, axis=1),   # (D, 8H)
            jnp.concatenate(wxb_cols, axis=1),   # (D, 8H)
            jnp.concatenate(wh_cols, axis=1),    # (2H, 8H)
            jnp.concatenate(b_cols))             # (8H,)


def prep_unidir_char_lstm(w_ih, w_hh, b):
    """Unidirectional char LSTM -> same kernel interface (backward Wx = 0)."""
    wx, whm, bb = prep_unidir_lstm(w_ih, w_hh, b)
    return wx, jnp.zeros_like(wx), whm, bb


# ----------------------------------------------------------------------------
# Encoder forward (glue: embedding gathers / reshapes are plain JAX)
# ----------------------------------------------------------------------------
def encoder_forward(params, conf, words_batch, chars_batch):
    """JAX/Pallas equivalent of Encoder.forward (eval mode, no `oov`).

    words_batch: (S, B) int32, chars_batch: (B*S, W) int32.
    Returns (hidden, cell), each (S, B, word_LSTM_hidden * word_dirs).
    """
    S, B = words_batch.shape
    words = jnp.take(params['word_emb'], words_batch, axis=0)      # (S, B, Dw)
    chars = jnp.take(params['char_emb'], chars_batch, axis=0)      # (B*S, W, Dc)
    # TODO(synk): `oov` fasttext-embedding override not modeled (inference path).

    # --- char LSTM: both directions fused, only the final hidden state is used.
    chars_tm = jnp.transpose(chars, (1, 0, 2))                     # (W, B*S, Dc)
    h_final = char_lstm_final(chars_tm, params['char_wx_f'], params['char_wx_b'],
                              params['char_wh'], params['char_b'])  # (B*S, He)
    # == torch.concat((hn[0], hn[1]), 1).reshape(B, S, -1).permute(1, 0, 2)
    char_feat = h_final.reshape(B, S, -1).transpose(1, 0, 2)       # (S, B, He)

    words = jnp.concatenate([words, char_feat], axis=2)            # (S, B, Din)
    # word_LSTM_{input,state,output}_dropout are identity in eval mode.
    return word_lstm_seq(words, params['word_wx'], params['word_wh'],
                         params['word_b'],
                         bidirectional=conf['word_LSTM_bidirectional'])


# ----------------------------------------------------------------------------
# Demo / self-check
# ----------------------------------------------------------------------------
if __name__ == "__main__":
    conf = dict(
        word_embeddings_dimension=32,
        char_embeddings_dimension=16,
        char_LSTM_hidden=16,
        char_LSTM_bidirectional=True,
        char_LSTM_directions=2,
        word_LSTM_hidden=32,
        word_LSTM_bidirectional=True,
        word_LSTM_input_dropout=0.0,
        word_LSTM_state_dropout=0.0,
        word_LSTM_output_dropout=0.0,
    )
    word_vocab, char_vocab = 50, 30
    S, B, W = 8, 2, 8                      # max_sentence_length, batch, max_word_length
    Dw = conf['word_embeddings_dimension']
    Dc = conf['char_embeddings_dimension']
    Hc = conf['char_LSTM_hidden']
    Hw = conf['word_LSTM_hidden']
    Din = Dw + Hc * conf['char_LSTM_directions']

    key = jax.random.PRNGKey(0)
    keys = jax.random.split(key, 12)

    def xavier(k, out_dim, in_dim):        # PyTorch-shaped (out, in) xavier uniform
        bound = (6.0 / (in_dim + out_dim)) ** 0.5
        return jax.random.uniform(k, (out_dim, in_dim), jnp.float32, -bound, bound)

    # Raw PyTorch-layout parameters, transposed to (D_in, 4H), gate order (i,f,g,o).
    # NOTE: PyTorch keeps separate b_ih / b_hh (both zero-initialized here); a real
    # checkpoint loader must pass b = b_ih + b_hh.
    char_wih_f = xavier(keys[2], 4 * Hc, Dc).T
    char_whh_f = xavier(keys[3], 4 * Hc, Hc).T
    char_b_f = jnp.zeros((4 * Hc,), jnp.float32)
    char_wih_b = xavier(keys[4], 4 * Hc, Dc).T
    char_whh_b = xavier(keys[5], 4 * Hc, Hc).T
    char_b_b = jnp.zeros((4 * Hc,), jnp.float32)
    word_wih = xavier(keys[6], 4 * Hw, Din).T
    word_whh = xavier(keys[7], 4 * Hw, Hw).T
    word_b = jnp.zeros((4 * Hw,), jnp.float32)

    char_wx_f, char_wx_b, char_wh, char_b = prep_bidir_char_lstm(
        char_wih_f, char_whh_f, char_b_f, char_wih_b, char_whh_b, char_b_b)
    word_wx, word_wh, word_bk = prep_unidir_lstm(word_wih, word_whh, word_b)

    params = {
        'word_emb': jax.random.normal(keys[0], (word_vocab, Dw), jnp.float32) * 0.1,
        'char_emb': xavier(keys[1], char_vocab, Dc),
        'char_wx_f': char_wx_f, 'char_wx_b': char_wx_b,           # (Dc, 8Hc) each
        'char_wh': char_wh, 'char_b': char_b,                     # (2Hc, 8Hc), (8Hc,)
        'word_wx': word_wx, 'word_wh': word_wh, 'word_b': word_bk,
    }

    words_batch = jax.random.randint(keys[8], (S, B), 0, word_vocab, jnp.int32)
    chars_batch = jax.random.randint(keys[9], (B * S, W), 0, char_vocab, jnp.int32)

    hidden, cell = encoder_forward(params, conf, words_batch, chars_batch)
    jax.block_until_ready((hidden, cell))

    word_dirs = 2 if conf['word_LSTM_bidirectional'] else 1
    assert hidden.shape == (S, B, Hw * word_dirs), hidden.shape
    assert cell.shape == (S, B, Hw * word_dirs), cell.shape

    # --- pure-JAX reference (per-direction, PyTorch gate order, f32-exact dots).
    HI = jax.lax.Precision.HIGHEST

    def lstm_ref(x_seq, wih, whh, b):
        T_, B_, _ = x_seq.shape
        H_ = whh.shape[0]
        h = jnp.zeros((B_, H_), jnp.float32)
        c = jnp.zeros((B_, H_), jnp.float32)
        hs, cs = [], []
        for t in range(T_):
            gates = (jnp.dot(x_seq[t], wih, precision=HI)
                     + jnp.dot(h, whh, precision=HI) + b)
            i = jax.nn.sigmoid(gates[:, 0 * H_:1 * H_])
            f = jax.nn.sigmoid(gates[:, 1 * H_:2 * H_])
            g = jnp.tanh(gates[:, 2 * H_:3 * H_])
            o = jax.nn.sigmoid(gates[:, 3 * H_:4 * H_])
            c = f * c + i * g
            h = o * jnp.tanh(c)
            hs.append(h)
            cs.append(c)
        return jnp.stack(hs), jnp.stack(cs)

    words_ref = jnp.take(params['word_emb'], words_batch, axis=0)
    chars_ref = jnp.take(params['char_emb'], chars_batch, axis=0)
    chars_tm = jnp.transpose(chars_ref, (1, 0, 2))
    hf, _ = lstm_ref(chars_tm, char_wih_f, char_whh_f, char_b_f)
    hb, _ = lstm_ref(chars_tm[::-1], char_wih_b, char_whh_b, char_b_b)
    char_feat_ref = (jnp.concatenate([hf[-1], hb[-1]], axis=1)
                     .reshape(B, S, -1).transpose(1, 0, 2))
    winp_ref = jnp.concatenate([words_ref, char_feat_ref], axis=2)
    h_fwd, c_fwd = lstm_ref(winp_ref, word_wih, word_whh, word_b)
    h_bwd, c_bwd = lstm_ref(winp_ref[::-1], word_wih, word_whh, word_b)
    hidden_ref = jnp.concatenate([h_fwd, h_bwd[::-1]], axis=2)
    cell_ref = jnp.concatenate([c_fwd, c_bwd[::-1]], axis=2)

    # Tight tolerance (was 2e-2): both sides use full-precision f32 matmuls, so
    # only reassociation-level (~1e-6) differences remain.
    assert jnp.allclose(hidden, hidden_ref, atol=1e-4, rtol=1e-4), \
        float(jnp.max(jnp.abs(hidden - hidden_ref)))
    assert jnp.allclose(cell, cell_ref, atol=1e-4, rtol=1e-4), \
        float(jnp.max(jnp.abs(cell - cell_ref)))

    print("KERNEL_OK")
</pallas_src>

<mosaic_0001>
module attributes {stable_mosaic.version = 11 : i64} {
  func.func @char_lstm_kernel(%arg0: i32, %arg1: memref<8x16x16xf32, #tpu.memory_space<vmem>>, %arg2: memref<16x128xf32, #tpu.memory_space<vmem>>, %arg3: memref<16x128xf32, #tpu.memory_space<vmem>>, %arg4: memref<32x128xf32, #tpu.memory_space<vmem>>, %arg5: memref<1x128xf32, #tpu.memory_space<vmem>>, %arg6: memref<16x32xf32, #tpu.memory_space<vmem>>) attributes {dimension_semantics = [#tpu.dimension_semantics<parallel>], iteration_bounds = array<i64: 1>, scalar_prefetch = 0 : i64, scratch_operands = 0 : i64, tpu.core_type = #tpu.core_type<tc>, window_params = [{transform_indices = @transform_0, window_bounds = array<i64: 8, 16, 16>}, {pipeline_mode = #tpu.pipeline_mode<synchronous>, transform_indices = @transform_1, window_bounds = array<i64: 16, 128>}, {pipeline_mode = #tpu.pipeline_mode<synchronous>, transform_indices = @transform_2, window_bounds = array<i64: 16, 128>}, {pipeline_mode = #tpu.pipeline_mode<synchronous>, transform_indices = @transform_3, window_bounds = array<i64: 32, 128>}, {pipeline_mode = #tpu.pipeline_mode<synchronous>, transform_indices = @transform_4, window_bounds = array<i64: 1, 128>}, {transform_indices = @transform_5, window_bounds = array<i64: 16, 32>}]} {
    %c0 = arith.constant 0 : index
    %c0_0 = arith.constant 0 : index
    %c0_1 = arith.constant 0 : index
    %0 = vector.load %arg1[%c0, %c0_0, %c0_1] : memref<8x16x16xf32, #tpu.memory_space<vmem>>, vector<8x16x16xf32>
    %1 = vector.shape_cast %0 : vector<8x16x16xf32> to vector<128x16xf32>
    %c0_2 = arith.constant 0 : index
    %c0_3 = arith.constant 0 : index
    %2 = vector.load %arg2[%c0_2, %c0_3] : memref<16x128xf32, #tpu.memory_space<vmem>>, vector<16x128xf32>
    %cst = arith.constant dense<0.000000e+00> : vector<128x128xf32>
    %3 = tpu.matmul %1, %2, %cst {dimension_numbers = #tpu.dot_dimension_numbers<[1], [0], [0], [1], [0, 0, 1, 1], [], []>, precision = #tpu.contract_precision<fp32>} : vector<128x16xf32>, vector<16x128xf32>, vector<128x128xf32> -> vector<128x128xf32>
    %c0_4 = arith.constant 0 : index
    %c0_5 = arith.constant 0 : index
    %4 = vector.load %arg5[%c0_4, %c0_5] : memref<1x128xf32, #tpu.memory_space<vmem>>, vector<1x128xf32>
    %5 = vector.broadcast %4 : vector<1x128xf32> to vector<128x128xf32>
    %6 = arith.addf %3, %5 : vector<128x128xf32>
    %c0_6 = arith.constant 0 : index
    %c0_7 = arith.constant 0 : index
    %7 = vector.load %arg3[%c0_6, %c0_7] : memref<16x128xf32, #tpu.memory_space<vmem>>, vector<16x128xf32>
    %cst_8 = arith.constant dense<0.000000e+00> : vector<128x128xf32>
    %8 = tpu.matmul %1, %7, %cst_8 {dimension_numbers = #tpu.dot_dimension_numbers<[1], [0], [0], [1], [0, 0, 1, 1], [], []>, precision = #tpu.contract_precision<fp32>} : vector<128x16xf32>, vector<16x128xf32>, vector<128x128xf32> -> vector<128x128xf32>
    %c0_9 = arith.constant 0 : index
    %c0_10 = arith.constant 0 : index
    %9 = vector.load %arg4[%c0_9, %c0_10] : memref<32x128xf32, #tpu.memory_space<vmem>>, vector<32x128xf32>
    %10 = vector.extract_strided_slice %6 {offsets = [0, 0], sizes = [16, 128], strides = [1, 1]} : vector<128x128xf32> to vector<16x128xf32>
    %11 = vector.extract_strided_slice %8 {offsets = [112, 0], sizes = [16, 128], strides = [1, 1]} : vector<128x128xf32> to vector<16x128xf32>
    %12 = arith.addf %10, %11 : vector<16x128xf32>
    %13 = vector.extract_strided_slice %6 {offsets = [16, 0], sizes = [16, 128], strides = [1, 1]} : vector<128x128xf32> to vector<16x128xf32>
    %14 = vector.extract_strided_slice %8 {offsets = [96, 0], sizes = [16, 128], strides = [1, 1]} : vector<128x128xf32> to vector<16x128xf32>
    %15 = arith.addf %13, %14 : vector<16x128xf32>
    %16 = vector.extract_strided_slice %6 {offsets = [32, 0], sizes = [16, 128], strides = [1, 1]} : vector<128x128xf32> to vector<16x128xf32>
    %17 = vector.extract_strided_slice %8 {offsets = [80, 0], sizes = [16, 128], strides = [1, 1]} : vector<128x128xf32> to vector<16x128xf32>
    %18 = arith.addf %16, %17 : vector<16x128xf32>
    %19 = vector.extract_strided_slice %6 {offsets = [48, 0], sizes = [16, 128], strides = [1, 1]} : vector<128x128xf32> to vector<16x128xf32>
    %20 = vector.extract_strided_slice %8 {offsets = [64, 0], sizes = [16, 128], strides = [1, 1]} : vector<128x128xf32> to vector<16x128xf32>
    %21 = arith.addf %19, %20 : vector<16x128xf32>
    %22 = vector.extract_strided_slice %6 {offsets = [64, 0], sizes = [16, 128], strides = [1, 1]} : vector<128x128xf32> to vector<16x128xf32>
    %23 = vector.extract_strided_slice %8 {offsets = [48, 0], sizes = [16, 128], strides = [1, 1]} : vector<128x128xf32> to vector<16x128xf32>
    %24 = arith.addf %22, %23 : vector<16x128xf32>
    %25 = vector.extract_strided_slice %6 {offsets = [80, 0], sizes = [16, 128], strides = [1, 1]} : vector<128x128xf32> to vector<16x128xf32>
    %26 = vector.extract_strided_slice %8 {offsets = [32, 0], sizes = [16, 128], strides = [1, 1]} : vector<128x128xf32> to vector<16x128xf32>
    %27 = arith.addf %25, %26 : vector<16x128xf32>
    %28 = vector.extract_strided_slice %6 {offsets = [96, 0], sizes = [16, 128], strides = [1, 1]} : vector<128x128xf32> to vector<16x128xf32>
    %29 = vector.extract_strided_slice %8 {offsets = [16, 0], sizes = [16, 128], strides = [1, 1]} : vector<128x128xf32> to vector<16x128xf32>
    %30 = arith.addf %28, %29 : vector<16x128xf32>
    %31 = vector.extract_strided_slice %6 {offsets = [112, 0], sizes = [16, 128], strides = [1, 1]} : vector<128x128xf32> to vector<16x128xf32>
    %32 = vector.extract_strided_slice %8 {offsets = [0, 0], sizes = [16, 128], strides = [1, 1]} : vector<128x128xf32> to vector<16x128xf32>
    %33 = arith.addf %31, %32 : vector<16x128xf32>
    %cst_11 = arith.constant 0.000000e+00 : f32
    %34 = vector.broadcast %cst_11 : f32 to vector<16x32xf32>
    %cst_12 = arith.constant 0.000000e+00 : f32
    %35 = vector.broadcast %cst_12 : f32 to vector<16x32xf32>
    %cst_13 = arith.constant dense<0.000000e+00> : vector<16x128xf32>
    %36 = tpu.matmul %34, %9, %cst_13 {dimension_numbers = #tpu.dot_dimension_numbers<[1], [0], [0], [1], [0, 0, 1, 1], [], []>, precision = #tpu.contract_precision<fp32>} : vector<16x32xf32>, vector<32x128xf32>, vector<16x128xf32> -> vector<16x128xf32>
    %37 = arith.addf %12, %36 : vector<16x128xf32>
    %38 = arith.negf %37 : vector<16x128xf32>
    %39 = math.exp %38 : vector<16x128xf32>
    %cst_14 = arith.constant 1.000000e+00 : f32
    %40 = vector.broadcast %cst_14 : f32 to vector<16x128xf32>
    %41 = arith.addf %40, %39 : vector<16x128xf32>
    %42 = arith.divf %40, %41 : vector<16x128xf32>
    %43 = vector.extract_strided_slice %37 {offsets = [0, 96], sizes = [16, 32], strides = [1, 1]} : vector<16x128xf32> to vector<16x32xf32>
    %44 = math.tanh %43 : vector<16x32xf32>
    %45 = vector.extract_strided_slice %42 {offsets = [0, 0], sizes = [16, 32], strides = [1, 1]} : vector<16x128xf32> to vector<16x32xf32>
    %46 = vector.extract_strided_slice %42 {offsets = [0, 32], sizes = [16, 32], strides = [1, 1]} : vector<16x128xf32> to vector<16x32xf32>
    %47 = vector.extract_strided_slice %42 {offsets = [0, 64], sizes = [16, 32], strides = [1, 1]} : vector<16x128xf32> to vector<16x32xf32>
    %48 = arith.mulf %46, %35 : vector<16x32xf32>
    %49 = arith.mulf %45, %44 : vector<16x32xf32>
    %50 = arith.addf %48, %49 : vector<16x32xf32>
    %51 = math.tanh %50 : vector<16x32xf32>
    %52 = arith.mulf %47, %51 : vector<16x32xf32>
    %cst_15 = arith.constant dense<0.000000e+00> : vector<16x128xf32>
    %53 = tpu.matmul %52, %9, %cst_15 {dimension_numbers = #tpu.dot_dimension_numbers<[1], [0], [0], [1], [0, 0, 1, 1], [], []>, precision = #tpu.contract_precision<fp32>} : vector<16x32xf32>, vector<32x128xf32>, vector<16x128xf32> -> vector<16x128xf32>
    %54 = arith.addf %15, %53 : vector<16x128xf32>
    %55 = arith.negf %54 : vector<16x128xf32>
    %56 = math.exp %55 : vector<16x128xf32>
    %cst_16 = arith.constant 1.000000e+00 : f32
    %57 = vector.broadcast %cst_16 : f32 to vector<16x128xf32>
    %58 = arith.addf %57, %56 : vector<16x128xf32>
    %59 = arith.divf %57, %58 : vector<16x128xf32>
    %60 = vector.extract_strided_slice %54 {offsets = [0, 96], sizes = [16, 32], strides = [1, 1]} : vector<16x128xf32> to vector<16x32xf32>
    %61 = math.tanh %60 : vector<16x32xf32>
    %62 = vector.extract_strided_slice %59 {offsets = [0, 0], sizes = [16, 32], strides = [1, 1]} : vector<16x128xf32> to vector<16x32xf32>
    %63 = vector.extract_strided_slice %59 {offsets = [0, 32], sizes = [16, 32], strides = [1, 1]} : vector<16x128xf32> to vector<16x32xf32>
    %64 = vector.extract_strided_slice %59 {offsets = [0, 64], sizes = [16, 32], strides = [1, 1]} : vector<16x128xf32> to vector<16x32xf32>
    %65 = arith.mulf %63, %50 : vector<16x32xf32>
    %66 = arith.mulf %62, %61 : vector<16x32xf32>
    %67 = arith.addf %65, %66 : vector<16x32xf32>
    %68 = math.tanh %67 : vector<16x32xf32>
    %69 = arith.mulf %64, %68 : vector<16x32xf32>
    %cst_17 = arith.constant dense<0.000000e+00> : vector<16x128xf32>
    %70 = tpu.matmul %69, %9, %cst_17 {dimension_numbers = #tpu.dot_dimension_numbers<[1], [0], [0], [1], [0, 0, 1, 1], [], []>, precision = #tpu.contract_precision<fp32>} : vector<16x32xf32>, vector<32x128xf32>, vector<16x128xf32> -> vector<16x128xf32>
    %71 = arith.addf %18, %70 : vector<16x128xf32>
    %72 = arith.negf %71 : vector<16x128xf32>
    %73 = math.exp %72 : vector<16x128xf32>
    %cst_18 = arith.constant 1.000000e+00 : f32
    %74 = vector.broadcast %cst_18 : f32 to vector<16x128xf32>
    %75 = arith.addf %74, %73 : vector<16x128xf32>
    %76 = arith.divf %74, %75 : vector<16x128xf32>
    %77 = vector.extract_strided_slice %71 {offsets = [0, 96], sizes = [16, 32], strides = [1, 1]} : vector<16x128xf32> to vector<16x32xf32>
    %78 = math.tanh %77 : vector<16x32xf32>
    %79 = vector.extract_strided_slice %76 {offsets = [0, 0], sizes = [16, 32], strides = [1, 1]} : vector<16x128xf32> to vector<16x32xf32>
    %80 = vector.extract_strided_slice %76 {offsets = [0, 32], sizes = [16, 32], strides = [1, 1]} : vector<16x128xf32> to vector<16x32xf32>
    %81 = vector.extract_strided_slice %76 {offsets = [0, 64], sizes = [16, 32], strides = [1, 1]} : vector<16x128xf32> to vector<16x32xf32>
    %82 = arith.mulf %80, %67 : vector<16x32xf32>
    %83 = arith.mulf %79, %78 : vector<16x32xf32>
    %84 = arith.addf %82, %83 : vector<16x32xf32>
    %85 = math.tanh %84 : vector<16x32xf32>
    %86 = arith.mulf %81, %85 : vector<16x32xf32>
    %cst_19 = arith.constant dense<0.000000e+00> : vector<16x128xf32>
    %87 = tpu.matmul %86, %9, %cst_19 {dimension_numbers = #tpu.dot_dimension_numbers<[1], [0], [0], [1], [0, 0, 1, 1], [], []>, precision = #tpu.contract_precision<fp32>} : vector<16x32xf32>, vector<32x128xf32>, vector<16x128xf32> -> vector<16x128xf32>
    %88 = arith.addf %21, %87 : vector<16x128xf32>
    %89 = arith.negf %88 : vector<16x128xf32>
    %90 = math.exp %89 : vector<16x128xf32>
    %cst_20 = arith.constant 1.000000e+00 : f32
    %91 = vector.broadcast %cst_20 : f32 to vector<16x128xf32>
    %92 = arith.addf %91, %90 : vector<16x128xf32>
    %93 = arith.divf %91, %92 : vector<16x128xf32>
    %94 = vector.extract_strided_slice %88 {offsets = [0, 96], sizes = [16, 32], strides = [1, 1]} : vector<16x128xf32> to vector<16x32xf32>
    %95 = math.tanh %94 : vector<16x32xf32>
    %96 = vector.extract_strided_slice %93 {offsets = [0, 0], sizes = [16, 32], strides = [1, 1]} : vector<16x128xf32> to vector<16x32xf32>
    %97 = vector.extract_strided_slice %93 {offsets = [0, 32], sizes = [16, 32], strides = [1, 1]} : vector<16x128xf32> to vector<16x32xf32>
    %98 = vector.extract_strided_slice %93 {offsets = [0, 64], sizes = [16, 32], strides = [1, 1]} : vector<16x128xf32> to vector<16x32xf32>
    %99 = arith.mulf %97, %84 : vector<16x32xf32>
    %100 = arith.mulf %96, %95 : vector<16x32xf32>
    %101 = arith.addf %99, %100 : vector<16x32xf32>
    %102 = math.tanh %101 : vector<16x32xf32>
    %103 = arith.mulf %98, %102 : vector<16x32xf32>
    %cst_21 = arith.constant dense<0.000000e+00> : vector<16x128xf32>
    %104 = tpu.matmul %103, %9, %cst_21 {dimension_numbers = #tpu.dot_dimension_numbers<[1], [0], [0], [1], [0, 0, 1, 1], [], []>, precision = #tpu.contract_precision<fp32>} : vector<16x32xf32>, vector<32x128xf32>, vector<16x128xf32> -> vector<16x128xf32>
    %105 = arith.addf %24, %104 : vector<16x128xf32>
    %106 = arith.negf %105 : vector<16x128xf32>
    %107 = math.exp %106 : vector<16x128xf32>
    %cst_22 = arith.constant 1.000000e+00 : f32
    %108 = vector.broadcast %cst_22 : f32 to vector<16x128xf32>
    %109 = arith.addf %108, %107 : vector<16x128xf32>
    %110 = arith.divf %108, %109 : vector<16x128xf32>
    %111 = vector.extract_strided_slice %105 {offsets = [0, 96], sizes = [16, 32], strides = [1, 1]} : vector<16x128xf32> to vector<16x32xf32>
    %112 = math.tanh %111 : vector<16x32xf32>
    %113 = vector.extract_strided_slice %110 {offsets = [0, 0], sizes = [16, 32], strides = [1, 1]} : vector<16x128xf32> to vector<16x32xf32>
    %114 = vector.extract_strided_slice %110 {offsets = [0, 32], sizes = [16, 32], strides = [1, 1]} : vector<16x128xf32> to vector<16x32xf32>
    %115 = vector.extract_strided_slice %110 {offsets = [0, 64], sizes = [16, 32], strides = [1, 1]} : vector<16x128xf32> to vector<16x32xf32>
    %116 = arith.mulf %114, %101 : vector<16x32xf32>
    %117 = arith.mulf %113, %112 : vector<16x32xf32>
    %118 = arith.addf %116, %117 : vector<16x32xf32>
    %119 = math.tanh %118 : vector<16x32xf32>
    %120 = arith.mulf %115, %119 : vector<16x32xf32>
    %cst_23 = arith.constant dense<0.000000e+00> : vector<16x128xf32>
    %121 = tpu.matmul %120, %9, %cst_23 {dimension_numbers = #tpu.dot_dimension_numbers<[1], [0], [0], [1], [0, 0, 1, 1], [], []>, precision = #tpu.contract_precision<fp32>} : vector<16x32xf32>, vector<32x128xf32>, vector<16x128xf32> -> vector<16x128xf32>
    %122 = arith.addf %27, %121 : vector<16x128xf32>
    %123 = arith.negf %122 : vector<16x128xf32>
    %124 = math.exp %123 : vector<16x128xf32>
    %cst_24 = arith.constant 1.000000e+00 : f32
    %125 = vector.broadcast %cst_24 : f32 to vector<16x128xf32>
    %126 = arith.addf %125, %124 : vector<16x128xf32>
    %127 = arith.divf %125, %126 : vector<16x128xf32>
    %128 = vector.extract_strided_slice %122 {offsets = [0, 96], sizes = [16, 32], strides = [1, 1]} : vector<16x128xf32> to vector<16x32xf32>
    %129 = math.tanh %128 : vector<16x32xf32>
    %130 = vector.extract_strided_slice %127 {offsets = [0, 0], sizes = [16, 32], strides = [1, 1]} : vector<16x128xf32> to vector<16x32xf32>
    %131 = vector.extract_strided_slice %127 {offsets = [0, 32], sizes = [16, 32], strides = [1, 1]} : vector<16x128xf32> to vector<16x32xf32>
    %132 = vector.extract_strided_slice %127 {offsets = [0, 64], sizes = [16, 32], strides = [1, 1]} : vector<16x128xf32> to vector<16x32xf32>
    %133 = arith.mulf %131, %118 : vector<16x32xf32>
    %134 = arith.mulf %130, %129 : vector<16x32xf32>
    %135 = arith.addf %133, %134 : vector<16x32xf32>
    %136 = math.tanh %135 : vector<16x32xf32>
    %137 = arith.mulf %132, %136 : vector<16x32xf32>
    %cst_25 = arith.constant dense<0.000000e+00> : vector<16x128xf32>
    %138 = tpu.matmul %137, %9, %cst_25 {dimension_numbers = #tpu.dot_dimension_numbers<[1], [0], [0], [1], [0, 0, 1, 1], [], []>, precision = #tpu.contract_precision<fp32>} : vector<16x32xf32>, vector<32x128xf32>, vector<16x128xf32> -> vector<16x128xf32>
    %139 = arith.addf %30, %138 : vector<16x128xf32>
    %140 = arith.negf %139 : vector<16x128xf32>
    %141 = math.exp %140 : vector<16x128xf32>
    %cst_26 = arith.constant 1.000000e+00 : f32
    %142 = vector.broadcast %cst_26 : f32 to vector<16x128xf32>
    %143 = arith.addf %142, %141 : vector<16x128xf32>
    %144 = arith.divf %142, %143 : vector<16x128xf32>
    %145 = vector.extract_strided_slice %139 {offsets = [0, 96], sizes = [16, 32], strides = [1, 1]} : vector<16x128xf32> to vector<16x32xf32>
    %146 = math.tanh %145 : vector<16x32xf32>
    %147 = vector.extract_strided_slice %144 {offsets = [0, 0], sizes = [16, 32], strides = [1, 1]} : vector<16x128xf32> to vector<16x32xf32>
    %148 = vector.extract_strided_slice %144 {offsets = [0, 32], sizes = [16, 32], strides = [1, 1]} : vector<16x128xf32> to vector<16x32xf32>
    %149 = vector.extract_strided_slice %144 {offsets = [0, 64], sizes = [16, 32], strides = [1, 1]} : vector<16x128xf32> to vector<16x32xf32>
    %150 = arith.mulf %148, %135 : vector<16x32xf32>
    %151 = arith.mulf %147, %146 : vector<16x32xf32>
    %152 = arith.addf %150, %151 : vector<16x32xf32>
    %153 = math.tanh %152 : vector<16x32xf32>
    %154 = arith.mulf %149, %153 : vector<16x32xf32>
    %cst_27 = arith.constant dense<0.000000e+00> : vector<16x128xf32>
    %155 = tpu.matmul %154, %9, %cst_27 {dimension_numbers = #tpu.dot_dimension_numbers<[1], [0], [0], [1], [0, 0, 1, 1], [], []>, precision = #tpu.contract_precision<fp32>} : vector<16x32xf32>, vector<32x128xf32>, vector<16x128xf32> -> vector<16x128xf32>
    %156 = arith.addf %33, %155 : vector<16x128xf32>
    %157 = arith.negf %156 : vector<16x128xf32>
    %158 = math.exp %157 : vector<16x128xf32>
    %cst_28 = arith.constant 1.000000e+00 : f32
    %159 = vector.broadcast %cst_28 : f32 to vector<16x128xf32>
    %160 = arith.addf %159, %158 : vector<16x128xf32>
    %161 = arith.divf %159, %160 : vector<16x128xf32>
    %162 = vector.extract_strided_slice %156 {offsets = [0, 96], sizes = [16, 32], strides = [1, 1]} : vector<16x128xf32> to vector<16x32xf32>
    %163 = math.tanh %162 : vector<16x32xf32>
    %164 = vector.extract_strided_slice %161 {offsets = [0, 0], sizes = [16, 32], strides = [1, 1]} : vector<16x128xf32> to vector<16x32xf32>
    %165 = vector.extract_strided_slice %161 {offsets = [0, 32], sizes = [16, 32], strides = [1, 1]} : vector<16x128xf32> to vector<16x32xf32>
    %166 = vector.extract_strided_slice %161 {offsets = [0, 64], sizes = [16, 32], strides = [1, 1]} : vector<16x128xf32> to vector<16x32xf32>
    %167 = arith.mulf %165, %152 : vector<16x32xf32>
    %168 = arith.mulf %164, %163 : vector<16x32xf32>
    %169 = arith.addf %167, %168 : vector<16x32xf32>
    %170 = math.tanh %169 : vector<16x32xf32>
    %171 = arith.mulf %166, %170 : vector<16x32xf32>
    %c0_29 = arith.constant 0 : index
    %c0_30 = arith.constant 0 : index
    %172 = vector.load %arg6[%c0_29, %c0_30] : memref<16x32xf32, #tpu.memory_space<vmem>>, vector<16x32xf32>
    tpu.vector_store %arg6[%c0_29, %c0_30], %171 {strides = array<i32>} : memref<16x32xf32, #tpu.memory_space<vmem>>, vector<16x32xf32>,
    return
  }
  func.func @transform_0(%arg0: i32) -> (i32, i32, i32) {
    %c0_i32 = arith.constant 0 : i32
    %c0_i32_0 = arith.constant 0 : i32
    %c0_i32_1 = arith.constant 0 : i32
    return %c0_i32, %arg0, %c0_i32_0 : i32, i32, i32
  }
  func.func @transform_1(%arg0: i32) -> (i32, i32) {
    %c0_i32 = arith.constant 0 : i32
    %c0_i32_0 = arith.constant 0 : i32
    %c0_i32_1 = arith.constant 0 : i32
    return %c0_i32, %c0_i32_0 : i32, i32
  }
  func.func @transform_2(%arg0: i32) -> (i32, i32) {
    %c0_i32 = arith.constant 0 : i32
    %c0_i32_0 = arith.constant 0 : i32
    %c0_i32_1 = arith.constant 0 : i32
    return %c0_i32, %c0_i32_0 : i32, i32
  }
  func.func @transform_3(%arg0: i32) -> (i32, i32) {
    %c0_i32 = arith.constant 0 : i32
    %c0_i32_0 = arith.constant 0 : i32
    %c0_i32_1 = arith.constant 0 : i32
    return %c0_i32, %c0_i32_0 : i32, i32
  }
  func.func @transform_4(%arg0: i32) -> (i32, i32) {
    %c0_i32 = arith.constant 0 : i32
    %c0_i32_0 = arith.constant 0 : i32
    %c0_i32_1 = arith.constant 0 : i32
    return %c0_i32, %c0_i32_0 : i32, i32
  }
  func.func @transform_5(%arg0: i32) -> (i32, i32) {
    %c0_i32 = arith.constant 0 : i32
    %c0_i32_0 = arith.constant 0 : i32
    return %arg0, %c0_i32 : i32, i32
  }
}

</mosaic_0001>

<llo_original>
// kernel: tpu_custom_call.1
$region0: #{tpu_custom_call.1}
  #allocation0 [shape = 'u32[]', space=smem, size = 0x4, offset = 0x4, fixed_abs, tag = 'smem constant byte address 0x4 - core index']
  #allocation1 [shape = 'u32[144,128]{1,0:T(1,128)}', space=vmem, size = 0x12000, scoped, tag = 'internal scratch']
  %s0 = inlined_call_operand.hbm [shape: f32[8,16,16], index: 0, kind: input, shape index: {}]
  %s1 = inlined_call_operand.hbm [shape: f32[16,128], index: 1, kind: input, shape index: {}]
  %s2 = inlined_call_operand.hbm [shape: f32[16,128], index: 2, kind: input, shape index: {}]
  %s3 = inlined_call_operand.hbm [shape: f32[32,128], index: 3, kind: input, shape index: {}]
  %s4 = inlined_call_operand.vmem [shape: f32[1,128], index: 4, kind: input, shape index: {}]
  %s5 = inlined_call_operand.hbm [shape: f32[16,32], index: 5, kind: output, shape index: {}]
  %s6 = sld [smem:[#allocation0]]
  $region46: #{tpu_custom_call.1} parent=0
    _
  %s8 = ssub.s32 1, %s6
  %s9 = scalar_select 0, %s8, %s6
  $region1: #{tpu_custom_call.1} parent=0
    #allocation2 [shape = 'u8[65536]{0}', space=vmem, size = 0x10000, scoped, tag = 'input window, operand 0, single buffered']
    #allocation3 [shape = 's32[1]{0}', space=sflag, size = 0x4, scoped, tag = 'scoped memory for tpu_custom_call.1']
    #allocation4 [shape = 's32[1]{0}', space=sflag, size = 0x4, scoped, tag = 'scoped memory for tpu_custom_call.1']
    #allocation5 [shape = 'u8[8192]{0}', space=vmem, size = 0x2000, scoped, tag = 'input window, operand 1, single buffered']
    #allocation6 [shape = 's32[1]{0}', space=sflag, size = 0x4, scoped, tag = 'scoped memory for tpu_custom_call.1']
    #allocation7 [shape = 'u8[8192]{0}', space=vmem, size = 0x2000, scoped, tag = 'input window, operand 2, single buffered']
    #allocation8 [shape = 'u8[16384]{0}', space=vmem, size = 0x4000, scoped, tag = 'input window, operand 3, single buffered']
    #allocation9 [shape = 's32[1]{0}', space=sflag, size = 0x4, scoped, tag = 'scoped memory for tpu_custom_call.1']
    #allocation10 [shape = 'u8[8192]{0}', space=vmem, size = 0x2000, scoped, tag = 'output window, operand 0, single buffered']
    %10 = vsyncpa [#allocation3], 0
    %11 = vsyncpa [#allocation6], 0
    %12 = vsyncpa [#allocation9], 0
    %13 = vsyncpa [#allocation4], 0
    // Predicated region
    $region2: #{tpu_custom_call.1} parent=1 // pred_check
      _
    $region3: #{tpu_custom_call.1} parent=1 // pred_check_branch
      %15 = sbr.rel (0) target = $region5
    $region4: #{tpu_custom_call.1} parent=1 // pred_region
      %s17 = ssub.s32 2048, 2048
      %18 = vsyncadd [#allocation3], %s17
      %s19 = sshll.u32 [#allocation2], 4
      %s20 = int_to_ptr.vmem [resolvable:$true] %s19
      %25 = dma.hbm_to_vmem [thread:$0]  %s0, 2048, %s20, [#allocation3], 128, 128, 8
    $region5: #{tpu_custom_call.1} parent=1 // pred_fallthru
      _
    // Predicated region
    $region6: #{tpu_custom_call.1} parent=1 // pred_check
      _
    $region7: #{tpu_custom_call.1} parent=1 // pred_check_branch
      %27 = sbr.rel (0) target = $region9
    $region8: #{tpu_custom_call.1} parent=1 // pred_region
      %s29 = ssub.s32 256, 256
      %30 = vsyncadd [#allocation6], %s29
      %s31 = sshll.u32 [#allocation5], 4
      %s32 = int_to_ptr.vmem [resolvable:$true] %s31
      %37 = dma.hbm_to_vmem [thread:$0]  %s1, 256, %s32, [#allocation6], 128, 128, 8
    $region9: #{tpu_custom_call.1} parent=1 // pred_fallthru
      _
    // Predicated region
    $region10: #{tpu_custom_call.1} parent=1 // pred_check
      _
    $region11: #{tpu_custom_call.1} parent=1 // pred_check_branch
      %39 = sbr.rel (0) target = $region13
    $region12: #{tpu_custom_call.1} parent=1 // pred_region
      %s41 = ssub.s32 256, 256
      %42 = vsyncadd [#allocation6], %s41
      %s43 = sshll.u32 [#allocation7], 4
      %s44 = int_to_ptr.vmem [resolvable:$true] %s43
      %49 = dma.hbm_to_vmem [thread:$0]  %s2, 256, %s44, [#allocation6], 128, 128, 8
    $region13: #{tpu_custom_call.1} parent=1 // pred_fallthru
      _
    // Predicated region
    $region14: #{tpu_custom_call.1} parent=1 // pred_check
      _
    $region15: #{tpu_custom_call.1} parent=1 // pred_check_branch
      %51 = sbr.rel (0) target = $region17
    $region16: #{tpu_custom_call.1} parent=1 // pred_region
      %s53 = ssub.s32 512, 512
      %54 = vsyncadd [#allocation9], %s53
      %s55 = sshll.u32 [#allocation8], 4
      %s56 = int_to_ptr.vmem [resolvable:$true] %s55
      %61 = dma.hbm_to_vmem [thread:$0]  %s3, 512, %s56, [#allocation9], 128, 128, 8
    $region17: #{tpu_custom_call.1} parent=1 // pred_fallthru
      _
    // Predicated region
    $region18: #{tpu_custom_call.1} parent=1 // pred_check
      _
    $region19: #{tpu_custom_call.1} parent=1 // pred_check_branch
      %63 = sbr.rel (0) target = $region21
    $region20: #{tpu_custom_call.1} parent=1 // pred_region
      _
    $region21: #{tpu_custom_call.1} parent=1 // pred_fallthru
      _
    // Predicated region
    $region22: #{tpu_custom_call.1} parent=1 // pred_check
      _
    $region23: #{tpu_custom_call.1} parent=1 // pred_check_branch
      %65 = sbr.rel (0) target = $region25
    $region24: #{tpu_custom_call.1} parent=1 // pred_region
      %66 = dma.done [#allocation3], 2048
    $region25: #{tpu_custom_call.1} parent=1 // pred_fallthru
      _
    // Predicated region
    $region26: #{tpu_custom_call.1} parent=1 // pred_check
      _
    $region27: #{tpu_custom_call.1} parent=1 // pred_check_branch
      %68 = sbr.rel (0) target = $region29
    $region28: #{tpu_custom_call.1} parent=1 // pred_region
      %69 = dma.done [#allocation6], 256
    $region29: #{tpu_custom_call.1} parent=1 // pred_fallthru
      _
    // Predicated region
    $region30: #{tpu_custom_call.1} parent=1 // pred_check
      _
    $region31: #{tpu_custom_call.1} parent=1 // pred_check_branch
      %71 = sbr.rel (0) target = $region33
    $region32: #{tpu_custom_call.1} parent=1 // pred_region
      %72 = dma.done [#allocation6], 256
    $region33: #{tpu_custom_call.1} parent=1 // pred_fallthru
      _
    // Predicated region
    $region34: #{tpu_custom_call.1} parent=1 // pred_check
      _
    $region35: #{tpu_custom_call.1} parent=1 // pred_check_branch
      %74 = sbr.rel (0) target = $region37
    $region36: #{tpu_custom_call.1} parent=1 // pred_region
      %75 = dma.done [#allocation9], 512
    $region37: #{tpu_custom_call.1} parent=1 // pred_fallthru
      _
    %v76 = vld [vmem:[#allocation2] sm:$0xff]
    %v77 = vld [vmem:[#allocation2 + $0x8] sm:$0xff]
    %v78 = vld [vmem:[#allocation2 + $0x10] sm:$0xff]
    %v79 = vld [vmem:[#allocation2 + $0x18] sm:$0xff]
    %v80 = vld [vmem:[#allocation2 + $0x20] sm:$0xff]
    %v81 = vld [vmem:[#allocation2 + $0x28] sm:$0xff]
    %v82 = vld [vmem:[#allocation2 + $0x30] sm:$0xff]
    %v83 = vld [vmem:[#allocation2 + $0x38] sm:$0xff]
    %v84 = vld [vmem:[#allocation2 + $0x40] sm:$0xff]
    %v85 = vld [vmem:[#allocation2 + $0x48] sm:$0xff]
    %v86 = vld [vmem:[#allocation2 + $0x50] sm:$0xff]
    %v87 = vld [vmem:[#allocation2 + $0x58] sm:$0xff]
    %v88 = vld [vmem:[#allocation2 + $0x60] sm:$0xff]
    %v89 = vld [vmem:[#allocation2 + $0x68] sm:$0xff]
    %v90 = vld [vmem:[#allocation2 + $0x70] sm:$0xff]
    %v91 = vld [vmem:[#allocation2 + $0x78] sm:$0xff]
    %v92 = vld [vmem:[#allocation5] sm:$0xff]
    %v93 = vld [vmem:[#allocation5 + $0x8] sm:$0xff]
    %v94 = vld [vmem:[%s4] sm:$0x1]
    %v96 = vlaneseq
    %v97 = vshrl.u32 %v96, 7
    %v98 = vsub.s32 0, %v97
    %v99 = vrot.slane %v94, %v98
    %vm101 = vcmask 130048
    %v103 = vsel %vm101, %v76, 0
    %v106 = vsel %vm101, %v77, 0
    %v109 = vsel %vm101, %v78, 0
    %v112 = vsel %vm101, %v79, 0
    %v115 = vsel %vm101, %v80, 0
    %v118 = vsel %vm101, %v81, 0
    %v121 = vsel %vm101, %v82, 0
    %v124 = vsel %vm101, %v83, 0
    %v127 = vsel %vm101, %v84, 0
    %v130 = vsel %vm101, %v85, 0
    %v133 = vsel %vm101, %v86, 0
    %v136 = vsel %vm101, %v87, 0
    %v139 = vsel %vm101, %v88, 0
    %v142 = vsel %vm101, %v89, 0
    %v145 = vsel %vm101, %v90, 0
    %v148 = vsel %vm101, %v91, 0
    %150 = vmatprep.subr.mxu0 0.0
    %151 = vmatpush1.msra.mxu0 0.0
    %152 = vmatprep.subr.mxu0 0.0
    %153 = vmatpush1.msra.mxu0 0.0
    %154 = vmatprep.subr.mxu0 0.0
    %155 = vmatpush1.msra.mxu0 0.0
    %156 = vmatprep.subr.mxu0 0.0
    %157 = vmatpush1.msra.mxu0 0.0
    %158 = vmatprep.subr.mxu0 0.0
    %159 = vmatpush1.msra.mxu0 0.0
    %160 = vmatprep.subr.mxu0 0.0
    %161 = vmatpush1.msra.mxu0 0.0
    %162 = vmatprep.subr.mxu0 0.0
    %163 = vmatpush1.msra.mxu0 0.0
    %164 = vmatprep.subr.mxu0 0.0
    %165 = vmatpush1.msra.mxu0 0.0
    %166 = vmatprep.subr.mxu0 0.0
    %167 = vmatpush1.msra.mxu0 0.0
    %168 = vmatprep.subr.mxu0 0.0
    %169 = vmatpush1.msra.mxu0 0.0
    %170 = vmatprep.subr.mxu0 0.0
    %171 = vmatpush1.msra.mxu0 0.0
    %172 = vmatprep.subr.mxu0 0.0
    %173 = vmatpush1.msra.mxu0 0.0
    %174 = vmatprep.subr.mxu0 0.0
    %175 = vmatpush1.msra.mxu0 0.0
    %176 = vmatprep.subr.mxu0 0.0
    %177 = vmatpush1.msra.mxu0 0.0
    %178 = vmatprep.subr.mxu0 0.0
    %v179 = vand.u32 %v93, 4294901760
    %180 = vmatpush1.msra.mxu0 %v179
    %181 = vmatprep.subr.mxu0 0.0
    %v182 = vand.u32 %v92, 4294901760
    %183 = vmatpush1.msra.mxu0 %v182
    %184 = vmatprep.subr.mxu0 0.0
    %185 = vmatpush2.msra.mxu0 0.0
    %186 = vmatprep.subr.mxu0 0.0
    %187 = vmatpush2.msra.mxu0 0.0
    %188 = vmatprep.subr.mxu0 0.0
    %189 = vmatpush2.msra.mxu0 0.0
    %190 = vmatprep.subr.mxu0 0.0
    %191 = vmatpush2.msra.mxu0 0.0
    %192 = vmatprep.subr.mxu0 0.0
    %193 = vmatpush2.msra.mxu0 0.0
    %194 = vmatprep.subr.mxu0 0.0
    %195 = vmatpush2.msra.mxu0 0.0
    %196 = vmatprep.subr.mxu0 0.0
    %197 = vmatpush2.msra.mxu0 0.0
    %198 = vmatprep.subr.mxu0 0.0
    %199 = vmatpush2.msra.mxu0 0.0
    %200 = vmatprep.subr.mxu0 0.0
    %201 = vmatpush2.msra.mxu0 0.0
    %202 = vmatprep.subr.mxu0 0.0
    %203 = vmatpush2.msra.mxu0 0.0
    %204 = vmatprep.subr.mxu0 0.0
    %205 = vmatpush2.msra.mxu0 0.0
    %206 = vmatprep.subr.mxu0 0.0
    %207 = vmatpush2.msra.mxu0 0.0
    %208 = vmatprep.subr.mxu0 0.0
    %209 = vmatpush2.msra.mxu0 0.0
    %210 = vmatprep.subr.mxu0 0.0
    %211 = vmatpush2.msra.mxu0 0.0
    %212 = vmatprep.subr.mxu0 0.0
    %213 = vmatpush2.msra.mxu0 0.0
    %214 = vmatprep.subr.mxu0 0.0
    %215 = vmatpush2.msra.mxu0 0.0
    %216 = vmatprep.mubr.f32.mxu0 0.0
    %v217 = vand.u32 %v103, 4294901760
    %v218 = vsub.f32 %v103, %v217
    %v219 = vand.u32 %v218, 4294901760
    %v220 = vsub.f32 %v218, %v219
    %v221 = vand.u32 %v220, 4294901760
    %222 = vmatmul.mubr.f32.gmra.mxu0 %v221
    %v223 = vpop.f32.mrf.mxu0
    %v224 = vadd.f32 %v99, %v223
    %v225 = vpop.f32.mrf.mxu0
    %226 = vmatprep.mubr.f32.mxu0 0.0
    %v227 = vand.u32 %v106, 4294901760
    %v228 = vsub.f32 %v106, %v227
    %v229 = vand.u32 %v228, 4294901760
    %v230 = vsub.f32 %v228, %v229
    %v231 = vand.u32 %v230, 4294901760
    %232 = vmatmul.mubr.f32.gmra.mxu0 %v231
    %v233 = vpop.f32.mrf.mxu0
    %v234 = vadd.f32 %v99, %v233
    %v235 = vpop.f32.mrf.mxu0
    %236 = vmatprep.mubr.f32.mxu0 0.0
    %v237 = vand.u32 %v109, 4294901760
    %v238 = vsub.f32 %v109, %v237
    %v239 = vand.u32 %v238, 4294901760
    %v240 = vsub.f32 %v238, %v239
    %v241 = vand.u32 %v240, 4294901760
    %242 = vmatmul.mubr.f32.gmra.mxu0 %v241
    %v243 = vpop.f32.mrf.mxu0
    %v244 = vadd.f32 %v99, %v243
    %v245 = vpop.f32.mrf.mxu0
    %246 = vmatprep.mubr.f32.mxu0 0.0
    %v247 = vand.u32 %v112, 4294901760
    %v248 = vsub.f32 %v112, %v247
    %v249 = vand.u32 %v248, 4294901760
    %v250 = vsub.f32 %v248, %v249
    %v251 = vand.u32 %v250, 4294901760
    %252 = vmatmul.mubr.f32.gmra.mxu0 %v251
    %v253 = vpop.f32.mrf.mxu0
    %v254 = vadd.f32 %v99, %v253
    %v255 = vpop.f32.mrf.mxu0
    %256 = vmatprep.mubr.f32.mxu0 0.0
    %v257 = vand.u32 %v115, 4294901760
    %v258 = vsub.f32 %v115, %v257
    %v259 = vand.u32 %v258, 4294901760
    %v260 = vsub.f32 %v258, %v259
    %v261 = vand.u32 %v260, 4294901760
    %262 = vmatmul.mubr.f32.gmra.mxu0 %v261
    %v263 = vpop.f32.mrf.mxu0
    %v264 = vadd.f32 %v99, %v263
    %v265 = vpop.f32.mrf.mxu0
    %266 = vmatprep.mubr.f32.mxu0 0.0
    %v267 = vand.u32 %v118, 4294901760
    %v268 = vsub.f32 %v118, %v267
    %v269 = vand.u32 %v268, 4294901760
    %v270 = vsub.f32 %v268, %v269
    %v271 = vand.u32 %v270, 4294901760
    %272 = vmatmul.mubr.f32.gmra.mxu0 %v271
    %v273 = vpop.f32.mrf.mxu0
    %v274 = vadd.f32 %v99, %v273
    %v275 = vpop.f32.mrf.mxu0
    %276 = vmatprep.mubr.f32.mxu0 0.0
    %v277 = vand.u32 %v121, 4294901760
    %v278 = vsub.f32 %v121, %v277
    %v279 = vand.u32 %v278, 4294901760
    %v280 = vsub.f32 %v278, %v279
    %v281 = vand.u32 %v280, 4294901760
    %282 = vmatmul.mubr.f32.gmra.mxu0 %v281
    %v283 = vpop.f32.mrf.mxu0
    %v284 = vadd.f32 %v99, %v283
    %v285 = vpop.f32.mrf.mxu0
    %286 = vmatprep.mubr.f32.mxu0 0.0
    %v287 = vand.u32 %v124, 4294901760
    %v288 = vsub.f32 %v124, %v287
    %v289 = vand.u32 %v288, 4294901760
    %v290 = vsub.f32 %v288, %v289
    %v291 = vand.u32 %v290, 4294901760
    %292 = vmatmul.mubr.f32.gmra.mxu0 %v291
    %v293 = vpop.f32.mrf.mxu0
    %v294 = vadd.f32 %v99, %v293
    %v295 = vpop.f32.mrf.mxu0
    %296 = vmatprep.mubr.f32.mxu0 0.0
    %v297 = vand.u32 %v127, 4294901760
    %v298 = vsub.f32 %v127, %v297
    %v299 = vand.u32 %v298, 4294901760
    %v300 = vsub.f32 %v298, %v299
    %v301 = vand.u32 %v300, 4294901760
    %302 = vmatmul.mubr.f32.gmra.mxu0 %v301
    %v303 = vpop.f32.mrf.mxu0
    %v304 = vadd.f32 %v99, %v303
    %v305 = vpop.f32.mrf.mxu0
    %306 = vmatprep.mubr.f32.mxu0 0.0
    %v307 = vand.u32 %v130, 4294901760
    %v308 = vsub.f32 %v130, %v307
    %v309 = vand.u32 %v308, 4294901760
    %v310 = vsub.f32 %v308, %v309
    %v311 = vand.u32 %v310, 4294901760
    %312 = vmatmul.mubr.f32.gmra.mxu0 %v311
    %v313 = vpop.f32.mrf.mxu0
    %v314 = vadd.f32 %v99, %v313
    %v315 = vpop.f32.mrf.mxu0
    %316 = vmatprep.mubr.f32.mxu0 0.0
    %v317 = vand.u32 %v133, 4294901760
    %v318 = vsub.f32 %v133, %v317
    %v319 = vand.u32 %v318, 4294901760
    %v320 = vsub.f32 %v318, %v319
    %v321 = vand.u32 %v320, 4294901760
    %322 = vmatmul.mubr.f32.gmra.mxu0 %v321
    %v323 = vpop.f32.mrf.mxu0
    %v324 = vadd.f32 %v99, %v323
    %v325 = vpop.f32.mrf.mxu0
    %326 = vmatprep.mubr.f32.mxu0 0.0
    %v327 = vand.u32 %v136, 4294901760
    %v328 = vsub.f32 %v136, %v327
    %v329 = vand.u32 %v328, 4294901760
    %v330 = vsub.f32 %v328, %v329
    %v331 = vand.u32 %v330, 4294901760
    %332 = vmatmul.mubr.f32.gmra.mxu0 %v331
    %v333 = vpop.f32.mrf.mxu0
    %v334 = vadd.f32 %v99, %v333
    %v335 = vpop.f32.mrf.mxu0
    %336 = vmatprep.mubr.f32.mxu0 0.0
    %v337 = vand.u32 %v139, 4294901760
    %v338 = vsub.f32 %v139, %v337
    %v339 = vand.u32 %v338, 4294901760
    %v340 = vsub.f32 %v338, %v339
    %v341 = vand.u32 %v340, 4294901760
    %342 = vmatmul.mubr.f32.gmra.mxu0 %v341
    %v343 = vpop.f32.mrf.mxu0
    %v344 = vadd.f32 %v99, %v343
    %v345 = vpop.f32.mrf.mxu0
    %346 = vmatprep.mubr.f32.mxu0 0.0
    %v347 = vand.u32 %v142, 4294901760
    %v348 = vsub.f32 %v142, %v347
    %v349 = vand.u32 %v348, 4294901760
    %v350 = vsub.f32 %v348, %v349
    %v351 = vand.u32 %v350, 4294901760
    %352 = vmatmul.mubr.f32.gmra.mxu0 %v351
    %v353 = vpop.f32.mrf.mxu0
    %v354 = vadd.f32 %v99, %v353
    %v355 = vpop.f32.mrf.mxu0
    %356 = vmatprep.mubr.f32.mxu0 0.0
    %v357 = vand.u32 %v145, 4294901760
    %v358 = vsub.f32 %v145, %v357
    %v359 = vand.u32 %v358, 4294901760
    %v360 = vsub.f32 %v358, %v359
    %v361 = vand.u32 %v360, 4294901760
    %362 = vmatmul.mubr.f32.gmra.mxu0 %v361
    %v363 = vpop.f32.mrf.mxu0
    %v364 = vadd.f32 %v99, %v363
    %v365 = vpop.f32.mrf.mxu0
    %366 = vmatprep.mubr.f32.mxu0 0.0
    %v367 = vand.u32 %v148, 4294901760
    %v368 = vsub.f32 %v148, %v367
    %v369 = vand.u32 %v368, 4294901760
    %v370 = vsub.f32 %v368, %v369
    %v371 = vand.u32 %v370, 4294901760
    %372 = vmatmul.mubr.f32.gmra.mxu0 %v371
    %v373 = vpop.f32.mrf.mxu0
    %v374 = vadd.f32 %v99, %v373
    %v375 = vpop.f32.mrf.mxu0
    %376 = vdwg.mxu0
    %377 = vmatprep.subr.mxu0 0.0
    %378 = vmatpush1.msra.mxu0 0.0
    %379 = vmatprep.subr.mxu0 0.0
    %380 = vmatpush1.msra.mxu0 0.0
    %381 = vmatprep.subr.mxu0 0.0
    %382 = vmatpush1.msra.mxu0 0.0
    %383 = vmatprep.subr.mxu0 0.0
    %384 = vmatpush1.msra.mxu0 0.0
    %385 = vmatprep.subr.mxu0 0.0
    %386 = vmatpush1.msra.mxu0 0.0
    %387 = vmatprep.subr.mxu0 0.0
    %388 = vmatpush1.msra.mxu0 0.0
    %389 = vmatprep.subr.mxu0 0.0
    %390 = vmatpush1.msra.mxu0 0.0
    %391 = vmatprep.subr.mxu0 0.0
    %392 = vmatpush1.msra.mxu0 0.0
    %393 = vmatprep.subr.mxu0 0.0
    %394 = vmatpush1.msra.mxu0 0.0
    %395 = vmatprep.subr.mxu0 0.0
    %396 = vmatpush1.msra.mxu0 0.0
    %397 = vmatprep.subr.mxu0 0.0
    %398 = vmatpush1.msra.mxu0 0.0
    %399 = vmatprep.subr.mxu0 0.0
    %400 = vmatpush1.msra.mxu0 0.0
    %401 = vmatprep.subr.mxu0 0.0
    %402 = vmatpush1.msra.mxu0 0.0
    %403 = vmatprep.subr.mxu0 0.0
    %404 = vmatpush1.msra.mxu0 0.0
    %405 = vmatprep.subr.mxu0 0.0
    %v406 = vand.u32 %v93, 4294901760
    %v407 = vsub.f32 %v93, %v406
    %v408 = vand.u32 %v407, 4294901760
    %v409 = vsub.f32 %v407, %v408
    %v410 = vand.u32 %v409, 4294901760
    %411 = vmatpush1.msra.mxu0 %v410
    %412 = vmatprep.subr.mxu0 0.0
    %v413 = vand.u32 %v92, 4294901760
    %v414 = vsub.f32 %v92, %v413
    %v415 = vand.u32 %v414, 4294901760
    %v416 = vsub.f32 %v414, %v415
    %v417 = vand.u32 %v416, 4294901760
    %418 = vmatpush1.msra.mxu0 %v417
    %419 = vmatprep.subr.mxu0 0.0
    %420 = vmatpush2.msra.mxu0 0.0
    %421 = vmatprep.subr.mxu0 0.0
    %422 = vmatpush2.msra.mxu0 0.0
    %423 = vmatprep.subr.mxu0 0.0
    %424 = vmatpush2.msra.mxu0 0.0
    %425 = vmatprep.subr.mxu0 0.0
    %426 = vmatpush2.msra.mxu0 0.0
    %427 = vmatprep.subr.mxu0 0.0
    %428 = vmatpush2.msra.mxu0 0.0
    %429 = vmatprep.subr.mxu0 0.0
    %430 = vmatpush2.msra.mxu0 0.0
    %431 = vmatprep.subr.mxu0 0.0
    %432 = vmatpush2.msra.mxu0 0.0
    %433 = vmatprep.subr.mxu0 0.0
    %434 = vmatpush2.msra.mxu0 0.0
    %435 = vmatprep.subr.mxu0 0.0
    %436 = vmatpush2.msra.mxu0 0.0
    %437 = vmatprep.subr.mxu0 0.0
    %438 = vmatpush2.msra.mxu0 0.0
    %439 = vmatprep.subr.mxu0 0.0
    %440 = vmatpush2.msra.mxu0 0.0
    %441 = vmatprep.subr.mxu0 0.0
    %442 = vmatpush2.msra.mxu0 0.0
    %443 = vmatprep.subr.mxu0 0.0
    %444 = vmatpush2.msra.mxu0 0.0
    %445 = vmatprep.subr.mxu0 0.0
    %446 = vmatpush2.msra.mxu0 0.0
    %447 = vmatprep.subr.mxu0 0.0
    %448 = vmatpush2.msra.mxu0 0.0
    %449 = vmatprep.subr.mxu0 0.0
    %450 = vmatpush2.msra.mxu0 0.0
    %451 = vmatprep.mubr.f32.mxu0 0.0
    %v452 = vand.u32 %v103, 4294901760
    %453 = vmatmul.mubr.f32.gmra.mxu0 %v452
    %v454 = vpop.f32.mrf.mxu0
    %v455 = vadd.f32 %v224, %v454
    %v456 = vpop.f32.mrf.mxu0
    %457 = vmatprep.mubr.f32.mxu0 0.0
    %v458 = vand.u32 %v106, 4294901760
    %459 = vmatmul.mubr.f32.gmra.mxu0 %v458
    %v460 = vpop.f32.mrf.mxu0
    %v461 = vadd.f32 %v234, %v460
    %v462 = vpop.f32.mrf.mxu0
    %463 = vmatprep.mubr.f32.mxu0 0.0
    %v464 = vand.u32 %v109, 4294901760
    %465 = vmatmul.mubr.f32.gmra.mxu0 %v464
    %v466 = vpop.f32.mrf.mxu0
    %v467 = vadd.f32 %v244, %v466
    %v468 = vpop.f32.mrf.mxu0
    %469 = vmatprep.mubr.f32.mxu0 0.0
    %v470 = vand.u32 %v112, 4294901760
    %471 = vmatmul.mubr.f32.gmra.mxu0 %v470
    %v472 = vpop.f32.mrf.mxu0
    %v473 = vadd.f32 %v254, %v472
    %v474 = vpop.f32.mrf.mxu0
    %475 = vmatprep.mubr.f32.mxu0 0.0
    %v476 = vand.u32 %v115, 4294901760
    %477 = vmatmul.mubr.f32.gmra.mxu0 %v476
    %v478 = vpop.f32.mrf.mxu0
    %v479 = vadd.f32 %v264, %v478
    %v480 = vpop.f32.mrf.mxu0
    %481 = vmatprep.mubr.f32.mxu0 0.0
    %v482 = vand.u32 %v118, 4294901760
    %483 = vmatmul.mubr.f32.gmra.mxu0 %v482
    %v484 = vpop.f32.mrf.mxu0
    %v485 = vadd.f32 %v274, %v484
    %v486 = vpop.f32.mrf.mxu0
    %487 = vmatprep.mubr.f32.mxu0 0.0
    %v488 = vand.u32 %v121, 4294901760
    %489 = vmatmul.mubr.f32.gmra.mxu0 %v488
    %v490 = vpop.f32.mrf.mxu0
    %v491 = vadd.f32 %v284, %v490
    %v492 = vpop.f32.mrf.mxu0
    %493 = vmatprep.mubr.f32.mxu0 0.0
    %v494 = vand.u32 %v124, 4294901760
    %495 = vmatmul.mubr.f32.gmra.mxu0 %v494
    %v496 = vpop.f32.mrf.mxu0
    %v497 = vadd.f32 %v294, %v496
    %v498 = vpop.f32.mrf.mxu0
    %499 = vmatprep.mubr.f32.mxu0 0.0
    %v500 = vand.u32 %v127, 4294901760
    %501 = vmatmul.mubr.f32.gmra.mxu0 %v500
    %v502 = vpop.f32.mrf.mxu0
    %v503 = vadd.f32 %v304, %v502
    %v504 = vpop.f32.mrf.mxu0
    %505 = vmatprep.mubr.f32.mxu0 0.0
    %v506 = vand.u32 %v130, 4294901760
    %507 = vmatmul.mubr.f32.gmra.mxu0 %v506
    %v508 = vpop.f32.mrf.mxu0
    %v509 = vadd.f32 %v314, %v508
    %v510 = vpop.f32.mrf.mxu0
    %511 = vmatprep.mubr.f32.mxu0 0.0
    %v512 = vand.u32 %v133, 4294901760
    %513 = vmatmul.mubr.f32.gmra.mxu0 %v512
    %v514 = vpop.f32.mrf.mxu0
    %v515 = vadd.f32 %v324, %v514
    %v516 = vpop.f32.mrf.mxu0
    %517 = vmatprep.mubr.f32.mxu0 0.0
    %v518 = vand.u32 %v136, 4294901760
    %519 = vmatmul.mubr.f32.gmra.mxu0 %v518
    %v520 = vpop.f32.mrf.mxu0
    %v521 = vadd.f32 %v334, %v520
    %v522 = vpop.f32.mrf.mxu0
    %523 = vmatprep.mubr.f32.mxu0 0.0
    %v524 = vand.u32 %v139, 4294901760
    %525 = vmatmul.mubr.f32.gmra.mxu0 %v524
    %v526 = vpop.f32.mrf.mxu0
    %v527 = vadd.f32 %v344, %v526
    %v528 = vpop.f32.mrf.mxu0
    %529 = vmatprep.mubr.f32.mxu0 0.0
    %v530 = vand.u32 %v142, 4294901760
    %531 = vmatmul.mubr.f32.gmra.mxu0 %v530
    %v532 = vpop.f32.mrf.mxu0
    %v533 = vadd.f32 %v354, %v532
    %v534 = vpop.f32.mrf.mxu0
    %535 = vmatprep.mubr.f32.mxu0 0.0
    %v536 = vand.u32 %v145, 4294901760
    %537 = vmatmul.mubr.f32.gmra.mxu0 %v536
    %v538 = vpop.f32.mrf.mxu0
    %v539 = vadd.f32 %v364, %v538
    %v540 = vpop.f32.mrf.mxu0
    %541 = vmatprep.mubr.f32.mxu0 0.0
    %v542 = vand.u32 %v148, 4294901760
    %543 = vmatmul.mubr.f32.gmra.mxu0 %v542
    %v544 = vpop.f32.mrf.mxu0
    %v545 = vadd.f32 %v374, %v544
    %v546 = vpop.f32.mrf.mxu0
    %547 = vdwg.mxu0
    %548 = vmatprep.subr.mxu0 0.0
    %549 = vmatpush1.msra.mxu0 0.0
    %550 = vmatprep.subr.mxu0 0.0
    %551 = vmatpush1.msra.mxu0 0.0
    %552 = vmatprep.subr.mxu0 0.0
    %553 = vmatpush1.msra.mxu0 0.0
    %554 = vmatprep.subr.mxu0 0.0
    %555 = vmatpush1.msra.mxu0 0.0
    %556 = vmatprep.subr.mxu0 0.0
    %557 = vmatpush1.msra.mxu0 0.0
    %558 = vmatprep.subr.mxu0 0.0
    %559 = vmatpush1.msra.mxu0 0.0
    %560 = vmatprep.subr.mxu0 0.0
    %561 = vmatpush1.msra.mxu0 0.0
    %562 = vmatprep.subr.mxu0 0.0
    %563 = vmatpush1.msra.mxu0 0.0
    %564 = vmatprep.subr.mxu0 0.0
    %565 = vmatpush1.msra.mxu0 0.0
    %566 = vmatprep.subr.mxu0 0.0
    %567 = vmatpush1.msra.mxu0 0.0
    %568 = vmatprep.subr.mxu0 0.0
    %569 = vmatpush1.msra.mxu0 0.0
    %570 = vmatprep.subr.mxu0 0.0
    %571 = vmatpush1.msra.mxu0 0.0
    %572 = vmatprep.subr.mxu0 0.0
    %573 = vmatpush1.msra.mxu0 0.0
    %574 = vmatprep.subr.mxu0 0.0
    %575 = vmatpush1.msra.mxu0 0.0
    %576 = vmatprep.subr.mxu0 0.0
    %v577 = vand.u32 %v93, 4294901760
    %v578 = vsub.f32 %v93, %v577
    %579 = vmatpush1.msra.mxu0 %v578
    %580 = vmatprep.subr.mxu0 0.0
    %v581 = vand.u32 %v92, 4294901760
    %v582 = vsub.f32 %v92, %v581
    %583 = vmatpush1.msra.mxu0 %v582
    %584 = vmatprep.subr.mxu0 0.0
    %585 = vmatpush2.msra.mxu0 0.0
    %586 = vmatprep.subr.mxu0 0.0
    %587 = vmatpush2.msra.mxu0 0.0
    %588 = vmatprep.subr.mxu0 0.0
    %589 = vmatpush2.msra.mxu0 0.0
    %590 = vmatprep.subr.mxu0 0.0
    %591 = vmatpush2.msra.mxu0 0.0
    %592 = vmatprep.subr.mxu0 0.0
    %593 = vmatpush2.msra.mxu0 0.0
    %594 = vmatprep.subr.mxu0 0.0
    %595 = vmatpush2.msra.mxu0 0.0
    %596 = vmatprep.subr.mxu0 0.0
    %597 = vmatpush2.msra.mxu0 0.0
    %598 = vmatprep.subr.mxu0 0.0
    %599 = vmatpush2.msra.mxu0 0.0
    %600 = vmatprep.subr.mxu0 0.0
    %601 = vmatpush2.msra.mxu0 0.0
    %602 = vmatprep.subr.mxu0 0.0
    %603 = vmatpush2.msra.mxu0 0.0
    %604 = vmatprep.subr.mxu0 0.0
    %605 = vmatpush2.msra.mxu0 0.0
    %606 = vmatprep.subr.mxu0 0.0
    %607 = vmatpush2.msra.mxu0 0.0
    %608 = vmatprep.subr.mxu0 0.0
    %609 = vmatpush2.msra.mxu0 0.0
    %610 = vmatprep.subr.mxu0 0.0
    %611 = vmatpush2.msra.mxu0 0.0
    %612 = vmatprep.subr.mxu0 0.0
    %613 = vmatpush2.msra.mxu0 0.0
    %614 = vmatprep.subr.mxu0 0.0
    %615 = vmatpush2.msra.mxu0 0.0
    %616 = vmatprep.mubr.f32.mxu0 0.0
    %v617 = vand.u32 %v103, 4294901760
    %v618 = vsub.f32 %v103, %v617
    %619 = vmatmul.mubr.f32.gmra.mxu0 %v618
    %v620 = vpop.f32.mrf.mxu0
    %v621 = vadd.f32 %v455, %v620
    %v622 = vpop.f32.mrf.mxu0
    %623 = vmatprep.mubr.f32.mxu0 0.0
    %v624 = vand.u32 %v106, 4294901760
    %v625 = vsub.f32 %v106, %v624
    %626 = vmatmul.mubr.f32.gmra.mxu0 %v625
    %v627 = vpop.f32.mrf.mxu0
    %v628 = vadd.f32 %v461, %v627
    %v629 = vpop.f32.mrf.mxu0
    %630 = vmatprep.mubr.f32.mxu0 0.0
    %v631 = vand.u32 %v109, 4294901760
    %v632 = vsub.f32 %v109, %v631
    %633 = vmatmul.mubr.f32.gmra.mxu0 %v632
    %v634 = vpop.f32.mrf.mxu0
    %v635 = vadd.f32 %v467, %v634
    %v636 = vpop.f32.mrf.mxu0
    %637 = vmatprep.mubr.f32.mxu0 0.0
    %v638 = vand.u32 %v112, 4294901760
    %v639 = vsub.f32 %v112, %v638
    %640 = vmatmul.mubr.f32.gmra.mxu0 %v639
    %v641 = vpop.f32.mrf.mxu0
    %v642 = vadd.f32 %v473, %v641
    %v643 = vpop.f32.mrf.mxu0
    %644 = vmatprep.mubr.f32.mxu0 0.0
    %v645 = vand.u32 %v115, 4294901760
    %v646 = vsub.f32 %v115, %v645
    %647 = vmatmul.mubr.f32.gmra.mxu0 %v646
    %v648 = vpop.f32.mrf.mxu0
    %v649 = vadd.f32 %v479, %v648
    %v650 = vpop.f32.mrf.mxu0
    %651 = vmatprep.mubr.f32.mxu0 0.0
    %v652 = vand.u32 %v118, 4294901760
    %v653 = vsub.f32 %v118, %v652
    %654 = vmatmul.mubr.f32.gmra.mxu0 %v653
    %v655 = vpop.f32.mrf.mxu0
    %v656 = vadd.f32 %v485, %v655
    %v657 = vpop.f32.mrf.mxu0
    %658 = vmatprep.mubr.f32.mxu0 0.0
    %v659 = vand.u32 %v121, 4294901760
    %v660 = vsub.f32 %v121, %v659
    %661 = vmatmul.mubr.f32.gmra.mxu0 %v660
    %v662 = vpop.f32.mrf.mxu0
    %v663 = vadd.f32 %v491, %v662
    %v664 = vpop.f32.mrf.mxu0
    %665 = vmatprep.mubr.f32.mxu0 0.0
    %v666 = vand.u32 %v124, 4294901760
    %v667 = vsub.f32 %v124, %v666
    %668 = vmatmul.mubr.f32.gmra.mxu0 %v667
    %v669 = vpop.f32.mrf.mxu0
    %v670 = vadd.f32 %v497, %v669
    %v671 = vpop.f32.mrf.mxu0
    %672 = vmatprep.mubr.f32.mxu0 0.0
    %v673 = vand.u32 %v127, 4294901760
    %v674 = vsub.f32 %v127, %v673
    %675 = vmatmul.mubr.f32.gmra.mxu0 %v674
    %v676 = vpop.f32.mrf.mxu0
    %v677 = vadd.f32 %v503, %v676
    %v678 = vpop.f32.mrf.mxu0
    %679 = vmatprep.mubr.f32.mxu0 0.0
    %v680 = vand.u32 %v130, 4294901760
    %v681 = vsub.f32 %v130, %v680
    %682 = vmatmul.mubr.f32.gmra.mxu0 %v681
    %v683 = vpop.f32.mrf.mxu0
    %v684 = vadd.f32 %v509, %v683
    %v685 = vpop.f32.mrf.mxu0
    %686 = vmatprep.mubr.f32.mxu0 0.0
    %v687 = vand.u32 %v133, 4294901760
    %v688 = vsub.f32 %v133, %v687
    %689 = vmatmul.mubr.f32.gmra.mxu0 %v688
    %v690 = vpop.f32.mrf.mxu0
    %v691 = vadd.f32 %v515, %v690
    %v692 = vpop.f32.mrf.mxu0
    %693 = vmatprep.mubr.f32.mxu0 0.0
    %v694 = vand.u32 %v136, 4294901760
    %v695 = vsub.f32 %v136, %v694
    %696 = vmatmul.mubr.f32.gmra.mxu0 %v695
    %v697 = vpop.f32.mrf.mxu0
    %v698 = vadd.f32 %v521, %v697
    %v699 = vpop.f32.mrf.mxu0
    %700 = vmatprep.mubr.f32.mxu0 0.0
    %v701 = vand.u32 %v139, 4294901760
    %v702 = vsub.f32 %v139, %v701
    %703 = vmatmul.mubr.f32.gmra.mxu0 %v702
    %v704 = vpop.f32.mrf.mxu0
    %v705 = vadd.f32 %v527, %v704
    %v706 = vpop.f32.mrf.mxu0
    %707 = vmatprep.mubr.f32.mxu0 0.0
    %v708 = vand.u32 %v142, 4294901760
    %v709 = vsub.f32 %v142, %v708
    %710 = vmatmul.mubr.f32.gmra.mxu0 %v709
    %v711 = vpop.f32.mrf.mxu0
    %v712 = vadd.f32 %v533, %v711
    %v713 = vpop.f32.mrf.mxu0
    %714 = vmatprep.mubr.f32.mxu0 0.0
    %v715 = vand.u32 %v145, 4294901760
    %v716 = vsub.f32 %v145, %v715
    %717 = vmatmul.mubr.f32.gmra.mxu0 %v716
    %v718 = vpop.f32.mrf.mxu0
    %v719 = vadd.f32 %v539, %v718
    %v720 = vpop.f32.mrf.mxu0
    %721 = vmatprep.mubr.f32.mxu0 0.0
    %v722 = vand.u32 %v148, 4294901760
    %v723 = vsub.f32 %v148, %v722
    %724 = vmatmul.mubr.f32.gmra.mxu0 %v723
    %v725 = vpop.f32.mrf.mxu0
    %v726 = vadd.f32 %v545, %v725
    %v727 = vpop.f32.mrf.mxu0
    %728 = vdwg.mxu0
    %729 = vmatprep.subr.mxu0 0.0
    %730 = vmatpush1.msra.mxu0 0.0
    %731 = vmatprep.subr.mxu0 0.0
    %732 = vmatpush1.msra.mxu0 0.0
    %733 = vmatprep.subr.mxu0 0.0
    %734 = vmatpush1.msra.mxu0 0.0
    %735 = vmatprep.subr.mxu0 0.0
    %736 = vmatpush1.msra.mxu0 0.0
    %737 = vmatprep.subr.mxu0 0.0
    %738 = vmatpush1.msra.mxu0 0.0
    %739 = vmatprep.subr.mxu0 0.0
    %740 = vmatpush1.msra.mxu0 0.0
    %741 = vmatprep.subr.mxu0 0.0
    %742 = vmatpush1.msra.mxu0 0.0
    %743 = vmatprep.subr.mxu0 0.0
    %744 = vmatpush1.msra.mxu0 0.0
    %745 = vmatprep.subr.mxu0 0.0
    %746 = vmatpush1.msra.mxu0 0.0
    %747 = vmatprep.subr.mxu0 0.0
    %748 = vmatpush1.msra.mxu0 0.0
    %749 = vmatprep.subr.mxu0 0.0
    %750 = vmatpush1.msra.mxu0 0.0
    %751 = vmatprep.subr.mxu0 0.0
    %752 = vmatpush1.msra.mxu0 0.0
    %753 = vmatprep.subr.mxu0 0.0
    %754 = vmatpush1.msra.mxu0 0.0
    %755 = vmatprep.subr.mxu0 0.0
    %756 = vmatpush1.msra.mxu0 0.0
    %757 = vmatprep.subr.mxu0 0.0
    %v758 = vand.u32 %v93, 4294901760
    %759 = vmatpush1.msra.mxu0 %v758
    %760 = vmatprep.subr.mxu0 0.0
    %v761 = vand.u32 %v92, 4294901760
    %762 = vmatpush1.msra.mxu0 %v761
    %763 = vmatprep.subr.mxu0 0.0
    %764 = vmatpush2.msra.mxu0 0.0
    %765 = vmatprep.subr.mxu0 0.0
    %766 = vmatpush2.msra.mxu0 0.0
    %767 = vmatprep.subr.mxu0 0.0
    %768 = vmatpush2.msra.mxu0 0.0
    %769 = vmatprep.subr.mxu0 0.0
    %770 = vmatpush2.msra.mxu0 0.0
    %771 = vmatprep.subr.mxu0 0.0
    %772 = vmatpush2.msra.mxu0 0.0
    %773 = vmatprep.subr.mxu0 0.0
    %774 = vmatpush2.msra.mxu0 0.0
    %775 = vmatprep.subr.mxu0 0.0
    %776 = vmatpush2.msra.mxu0 0.0
    %777 = vmatprep.subr.mxu0 0.0
    %778 = vmatpush2.msra.mxu0 0.0
    %779 = vmatprep.subr.mxu0 0.0
    %780 = vmatpush2.msra.mxu0 0.0
    %781 = vmatprep.subr.mxu0 0.0
    %782 = vmatpush2.msra.mxu0 0.0
    %783 = vmatprep.subr.mxu0 0.0
    %784 = vmatpush2.msra.mxu0 0.0
    %785 = vmatprep.subr.mxu0 0.0
    %786 = vmatpush2.msra.mxu0 0.0
    %787 = vmatprep.subr.mxu0 0.0
    %788 = vmatpush2.msra.mxu0 0.0
    %789 = vmatprep.subr.mxu0 0.0
    %790 = vmatpush2.msra.mxu0 0.0
    %791 = vmatprep.subr.mxu0 0.0
    %792 = vmatpush2.msra.mxu0 0.0
    %793 = vmatprep.subr.mxu0 0.0
    %794 = vmatpush2.msra.mxu0 0.0
    %795 = vmatprep.mubr.f32.mxu0 0.0
    %v796 = vand.u32 %v103, 4294901760
    %v797 = vsub.f32 %v103, %v796
    %v798 = vand.u32 %v797, 4294901760
    %799 = vmatmul.mubr.f32.gmra.mxu0 %v798
    %v800 = vpop.f32.mrf.mxu0
    %v801 = vadd.f32 %v621, %v800
    %v802 = vpop.f32.mrf.mxu0
    %803 = vmatprep.mubr.f32.mxu0 0.0
    %v804 = vand.u32 %v106, 4294901760
    %v805 = vsub.f32 %v106, %v804
    %v806 = vand.u32 %v805, 4294901760
    %807 = vmatmul.mubr.f32.gmra.mxu0 %v806
    %v808 = vpop.f32.mrf.mxu0
    %v809 = vadd.f32 %v628, %v808
    %v810 = vpop.f32.mrf.mxu0
    %811 = vmatprep.mubr.f32.mxu0 0.0
    %v812 = vand.u32 %v109, 4294901760
    %v813 = vsub.f32 %v109, %v812
    %v814 = vand.u32 %v813, 4294901760
    %815 = vmatmul.mubr.f32.gmra.mxu0 %v814
    %v816 = vpop.f32.mrf.mxu0
    %v817 = vadd.f32 %v635, %v816
    %v818 = vpop.f32.mrf.mxu0
    %819 = vmatprep.mubr.f32.mxu0 0.0
    %v820 = vand.u32 %v112, 4294901760
    %v821 = vsub.f32 %v112, %v820
    %v822 = vand.u32 %v821, 4294901760
    %823 = vmatmul.mubr.f32.gmra.mxu0 %v822
    %v824 = vpop.f32.mrf.mxu0
    %v825 = vadd.f32 %v642, %v824
    %v826 = vpop.f32.mrf.mxu0
    %827 = vmatprep.mubr.f32.mxu0 0.0
    %v828 = vand.u32 %v115, 4294901760
    %v829 = vsub.f32 %v115, %v828
    %v830 = vand.u32 %v829, 4294901760
    %831 = vmatmul.mubr.f32.gmra.mxu0 %v830
    %v832 = vpop.f32.mrf.mxu0
    %v833 = vadd.f32 %v649, %v832
    %v834 = vpop.f32.mrf.mxu0
    %835 = vmatprep.mubr.f32.mxu0 0.0
    %v836 = vand.u32 %v118, 4294901760
    %v837 = vsub.f32 %v118, %v836
    %v838 = vand.u32 %v837, 4294901760
    %839 = vmatmul.mubr.f32.gmra.mxu0 %v838
    %v840 = vpop.f32.mrf.mxu0
    %v841 = vadd.f32 %v656, %v840
    %v842 = vpop.f32.mrf.mxu0
    %843 = vmatprep.mubr.f32.mxu0 0.0
    %v844 = vand.u32 %v121, 4294901760
    %v845 = vsub.f32 %v121, %v844
    %v846 = vand.u32 %v845, 4294901760
    %847 = vmatmul.mubr.f32.gmra.mxu0 %v846
    %v848 = vpop.f32.mrf.mxu0
    %v849 = vadd.f32 %v663, %v848
    %v850 = vpop.f32.mrf.mxu0
    %851 = vmatprep.mubr.f32.mxu0 0.0
    %v852 = vand.u32 %v124, 4294901760
    %v853 = vsub.f32 %v124, %v852
    %v854 = vand.u32 %v853, 4294901760
    %855 = vmatmul.mubr.f32.gmra.mxu0 %v854
    %v856 = vpop.f32.mrf.mxu0
    %v857 = vadd.f32 %v670, %v856
    %v858 = vpop.f32.mrf.mxu0
    %859 = vmatprep.mubr.f32.mxu0 0.0
    %v860 = vand.u32 %v127, 4294901760
    %v861 = vsub.f32 %v127, %v860
    %v862 = vand.u32 %v861, 4294901760
    %863 = vmatmul.mubr.f32.gmra.mxu0 %v862
    %v864 = vpop.f32.mrf.mxu0
    %v865 = vadd.f32 %v677, %v864
    %v866 = vpop.f32.mrf.mxu0
    %867 = vmatprep.mubr.f32.mxu0 0.0
    %v868 = vand.u32 %v130, 4294901760
    %v869 = vsub.f32 %v130, %v868
    %v870 = vand.u32 %v869, 4294901760
    %871 = vmatmul.mubr.f32.gmra.mxu0 %v870
    %v872 = vpop.f32.mrf.mxu0
    %v873 = vadd.f32 %v684, %v872
    %v874 = vpop.f32.mrf.mxu0
    %875 = vmatprep.mubr.f32.mxu0 0.0
    %v876 = vand.u32 %v133, 4294901760
    %v877 = vsub.f32 %v133, %v876
    %v878 = vand.u32 %v877, 4294901760
    %879 = vmatmul.mubr.f32.gmra.mxu0 %v878
    %v880 = vpop.f32.mrf.mxu0
    %v881 = vadd.f32 %v691, %v880
    %v882 = vpop.f32.mrf.mxu0
    %883 = vmatprep.mubr.f32.mxu0 0.0
    %v884 = vand.u32 %v136, 4294901760
    %v885 = vsub.f32 %v136, %v884
    %v886 = vand.u32 %v885, 4294901760
    %887 = vmatmul.mubr.f32.gmra.mxu0 %v886
    %v888 = vpop.f32.mrf.mxu0
    %v889 = vadd.f32 %v698, %v888
    %v890 = vpop.f32.mrf.mxu0
    %891 = vmatprep.mubr.f32.mxu0 0.0
    %v892 = vand.u32 %v139, 4294901760
    %v893 = vsub.f32 %v139, %v892
    %v894 = vand.u32 %v893, 4294901760
    %895 = vmatmul.mubr.f32.gmra.mxu0 %v894
    %v896 = vpop.f32.mrf.mxu0
    %v897 = vadd.f32 %v705, %v896
    %v898 = vpop.f32.mrf.mxu0
    %899 = vmatprep.mubr.f32.mxu0 0.0
    %v900 = vand.u32 %v142, 4294901760
    %v901 = vsub.f32 %v142, %v900
    %v902 = vand.u32 %v901, 4294901760
    %903 = vmatmul.mubr.f32.gmra.mxu0 %v902
    %v904 = vpop.f32.mrf.mxu0
    %v905 = vadd.f32 %v712, %v904
    %v906 = vpop.f32.mrf.mxu0
    %907 = vmatprep.mubr.f32.mxu0 0.0
    %v908 = vand.u32 %v145, 4294901760
    %v909 = vsub.f32 %v145, %v908
    %v910 = vand.u32 %v909, 4294901760
    %911 = vmatmul.mubr.f32.gmra.mxu0 %v910
    %v912 = vpop.f32.mrf.mxu0
    %v913 = vadd.f32 %v719, %v912
    %v914 = vpop.f32.mrf.mxu0
    %915 = vmatprep.mubr.f32.mxu0 0.0
    %v916 = vand.u32 %v148, 4294901760
    %v917 = vsub.f32 %v148, %v916
    %v918 = vand.u32 %v917, 4294901760
    %919 = vmatmul.mubr.f32.gmra.mxu0 %v918
    %v920 = vpop.f32.mrf.mxu0
    %v921 = vadd.f32 %v726, %v920
    %v922 = vpop.f32.mrf.mxu0
    %923 = vdwg.mxu0
    %924 = vmatprep.subr.mxu0 0.0
    %925 = vmatpush1.msra.mxu0 0.0
    %926 = vmatprep.subr.mxu0 0.0
    %927 = vmatpush1.msra.mxu0 0.0
    %928 = vmatprep.subr.mxu0 0.0
    %929 = vmatpush1.msra.mxu0 0.0
    %930 = vmatprep.subr.mxu0 0.0
    %931 = vmatpush1.msra.mxu0 0.0
    %932 = vmatprep.subr.mxu0 0.0
    %933 = vmatpush1.msra.mxu0 0.0
    %934 = vmatprep.subr.mxu0 0.0
    %935 = vmatpush1.msra.mxu0 0.0
    %936 = vmatprep.subr.mxu0 0.0
    %937 = vmatpush1.msra.mxu0 0.0
    %938 = vmatprep.subr.mxu0 0.0
    %939 = vmatpush1.msra.mxu0 0.0
    %940 = vmatprep.subr.mxu0 0.0
    %941 = vmatpush1.msra.mxu0 0.0
    %942 = vmatprep.subr.mxu0 0.0
    %943 = vmatpush1.msra.mxu0 0.0
    %944 = vmatprep.subr.mxu0 0.0
    %945 = vmatpush1.msra.mxu0 0.0
    %946 = vmatprep.subr.mxu0 0.0
    %947 = vmatpush1.msra.mxu0 0.0
    %948 = vmatprep.subr.mxu0 0.0
    %949 = vmatpush1.msra.mxu0 0.0
    %950 = vmatprep.subr.mxu0 0.0
    %951 = vmatpush1.msra.mxu0 0.0
    %952 = vmatprep.subr.mxu0 0.0
    %v953 = vand.u32 %v93, 4294901760
    %v954 = vsub.f32 %v93, %v953
    %v955 = vand.u32 %v954, 4294901760
    %956 = vmatpush1.msra.mxu0 %v955
    %957 = vmatprep.subr.mxu0 0.0
    %v958 = vand.u32 %v92, 4294901760
    %v959 = vsub.f32 %v92, %v958
    %v960 = vand.u32 %v959, 4294901760
    %961 = vmatpush1.msra.mxu0 %v960
    %962 = vmatprep.subr.mxu0 0.0
    %963 = vmatpush2.msra.mxu0 0.0
    %964 = vmatprep.subr.mxu0 0.0
    %965 = vmatpush2.msra.mxu0 0.0
    %966 = vmatprep.subr.mxu0 0.0
    %967 = vmatpush2.msra.mxu0 0.0
    %968 = vmatprep.subr.mxu0 0.0
    %969 = vmatpush2.msra.mxu0 0.0
    %970 = vmatprep.subr.mxu0 0.0
    %971 = vmatpush2.msra.mxu0 0.0
    %972 = vmatprep.subr.mxu0 0.0
    %973 = vmatpush2.msra.mxu0 0.0
    %974 = vmatprep.subr.mxu0 0.0
    %975 = vmatpush2.msra.mxu0 0.0
    %976 = vmatprep.subr.mxu0 0.0
    %977 = vmatpush2.msra.mxu0 0.0
    %978 = vmatprep.subr.mxu0 0.0
    %979 = vmatpush2.msra.mxu0 0.0
    %980 = vmatprep.subr.mxu0 0.0
    %981 = vmatpush2.msra.mxu0 0.0
    %982 = vmatprep.subr.mxu0 0.0
    %983 = vmatpush2.msra.mxu0 0.0
    %984 = vmatprep.subr.mxu0 0.0
    %985 = vmatpush2.msra.mxu0 0.0
    %986 = vmatprep.subr.mxu0 0.0
    %987 = vmatpush2.msra.mxu0 0.0
    %988 = vmatprep.subr.mxu0 0.0
    %989 = vmatpush2.msra.mxu0 0.0
    %990 = vmatprep.subr.mxu0 0.0
    %991 = vmatpush2.msra.mxu0 0.0
    %992 = vmatprep.subr.mxu0 0.0
    %993 = vmatpush2.msra.mxu0 0.0
    %994 = vmatprep.mubr.f32.mxu0 0.0
    %v995 = vand.u32 %v103, 4294901760
    %996 = vmatmul.mubr.f32.gmra.mxu0 %v995
    %v997 = vpop.f32.mrf.mxu0
    %v998 = vadd.f32 %v801, %v997
    %v999 = vpop.f32.mrf.mxu0
    %1000 = vmatprep.mubr.f32.mxu0 0.0
    %v1001 = vand.u32 %v106, 4294901760
    %1002 = vmatmul.mubr.f32.gmra.mxu0 %v1001
    %v1003 = vpop.f32.mrf.mxu0
    %v1004 = vadd.f32 %v809, %v1003
    %v1005 = vpop.f32.mrf.mxu0
    %1006 = vmatprep.mubr.f32.mxu0 0.0
    %v1007 = vand.u32 %v109, 4294901760
    %1008 = vmatmul.mubr.f32.gmra.mxu0 %v1007
    %v1009 = vpop.f32.mrf.mxu0
    %v1010 = vadd.f32 %v817, %v1009
    %v1011 = vpop.f32.mrf.mxu0
    %1012 = vmatprep.mubr.f32.mxu0 0.0
    %v1013 = vand.u32 %v112, 4294901760
    %1014 = vmatmul.mubr.f32.gmra.mxu0 %v1013
    %v1015 = vpop.f32.mrf.mxu0
    %v1016 = vadd.f32 %v825, %v1015
    %v1017 = vpop.f32.mrf.mxu0
    %1018 = vmatprep.mubr.f32.mxu0 0.0
    %v1019 = vand.u32 %v115, 4294901760
    %1020 = vmatmul.mubr.f32.gmra.mxu0 %v1019
    %v1021 = vpop.f32.mrf.mxu0
    %v1022 = vadd.f32 %v833, %v1021
    %v1023 = vpop.f32.mrf.mxu0
    %1024 = vmatprep.mubr.f32.mxu0 0.0
    %v1025 = vand.u32 %v118, 4294901760
    %1026 = vmatmul.mubr.f32.gmra.mxu0 %v1025
    %v1027 = vpop.f32.mrf.mxu0
    %v1028 = vadd.f32 %v841, %v1027
    %v1029 = vpop.f32.mrf.mxu0
    %1030 = vmatprep.mubr.f32.mxu0 0.0
    %v1031 = vand.u32 %v121, 4294901760
    %1032 = vmatmul.mubr.f32.gmra.mxu0 %v1031
    %v1033 = vpop.f32.mrf.mxu0
    %v1034 = vadd.f32 %v849, %v1033
    %v1035 = vpop.f32.mrf.mxu0
    %1036 = vmatprep.mubr.f32.mxu0 0.0
    %v1037 = vand.u32 %v124, 4294901760
    %1038 = vmatmul.mubr.f32.gmra.mxu0 %v1037
    %v1039 = vpop.f32.mrf.mxu0
    %v1040 = vadd.f32 %v857, %v1039
    %v1041 = vpop.f32.mrf.mxu0
    %1042 = vmatprep.mubr.f32.mxu0 0.0
    %v1043 = vand.u32 %v127, 4294901760
    %1044 = vmatmul.mubr.f32.gmra.mxu0 %v1043
    %v1045 = vpop.f32.mrf.mxu0
    %v1046 = vadd.f32 %v865, %v1045
    %v1047 = vpop.f32.mrf.mxu0
    %1048 = vmatprep.mubr.f32.mxu0 0.0
    %v1049 = vand.u32 %v130, 4294901760
    %1050 = vmatmul.mubr.f32.gmra.mxu0 %v1049
    %v1051 = vpop.f32.mrf.mxu0
    %v1052 = vadd.f32 %v873, %v1051
    %v1053 = vpop.f32.mrf.mxu0
    %1054 = vmatprep.mubr.f32.mxu0 0.0
    %v1055 = vand.u32 %v133, 4294901760
    %1056 = vmatmul.mubr.f32.gmra.mxu0 %v1055
    %v1057 = vpop.f32.mrf.mxu0
    %v1058 = vadd.f32 %v881, %v1057
    %v1059 = vpop.f32.mrf.mxu0
    %1060 = vmatprep.mubr.f32.mxu0 0.0
    %v1061 = vand.u32 %v136, 4294901760
    %1062 = vmatmul.mubr.f32.gmra.mxu0 %v1061
    %v1063 = vpop.f32.mrf.mxu0
    %v1064 = vadd.f32 %v889, %v1063
    %v1065 = vpop.f32.mrf.mxu0
    %1066 = vmatprep.mubr.f32.mxu0 0.0
    %v1067 = vand.u32 %v139, 4294901760
    %1068 = vmatmul.mubr.f32.gmra.mxu0 %v1067
    %v1069 = vpop.f32.mrf.mxu0
    %v1070 = vadd.f32 %v897, %v1069
    %v1071 = vpop.f32.mrf.mxu0
    %1072 = vmatprep.mubr.f32.mxu0 0.0
    %v1073 = vand.u32 %v142, 4294901760
    %1074 = vmatmul.mubr.f32.gmra.mxu0 %v1073
    %v1075 = vpop.f32.mrf.mxu0
    %v1076 = vadd.f32 %v905, %v1075
    %v1077 = vpop.f32.mrf.mxu0
    %1078 = vmatprep.mubr.f32.mxu0 0.0
    %v1079 = vand.u32 %v145, 4294901760
    %1080 = vmatmul.mubr.f32.gmra.mxu0 %v1079
    %v1081 = vpop.f32.mrf.mxu0
    %v1082 = vadd.f32 %v913, %v1081
    %v1083 = vpop.f32.mrf.mxu0
    %1084 = vmatprep.mubr.f32.mxu0 0.0
    %v1085 = vand.u32 %v148, 4294901760
    %1086 = vmatmul.mubr.f32.gmra.mxu0 %v1085
    %v1087 = vpop.f32.mrf.mxu0
    %v1088 = vadd.f32 %v921, %v1087
    %v1089 = vpop.f32.mrf.mxu0
    %1090 = vdwg.mxu0
    %1091 = vmatprep.subr.mxu0 0.0
    %1092 = vmatpush1.msra.mxu0 0.0
    %1093 = vmatprep.subr.mxu0 0.0
    %1094 = vmatpush1.msra.mxu0 0.0
    %1095 = vmatprep.subr.mxu0 0.0
    %1096 = vmatpush1.msra.mxu0 0.0
    %1097 = vmatprep.subr.mxu0 0.0
    %1098 = vmatpush1.msra.mxu0 0.0
    %1099 = vmatprep.subr.mxu0 0.0
    %1100 = vmatpush1.msra.mxu0 0.0
    %1101 = vmatprep.subr.mxu0 0.0
    %1102 = vmatpush1.msra.mxu0 0.0
    %1103 = vmatprep.subr.mxu0 0.0
    %1104 = vmatpush1.msra.mxu0 0.0
    %1105 = vmatprep.subr.mxu0 0.0
    %1106 = vmatpush1.msra.mxu0 0.0
    %1107 = vmatprep.subr.mxu0 0.0
    %1108 = vmatpush1.msra.mxu0 0.0
    %1109 = vmatprep.subr.mxu0 0.0
    %1110 = vmatpush1.msra.mxu0 0.0
    %1111 = vmatprep.subr.mxu0 0.0
    %1112 = vmatpush1.msra.mxu0 0.0
    %1113 = vmatprep.subr.mxu0 0.0
    %1114 = vmatpush1.msra.mxu0 0.0
    %1115 = vmatprep.subr.mxu0 0.0
    %1116 = vmatpush1.msra.mxu0 0.0
    %1117 = vmatprep.subr.mxu0 0.0
    %1118 = vmatpush1.msra.mxu0 0.0
    %1119 = vmatprep.subr.mxu0 0.0
    %v1120 = vand.u32 %v93, 4294901760
    %1121 = vmatpush1.msra.mxu0 %v1120
    %1122 = vmatprep.subr.mxu0 0.0
    %v1123 = vand.u32 %v92, 4294901760
    %1124 = vmatpush1.msra.mxu0 %v1123
    %1125 = vmatprep.subr.mxu0 0.0
    %1126 = vmatpush2.msra.mxu0 0.0
    %1127 = vmatprep.subr.mxu0 0.0
    %1128 = vmatpush2.msra.mxu0 0.0
    %1129 = vmatprep.subr.mxu0 0.0
    %1130 = vmatpush2.msra.mxu0 0.0
    %1131 = vmatprep.subr.mxu0 0.0
    %1132 = vmatpush2.msra.mxu0 0.0
    %1133 = vmatprep.subr.mxu0 0.0
    %1134 = vmatpush2.msra.mxu0 0.0
    %1135 = vmatprep.subr.mxu0 0.0
    %1136 = vmatpush2.msra.mxu0 0.0
    %1137 = vmatprep.subr.mxu0 0.0
    %1138 = vmatpush2.msra.mxu0 0.0
    %1139 = vmatprep.subr.mxu0 0.0
    %1140 = vmatpush2.msra.mxu0 0.0
    %1141 = vmatprep.subr.mxu0 0.0
    %1142 = vmatpush2.msra.mxu0 0.0
    %1143 = vmatprep.subr.mxu0 0.0
    %1144 = vmatpush2.msra.mxu0 0.0
    %1145 = vmatprep.subr.mxu0 0.0
    %1146 = vmatpush2.msra.mxu0 0.0
    %1147 = vmatprep.subr.mxu0 0.0
    %1148 = vmatpush2.msra.mxu0 0.0
    %1149 = vmatprep.subr.mxu0 0.0
    %1150 = vmatpush2.msra.mxu0 0.0
    %1151 = vmatprep.subr.mxu0 0.0
    %1152 = vmatpush2.msra.mxu0 0.0
    %1153 = vmatprep.subr.mxu0 0.0
    %1154 = vmatpush2.msra.mxu0 0.0
    %1155 = vmatprep.subr.mxu0 0.0
    %1156 = vmatpush2.msra.mxu0 0.0
    %1157 = vmatprep.mubr.f32.mxu0 0.0
    %v1158 = vand.u32 %v103, 4294901760
    %1159 = vmatmul.mubr.f32.gmra.mxu0 %v1158
    %v1160 = vpop.f32.mrf.mxu0
    %v1161 = vadd.f32 %v998, %v1160
    %v1162 = vpop.f32.mrf.mxu0
    %1163 = vmatprep.mubr.f32.mxu0 0.0
    %v1164 = vand.u32 %v106, 4294901760
    %1165 = vmatmul.mubr.f32.gmra.mxu0 %v1164
    %v1166 = vpop.f32.mrf.mxu0
    %v1167 = vadd.f32 %v1004, %v1166
    %v1168 = vpop.f32.mrf.mxu0
    %1169 = vmatprep.mubr.f32.mxu0 0.0
    %v1170 = vand.u32 %v109, 4294901760
    %1171 = vmatmul.mubr.f32.gmra.mxu0 %v1170
    %v1172 = vpop.f32.mrf.mxu0
    %v1173 = vadd.f32 %v1010, %v1172
    %v1174 = vpop.f32.mrf.mxu0
    %1175 = vmatprep.mubr.f32.mxu0 0.0
    %v1176 = vand.u32 %v112, 4294901760
    %1177 = vmatmul.mubr.f32.gmra.mxu0 %v1176
    %v1178 = vpop.f32.mrf.mxu0
    %v1179 = vadd.f32 %v1016, %v1178
    %v1180 = vpop.f32.mrf.mxu0
    %1181 = vmatprep.mubr.f32.mxu0 0.0
    %v1182 = vand.u32 %v115, 4294901760
    %1183 = vmatmul.mubr.f32.gmra.mxu0 %v1182
    %v1184 = vpop.f32.mrf.mxu0
    %v1185 = vadd.f32 %v1022, %v1184
    %v1186 = vpop.f32.mrf.mxu0
    %1187 = vmatprep.mubr.f32.mxu0 0.0
    %v1188 = vand.u32 %v118, 4294901760
    %1189 = vmatmul.mubr.f32.gmra.mxu0 %v1188
    %v1190 = vpop.f32.mrf.mxu0
    %v1191 = vadd.f32 %v1028, %v1190
    %v1192 = vpop.f32.mrf.mxu0
    %1193 = vmatprep.mubr.f32.mxu0 0.0
    %v1194 = vand.u32 %v121, 4294901760
    %1195 = vmatmul.mubr.f32.gmra.mxu0 %v1194
    %v1196 = vpop.f32.mrf.mxu0
    %v1197 = vadd.f32 %v1034, %v1196
    %v1198 = vpop.f32.mrf.mxu0
    %1199 = vmatprep.mubr.f32.mxu0 0.0
    %v1200 = vand.u32 %v124, 4294901760
    %1201 = vmatmul.mubr.f32.gmra.mxu0 %v1200
    %v1202 = vpop.f32.mrf.mxu0
    %v1203 = vadd.f32 %v1040, %v1202
    %v1204 = vpop.f32.mrf.mxu0
    %1205 = vmatprep.mubr.f32.mxu0 0.0
    %v1206 = vand.u32 %v127, 4294901760
    %1207 = vmatmul.mubr.f32.gmra.mxu0 %v1206
    %v1208 = vpop.f32.mrf.mxu0
    %v1209 = vadd.f32 %v1046, %v1208
    %v1210 = vpop.f32.mrf.mxu0
    %1211 = vmatprep.mubr.f32.mxu0 0.0
    %v1212 = vand.u32 %v130, 4294901760
    %1213 = vmatmul.mubr.f32.gmra.mxu0 %v1212
    %v1214 = vpop.f32.mrf.mxu0
    %v1215 = vadd.f32 %v1052, %v1214
    %v1216 = vpop.f32.mrf.mxu0
    %1217 = vmatprep.mubr.f32.mxu0 0.0
    %v1218 = vand.u32 %v133, 4294901760
    %1219 = vmatmul.mubr.f32.gmra.mxu0 %v1218
    %v1220 = vpop.f32.mrf.mxu0
    %v1221 = vadd.f32 %v1058, %v1220
    %v1222 = vpop.f32.mrf.mxu0
    %1223 = vmatprep.mubr.f32.mxu0 0.0
    %v1224 = vand.u32 %v136, 4294901760
    %1225 = vmatmul.mubr.f32.gmra.mxu0 %v1224
    %v1226 = vpop.f32.mrf.mxu0
    %v1227 = vadd.f32 %v1064, %v1226
    %v1228 = vpop.f32.mrf.mxu0
    %1229 = vmatprep.mubr.f32.mxu0 0.0
    %v1230 = vand.u32 %v139, 4294901760
    %1231 = vmatmul.mubr.f32.gmra.mxu0 %v1230
    %v1232 = vpop.f32.mrf.mxu0
    %v1233 = vadd.f32 %v1070, %v1232
    %v1234 = vpop.f32.mrf.mxu0
    %1235 = vmatprep.mubr.f32.mxu0 0.0
    %v1236 = vand.u32 %v142, 4294901760
    %1237 = vmatmul.mubr.f32.gmra.mxu0 %v1236
    %v1238 = vpop.f32.mrf.mxu0
    %v1239 = vadd.f32 %v1076, %v1238
    %v1240 = vpop.f32.mrf.mxu0
    %1241 = vmatprep.mubr.f32.mxu0 0.0
    %v1242 = vand.u32 %v145, 4294901760
    %1243 = vmatmul.mubr.f32.gmra.mxu0 %v1242
    %v1244 = vpop.f32.mrf.mxu0
    %v1245 = vadd.f32 %v1082, %v1244
    %v1246 = vpop.f32.mrf.mxu0
    %1247 = vmatprep.mubr.f32.mxu0 0.0
    %v1248 = vand.u32 %v148, 4294901760
    %1249 = vmatmul.mubr.f32.gmra.mxu0 %v1248
    %v1250 = vpop.f32.mrf.mxu0
    %v1251 = vadd.f32 %v1088, %v1250
    %v1252 = vpop.f32.mrf.mxu0
    %1253 = vdwg.mxu0
    %v1254 = vld [vmem:[#allocation7] sm:$0xff]
    %v1255 = vld [vmem:[#allocation7 + $0x8] sm:$0xff]
    %1256 = vmatprep.subr.mxu0 0.0
    %1257 = vmatpush1.msra.mxu0 0.0
    %1258 = vmatprep.subr.mxu0 0.0
    %1259 = vmatpush1.msra.mxu0 0.0
    %1260 = vmatprep.subr.mxu0 0.0
    %1261 = vmatpush1.msra.mxu0 0.0
    %1262 = vmatprep.subr.mxu0 0.0
    %1263 = vmatpush1.msra.mxu0 0.0
    %1264 = vmatprep.subr.mxu0 0.0
    %1265 = vmatpush1.msra.mxu0 0.0
    %1266 = vmatprep.subr.mxu0 0.0
    %1267 = vmatpush1.msra.mxu0 0.0
    %1268 = vmatprep.subr.mxu0 0.0
    %1269 = vmatpush1.msra.mxu0 0.0
    %1270 = vmatprep.subr.mxu0 0.0
    %1271 = vmatpush1.msra.mxu0 0.0
    %1272 = vmatprep.subr.mxu0 0.0
    %1273 = vmatpush1.msra.mxu0 0.0
    %1274 = vmatprep.subr.mxu0 0.0
    %1275 = vmatpush1.msra.mxu0 0.0
    %1276 = vmatprep.subr.mxu0 0.0
    %1277 = vmatpush1.msra.mxu0 0.0
    %1278 = vmatprep.subr.mxu0 0.0
    %1279 = vmatpush1.msra.mxu0 0.0
    %1280 = vmatprep.subr.mxu0 0.0
    %1281 = vmatpush1.msra.mxu0 0.0
    %1282 = vmatprep.subr.mxu0 0.0
    %1283 = vmatpush1.msra.mxu0 0.0
    %1284 = vmatprep.subr.mxu0 0.0
    %v1285 = vand.u32 %v1255, 4294901760
    %1286 = vmatpush1.msra.mxu0 %v1285
    %1287 = vmatprep.subr.mxu0 0.0
    %v1288 = vand.u32 %v1254, 4294901760
    %1289 = vmatpush1.msra.mxu0 %v1288
    %1290 = vmatprep.subr.mxu0 0.0
    %1291 = vmatpush2.msra.mxu0 0.0
    %1292 = vmatprep.subr.mxu0 0.0
    %1293 = vmatpush2.msra.mxu0 0.0
    %1294 = vmatprep.subr.mxu0 0.0
    %1295 = vmatpush2.msra.mxu0 0.0
    %1296 = vmatprep.subr.mxu0 0.0
    %1297 = vmatpush2.msra.mxu0 0.0
    %1298 = vmatprep.subr.mxu0 0.0
    %1299 = vmatpush2.msra.mxu0 0.0
    %1300 = vmatprep.subr.mxu0 0.0
    %1301 = vmatpush2.msra.mxu0 0.0
    %1302 = vmatprep.subr.mxu0 0.0
    %1303 = vmatpush2.msra.mxu0 0.0
    %1304 = vmatprep.subr.mxu0 0.0
    %1305 = vmatpush2.msra.mxu0 0.0
    %1306 = vmatprep.subr.mxu0 0.0
    %1307 = vmatpush2.msra.mxu0 0.0
    %1308 = vmatprep.subr.mxu0 0.0
    %1309 = vmatpush2.msra.mxu0 0.0
    %1310 = vmatprep.subr.mxu0 0.0
    %1311 = vmatpush2.msra.mxu0 0.0
    %1312 = vmatprep.subr.mxu0 0.0
    %1313 = vmatpush2.msra.mxu0 0.0
    %1314 = vmatprep.subr.mxu0 0.0
    %1315 = vmatpush2.msra.mxu0 0.0
    %1316 = vmatprep.subr.mxu0 0.0
    %1317 = vmatpush2.msra.mxu0 0.0
    %1318 = vmatprep.subr.mxu0 0.0
    %1319 = vmatpush2.msra.mxu0 0.0
    %1320 = vmatprep.subr.mxu0 0.0
    %1321 = vmatpush2.msra.mxu0 0.0
    %1322 = vmatprep.mubr.f32.mxu0 0.0
    %v1323 = vand.u32 %v103, 4294901760
    %v1324 = vsub.f32 %v103, %v1323
    %v1325 = vand.u32 %v1324, 4294901760
    %v1326 = vsub.f32 %v1324, %v1325
    %v1327 = vand.u32 %v1326, 4294901760
    %1328 = vmatmul.mubr.f32.gmra.mxu0 %v1327
    %v1329 = vpop.f32.mrf.mxu0
    %v1330 = vadd.f32 0.0, %v1329
    %v1331 = vpop.f32.mrf.mxu0
    %1332 = vmatprep.mubr.f32.mxu0 0.0
    %v1333 = vand.u32 %v106, 4294901760
    %v1334 = vsub.f32 %v106, %v1333
    %v1335 = vand.u32 %v1334, 4294901760
    %v1336 = vsub.f32 %v1334, %v1335
    %v1337 = vand.u32 %v1336, 4294901760
    %1338 = vmatmul.mubr.f32.gmra.mxu0 %v1337
    %v1339 = vpop.f32.mrf.mxu0
    %v1340 = vadd.f32 0.0, %v1339
    %v1341 = vpop.f32.mrf.mxu0
    %1342 = vmatprep.mubr.f32.mxu0 0.0
    %v1343 = vand.u32 %v109, 4294901760
    %v1344 = vsub.f32 %v109, %v1343
    %v1345 = vand.u32 %v1344, 4294901760
    %v1346 = vsub.f32 %v1344, %v1345
    %v1347 = vand.u32 %v1346, 4294901760
    %1348 = vmatmul.mubr.f32.gmra.mxu0 %v1347
    %v1349 = vpop.f32.mrf.mxu0
    %v1350 = vadd.f32 0.0, %v1349
    %v1351 = vpop.f32.mrf.mxu0
    %1352 = vmatprep.mubr.f32.mxu0 0.0
    %v1353 = vand.u32 %v112, 4294901760
    %v1354 = vsub.f32 %v112, %v1353
    %v1355 = vand.u32 %v1354, 4294901760
    %v1356 = vsub.f32 %v1354, %v1355
    %v1357 = vand.u32 %v1356, 4294901760
    %1358 = vmatmul.mubr.f32.gmra.mxu0 %v1357
    %v1359 = vpop.f32.mrf.mxu0
    %v1360 = vadd.f32 0.0, %v1359
    %v1361 = vpop.f32.mrf.mxu0
    %1362 = vmatprep.mubr.f32.mxu0 0.0
    %v1363 = vand.u32 %v115, 4294901760
    %v1364 = vsub.f32 %v115, %v1363
    %v1365 = vand.u32 %v1364, 4294901760
    %v1366 = vsub.f32 %v1364, %v1365
    %v1367 = vand.u32 %v1366, 4294901760
    %1368 = vmatmul.mubr.f32.gmra.mxu0 %v1367
    %v1369 = vpop.f32.mrf.mxu0
    %v1370 = vadd.f32 0.0, %v1369
    %v1371 = vpop.f32.mrf.mxu0
    %1372 = vmatprep.mubr.f32.mxu0 0.0
    %v1373 = vand.u32 %v118, 4294901760
    %v1374 = vsub.f32 %v118, %v1373
    %v1375 = vand.u32 %v1374, 4294901760
    %v1376 = vsub.f32 %v1374, %v1375
    %v1377 = vand.u32 %v1376, 4294901760
    %1378 = vmatmul.mubr.f32.gmra.mxu0 %v1377
    %v1379 = vpop.f32.mrf.mxu0
    %v1380 = vadd.f32 0.0, %v1379
    %v1381 = vpop.f32.mrf.mxu0
    %1382 = vmatprep.mubr.f32.mxu0 0.0
    %v1383 = vand.u32 %v121, 4294901760
    %v1384 = vsub.f32 %v121, %v1383
    %v1385 = vand.u32 %v1384, 4294901760
    %v1386 = vsub.f32 %v1384, %v1385
    %v1387 = vand.u32 %v1386, 4294901760
    %1388 = vmatmul.mubr.f32.gmra.mxu0 %v1387
    %v1389 = vpop.f32.mrf.mxu0
    %v1390 = vadd.f32 0.0, %v1389
    %v1391 = vpop.f32.mrf.mxu0
    %1392 = vmatprep.mubr.f32.mxu0 0.0
    %v1393 = vand.u32 %v124, 4294901760
    %v1394 = vsub.f32 %v124, %v1393
    %v1395 = vand.u32 %v1394, 4294901760
    %v1396 = vsub.f32 %v1394, %v1395
    %v1397 = vand.u32 %v1396, 4294901760
    %1398 = vmatmul.mubr.f32.gmra.mxu0 %v1397
    %v1399 = vpop.f32.mrf.mxu0
    %v1400 = vadd.f32 0.0, %v1399
    %v1401 = vpop.f32.mrf.mxu0
    %1402 = vmatprep.mubr.f32.mxu0 0.0
    %v1403 = vand.u32 %v127, 4294901760
    %v1404 = vsub.f32 %v127, %v1403
    %v1405 = vand.u32 %v1404, 4294901760
    %v1406 = vsub.f32 %v1404, %v1405
    %v1407 = vand.u32 %v1406, 4294901760
    %1408 = vmatmul.mubr.f32.gmra.mxu0 %v1407
    %v1409 = vpop.f32.mrf.mxu0
    %v1410 = vadd.f32 0.0, %v1409
    %v1411 = vpop.f32.mrf.mxu0
    %1412 = vmatprep.mubr.f32.mxu0 0.0
    %v1413 = vand.u32 %v130, 4294901760
    %v1414 = vsub.f32 %v130, %v1413
    %v1415 = vand.u32 %v1414, 4294901760
    %v1416 = vsub.f32 %v1414, %v1415
    %v1417 = vand.u32 %v1416, 4294901760
    %1418 = vmatmul.mubr.f32.gmra.mxu0 %v1417
    %v1419 = vpop.f32.mrf.mxu0
    %v1420 = vadd.f32 0.0, %v1419
    %v1421 = vpop.f32.mrf.mxu0
    %1422 = vmatprep.mubr.f32.mxu0 0.0
    %v1423 = vand.u32 %v133, 4294901760
    %v1424 = vsub.f32 %v133, %v1423
    %v1425 = vand.u32 %v1424, 4294901760
    %v1426 = vsub.f32 %v1424, %v1425
    %v1427 = vand.u32 %v1426, 4294901760
    %1428 = vmatmul.mubr.f32.gmra.mxu0 %v1427
    %v1429 = vpop.f32.mrf.mxu0
    %v1430 = vadd.f32 0.0, %v1429
    %v1431 = vpop.f32.mrf.mxu0
    %1432 = vmatprep.mubr.f32.mxu0 0.0
    %v1433 = vand.u32 %v136, 4294901760
    %v1434 = vsub.f32 %v136, %v1433
    %v1435 = vand.u32 %v1434, 4294901760
    %v1436 = vsub.f32 %v1434, %v1435
    %v1437 = vand.u32 %v1436, 4294901760
    %1438 = vmatmul.mubr.f32.gmra.mxu0 %v1437
    %v1439 = vpop.f32.mrf.mxu0
    %v1440 = vadd.f32 0.0, %v1439
    %v1441 = vpop.f32.mrf.mxu0
    %1442 = vmatprep.mubr.f32.mxu0 0.0
    %v1443 = vand.u32 %v139, 4294901760
    %v1444 = vsub.f32 %v139, %v1443
    %v1445 = vand.u32 %v1444, 4294901760
    %v1446 = vsub.f32 %v1444, %v1445
    %v1447 = vand.u32 %v1446, 4294901760
    %1448 = vmatmul.mubr.f32.gmra.mxu0 %v1447
    %v1449 = vpop.f32.mrf.mxu0
    %v1450 = vadd.f32 0.0, %v1449
    %v1451 = vpop.f32.mrf.mxu0
    %1452 = vmatprep.mubr.f32.mxu0 0.0
    %v1453 = vand.u32 %v142, 4294901760
    %v1454 = vsub.f32 %v142, %v1453
    %v1455 = vand.u32 %v1454, 4294901760
    %v1456 = vsub.f32 %v1454, %v1455
    %v1457 = vand.u32 %v1456, 4294901760
    %1458 = vmatmul.mubr.f32.gmra.mxu0 %v1457
    %v1459 = vpop.f32.mrf.mxu0
    %v1460 = vadd.f32 0.0, %v1459
    %v1461 = vpop.f32.mrf.mxu0
    %1462 = vmatprep.mubr.f32.mxu0 0.0
    %v1463 = vand.u32 %v145, 4294901760
    %v1464 = vsub.f32 %v145, %v1463
    %v1465 = vand.u32 %v1464, 4294901760
    %v1466 = vsub.f32 %v1464, %v1465
    %v1467 = vand.u32 %v1466, 4294901760
    %1468 = vmatmul.mubr.f32.gmra.mxu0 %v1467
    %v1469 = vpop.f32.mrf.mxu0
    %v1470 = vadd.f32 0.0, %v1469
    %v1471 = vpop.f32.mrf.mxu0
    %1472 = vmatprep.mubr.f32.mxu0 0.0
    %v1473 = vand.u32 %v148, 4294901760
    %v1474 = vsub.f32 %v148, %v1473
    %v1475 = vand.u32 %v1474, 4294901760
    %v1476 = vsub.f32 %v1474, %v1475
    %v1477 = vand.u32 %v1476, 4294901760
    %1478 = vmatmul.mubr.f32.gmra.mxu0 %v1477
    %v1479 = vpop.f32.mrf.mxu0
    %v1480 = vadd.f32 0.0, %v1479
    %v1481 = vpop.f32.mrf.mxu0
    %1482 = vdwg.mxu0
    %1483 = vmatprep.subr.mxu0 0.0
    %1484 = vmatpush1.msra.mxu0 0.0
    %1485 = vmatprep.subr.mxu0 0.0
    %1486 = vmatpush1.msra.mxu0 0.0
    %1487 = vmatprep.subr.mxu0 0.0
    %1488 = vmatpush1.msra.mxu0 0.0
    %1489 = vmatprep.subr.mxu0 0.0
    %1490 = vmatpush1.msra.mxu0 0.0
    %1491 = vmatprep.subr.mxu0 0.0
    %1492 = vmatpush1.msra.mxu0 0.0
    %1493 = vmatprep.subr.mxu0 0.0
    %1494 = vmatpush1.msra.mxu0 0.0
    %1495 = vmatprep.subr.mxu0 0.0
    %1496 = vmatpush1.msra.mxu0 0.0
    %1497 = vmatprep.subr.mxu0 0.0
    %1498 = vmatpush1.msra.mxu0 0.0
    %1499 = vmatprep.subr.mxu0 0.0
    %1500 = vmatpush1.msra.mxu0 0.0
    %1501 = vmatprep.subr.mxu0 0.0
    %1502 = vmatpush1.msra.mxu0 0.0
    %1503 = vmatprep.subr.mxu0 0.0
    %1504 = vmatpush1.msra.mxu0 0.0
    %1505 = vmatprep.subr.mxu0 0.0
    %1506 = vmatpush1.msra.mxu0 0.0
    %1507 = vmatprep.subr.mxu0 0.0
    %1508 = vmatpush1.msra.mxu0 0.0
    %1509 = vmatprep.subr.mxu0 0.0
    %1510 = vmatpush1.msra.mxu0 0.0
    %1511 = vmatprep.subr.mxu0 0.0
    %v1512 = vand.u32 %v1255, 4294901760
    %v1513 = vsub.f32 %v1255, %v1512
    %v1514 = vand.u32 %v1513, 4294901760
    %v1515 = vsub.f32 %v1513, %v1514
    %v1516 = vand.u32 %v1515, 4294901760
    %1517 = vmatpush1.msra.mxu0 %v1516
    %1518 = vmatprep.subr.mxu0 0.0
    %v1519 = vand.u32 %v1254, 4294901760
    %v1520 = vsub.f32 %v1254, %v1519
    %v1521 = vand.u32 %v1520, 4294901760
    %v1522 = vsub.f32 %v1520, %v1521
    %v1523 = vand.u32 %v1522, 4294901760
    %1524 = vmatpush1.msra.mxu0 %v1523
    %1525 = vmatprep.subr.mxu0 0.0
    %1526 = vmatpush2.msra.mxu0 0.0
    %1527 = vmatprep.subr.mxu0 0.0
    %1528 = vmatpush2.msra.mxu0 0.0
    %1529 = vmatprep.subr.mxu0 0.0
    %1530 = vmatpush2.msra.mxu0 0.0
    %1531 = vmatprep.subr.mxu0 0.0
    %1532 = vmatpush2.msra.mxu0 0.0
    %1533 = vmatprep.subr.mxu0 0.0
    %1534 = vmatpush2.msra.mxu0 0.0
    %1535 = vmatprep.subr.mxu0 0.0
    %1536 = vmatpush2.msra.mxu0 0.0
    %1537 = vmatprep.subr.mxu0 0.0
    %1538 = vmatpush2.msra.mxu0 0.0
    %1539 = vmatprep.subr.mxu0 0.0
    %1540 = vmatpush2.msra.mxu0 0.0
    %1541 = vmatprep.subr.mxu0 0.0
    %1542 = vmatpush2.msra.mxu0 0.0
    %1543 = vmatprep.subr.mxu0 0.0
    %1544 = vmatpush2.msra.mxu0 0.0
    %1545 = vmatprep.subr.mxu0 0.0
    %1546 = vmatpush2.msra.mxu0 0.0
    %1547 = vmatprep.subr.mxu0 0.0
    %1548 = vmatpush2.msra.mxu0 0.0
    %1549 = vmatprep.subr.mxu0 0.0
    %1550 = vmatpush2.msra.mxu0 0.0
    %1551 = vmatprep.subr.mxu0 0.0
    %1552 = vmatpush2.msra.mxu0 0.0
    %1553 = vmatprep.subr.mxu0 0.0
    %1554 = vmatpush2.msra.mxu0 0.0
    %1555 = vmatprep.subr.mxu0 0.0
    %1556 = vmatpush2.msra.mxu0 0.0
    %1557 = vmatprep.mubr.f32.mxu0 0.0
    %v1558 = vand.u32 %v103, 4294901760
    %1559 = vmatmul.mubr.f32.gmra.mxu0 %v1558
    %v1560 = vpop.f32.mrf.mxu0
    %v1561 = vadd.f32 %v1330, %v1560
    %v1562 = vpop.f32.mrf.mxu0
    %1563 = vmatprep.mubr.f32.mxu0 0.0
    %v1564 = vand.u32 %v106, 4294901760
    %1565 = vmatmul.mubr.f32.gmra.mxu0 %v1564
    %v1566 = vpop.f32.mrf.mxu0
    %v1567 = vadd.f32 %v1340, %v1566
    %v1568 = vpop.f32.mrf.mxu0
    %1569 = vmatprep.mubr.f32.mxu0 0.0
    %v1570 = vand.u32 %v109, 4294901760
    %1571 = vmatmul.mubr.f32.gmra.mxu0 %v1570
    %v1572 = vpop.f32.mrf.mxu0
    %v1573 = vadd.f32 %v1350, %v1572
    %v1574 = vpop.f32.mrf.mxu0
    %1575 = vmatprep.mubr.f32.mxu0 0.0
    %v1576 = vand.u32 %v112, 4294901760
    %1577 = vmatmul.mubr.f32.gmra.mxu0 %v1576
    %v1578 = vpop.f32.mrf.mxu0
    %v1579 = vadd.f32 %v1360, %v1578
    %v1580 = vpop.f32.mrf.mxu0
    %1581 = vmatprep.mubr.f32.mxu0 0.0
    %v1582 = vand.u32 %v115, 4294901760
    %1583 = vmatmul.mubr.f32.gmra.mxu0 %v1582
    %v1584 = vpop.f32.mrf.mxu0
    %v1585 = vadd.f32 %v1370, %v1584
    %v1586 = vpop.f32.mrf.mxu0
    %1587 = vmatprep.mubr.f32.mxu0 0.0
    %v1588 = vand.u32 %v118, 4294901760
    %1589 = vmatmul.mubr.f32.gmra.mxu0 %v1588
    %v1590 = vpop.f32.mrf.mxu0
    %v1591 = vadd.f32 %v1380, %v1590
    %v1592 = vpop.f32.mrf.mxu0
    %1593 = vmatprep.mubr.f32.mxu0 0.0
    %v1594 = vand.u32 %v121, 4294901760
    %1595 = vmatmul.mubr.f32.gmra.mxu0 %v1594
    %v1596 = vpop.f32.mrf.mxu0
    %v1597 = vadd.f32 %v1390, %v1596
    %v1598 = vpop.f32.mrf.mxu0
    %1599 = vmatprep.mubr.f32.mxu0 0.0
    %v1600 = vand.u32 %v124, 4294901760
    %1601 = vmatmul.mubr.f32.gmra.mxu0 %v1600
    %v1602 = vpop.f32.mrf.mxu0
    %v1603 = vadd.f32 %v1400, %v1602
    %v1604 = vpop.f32.mrf.mxu0
    %1605 = vmatprep.mubr.f32.mxu0 0.0
    %v1606 = vand.u32 %v127, 4294901760
    %1607 = vmatmul.mubr.f32.gmra.mxu0 %v1606
    %v1608 = vpop.f32.mrf.mxu0
    %v1609 = vadd.f32 %v1410, %v1608
    %v1610 = vpop.f32.mrf.mxu0
    %1611 = vmatprep.mubr.f32.mxu0 0.0
    %v1612 = vand.u32 %v130, 4294901760
    %1613 = vmatmul.mubr.f32.gmra.mxu0 %v1612
    %v1614 = vpop.f32.mrf.mxu0
    %v1615 = vadd.f32 %v1420, %v1614
    %v1616 = vpop.f32.mrf.mxu0
    %1617 = vmatprep.mubr.f32.mxu0 0.0
    %v1618 = vand.u32 %v133, 4294901760
    %1619 = vmatmul.mubr.f32.gmra.mxu0 %v1618
    %v1620 = vpop.f32.mrf.mxu0
    %v1621 = vadd.f32 %v1430, %v1620
    %v1622 = vpop.f32.mrf.mxu0
    %1623 = vmatprep.mubr.f32.mxu0 0.0
    %v1624 = vand.u32 %v136, 4294901760
    %1625 = vmatmul.mubr.f32.gmra.mxu0 %v1624
    %v1626 = vpop.f32.mrf.mxu0
    %v1627 = vadd.f32 %v1440, %v1626
    %v1628 = vpop.f32.mrf.mxu0
    %1629 = vmatprep.mubr.f32.mxu0 0.0
    %v1630 = vand.u32 %v139, 4294901760
    %1631 = vmatmul.mubr.f32.gmra.mxu0 %v1630
    %v1632 = vpop.f32.mrf.mxu0
    %v1633 = vadd.f32 %v1450, %v1632
    %v1634 = vpop.f32.mrf.mxu0
    %1635 = vmatprep.mubr.f32.mxu0 0.0
    %v1636 = vand.u32 %v142, 4294901760
    %1637 = vmatmul.mubr.f32.gmra.mxu0 %v1636
    %v1638 = vpop.f32.mrf.mxu0
    %v1639 = vadd.f32 %v1460, %v1638
    %v1640 = vpop.f32.mrf.mxu0
    %1641 = vmatprep.mubr.f32.mxu0 0.0
    %v1642 = vand.u32 %v145, 4294901760
    %1643 = vmatmul.mubr.f32.gmra.mxu0 %v1642
    %v1644 = vpop.f32.mrf.mxu0
    %v1645 = vadd.f32 %v1470, %v1644
    %v1646 = vpop.f32.mrf.mxu0
    %1647 = vmatprep.mubr.f32.mxu0 0.0
    %v1648 = vand.u32 %v148, 4294901760
    %1649 = vmatmul.mubr.f32.gmra.mxu0 %v1648
    %v1650 = vpop.f32.mrf.mxu0
    %v1651 = vadd.f32 %v1480, %v1650
    %v1652 = vpop.f32.mrf.mxu0
    %1653 = vdwg.mxu0
    %1654 = vmatprep.subr.mxu0 0.0
    %1655 = vmatpush1.msra.mxu0 0.0
    %1656 = vmatprep.subr.mxu0 0.0
    %1657 = vmatpush1.msra.mxu0 0.0
    %1658 = vmatprep.subr.mxu0 0.0
    %1659 = vmatpush1.msra.mxu0 0.0
    %1660 = vmatprep.subr.mxu0 0.0
    %1661 = vmatpush1.msra.mxu0 0.0
    %1662 = vmatprep.subr.mxu0 0.0
    %1663 = vmatpush1.msra.mxu0 0.0
    %1664 = vmatprep.subr.mxu0 0.0
    %1665 = vmatpush1.msra.mxu0 0.0
    %1666 = vmatprep.subr.mxu0 0.0
    %1667 = vmatpush1.msra.mxu0 0.0
    %1668 = vmatprep.subr.mxu0 0.0
    %1669 = vmatpush1.msra.mxu0 0.0
    %1670 = vmatprep.subr.mxu0 0.0
    %1671 = vmatpush1.msra.mxu0 0.0
    %1672 = vmatprep.subr.mxu0 0.0
    %1673 = vmatpush1.msra.mxu0 0.0
    %1674 = vmatprep.subr.mxu0 0.0
    %1675 = vmatpush1.msra.mxu0 0.0
    %1676 = vmatprep.subr.mxu0 0.0
    %1677 = vmatpush1.msra.mxu0 0.0
    %1678 = vmatprep.subr.mxu0 0.0
    %1679 = vmatpush1.msra.mxu0 0.0
    %1680 = vmatprep.subr.mxu0 0.0
    %1681 = vmatpush1.msra.mxu0 0.0
    %1682 = vmatprep.subr.mxu0 0.0
    %v1683 = vand.u32 %v1255, 4294901760
    %v1684 = vsub.f32 %v1255, %v1683
    %1685 = vmatpush1.msra.mxu0 %v1684
    %1686 = vmatprep.subr.mxu0 0.0
    %v1687 = vand.u32 %v1254, 4294901760
    %v1688 = vsub.f32 %v1254, %v1687
    %1689 = vmatpush1.msra.mxu0 %v1688
    %1690 = vmatprep.subr.mxu0 0.0
    %1691 = vmatpush2.msra.mxu0 0.0
    %1692 = vmatprep.subr.mxu0 0.0
    %1693 = vmatpush2.msra.mxu0 0.0
    %1694 = vmatprep.subr.mxu0 0.0
    %1695 = vmatpush2.msra.mxu0 0.0
    %1696 = vmatprep.subr.mxu0 0.0
    %1697 = vmatpush2.msra.mxu0 0.0
    %1698 = vmatprep.subr.mxu0 0.0
    %1699 = vmatpush2.msra.mxu0 0.0
    %1700 = vmatprep.subr.mxu0 0.0
    %1701 = vmatpush2.msra.mxu0 0.0
    %1702 = vmatprep.subr.mxu0 0.0
    %1703 = vmatpush2.msra.mxu0 0.0
    %1704 = vmatprep.subr.mxu0 0.0
    %1705 = vmatpush2.msra.mxu0 0.0
    %1706 = vmatprep.subr.mxu0 0.0
    %1707 = vmatpush2.msra.mxu0 0.0
    %1708 = vmatprep.subr.mxu0 0.0
    %1709 = vmatpush2.msra.mxu0 0.0
    %1710 = vmatprep.subr.mxu0 0.0
    %1711 = vmatpush2.msra.mxu0 0.0
    %1712 = vmatprep.subr.mxu0 0.0
    %1713 = vmatpush2.msra.mxu0 0.0
    %1714 = vmatprep.subr.mxu0 0.0
    %1715 = vmatpush2.msra.mxu0 0.0
    %1716 = vmatprep.subr.mxu0 0.0
    %1717 = vmatpush2.msra.mxu0 0.0
    %1718 = vmatprep.subr.mxu0 0.0
    %1719 = vmatpush2.msra.mxu0 0.0
    %1720 = vmatprep.subr.mxu0 0.0
    %1721 = vmatpush2.msra.mxu0 0.0
    %1722 = vmatprep.mubr.f32.mxu0 0.0
    %v1723 = vand.u32 %v103, 4294901760
    %v1724 = vsub.f32 %v103, %v1723
    %1725 = vmatmul.mubr.f32.gmra.mxu0 %v1724
    %v1726 = vpop.f32.mrf.mxu0
    %v1727 = vadd.f32 %v1561, %v1726
    %v1728 = vpop.f32.mrf.mxu0
    %1729 = vmatprep.mubr.f32.mxu0 0.0
    %v1730 = vand.u32 %v106, 4294901760
    %v1731 = vsub.f32 %v106, %v1730
    %1732 = vmatmul.mubr.f32.gmra.mxu0 %v1731
    %v1733 = vpop.f32.mrf.mxu0
    %v1734 = vadd.f32 %v1567, %v1733
    %v1735 = vpop.f32.mrf.mxu0
    %1736 = vmatprep.mubr.f32.mxu0 0.0
    %v1737 = vand.u32 %v109, 4294901760
    %v1738 = vsub.f32 %v109, %v1737
    %1739 = vmatmul.mubr.f32.gmra.mxu0 %v1738
    %v1740 = vpop.f32.mrf.mxu0
    %v1741 = vadd.f32 %v1573, %v1740
    %v1742 = vpop.f32.mrf.mxu0
    %1743 = vmatprep.mubr.f32.mxu0 0.0
    %v1744 = vand.u32 %v112, 4294901760
    %v1745 = vsub.f32 %v112, %v1744
    %1746 = vmatmul.mubr.f32.gmra.mxu0 %v1745
    %v1747 = vpop.f32.mrf.mxu0
    %v1748 = vadd.f32 %v1579, %v1747
    %v1749 = vpop.f32.mrf.mxu0
    %1750 = vmatprep.mubr.f32.mxu0 0.0
    %v1751 = vand.u32 %v115, 4294901760
    %v1752 = vsub.f32 %v115, %v1751
    %1753 = vmatmul.mubr.f32.gmra.mxu0 %v1752
    %v1754 = vpop.f32.mrf.mxu0
    %v1755 = vadd.f32 %v1585, %v1754
    %v1756 = vpop.f32.mrf.mxu0
    %1757 = vmatprep.mubr.f32.mxu0 0.0
    %v1758 = vand.u32 %v118, 4294901760
    %v1759 = vsub.f32 %v118, %v1758
    %1760 = vmatmul.mubr.f32.gmra.mxu0 %v1759
    %v1761 = vpop.f32.mrf.mxu0
    %v1762 = vadd.f32 %v1591, %v1761
    %v1763 = vpop.f32.mrf.mxu0
    %1764 = vmatprep.mubr.f32.mxu0 0.0
    %v1765 = vand.u32 %v121, 4294901760
    %v1766 = vsub.f32 %v121, %v1765
    %1767 = vmatmul.mubr.f32.gmra.mxu0 %v1766
    %v1768 = vpop.f32.mrf.mxu0
    %v1769 = vadd.f32 %v1597, %v1768
    %v1770 = vpop.f32.mrf.mxu0
    %1771 = vmatprep.mubr.f32.mxu0 0.0
    %v1772 = vand.u32 %v124, 4294901760
    %v1773 = vsub.f32 %v124, %v1772
    %1774 = vmatmul.mubr.f32.gmra.mxu0 %v1773
    %v1775 = vpop.f32.mrf.mxu0
    %v1776 = vadd.f32 %v1603, %v1775
    %v1777 = vpop.f32.mrf.mxu0
    %1778 = vmatprep.mubr.f32.mxu0 0.0
    %v1779 = vand.u32 %v127, 4294901760
    %v1780 = vsub.f32 %v127, %v1779
    %1781 = vmatmul.mubr.f32.gmra.mxu0 %v1780
    %v1782 = vpop.f32.mrf.mxu0
    %v1783 = vadd.f32 %v1609, %v1782
    %v1784 = vpop.f32.mrf.mxu0
    %1785 = vmatprep.mubr.f32.mxu0 0.0
    %v1786 = vand.u32 %v130, 4294901760
    %v1787 = vsub.f32 %v130, %v1786
    %1788 = vmatmul.mubr.f32.gmra.mxu0 %v1787
    %v1789 = vpop.f32.mrf.mxu0
    %v1790 = vadd.f32 %v1615, %v1789
    %v1791 = vpop.f32.mrf.mxu0
    %1792 = vmatprep.mubr.f32.mxu0 0.0
    %v1793 = vand.u32 %v133, 4294901760
    %v1794 = vsub.f32 %v133, %v1793
    %1795 = vmatmul.mubr.f32.gmra.mxu0 %v1794
    %v1796 = vpop.f32.mrf.mxu0
    %v1797 = vadd.f32 %v1621, %v1796
    %v1798 = vpop.f32.mrf.mxu0
    %1799 = vmatprep.mubr.f32.mxu0 0.0
    %v1800 = vand.u32 %v136, 4294901760
    %v1801 = vsub.f32 %v136, %v1800
    %1802 = vmatmul.mubr.f32.gmra.mxu0 %v1801
    %v1803 = vpop.f32.mrf.mxu0
    %v1804 = vadd.f32 %v1627, %v1803
    %v1805 = vpop.f32.mrf.mxu0
    %1806 = vmatprep.mubr.f32.mxu0 0.0
    %v1807 = vand.u32 %v139, 4294901760
    %v1808 = vsub.f32 %v139, %v1807
    %1809 = vmatmul.mubr.f32.gmra.mxu0 %v1808
    %v1810 = vpop.f32.mrf.mxu0
    %v1811 = vadd.f32 %v1633, %v1810
    %v1812 = vpop.f32.mrf.mxu0
    %1813 = vmatprep.mubr.f32.mxu0 0.0
    %v1814 = vand.u32 %v142, 4294901760
    %v1815 = vsub.f32 %v142, %v1814
    %1816 = vmatmul.mubr.f32.gmra.mxu0 %v1815
    %v1817 = vpop.f32.mrf.mxu0
    %v1818 = vadd.f32 %v1639, %v1817
    %v1819 = vpop.f32.mrf.mxu0
    %1820 = vmatprep.mubr.f32.mxu0 0.0
    %v1821 = vand.u32 %v145, 4294901760
    %v1822 = vsub.f32 %v145, %v1821
    %1823 = vmatmul.mubr.f32.gmra.mxu0 %v1822
    %v1824 = vpop.f32.mrf.mxu0
    %v1825 = vadd.f32 %v1645, %v1824
    %v1826 = vpop.f32.mrf.mxu0
    %1827 = vmatprep.mubr.f32.mxu0 0.0
    %v1828 = vand.u32 %v148, 4294901760
    %v1829 = vsub.f32 %v148, %v1828
    %1830 = vmatmul.mubr.f32.gmra.mxu0 %v1829
    %v1831 = vpop.f32.mrf.mxu0
    %v1832 = vadd.f32 %v1651, %v1831
    %v1833 = vpop.f32.mrf.mxu0
    %1834 = vdwg.mxu0
    %1835 = vmatprep.subr.mxu0 0.0
    %1836 = vmatpush1.msra.mxu0 0.0
    %1837 = vmatprep.subr.mxu0 0.0
    %1838 = vmatpush1.msra.mxu0 0.0
    %1839 = vmatprep.subr.mxu0 0.0
    %1840 = vmatpush1.msra.mxu0 0.0
    %1841 = vmatprep.subr.mxu0 0.0
    %1842 = vmatpush1.msra.mxu0 0.0
    %1843 = vmatprep.subr.mxu0 0.0
    %1844 = vmatpush1.msra.mxu0 0.0
    %1845 = vmatprep.subr.mxu0 0.0
    %1846 = vmatpush1.msra.mxu0 0.0
    %1847 = vmatprep.subr.mxu0 0.0
    %1848 = vmatpush1.msra.mxu0 0.0
    %1849 = vmatprep.subr.mxu0 0.0
    %1850 = vmatpush1.msra.mxu0 0.0
    %1851 = vmatprep.subr.mxu0 0.0
    %1852 = vmatpush1.msra.mxu0 0.0
    %1853 = vmatprep.subr.mxu0 0.0
    %1854 = vmatpush1.msra.mxu0 0.0
    %1855 = vmatprep.subr.mxu0 0.0
    %1856 = vmatpush1.msra.mxu0 0.0
    %1857 = vmatprep.subr.mxu0 0.0
    %1858 = vmatpush1.msra.mxu0 0.0
    %1859 = vmatprep.subr.mxu0 0.0
    %1860 = vmatpush1.msra.mxu0 0.0
    %1861 = vmatprep.subr.mxu0 0.0
    %1862 = vmatpush1.msra.mxu0 0.0
    %1863 = vmatprep.subr.mxu0 0.0
    %v1864 = vand.u32 %v1255, 4294901760
    %1865 = vmatpush1.msra.mxu0 %v1864
    %1866 = vmatprep.subr.mxu0 0.0
    %v1867 = vand.u32 %v1254, 4294901760
    %1868 = vmatpush1.msra.mxu0 %v1867
    %1869 = vmatprep.subr.mxu0 0.0
    %1870 = vmatpush2.msra.mxu0 0.0
    %1871 = vmatprep.subr.mxu0 0.0
    %1872 = vmatpush2.msra.mxu0 0.0
    %1873 = vmatprep.subr.mxu0 0.0
    %1874 = vmatpush2.msra.mxu0 0.0
    %1875 = vmatprep.subr.mxu0 0.0
    %1876 = vmatpush2.msra.mxu0 0.0
    %1877 = vmatprep.subr.mxu0 0.0
    %1878 = vmatpush2.msra.mxu0 0.0
    %1879 = vmatprep.subr.mxu0 0.0
    %1880 = vmatpush2.msra.mxu0 0.0
    %1881 = vmatprep.subr.mxu0 0.0
    %1882 = vmatpush2.msra.mxu0 0.0
    %1883 = vmatprep.subr.mxu0 0.0
    %1884 = vmatpush2.msra.mxu0 0.0
    %1885 = vmatprep.subr.mxu0 0.0
    %1886 = vmatpush2.msra.mxu0 0.0
    %1887 = vmatprep.subr.mxu0 0.0
    %1888 = vmatpush2.msra.mxu0 0.0
    %1889 = vmatprep.subr.mxu0 0.0
    %1890 = vmatpush2.msra.mxu0 0.0
    %1891 = vmatprep.subr.mxu0 0.0
    %1892 = vmatpush2.msra.mxu0 0.0
    %1893 = vmatprep.subr.mxu0 0.0
    %1894 = vmatpush2.msra.mxu0 0.0
    %1895 = vmatprep.subr.mxu0 0.0
    %1896 = vmatpush2.msra.mxu0 0.0
    %1897 = vmatprep.subr.mxu0 0.0
    %1898 = vmatpush2.msra.mxu0 0.0
    %1899 = vmatprep.subr.mxu0 0.0
    %1900 = vmatpush2.msra.mxu0 0.0
    %1901 = vmatprep.mubr.f32.mxu0 0.0
    %v1902 = vand.u32 %v103, 4294901760
    %v1903 = vsub.f32 %v103, %v1902
    %v1904 = vand.u32 %v1903, 4294901760
    %1905 = vmatmul.mubr.f32.gmra.mxu0 %v1904
    %v1906 = vpop.f32.mrf.mxu0
    %v1907 = vadd.f32 %v1727, %v1906
    %v1908 = vpop.f32.mrf.mxu0
    %1909 = vmatprep.mubr.f32.mxu0 0.0
    %v1910 = vand.u32 %v106, 4294901760
    %v1911 = vsub.f32 %v106, %v1910
    %v1912 = vand.u32 %v1911, 4294901760
    %1913 = vmatmul.mubr.f32.gmra.mxu0 %v1912
    %v1914 = vpop.f32.mrf.mxu0
    %v1915 = vadd.f32 %v1734, %v1914
    %v1916 = vpop.f32.mrf.mxu0
    %1917 = vmatprep.mubr.f32.mxu0 0.0
    %v1918 = vand.u32 %v109, 4294901760
    %v1919 = vsub.f32 %v109, %v1918
    %v1920 = vand.u32 %v1919, 4294901760
    %1921 = vmatmul.mubr.f32.gmra.mxu0 %v1920
    %v1922 = vpop.f32.mrf.mxu0
    %v1923 = vadd.f32 %v1741, %v1922
    %v1924 = vpop.f32.mrf.mxu0
    %1925 = vmatprep.mubr.f32.mxu0 0.0
    %v1926 = vand.u32 %v112, 4294901760
    %v1927 = vsub.f32 %v112, %v1926
    %v1928 = vand.u32 %v1927, 4294901760
    %1929 = vmatmul.mubr.f32.gmra.mxu0 %v1928
    %v1930 = vpop.f32.mrf.mxu0
    %v1931 = vadd.f32 %v1748, %v1930
    %v1932 = vpop.f32.mrf.mxu0
    %1933 = vmatprep.mubr.f32.mxu0 0.0
    %v1934 = vand.u32 %v115, 4294901760
    %v1935 = vsub.f32 %v115, %v1934
    %v1936 = vand.u32 %v1935, 4294901760
    %1937 = vmatmul.mubr.f32.gmra.mxu0 %v1936
    %v1938 = vpop.f32.mrf.mxu0
    %v1939 = vadd.f32 %v1755, %v1938
    %v1940 = vpop.f32.mrf.mxu0
    %1941 = vmatprep.mubr.f32.mxu0 0.0
    %v1942 = vand.u32 %v118, 4294901760
    %v1943 = vsub.f32 %v118, %v1942
    %v1944 = vand.u32 %v1943, 4294901760
    %1945 = vmatmul.mubr.f32.gmra.mxu0 %v1944
    %v1946 = vpop.f32.mrf.mxu0
    %v1947 = vadd.f32 %v1762, %v1946
    %v1948 = vpop.f32.mrf.mxu0
    %1949 = vmatprep.mubr.f32.mxu0 0.0
    %v1950 = vand.u32 %v121, 4294901760
    %v1951 = vsub.f32 %v121, %v1950
    %v1952 = vand.u32 %v1951, 4294901760
    %1953 = vmatmul.mubr.f32.gmra.mxu0 %v1952
    %v1954 = vpop.f32.mrf.mxu0
    %v1955 = vadd.f32 %v1769, %v1954
    %v1956 = vpop.f32.mrf.mxu0
    %1957 = vmatprep.mubr.f32.mxu0 0.0
    %v1958 = vand.u32 %v124, 4294901760
    %v1959 = vsub.f32 %v124, %v1958
    %v1960 = vand.u32 %v1959, 4294901760
    %1961 = vmatmul.mubr.f32.gmra.mxu0 %v1960
    %v1962 = vpop.f32.mrf.mxu0
    %v1963 = vadd.f32 %v1776, %v1962
    %v1964 = vpop.f32.mrf.mxu0
    %1965 = vmatprep.mubr.f32.mxu0 0.0
    %v1966 = vand.u32 %v127, 4294901760
    %v1967 = vsub.f32 %v127, %v1966
    %v1968 = vand.u32 %v1967, 4294901760
    %1969 = vmatmul.mubr.f32.gmra.mxu0 %v1968
    %v1970 = vpop.f32.mrf.mxu0
    %v1971 = vadd.f32 %v1783, %v1970
    %v1972 = vpop.f32.mrf.mxu0
    %1973 = vmatprep.mubr.f32.mxu0 0.0
    %v1974 = vand.u32 %v130, 4294901760
    %v1975 = vsub.f32 %v130, %v1974
    %v1976 = vand.u32 %v1975, 4294901760
    %1977 = vmatmul.mubr.f32.gmra.mxu0 %v1976
    %v1978 = vpop.f32.mrf.mxu0
    %v1979 = vadd.f32 %v1790, %v1978
    %v1980 = vpop.f32.mrf.mxu0
    %1981 = vmatprep.mubr.f32.mxu0 0.0
    %v1982 = vand.u32 %v133, 4294901760
    %v1983 = vsub.f32 %v133, %v1982
    %v1984 = vand.u32 %v1983, 4294901760
    %1985 = vmatmul.mubr.f32.gmra.mxu0 %v1984
    %v1986 = vpop.f32.mrf.mxu0
    %v1987 = vadd.f32 %v1797, %v1986
    %v1988 = vpop.f32.mrf.mxu0
    %1989 = vmatprep.mubr.f32.mxu0 0.0
    %v1990 = vand.u32 %v136, 4294901760
    %v1991 = vsub.f32 %v136, %v1990
    %v1992 = vand.u32 %v1991, 4294901760
    %1993 = vmatmul.mubr.f32.gmra.mxu0 %v1992
    %v1994 = vpop.f32.mrf.mxu0
    %v1995 = vadd.f32 %v1804, %v1994
    %v1996 = vpop.f32.mrf.mxu0
    %1997 = vmatprep.mubr.f32.mxu0 0.0
    %v1998 = vand.u32 %v139, 4294901760
    %v1999 = vsub.f32 %v139, %v1998
    %v2000 = vand.u32 %v1999, 4294901760
    %2001 = vmatmul.mubr.f32.gmra.mxu0 %v2000
    %v2002 = vpop.f32.mrf.mxu0
    %v2003 = vadd.f32 %v1811, %v2002
    %v2004 = vpop.f32.mrf.mxu0
    %2005 = vmatprep.mubr.f32.mxu0 0.0
    %v2006 = vand.u32 %v142, 4294901760
    %v2007 = vsub.f32 %v142, %v2006
    %v2008 = vand.u32 %v2007, 4294901760
    %2009 = vmatmul.mubr.f32.gmra.mxu0 %v2008
    %v2010 = vpop.f32.mrf.mxu0
    %v2011 = vadd.f32 %v1818, %v2010
    %v2012 = vpop.f32.mrf.mxu0
    %2013 = vmatprep.mubr.f32.mxu0 0.0
    %v2014 = vand.u32 %v145, 4294901760
    %v2015 = vsub.f32 %v145, %v2014
    %v2016 = vand.u32 %v2015, 4294901760
    %2017 = vmatmul.mubr.f32.gmra.mxu0 %v2016
    %v2018 = vpop.f32.mrf.mxu0
    %v2019 = vadd.f32 %v1825, %v2018
    %v2020 = vpop.f32.mrf.mxu0
    %2021 = vmatprep.mubr.f32.mxu0 0.0
    %v2022 = vand.u32 %v148, 4294901760
    %v2023 = vsub.f32 %v148, %v2022
    %v2024 = vand.u32 %v2023, 4294901760
    %2025 = vmatmul.mubr.f32.gmra.mxu0 %v2024
    %v2026 = vpop.f32.mrf.mxu0
    %v2027 = vadd.f32 %v1832, %v2026
    %v2028 = vpop.f32.mrf.mxu0
    %2029 = vdwg.mxu0
    %2030 = vmatprep.subr.mxu0 0.0
    %2031 = vmatpush1.msra.mxu0 0.0
    %2032 = vmatprep.subr.mxu0 0.0
    %2033 = vmatpush1.msra.mxu0 0.0
    %2034 = vmatprep.subr.mxu0 0.0
    %2035 = vmatpush1.msra.mxu0 0.0
    %2036 = vmatprep.subr.mxu0 0.0
    %2037 = vmatpush1.msra.mxu0 0.0
    %2038 = vmatprep.subr.mxu0 0.0
    %2039 = vmatpush1.msra.mxu0 0.0
    %2040 = vmatprep.subr.mxu0 0.0
    %2041 = vmatpush1.msra.mxu0 0.0
    %2042 = vmatprep.subr.mxu0 0.0
    %2043 = vmatpush1.msra.mxu0 0.0
    %2044 = vmatprep.subr.mxu0 0.0
    %2045 = vmatpush1.msra.mxu0 0.0
    %2046 = vmatprep.subr.mxu0 0.0
    %2047 = vmatpush1.msra.mxu0 0.0
    %2048 = vmatprep.subr.mxu0 0.0
    %2049 = vmatpush1.msra.mxu0 0.0
    %2050 = vmatprep.subr.mxu0 0.0
    %2051 = vmatpush1.msra.mxu0 0.0
    %2052 = vmatprep.subr.mxu0 0.0
    %2053 = vmatpush1.msra.mxu0 0.0
    %2054 = vmatprep.subr.mxu0 0.0
    %2055 = vmatpush1.msra.mxu0 0.0
    %2056 = vmatprep.subr.mxu0 0.0
    %2057 = vmatpush1.msra.mxu0 0.0
    %2058 = vmatprep.subr.mxu0 0.0
    %v2059 = vand.u32 %v1255, 4294901760
    %v2060 = vsub.f32 %v1255, %v2059
    %v2061 = vand.u32 %v2060, 4294901760
    %2062 = vmatpush1.msra.mxu0 %v2061
    %2063 = vmatprep.subr.mxu0 0.0
    %v2064 = vand.u32 %v1254, 4294901760
    %v2065 = vsub.f32 %v1254, %v2064
    %v2066 = vand.u32 %v2065, 4294901760
    %2067 = vmatpush1.msra.mxu0 %v2066
    %2068 = vmatprep.subr.mxu0 0.0
    %2069 = vmatpush2.msra.mxu0 0.0
    %2070 = vmatprep.subr.mxu0 0.0
    %2071 = vmatpush2.msra.mxu0 0.0
    %2072 = vmatprep.subr.mxu0 0.0
    %2073 = vmatpush2.msra.mxu0 0.0
    %2074 = vmatprep.subr.mxu0 0.0
    %2075 = vmatpush2.msra.mxu0 0.0
    %2076 = vmatprep.subr.mxu0 0.0
    %2077 = vmatpush2.msra.mxu0 0.0
    %2078 = vmatprep.subr.mxu0 0.0
    %2079 = vmatpush2.msra.mxu0 0.0
    %2080 = vmatprep.subr.mxu0 0.0
    %2081 = vmatpush2.msra.mxu0 0.0
    %2082 = vmatprep.subr.mxu0 0.0
    %2083 = vmatpush2.msra.mxu0 0.0
    %2084 = vmatprep.subr.mxu0 0.0
    %2085 = vmatpush2.msra.mxu0 0.0
    %2086 = vmatprep.subr.mxu0 0.0
    %2087 = vmatpush2.msra.mxu0 0.0
    %2088 = vmatprep.subr.mxu0 0.0
    %2089 = vmatpush2.msra.mxu0 0.0
    %2090 = vmatprep.subr.mxu0 0.0
    %2091 = vmatpush2.msra.mxu0 0.0
    %2092 = vmatprep.subr.mxu0 0.0
    %2093 = vmatpush2.msra.mxu0 0.0
    %2094 = vmatprep.subr.mxu0 0.0
    %2095 = vmatpush2.msra.mxu0 0.0
    %2096 = vmatprep.subr.mxu0 0.0
    %2097 = vmatpush2.msra.mxu0 0.0
    %2098 = vmatprep.subr.mxu0 0.0
    %2099 = vmatpush2.msra.mxu0 0.0
    %2100 = vmatprep.mubr.f32.mxu0 0.0
    %v2101 = vand.u32 %v103, 4294901760
    %2102 = vmatmul.mubr.f32.gmra.mxu0 %v2101
    %v2103 = vpop.f32.mrf.mxu0
    %v2104 = vadd.f32 %v1907, %v2103
    %v2105 = vpop.f32.mrf.mxu0
    %2106 = vmatprep.mubr.f32.mxu0 0.0
    %v2107 = vand.u32 %v106, 4294901760
    %2108 = vmatmul.mubr.f32.gmra.mxu0 %v2107
    %v2109 = vpop.f32.mrf.mxu0
    %v2110 = vadd.f32 %v1915, %v2109
    %v2111 = vpop.f32.mrf.mxu0
    %2112 = vmatprep.mubr.f32.mxu0 0.0
    %v2113 = vand.u32 %v109, 4294901760
    %2114 = vmatmul.mubr.f32.gmra.mxu0 %v2113
    %v2115 = vpop.f32.mrf.mxu0
    %v2116 = vadd.f32 %v1923, %v2115
    %v2117 = vpop.f32.mrf.mxu0
    %2118 = vmatprep.mubr.f32.mxu0 0.0
    %v2119 = vand.u32 %v112, 4294901760
    %2120 = vmatmul.mubr.f32.gmra.mxu0 %v2119
    %v2121 = vpop.f32.mrf.mxu0
    %v2122 = vadd.f32 %v1931, %v2121
    %v2123 = vpop.f32.mrf.mxu0
    %2124 = vmatprep.mubr.f32.mxu0 0.0
    %v2125 = vand.u32 %v115, 4294901760
    %2126 = vmatmul.mubr.f32.gmra.mxu0 %v2125
    %v2127 = vpop.f32.mrf.mxu0
    %v2128 = vadd.f32 %v1939, %v2127
    %v2129 = vpop.f32.mrf.mxu0
    %2130 = vmatprep.mubr.f32.mxu0 0.0
    %v2131 = vand.u32 %v118, 4294901760
    %2132 = vmatmul.mubr.f32.gmra.mxu0 %v2131
    %v2133 = vpop.f32.mrf.mxu0
    %v2134 = vadd.f32 %v1947, %v2133
    %v2135 = vpop.f32.mrf.mxu0
    %2136 = vmatprep.mubr.f32.mxu0 0.0
    %v2137 = vand.u32 %v121, 4294901760
    %2138 = vmatmul.mubr.f32.gmra.mxu0 %v2137
    %v2139 = vpop.f32.mrf.mxu0
    %v2140 = vadd.f32 %v1955, %v2139
    %v2141 = vpop.f32.mrf.mxu0
    %2142 = vmatprep.mubr.f32.mxu0 0.0
    %v2143 = vand.u32 %v124, 4294901760
    %2144 = vmatmul.mubr.f32.gmra.mxu0 %v2143
    %v2145 = vpop.f32.mrf.mxu0
    %v2146 = vadd.f32 %v1963, %v2145
    %v2147 = vpop.f32.mrf.mxu0
    %2148 = vmatprep.mubr.f32.mxu0 0.0
    %v2149 = vand.u32 %v127, 4294901760
    %2150 = vmatmul.mubr.f32.gmra.mxu0 %v2149
    %v2151 = vpop.f32.mrf.mxu0
    %v2152 = vadd.f32 %v1971, %v2151
    %v2153 = vpop.f32.mrf.mxu0
    %2154 = vmatprep.mubr.f32.mxu0 0.0
    %v2155 = vand.u32 %v130, 4294901760
    %2156 = vmatmul.mubr.f32.gmra.mxu0 %v2155
    %v2157 = vpop.f32.mrf.mxu0
    %v2158 = vadd.f32 %v1979, %v2157
    %v2159 = vpop.f32.mrf.mxu0
    %2160 = vmatprep.mubr.f32.mxu0 0.0
    %v2161 = vand.u32 %v133, 4294901760
    %2162 = vmatmul.mubr.f32.gmra.mxu0 %v2161
    %v2163 = vpop.f32.mrf.mxu0
    %v2164 = vadd.f32 %v1987, %v2163
    %v2165 = vpop.f32.mrf.mxu0
    %2166 = vmatprep.mubr.f32.mxu0 0.0
    %v2167 = vand.u32 %v136, 4294901760
    %2168 = vmatmul.mubr.f32.gmra.mxu0 %v2167
    %v2169 = vpop.f32.mrf.mxu0
    %v2170 = vadd.f32 %v1995, %v2169
    %v2171 = vpop.f32.mrf.mxu0
    %2172 = vmatprep.mubr.f32.mxu0 0.0
    %v2173 = vand.u32 %v139, 4294901760
    %2174 = vmatmul.mubr.f32.gmra.mxu0 %v2173
    %v2175 = vpop.f32.mrf.mxu0
    %v2176 = vadd.f32 %v2003, %v2175
    %v2177 = vpop.f32.mrf.mxu0
    %2178 = vmatprep.mubr.f32.mxu0 0.0
    %v2179 = vand.u32 %v142, 4294901760
    %2180 = vmatmul.mubr.f32.gmra.mxu0 %v2179
    %v2181 = vpop.f32.mrf.mxu0
    %v2182 = vadd.f32 %v2011, %v2181
    %v2183 = vpop.f32.mrf.mxu0
    %2184 = vmatprep.mubr.f32.mxu0 0.0
    %v2185 = vand.u32 %v145, 4294901760
    %2186 = vmatmul.mubr.f32.gmra.mxu0 %v2185
    %v2187 = vpop.f32.mrf.mxu0
    %v2188 = vadd.f32 %v2019, %v2187
    %v2189 = vpop.f32.mrf.mxu0
    %2190 = vmatprep.mubr.f32.mxu0 0.0
    %v2191 = vand.u32 %v148, 4294901760
    %2192 = vmatmul.mubr.f32.gmra.mxu0 %v2191
    %v2193 = vpop.f32.mrf.mxu0
    %v2194 = vadd.f32 %v2027, %v2193
    %v2195 = vpop.f32.mrf.mxu0
    %2196 = vdwg.mxu0
    %2197 = vmatprep.subr.mxu0 0.0
    %2198 = vmatpush1.msra.mxu0 0.0
    %2199 = vmatprep.subr.mxu0 0.0
    %2200 = vmatpush1.msra.mxu0 0.0
    %2201 = vmatprep.subr.mxu0 0.0
    %2202 = vmatpush1.msra.mxu0 0.0
    %2203 = vmatprep.subr.mxu0 0.0
    %2204 = vmatpush1.msra.mxu0 0.0
    %2205 = vmatprep.subr.mxu0 0.0
    %2206 = vmatpush1.msra.mxu0 0.0
    %2207 = vmatprep.subr.mxu0 0.0
    %2208 = vmatpush1.msra.mxu0 0.0
    %2209 = vmatprep.subr.mxu0 0.0
    %2210 = vmatpush1.msra.mxu0 0.0
    %2211 = vmatprep.subr.mxu0 0.0
    %2212 = vmatpush1.msra.mxu0 0.0
    %2213 = vmatprep.subr.mxu0 0.0
    %2214 = vmatpush1.msra.mxu0 0.0
    %2215 = vmatprep.subr.mxu0 0.0
    %2216 = vmatpush1.msra.mxu0 0.0
    %2217 = vmatprep.subr.mxu0 0.0
    %2218 = vmatpush1.msra.mxu0 0.0
    %2219 = vmatprep.subr.mxu0 0.0
    %2220 = vmatpush1.msra.mxu0 0.0
    %2221 = vmatprep.subr.mxu0 0.0
    %2222 = vmatpush1.msra.mxu0 0.0
    %2223 = vmatprep.subr.mxu0 0.0
    %2224 = vmatpush1.msra.mxu0 0.0
    %2225 = vmatprep.subr.mxu0 0.0
    %v2226 = vand.u32 %v1255, 4294901760
    %2227 = vmatpush1.msra.mxu0 %v2226
    %2228 = vmatprep.subr.mxu0 0.0
    %v2229 = vand.u32 %v1254, 4294901760
    %2230 = vmatpush1.msra.mxu0 %v2229
    %2231 = vmatprep.subr.mxu0 0.0
    %2232 = vmatpush2.msra.mxu0 0.0
    %2233 = vmatprep.subr.mxu0 0.0
    %2234 = vmatpush2.msra.mxu0 0.0
    %2235 = vmatprep.subr.mxu0 0.0
    %2236 = vmatpush2.msra.mxu0 0.0
    %2237 = vmatprep.subr.mxu0 0.0
    %2238 = vmatpush2.msra.mxu0 0.0
    %2239 = vmatprep.subr.mxu0 0.0
    %2240 = vmatpush2.msra.mxu0 0.0
    %2241 = vmatprep.subr.mxu0 0.0
    %2242 = vmatpush2.msra.mxu0 0.0
    %2243 = vmatprep.subr.mxu0 0.0
    %2244 = vmatpush2.msra.mxu0 0.0
    %2245 = vmatprep.subr.mxu0 0.0
    %2246 = vmatpush2.msra.mxu0 0.0
    %2247 = vmatprep.subr.mxu0 0.0
    %2248 = vmatpush2.msra.mxu0 0.0
    %2249 = vmatprep.subr.mxu0 0.0
    %2250 = vmatpush2.msra.mxu0 0.0
    %2251 = vmatprep.subr.mxu0 0.0
    %2252 = vmatpush2.msra.mxu0 0.0
    %2253 = vmatprep.subr.mxu0 0.0
    %2254 = vmatpush2.msra.mxu0 0.0
    %2255 = vmatprep.subr.mxu0 0.0
    %2256 = vmatpush2.msra.mxu0 0.0
    %2257 = vmatprep.subr.mxu0 0.0
    %2258 = vmatpush2.msra.mxu0 0.0
    %2259 = vmatprep.subr.mxu0 0.0
    %2260 = vmatpush2.msra.mxu0 0.0
    %2261 = vmatprep.subr.mxu0 0.0
    %2262 = vmatpush2.msra.mxu0 0.0
    %2263 = vmatprep.mubr.f32.mxu0 0.0
    %v2264 = vand.u32 %v103, 4294901760
    %2265 = vmatmul.mubr.f32.gmra.mxu0 %v2264
    %v2266 = vpop.f32.mrf.mxu0
    %v2267 = vadd.f32 %v2104, %v2266
    %v2268 = vpop.f32.mrf.mxu0
    %2269 = vmatprep.mubr.f32.mxu0 0.0
    %v2270 = vand.u32 %v106, 4294901760
    %2271 = vmatmul.mubr.f32.gmra.mxu0 %v2270
    %v2272 = vpop.f32.mrf.mxu0
    %v2273 = vadd.f32 %v2110, %v2272
    %v2274 = vpop.f32.mrf.mxu0
    %2275 = vmatprep.mubr.f32.mxu0 0.0
    %v2276 = vand.u32 %v109, 4294901760
    %2277 = vmatmul.mubr.f32.gmra.mxu0 %v2276
    %v2278 = vpop.f32.mrf.mxu0
    %v2279 = vadd.f32 %v2116, %v2278
    %v2280 = vpop.f32.mrf.mxu0
    %2281 = vmatprep.mubr.f32.mxu0 0.0
    %v2282 = vand.u32 %v112, 4294901760
    %2283 = vmatmul.mubr.f32.gmra.mxu0 %v2282
    %v2284 = vpop.f32.mrf.mxu0
    %v2285 = vadd.f32 %v2122, %v2284
    %v2286 = vpop.f32.mrf.mxu0
    %2287 = vmatprep.mubr.f32.mxu0 0.0
    %v2288 = vand.u32 %v115, 4294901760
    %2289 = vmatmul.mubr.f32.gmra.mxu0 %v2288
    %v2290 = vpop.f32.mrf.mxu0
    %v2291 = vadd.f32 %v2128, %v2290
    %v2292 = vpop.f32.mrf.mxu0
    %2293 = vmatprep.mubr.f32.mxu0 0.0
    %v2294 = vand.u32 %v118, 4294901760
    %2295 = vmatmul.mubr.f32.gmra.mxu0 %v2294
    %v2296 = vpop.f32.mrf.mxu0
    %v2297 = vadd.f32 %v2134, %v2296
    %v2298 = vpop.f32.mrf.mxu0
    %2299 = vmatprep.mubr.f32.mxu0 0.0
    %v2300 = vand.u32 %v121, 4294901760
    %2301 = vmatmul.mubr.f32.gmra.mxu0 %v2300
    %v2302 = vpop.f32.mrf.mxu0
    %v2303 = vadd.f32 %v2140, %v2302
    %v2304 = vpop.f32.mrf.mxu0
    %2305 = vmatprep.mubr.f32.mxu0 0.0
    %v2306 = vand.u32 %v124, 4294901760
    %2307 = vmatmul.mubr.f32.gmra.mxu0 %v2306
    %v2308 = vpop.f32.mrf.mxu0
    %v2309 = vadd.f32 %v2146, %v2308
    %v2310 = vpop.f32.mrf.mxu0
    %2311 = vmatprep.mubr.f32.mxu0 0.0
    %v2312 = vand.u32 %v127, 4294901760
    %2313 = vmatmul.mubr.f32.gmra.mxu0 %v2312
    %v2314 = vpop.f32.mrf.mxu0
    %v2315 = vadd.f32 %v2152, %v2314
    %v2316 = vpop.f32.mrf.mxu0
    %2317 = vmatprep.mubr.f32.mxu0 0.0
    %v2318 = vand.u32 %v130, 4294901760
    %2319 = vmatmul.mubr.f32.gmra.mxu0 %v2318
    %v2320 = vpop.f32.mrf.mxu0
    %v2321 = vadd.f32 %v2158, %v2320
    %v2322 = vpop.f32.mrf.mxu0
    %2323 = vmatprep.mubr.f32.mxu0 0.0
    %v2324 = vand.u32 %v133, 4294901760
    %2325 = vmatmul.mubr.f32.gmra.mxu0 %v2324
    %v2326 = vpop.f32.mrf.mxu0
    %v2327 = vadd.f32 %v2164, %v2326
    %v2328 = vpop.f32.mrf.mxu0
    %2329 = vmatprep.mubr.f32.mxu0 0.0
    %v2330 = vand.u32 %v136, 4294901760
    %2331 = vmatmul.mubr.f32.gmra.mxu0 %v2330
    %v2332 = vpop.f32.mrf.mxu0
    %v2333 = vadd.f32 %v2170, %v2332
    %v2334 = vpop.f32.mrf.mxu0
    %2335 = vmatprep.mubr.f32.mxu0 0.0
    %v2336 = vand.u32 %v139, 4294901760
    %2337 = vmatmul.mubr.f32.gmra.mxu0 %v2336
    %v2338 = vpop.f32.mrf.mxu0
    %v2339 = vadd.f32 %v2176, %v2338
    %v2340 = vpop.f32.mrf.mxu0
    %2341 = vmatprep.mubr.f32.mxu0 0.0
    %v2342 = vand.u32 %v142, 4294901760
    %2343 = vmatmul.mubr.f32.gmra.mxu0 %v2342
    %v2344 = vpop.f32.mrf.mxu0
    %v2345 = vadd.f32 %v2182, %v2344
    %v2346 = vpop.f32.mrf.mxu0
    %2347 = vmatprep.mubr.f32.mxu0 0.0
    %v2348 = vand.u32 %v145, 4294901760
    %2349 = vmatmul.mubr.f32.gmra.mxu0 %v2348
    %v2350 = vpop.f32.mrf.mxu0
    %v2351 = vadd.f32 %v2188, %v2350
    %v2352 = vpop.f32.mrf.mxu0
    %2353 = vmatprep.mubr.f32.mxu0 0.0
    %v2354 = vand.u32 %v148, 4294901760
    %2355 = vmatmul.mubr.f32.gmra.mxu0 %v2354
    %v2356 = vpop.f32.mrf.mxu0
    %v2357 = vadd.f32 %v2194, %v2356
    %v2358 = vpop.f32.mrf.mxu0
    %2359 = vdwg.mxu0
    %v2360 = vld [vmem:[#allocation8] sm:$0xff]
    %v2361 = vld [vmem:[#allocation8 + $0x8] sm:$0xff]
    %v2362 = vld [vmem:[#allocation8 + $0x10] sm:$0xff]
    %v2363 = vld [vmem:[#allocation8 + $0x18] sm:$0xff]
    %v2364 = vadd.f32 %v1161, %v2351
    %v2365 = vadd.f32 %v1167, %v2357
    %v2366 = vadd.f32 %v1173, %v2339
    %v2367 = vadd.f32 %v1179, %v2345
    %v2368 = vadd.f32 %v1185, %v2327
    %v2369 = vadd.f32 %v1191, %v2333
    %v2370 = vadd.f32 %v1197, %v2315
    %v2371 = vadd.f32 %v1203, %v2321
    %v2372 = vadd.f32 %v1209, %v2303
    %v2373 = vadd.f32 %v1215, %v2309
    %v2374 = vadd.f32 %v1221, %v2291
    %v2375 = vadd.f32 %v1227, %v2297
    %v2376 = vadd.f32 %v1233, %v2279
    %v2377 = vadd.f32 %v1239, %v2285
    %v2378 = vadd.f32 %v1245, %v2267
    %v2379 = vadd.f32 %v1251, %v2273
    %vm2380 = vcmask 261120
    %v2382 = vsel %vm2380, 0.0, 0
    %2384 = vmatprep.subr.mxu0 0.0
    %2385 = vmatpush1.msra.mxu0 0.0
    %2386 = vmatprep.subr.mxu0 0.0
    %2387 = vmatpush1.msra.mxu0 0.0
    %2388 = vmatprep.subr.mxu0 0.0
    %2389 = vmatpush1.msra.mxu0 0.0
    %2390 = vmatprep.subr.mxu0 0.0
    %2391 = vmatpush1.msra.mxu0 0.0
    %2392 = vmatprep.subr.mxu0 0.0
    %2393 = vmatpush1.msra.mxu0 0.0
    %2394 = vmatprep.subr.mxu0 0.0
    %2395 = vmatpush1.msra.mxu0 0.0
    %2396 = vmatprep.subr.mxu0 0.0
    %2397 = vmatpush1.msra.mxu0 0.0
    %2398 = vmatprep.subr.mxu0 0.0
    %2399 = vmatpush1.msra.mxu0 0.0
    %2400 = vmatprep.subr.mxu0 0.0
    %2401 = vmatpush1.msra.mxu0 0.0
    %2402 = vmatprep.subr.mxu0 0.0
    %2403 = vmatpush1.msra.mxu0 0.0
    %2404 = vmatprep.subr.mxu0 0.0
    %2405 = vmatpush1.msra.mxu0 0.0
    %2406 = vmatprep.subr.mxu0 0.0
    %2407 = vmatpush1.msra.mxu0 0.0
    %2408 = vmatprep.subr.mxu0 0.0
    %v2409 = vand.u32 %v2363, 4294901760
    %2410 = vmatpush1.msra.mxu0 %v2409
    %2411 = vmatprep.subr.mxu0 0.0
    %v2412 = vand.u32 %v2362, 4294901760
    %2413 = vmatpush1.msra.mxu0 %v2412
    %2414 = vmatprep.subr.mxu0 0.0
    %v2415 = vand.u32 %v2361, 4294901760
    %2416 = vmatpush1.msra.mxu0 %v2415
    %2417 = vmatprep.subr.mxu0 0.0
    %v2418 = vand.u32 %v2360, 4294901760
    %2419 = vmatpush1.msra.mxu0 %v2418
    %2420 = vmatprep.subr.mxu0 0.0
    %2421 = vmatpush2.msra.mxu0 0.0
    %2422 = vmatprep.subr.mxu0 0.0
    %2423 = vmatpush2.msra.mxu0 0.0
    %2424 = vmatprep.subr.mxu0 0.0
    %2425 = vmatpush2.msra.mxu0 0.0
    %2426 = vmatprep.subr.mxu0 0.0
    %2427 = vmatpush2.msra.mxu0 0.0
    %2428 = vmatprep.subr.mxu0 0.0
    %2429 = vmatpush2.msra.mxu0 0.0
    %2430 = vmatprep.subr.mxu0 0.0
    %2431 = vmatpush2.msra.mxu0 0.0
    %2432 = vmatprep.subr.mxu0 0.0
    %2433 = vmatpush2.msra.mxu0 0.0
    %2434 = vmatprep.subr.mxu0 0.0
    %2435 = vmatpush2.msra.mxu0 0.0
    %2436 = vmatprep.subr.mxu0 0.0
    %2437 = vmatpush2.msra.mxu0 0.0
    %2438 = vmatprep.subr.mxu0 0.0
    %2439 = vmatpush2.msra.mxu0 0.0
    %2440 = vmatprep.subr.mxu0 0.0
    %2441 = vmatpush2.msra.mxu0 0.0
    %2442 = vmatprep.subr.mxu0 0.0
    %2443 = vmatpush2.msra.mxu0 0.0
    %2444 = vmatprep.subr.mxu0 0.0
    %2445 = vmatpush2.msra.mxu0 0.0
    %2446 = vmatprep.subr.mxu0 0.0
    %2447 = vmatpush2.msra.mxu0 0.0
    %2448 = vmatprep.subr.mxu0 0.0
    %2449 = vmatpush2.msra.mxu0 0.0
    %2450 = vmatprep.subr.mxu0 0.0
    %2451 = vmatpush2.msra.mxu0 0.0
    %2452 = vmatprep.mubr.f32.mxu0 0.0
    %v2453 = vand.u32 %v2382, 4294901760
    %v2454 = vsub.f32 %v2382, %v2453
    %v2455 = vand.u32 %v2454, 4294901760
    %v2456 = vsub.f32 %v2454, %v2455
    %v2457 = vand.u32 %v2456, 4294901760
    %2458 = vmatmul.mubr.f32.gmra.mxu0 %v2457
    %v2459 = vpop.f32.mrf.mxu0
    %v2460 = vadd.f32 0.0, %v2459
    %v2461 = vpop.f32.mrf.mxu0
    %2462 = vmatprep.mubr.f32.mxu0 0.0
    %v2463 = vand.u32 %v2382, 4294901760
    %v2464 = vsub.f32 %v2382, %v2463
    %v2465 = vand.u32 %v2464, 4294901760
    %v2466 = vsub.f32 %v2464, %v2465
    %v2467 = vand.u32 %v2466, 4294901760
    %2468 = vmatmul.mubr.f32.gmra.mxu0 %v2467
    %v2469 = vpop.f32.mrf.mxu0
    %v2470 = vadd.f32 0.0, %v2469
    %v2471 = vpop.f32.mrf.mxu0
    %2472 = vdwg.mxu0
    %2473 = vmatprep.subr.mxu0 0.0
    %2474 = vmatpush1.msra.mxu0 0.0
    %2475 = vmatprep.subr.mxu0 0.0
    %2476 = vmatpush1.msra.mxu0 0.0
    %2477 = vmatprep.subr.mxu0 0.0
    %2478 = vmatpush1.msra.mxu0 0.0
    %2479 = vmatprep.subr.mxu0 0.0
    %2480 = vmatpush1.msra.mxu0 0.0
    %2481 = vmatprep.subr.mxu0 0.0
    %2482 = vmatpush1.msra.mxu0 0.0
    %2483 = vmatprep.subr.mxu0 0.0
    %2484 = vmatpush1.msra.mxu0 0.0
    %2485 = vmatprep.subr.mxu0 0.0
    %2486 = vmatpush1.msra.mxu0 0.0
    %2487 = vmatprep.subr.mxu0 0.0
    %2488 = vmatpush1.msra.mxu0 0.0
    %2489 = vmatprep.subr.mxu0 0.0
    %2490 = vmatpush1.msra.mxu0 0.0
    %2491 = vmatprep.subr.mxu0 0.0
    %2492 = vmatpush1.msra.mxu0 0.0
    %2493 = vmatprep.subr.mxu0 0.0
    %2494 = vmatpush1.msra.mxu0 0.0
    %2495 = vmatprep.subr.mxu0 0.0
    %2496 = vmatpush1.msra.mxu0 0.0
    %2497 = vmatprep.subr.mxu0 0.0
    %v2498 = vand.u32 %v2363, 4294901760
    %v2499 = vsub.f32 %v2363, %v2498
    %v2500 = vand.u32 %v2499, 4294901760
    %v2501 = vsub.f32 %v2499, %v2500
    %v2502 = vand.u32 %v2501, 4294901760
    %2503 = vmatpush1.msra.mxu0 %v2502
    %2504 = vmatprep.subr.mxu0 0.0
    %v2505 = vand.u32 %v2362, 4294901760
    %v2506 = vsub.f32 %v2362, %v2505
    %v2507 = vand.u32 %v2506, 4294901760
    %v2508 = vsub.f32 %v2506, %v2507
    %v2509 = vand.u32 %v2508, 4294901760
    %2510 = vmatpush1.msra.mxu0 %v2509
    %2511 = vmatprep.subr.mxu0 0.0
    %v2512 = vand.u32 %v2361, 4294901760
    %v2513 = vsub.f32 %v2361, %v2512
    %v2514 = vand.u32 %v2513, 4294901760
    %v2515 = vsub.f32 %v2513, %v2514
    %v2516 = vand.u32 %v2515, 4294901760
    %2517 = vmatpush1.msra.mxu0 %v2516
    %2518 = vmatprep.subr.mxu0 0.0
    %v2519 = vand.u32 %v2360, 4294901760
    %v2520 = vsub.f32 %v2360, %v2519
    %v2521 = vand.u32 %v2520, 4294901760
    %v2522 = vsub.f32 %v2520, %v2521
    %v2523 = vand.u32 %v2522, 4294901760
    %2524 = vmatpush1.msra.mxu0 %v2523
    %2525 = vmatprep.subr.mxu0 0.0
    %2526 = vmatpush2.msra.mxu0 0.0
    %2527 = vmatprep.subr.mxu0 0.0
    %2528 = vmatpush2.msra.mxu0 0.0
    %2529 = vmatprep.subr.mxu0 0.0
    %2530 = vmatpush2.msra.mxu0 0.0
    %2531 = vmatprep.subr.mxu0 0.0
    %2532 = vmatpush2.msra.mxu0 0.0
    %2533 = vmatprep.subr.mxu0 0.0
    %2534 = vmatpush2.msra.mxu0 0.0
    %2535 = vmatprep.subr.mxu0 0.0
    %2536 = vmatpush2.msra.mxu0 0.0
    %2537 = vmatprep.subr.mxu0 0.0
    %2538 = vmatpush2.msra.mxu0 0.0
    %2539 = vmatprep.subr.mxu0 0.0
    %2540 = vmatpush2.msra.mxu0 0.0
    %2541 = vmatprep.subr.mxu0 0.0
    %2542 = vmatpush2.msra.mxu0 0.0
    %2543 = vmatprep.subr.mxu0 0.0
    %2544 = vmatpush2.msra.mxu0 0.0
    %2545 = vmatprep.subr.mxu0 0.0
    %2546 = vmatpush2.msra.mxu0 0.0
    %2547 = vmatprep.subr.mxu0 0.0
    %2548 = vmatpush2.msra.mxu0 0.0
    %2549 = vmatprep.subr.mxu0 0.0
    %2550 = vmatpush2.msra.mxu0 0.0
    %2551 = vmatprep.subr.mxu0 0.0
    %2552 = vmatpush2.msra.mxu0 0.0
    %2553 = vmatprep.subr.mxu0 0.0
    %2554 = vmatpush2.msra.mxu0 0.0
    %2555 = vmatprep.subr.mxu0 0.0
    %2556 = vmatpush2.msra.mxu0 0.0
    %2557 = vmatprep.mubr.f32.mxu0 0.0
    %v2558 = vand.u32 %v2382, 4294901760
    %2559 = vmatmul.mubr.f32.gmra.mxu0 %v2558
    %v2560 = vpop.f32.mrf.mxu0
    %v2561 = vadd.f32 %v2460, %v2560
    %v2562 = vpop.f32.mrf.mxu0
    %2563 = vmatprep.mubr.f32.mxu0 0.0
    %v2564 = vand.u32 %v2382, 4294901760
    %2565 = vmatmul.mubr.f32.gmra.mxu0 %v2564
    %v2566 = vpop.f32.mrf.mxu0
    %v2567 = vadd.f32 %v2470, %v2566
    %v2568 = vpop.f32.mrf.mxu0
    %2569 = vdwg.mxu0
    %2570 = vmatprep.subr.mxu0 0.0
    %2571 = vmatpush1.msra.mxu0 0.0
    %2572 = vmatprep.subr.mxu0 0.0
    %2573 = vmatpush1.msra.mxu0 0.0
    %2574 = vmatprep.subr.mxu0 0.0
    %2575 = vmatpush1.msra.mxu0 0.0
    %2576 = vmatprep.subr.mxu0 0.0
    %2577 = vmatpush1.msra.mxu0 0.0
    %2578 = vmatprep.subr.mxu0 0.0
    %2579 = vmatpush1.msra.mxu0 0.0
    %2580 = vmatprep.subr.mxu0 0.0
    %2581 = vmatpush1.msra.mxu0 0.0
    %2582 = vmatprep.subr.mxu0 0.0
    %2583 = vmatpush1.msra.mxu0 0.0
    %2584 = vmatprep.subr.mxu0 0.0
    %2585 = vmatpush1.msra.mxu0 0.0
    %2586 = vmatprep.subr.mxu0 0.0
    %2587 = vmatpush1.msra.mxu0 0.0
    %2588 = vmatprep.subr.mxu0 0.0
    %2589 = vmatpush1.msra.mxu0 0.0
    %2590 = vmatprep.subr.mxu0 0.0
    %2591 = vmatpush1.msra.mxu0 0.0
    %2592 = vmatprep.subr.mxu0 0.0
    %2593 = vmatpush1.msra.mxu0 0.0
    %2594 = vmatprep.subr.mxu0 0.0
    %v2595 = vand.u32 %v2363, 4294901760
    %v2596 = vsub.f32 %v2363, %v2595
    %2597 = vmatpush1.msra.mxu0 %v2596
    %2598 = vmatprep.subr.mxu0 0.0
    %v2599 = vand.u32 %v2362, 4294901760
    %v2600 = vsub.f32 %v2362, %v2599
    %2601 = vmatpush1.msra.mxu0 %v2600
    %2602 = vmatprep.subr.mxu0 0.0
    %v2603 = vand.u32 %v2361, 4294901760
    %v2604 = vsub.f32 %v2361, %v2603
    %2605 = vmatpush1.msra.mxu0 %v2604
    %2606 = vmatprep.subr.mxu0 0.0
    %v2607 = vand.u32 %v2360, 4294901760
    %v2608 = vsub.f32 %v2360, %v2607
    %2609 = vmatpush1.msra.mxu0 %v2608
    %2610 = vmatprep.subr.mxu0 0.0
    %2611 = vmatpush2.msra.mxu0 0.0
    %2612 = vmatprep.subr.mxu0 0.0
    %2613 = vmatpush2.msra.mxu0 0.0
    %2614 = vmatprep.subr.mxu0 0.0
    %2615 = vmatpush2.msra.mxu0 0.0
    %2616 = vmatprep.subr.mxu0 0.0
    %2617 = vmatpush2.msra.mxu0 0.0
    %2618 = vmatprep.subr.mxu0 0.0
    %2619 = vmatpush2.msra.mxu0 0.0
    %2620 = vmatprep.subr.mxu0 0.0
    %2621 = vmatpush2.msra.mxu0 0.0
    %2622 = vmatprep.subr.mxu0 0.0
    %2623 = vmatpush2.msra.mxu0 0.0
    %2624 = vmatprep.subr.mxu0 0.0
    %2625 = vmatpush2.msra.mxu0 0.0
    %2626 = vmatprep.subr.mxu0 0.0
    %2627 = vmatpush2.msra.mxu0 0.0
    %2628 = vmatprep.subr.mxu0 0.0
    %2629 = vmatpush2.msra.mxu0 0.0
    %2630 = vmatprep.subr.mxu0 0.0
    %2631 = vmatpush2.msra.mxu0 0.0
    %2632 = vmatprep.subr.mxu0 0.0
    %2633 = vmatpush2.msra.mxu0 0.0
    %2634 = vmatprep.subr.mxu0 0.0
    %2635 = vmatpush2.msra.mxu0 0.0
    %2636 = vmatprep.subr.mxu0 0.0
    %2637 = vmatpush2.msra.mxu0 0.0
    %2638 = vmatprep.subr.mxu0 0.0
    %2639 = vmatpush2.msra.mxu0 0.0
    %2640 = vmatprep.subr.mxu0 0.0
    %2641 = vmatpush2.msra.mxu0 0.0
    %2642 = vmatprep.mubr.f32.mxu0 0.0
    %v2643 = vand.u32 %v2382, 4294901760
    %v2644 = vsub.f32 %v2382, %v2643
    %2645 = vmatmul.mubr.f32.gmra.mxu0 %v2644
    %v2646 = vpop.f32.mrf.mxu0
    %v2647 = vadd.f32 %v2561, %v2646
    %v2648 = vpop.f32.mrf.mxu0
    %2649 = vmatprep.mubr.f32.mxu0 0.0
    %v2650 = vand.u32 %v2382, 4294901760
    %v2651 = vsub.f32 %v2382, %v2650
    %2652 = vmatmul.mubr.f32.gmra.mxu0 %v2651
    %v2653 = vpop.f32.mrf.mxu0
    %v2654 = vadd.f32 %v2567, %v2653
    %v2655 = vpop.f32.mrf.mxu0
    %2656 = vdwg.mxu0
    %2657 = vmatprep.subr.mxu0 0.0
    %2658 = vmatpush1.msra.mxu0 0.0
    %2659 = vmatprep.subr.mxu0 0.0
    %2660 = vmatpush1.msra.mxu0 0.0
    %2661 = vmatprep.subr.mxu0 0.0
    %2662 = vmatpush1.msra.mxu0 0.0
    %2663 = vmatprep.subr.mxu0 0.0
    %2664 = vmatpush1.msra.mxu0 0.0
    %2665 = vmatprep.subr.mxu0 0.0
    %2666 = vmatpush1.msra.mxu0 0.0
    %2667 = vmatprep.subr.mxu0 0.0
    %2668 = vmatpush1.msra.mxu0 0.0
    %2669 = vmatprep.subr.mxu0 0.0
    %2670 = vmatpush1.msra.mxu0 0.0
    %2671 = vmatprep.subr.mxu0 0.0
    %2672 = vmatpush1.msra.mxu0 0.0
    %2673 = vmatprep.subr.mxu0 0.0
    %2674 = vmatpush1.msra.mxu0 0.0
    %2675 = vmatprep.subr.mxu0 0.0
    %2676 = vmatpush1.msra.mxu0 0.0
    %2677 = vmatprep.subr.mxu0 0.0
    %2678 = vmatpush1.msra.mxu0 0.0
    %2679 = vmatprep.subr.mxu0 0.0
    %2680 = vmatpush1.msra.mxu0 0.0
    %2681 = vmatprep.subr.mxu0 0.0
    %v2682 = vand.u32 %v2363, 4294901760
    %2683 = vmatpush1.msra.mxu0 %v2682
    %2684 = vmatprep.subr.mxu0 0.0
    %v2685 = vand.u32 %v2362, 4294901760
    %2686 = vmatpush1.msra.mxu0 %v2685
    %2687 = vmatprep.subr.mxu0 0.0
    %v2688 = vand.u32 %v2361, 4294901760
    %2689 = vmatpush1.msra.mxu0 %v2688
    %2690 = vmatprep.subr.mxu0 0.0
    %v2691 = vand.u32 %v2360, 4294901760
    %2692 = vmatpush1.msra.mxu0 %v2691
    %2693 = vmatprep.subr.mxu0 0.0
    %2694 = vmatpush2.msra.mxu0 0.0
    %2695 = vmatprep.subr.mxu0 0.0
    %2696 = vmatpush2.msra.mxu0 0.0
    %2697 = vmatprep.subr.mxu0 0.0
    %2698 = vmatpush2.msra.mxu0 0.0
    %2699 = vmatprep.subr.mxu0 0.0
    %2700 = vmatpush2.msra.mxu0 0.0
    %2701 = vmatprep.subr.mxu0 0.0
    %2702 = vmatpush2.msra.mxu0 0.0
    %2703 = vmatprep.subr.mxu0 0.0
    %2704 = vmatpush2.msra.mxu0 0.0
    %2705 = vmatprep.subr.mxu0 0.0
    %2706 = vmatpush2.msra.mxu0 0.0
    %2707 = vmatprep.subr.mxu0 0.0
    %2708 = vmatpush2.msra.mxu0 0.0
    %2709 = vmatprep.subr.mxu0 0.0
    %2710 = vmatpush2.msra.mxu0 0.0
    %2711 = vmatprep.subr.mxu0 0.0
    %2712 = vmatpush2.msra.mxu0 0.0
    %2713 = vmatprep.subr.mxu0 0.0
    %2714 = vmatpush2.msra.mxu0 0.0
    %2715 = vmatprep.subr.mxu0 0.0
    %2716 = vmatpush2.msra.mxu0 0.0
    %2717 = vmatprep.subr.mxu0 0.0
    %2718 = vmatpush2.msra.mxu0 0.0
    %2719 = vmatprep.subr.mxu0 0.0
    %2720 = vmatpush2.msra.mxu0 0.0
    %2721 = vmatprep.subr.mxu0 0.0
    %2722 = vmatpush2.msra.mxu0 0.0
    %2723 = vmatprep.subr.mxu0 0.0
    %2724 = vmatpush2.msra.mxu0 0.0
    %2725 = vmatprep.mubr.f32.mxu0 0.0
    %v2726 = vand.u32 %v2382, 4294901760
    %v2727 = vsub.f32 %v2382, %v2726
    %v2728 = vand.u32 %v2727, 4294901760
    %2729 = vmatmul.mubr.f32.gmra.mxu0 %v2728
    %v2730 = vpop.f32.mrf.mxu0
    %v2731 = vadd.f32 %v2647, %v2730
    %v2732 = vpop.f32.mrf.mxu0
    %2733 = vmatprep.mubr.f32.mxu0 0.0
    %v2734 = vand.u32 %v2382, 4294901760
    %v2735 = vsub.f32 %v2382, %v2734
    %v2736 = vand.u32 %v2735, 4294901760
    %2737 = vmatmul.mubr.f32.gmra.mxu0 %v2736
    %v2738 = vpop.f32.mrf.mxu0
    %v2739 = vadd.f32 %v2654, %v2738
    %v2740 = vpop.f32.mrf.mxu0
    %2741 = vdwg.mxu0
    %2742 = vmatprep.subr.mxu0 0.0
    %2743 = vmatpush1.msra.mxu0 0.0
    %2744 = vmatprep.subr.mxu0 0.0
    %2745 = vmatpush1.msra.mxu0 0.0
    %2746 = vmatprep.subr.mxu0 0.0
    %2747 = vmatpush1.msra.mxu0 0.0
    %2748 = vmatprep.subr.mxu0 0.0
    %2749 = vmatpush1.msra.mxu0 0.0
    %2750 = vmatprep.subr.mxu0 0.0
    %2751 = vmatpush1.msra.mxu0 0.0
    %2752 = vmatprep.subr.mxu0 0.0
    %2753 = vmatpush1.msra.mxu0 0.0
    %2754 = vmatprep.subr.mxu0 0.0
    %2755 = vmatpush1.msra.mxu0 0.0
    %2756 = vmatprep.subr.mxu0 0.0
    %2757 = vmatpush1.msra.mxu0 0.0
    %2758 = vmatprep.subr.mxu0 0.0
    %2759 = vmatpush1.msra.mxu0 0.0
    %2760 = vmatprep.subr.mxu0 0.0
    %2761 = vmatpush1.msra.mxu0 0.0
    %2762 = vmatprep.subr.mxu0 0.0
    %2763 = vmatpush1.msra.mxu0 0.0
    %2764 = vmatprep.subr.mxu0 0.0
    %2765 = vmatpush1.msra.mxu0 0.0
    %2766 = vmatprep.subr.mxu0 0.0
    %v2767 = vand.u32 %v2363, 4294901760
    %v2768 = vsub.f32 %v2363, %v2767
    %v2769 = vand.u32 %v2768, 4294901760
    %2770 = vmatpush1.msra.mxu0 %v2769
    %2771 = vmatprep.subr.mxu0 0.0
    %v2772 = vand.u32 %v2362, 4294901760
    %v2773 = vsub.f32 %v2362, %v2772
    %v2774 = vand.u32 %v2773, 4294901760
    %2775 = vmatpush1.msra.mxu0 %v2774
    %2776 = vmatprep.subr.mxu0 0.0
    %v2777 = vand.u32 %v2361, 4294901760
    %v2778 = vsub.f32 %v2361, %v2777
    %v2779 = vand.u32 %v2778, 4294901760
    %2780 = vmatpush1.msra.mxu0 %v2779
    %2781 = vmatprep.subr.mxu0 0.0
    %v2782 = vand.u32 %v2360, 4294901760
    %v2783 = vsub.f32 %v2360, %v2782
    %v2784 = vand.u32 %v2783, 4294901760
    %2785 = vmatpush1.msra.mxu0 %v2784
    %2786 = vmatprep.subr.mxu0 0.0
    %2787 = vmatpush2.msra.mxu0 0.0
    %2788 = vmatprep.subr.mxu0 0.0
    %2789 = vmatpush2.msra.mxu0 0.0
    %2790 = vmatprep.subr.mxu0 0.0
    %2791 = vmatpush2.msra.mxu0 0.0
    %2792 = vmatprep.subr.mxu0 0.0
    %2793 = vmatpush2.msra.mxu0 0.0
    %2794 = vmatprep.subr.mxu0 0.0
    %2795 = vmatpush2.msra.mxu0 0.0
    %2796 = vmatprep.subr.mxu0 0.0
    %2797 = vmatpush2.msra.mxu0 0.0
    %2798 = vmatprep.subr.mxu0 0.0
    %2799 = vmatpush2.msra.mxu0 0.0
    %2800 = vmatprep.subr.mxu0 0.0
    %2801 = vmatpush2.msra.mxu0 0.0
    %2802 = vmatprep.subr.mxu0 0.0
    %2803 = vmatpush2.msra.mxu0 0.0
    %2804 = vmatprep.subr.mxu0 0.0
    %2805 = vmatpush2.msra.mxu0 0.0
    %2806 = vmatprep.subr.mxu0 0.0
    %2807 = vmatpush2.msra.mxu0 0.0
    %2808 = vmatprep.subr.mxu0 0.0
    %2809 = vmatpush2.msra.mxu0 0.0
    %2810 = vmatprep.subr.mxu0 0.0
    %2811 = vmatpush2.msra.mxu0 0.0
    %2812 = vmatprep.subr.mxu0 0.0
    %2813 = vmatpush2.msra.mxu0 0.0
    %2814 = vmatprep.subr.mxu0 0.0
    %2815 = vmatpush2.msra.mxu0 0.0
    %2816 = vmatprep.subr.mxu0 0.0
    %2817 = vmatpush2.msra.mxu0 0.0
    %2818 = vmatprep.mubr.f32.mxu0 0.0
    %v2819 = vand.u32 %v2382, 4294901760
    %2820 = vmatmul.mubr.f32.gmra.mxu0 %v2819
    %v2821 = vpop.f32.mrf.mxu0
    %v2822 = vadd.f32 %v2731, %v2821
    %v2823 = vpop.f32.mrf.mxu0
    %2824 = vmatprep.mubr.f32.mxu0 0.0
    %v2825 = vand.u32 %v2382, 4294901760
    %2826 = vmatmul.mubr.f32.gmra.mxu0 %v2825
    %v2827 = vpop.f32.mrf.mxu0
    %v2828 = vadd.f32 %v2739, %v2827
    %v2829 = vpop.f32.mrf.mxu0
    %2830 = vdwg.mxu0
    %2831 = vmatprep.subr.mxu0 0.0
    %2832 = vmatpush1.msra.mxu0 0.0
    %2833 = vmatprep.subr.mxu0 0.0
    %2834 = vmatpush1.msra.mxu0 0.0
    %2835 = vmatprep.subr.mxu0 0.0
    %2836 = vmatpush1.msra.mxu0 0.0
    %2837 = vmatprep.subr.mxu0 0.0
    %2838 = vmatpush1.msra.mxu0 0.0
    %2839 = vmatprep.subr.mxu0 0.0
    %2840 = vmatpush1.msra.mxu0 0.0
    %2841 = vmatprep.subr.mxu0 0.0
    %2842 = vmatpush1.msra.mxu0 0.0
    %2843 = vmatprep.subr.mxu0 0.0
    %2844 = vmatpush1.msra.mxu0 0.0
    %2845 = vmatprep.subr.mxu0 0.0
    %2846 = vmatpush1.msra.mxu0 0.0
    %2847 = vmatprep.subr.mxu0 0.0
    %2848 = vmatpush1.msra.mxu0 0.0
    %2849 = vmatprep.subr.mxu0 0.0
    %2850 = vmatpush1.msra.mxu0 0.0
    %2851 = vmatprep.subr.mxu0 0.0
    %2852 = vmatpush1.msra.mxu0 0.0
    %2853 = vmatprep.subr.mxu0 0.0
    %2854 = vmatpush1.msra.mxu0 0.0
    %2855 = vmatprep.subr.mxu0 0.0
    %v2856 = vand.u32 %v2363, 4294901760
    %2857 = vmatpush1.msra.mxu0 %v2856
    %2858 = vmatprep.subr.mxu0 0.0
    %v2859 = vand.u32 %v2362, 4294901760
    %2860 = vmatpush1.msra.mxu0 %v2859
    %2861 = vmatprep.subr.mxu0 0.0
    %v2862 = vand.u32 %v2361, 4294901760
    %2863 = vmatpush1.msra.mxu0 %v2862
    %2864 = vmatprep.subr.mxu0 0.0
    %v2865 = vand.u32 %v2360, 4294901760
    %2866 = vmatpush1.msra.mxu0 %v2865
    %2867 = vmatprep.subr.mxu0 0.0
    %2868 = vmatpush2.msra.mxu0 0.0
    %2869 = vmatprep.subr.mxu0 0.0
    %2870 = vmatpush2.msra.mxu0 0.0
    %2871 = vmatprep.subr.mxu0 0.0
    %2872 = vmatpush2.msra.mxu0 0.0
    %2873 = vmatprep.subr.mxu0 0.0
    %2874 = vmatpush2.msra.mxu0 0.0
    %2875 = vmatprep.subr.mxu0 0.0
    %2876 = vmatpush2.msra.mxu0 0.0
    %2877 = vmatprep.subr.mxu0 0.0
    %2878 = vmatpush2.msra.mxu0 0.0
    %2879 = vmatprep.subr.mxu0 0.0
    %2880 = vmatpush2.msra.mxu0 0.0
    %2881 = vmatprep.subr.mxu0 0.0
    %2882 = vmatpush2.msra.mxu0 0.0
    %2883 = vmatprep.subr.mxu0 0.0
    %2884 = vmatpush2.msra.mxu0 0.0
    %2885 = vmatprep.subr.mxu0 0.0
    %2886 = vmatpush2.msra.mxu0 0.0
    %2887 = vmatprep.subr.mxu0 0.0
    %2888 = vmatpush2.msra.mxu0 0.0
    %2889 = vmatprep.subr.mxu0 0.0
    %2890 = vmatpush2.msra.mxu0 0.0
    %2891 = vmatprep.subr.mxu0 0.0
    %2892 = vmatpush2.msra.mxu0 0.0
    %2893 = vmatprep.subr.mxu0 0.0
    %2894 = vmatpush2.msra.mxu0 0.0
    %2895 = vmatprep.subr.mxu0 0.0
    %2896 = vmatpush2.msra.mxu0 0.0
    %2897 = vmatprep.subr.mxu0 0.0
    %2898 = vmatpush2.msra.mxu0 0.0
    %2899 = vmatprep.mubr.f32.mxu0 0.0
    %v2900 = vand.u32 %v2382, 4294901760
    %2901 = vmatmul.mubr.f32.gmra.mxu0 %v2900
    %v2902 = vpop.f32.mrf.mxu0
    %v2903 = vadd.f32 %v2822, %v2902
    %v2904 = vpop.f32.mrf.mxu0
    %2905 = vmatprep.mubr.f32.mxu0 0.0
    %v2906 = vand.u32 %v2382, 4294901760
    %2907 = vmatmul.mubr.f32.gmra.mxu0 %v2906
    %v2908 = vpop.f32.mrf.mxu0
    %v2909 = vadd.f32 %v2828, %v2908
    %v2910 = vpop.f32.mrf.mxu0
    %2911 = vdwg.mxu0
    %v2912 = vadd.f32 %v2364, %v2903
    %v2913 = vadd.f32 %v2365, %v2909
    %v2914 = vxor.u32 %v2912, 2147483648
    %v2915 = vxor.u32 %v2913, 2147483648
    %v2916 = vmul.f32 %v2914, 1.442695
    %v2917 = vpow.pop %v2916
    %v2918 = vmul.f32 %v2915, 1.442695
    %v2919 = vpow.pop %v2918
    %v2920 = vadd.f32 %v2917, 1.0
    %v2921 = vadd.f32 %v2919, 1.0
    %v2922 = vrcp.pop %v2920
    %v2923 = vmul.f32 1.0, %v2922
    %v2924 = vrcp.pop %v2921
    %v2925 = vmul.f32 1.0, %v2924
    %v2926 = vtanh.pop %v2912
    %v2927 = vtanh.pop %v2913
    %v2928 = vmul.f32 %v2923, 0.0
    %v2929 = vmul.f32 %v2925, 0.0
    %2932 = vrot.lane.b32.xlu0 %v2926, 32
    %v2933 = vpop.permute.xlu0 %2932
    %2934 = vrot.lane.b32.xlu0 %v2927, 32
    %v2935 = vpop.permute.xlu0 %2934
    %v2938 = vmul.f32 %v2923, %v2933
    %v2939 = vmul.f32 %v2925, %v2935
    %2942 = vrot.lane.b32.xlu0 %v2938, 32
    %v2943 = vpop.permute.xlu0 %2942
    %2944 = vrot.lane.b32.xlu0 %v2939, 32
    %v2945 = vpop.permute.xlu0 %2944
    %v2948 = vadd.f32 %v2928, %v2943
    %v2949 = vadd.f32 %v2929, %v2945
    %v2950 = vtanh.pop %v2948
    %v2951 = vtanh.pop %v2949
    %2954 = vrot.lane.b32.xlu0 %v2950, 32
    %v2955 = vpop.permute.xlu0 %2954
    %2956 = vrot.lane.b32.xlu0 %v2951, 32
    %v2957 = vpop.permute.xlu0 %2956
    %v2960 = vmul.f32 %v2923, %v2955
    %v2961 = vmul.f32 %v2925, %v2957
    %2964 = vrot.lane.b32.xlu0 %v2960, 64
    %v2965 = vpop.permute.xlu0 %2964
    %2966 = vrot.lane.b32.xlu0 %v2961, 64
    %v2967 = vpop.permute.xlu0 %2966
    %v2968 = vsel %vm2380, %v2965, 0
    %v2970 = vsel %vm2380, %v2967, 0
    %2972 = vmatprep.subr.mxu0 0.0
    %2973 = vmatpush1.msra.mxu0 0.0
    %2974 = vmatprep.subr.mxu0 0.0
    %2975 = vmatpush1.msra.mxu0 0.0
    %2976 = vmatprep.subr.mxu0 0.0
    %2977 = vmatpush1.msra.mxu0 0.0
    %2978 = vmatprep.subr.mxu0 0.0
    %2979 = vmatpush1.msra.mxu0 0.0
    %2980 = vmatprep.subr.mxu0 0.0
    %2981 = vmatpush1.msra.mxu0 0.0
    %2982 = vmatprep.subr.mxu0 0.0
    %2983 = vmatpush1.msra.mxu0 0.0
    %2984 = vmatprep.subr.mxu0 0.0
    %2985 = vmatpush1.msra.mxu0 0.0
    %2986 = vmatprep.subr.mxu0 0.0
    %2987 = vmatpush1.msra.mxu0 0.0
    %2988 = vmatprep.subr.mxu0 0.0
    %2989 = vmatpush1.msra.mxu0 0.0
    %2990 = vmatprep.subr.mxu0 0.0
    %2991 = vmatpush1.msra.mxu0 0.0
    %2992 = vmatprep.subr.mxu0 0.0
    %2993 = vmatpush1.msra.mxu0 0.0
    %2994 = vmatprep.subr.mxu0 0.0
    %2995 = vmatpush1.msra.mxu0 0.0
    %2996 = vmatprep.subr.mxu0 0.0
    %v2997 = vand.u32 %v2363, 4294901760
    %2998 = vmatpush1.msra.mxu0 %v2997
    %2999 = vmatprep.subr.mxu0 0.0
    %v3000 = vand.u32 %v2362, 4294901760
    %3001 = vmatpush1.msra.mxu0 %v3000
    %3002 = vmatprep.subr.mxu0 0.0
    %v3003 = vand.u32 %v2361, 4294901760
    %3004 = vmatpush1.msra.mxu0 %v3003
    %3005 = vmatprep.subr.mxu0 0.0
    %v3006 = vand.u32 %v2360, 4294901760
    %3007 = vmatpush1.msra.mxu0 %v3006
    %3008 = vmatprep.subr.mxu0 0.0
    %3009 = vmatpush2.msra.mxu0 0.0
    %3010 = vmatprep.subr.mxu0 0.0
    %3011 = vmatpush2.msra.mxu0 0.0
    %3012 = vmatprep.subr.mxu0 0.0
    %3013 = vmatpush2.msra.mxu0 0.0
    %3014 = vmatprep.subr.mxu0 0.0
    %3015 = vmatpush2.msra.mxu0 0.0
    %3016 = vmatprep.subr.mxu0 0.0
    %3017 = vmatpush2.msra.mxu0 0.0
    %3018 = vmatprep.subr.mxu0 0.0
    %3019 = vmatpush2.msra.mxu0 0.0
    %3020 = vmatprep.subr.mxu0 0.0
    %3021 = vmatpush2.msra.mxu0 0.0
    %3022 = vmatprep.subr.mxu0 0.0
    %3023 = vmatpush2.msra.mxu0 0.0
    %3024 = vmatprep.subr.mxu0 0.0
    %3025 = vmatpush2.msra.mxu0 0.0
    %3026 = vmatprep.subr.mxu0 0.0
    %3027 = vmatpush2.msra.mxu0 0.0
    %3028 = vmatprep.subr.mxu0 0.0
    %3029 = vmatpush2.msra.mxu0 0.0
    %3030 = vmatprep.subr.mxu0 0.0
    %3031 = vmatpush2.msra.mxu0 0.0
    %3032 = vmatprep.subr.mxu0 0.0
    %3033 = vmatpush2.msra.mxu0 0.0
    %3034 = vmatprep.subr.mxu0 0.0
    %3035 = vmatpush2.msra.mxu0 0.0
    %3036 = vmatprep.subr.mxu0 0.0
    %3037 = vmatpush2.msra.mxu0 0.0
    %3038 = vmatprep.subr.mxu0 0.0
    %3039 = vmatpush2.msra.mxu0 0.0
    %3040 = vmatprep.mubr.f32.mxu0 0.0
    %v3041 = vand.u32 %v2968, 4294901760
    %v3042 = vsub.f32 %v2968, %v3041
    %v3043 = vand.u32 %v3042, 4294901760
    %v3044 = vsub.f32 %v3042, %v3043
    %v3045 = vand.u32 %v3044, 4294901760
    %3046 = vmatmul.mubr.f32.gmra.mxu0 %v3045
    %v3047 = vpop.f32.mrf.mxu0
    %v3048 = vadd.f32 0.0, %v3047
    %v3049 = vpop.f32.mrf.mxu0
    %3050 = vmatprep.mubr.f32.mxu0 0.0
    %v3051 = vand.u32 %v2970, 4294901760
    %v3052 = vsub.f32 %v2970, %v3051
    %v3053 = vand.u32 %v3052, 4294901760
    %v3054 = vsub.f32 %v3052, %v3053
    %v3055 = vand.u32 %v3054, 4294901760
    %3056 = vmatmul.mubr.f32.gmra.mxu0 %v3055
    %v3057 = vpop.f32.mrf.mxu0
    %v3058 = vadd.f32 0.0, %v3057
    %v3059 = vpop.f32.mrf.mxu0
    %3060 = vdwg.mxu0
    %3061 = vmatprep.subr.mxu0 0.0
    %3062 = vmatpush1.msra.mxu0 0.0
    %3063 = vmatprep.subr.mxu0 0.0
    %3064 = vmatpush1.msra.mxu0 0.0
    %3065 = vmatprep.subr.mxu0 0.0
    %3066 = vmatpush1.msra.mxu0 0.0
    %3067 = vmatprep.subr.mxu0 0.0
    %3068 = vmatpush1.msra.mxu0 0.0
    %3069 = vmatprep.subr.mxu0 0.0
    %3070 = vmatpush1.msra.mxu0 0.0
    %3071 = vmatprep.subr.mxu0 0.0
    %3072 = vmatpush1.msra.mxu0 0.0
    %3073 = vmatprep.subr.mxu0 0.0
    %3074 = vmatpush1.msra.mxu0 0.0
    %3075 = vmatprep.subr.mxu0 0.0
    %3076 = vmatpush1.msra.mxu0 0.0
    %3077 = vmatprep.subr.mxu0 0.0
    %3078 = vmatpush1.msra.mxu0 0.0
    %3079 = vmatprep.subr.mxu0 0.0
    %3080 = vmatpush1.msra.mxu0 0.0
    %3081 = vmatprep.subr.mxu0 0.0
    %3082 = vmatpush1.msra.mxu0 0.0
    %3083 = vmatprep.subr.mxu0 0.0
    %3084 = vmatpush1.msra.mxu0 0.0
    %3085 = vmatprep.subr.mxu0 0.0
    %v3086 = vand.u32 %v2363, 4294901760
    %v3087 = vsub.f32 %v2363, %v3086
    %v3088 = vand.u32 %v3087, 4294901760
    %v3089 = vsub.f32 %v3087, %v3088
    %v3090 = vand.u32 %v3089, 4294901760
    %3091 = vmatpush1.msra.mxu0 %v3090
    %3092 = vmatprep.subr.mxu0 0.0
    %v3093 = vand.u32 %v2362, 4294901760
    %v3094 = vsub.f32 %v2362, %v3093
    %v3095 = vand.u32 %v3094, 4294901760
    %v3096 = vsub.f32 %v3094, %v3095
    %v3097 = vand.u32 %v3096, 4294901760
    %3098 = vmatpush1.msra.mxu0 %v3097
    %3099 = vmatprep.subr.mxu0 0.0
    %v3100 = vand.u32 %v2361, 4294901760
    %v3101 = vsub.f32 %v2361, %v3100
    %v3102 = vand.u32 %v3101, 4294901760
    %v3103 = vsub.f32 %v3101, %v3102
    %v3104 = vand.u32 %v3103, 4294901760
    %3105 = vmatpush1.msra.mxu0 %v3104
    %3106 = vmatprep.subr.mxu0 0.0
    %v3107 = vand.u32 %v2360, 4294901760
    %v3108 = vsub.f32 %v2360, %v3107
    %v3109 = vand.u32 %v3108, 4294901760
    %v3110 = vsub.f32 %v3108, %v3109
    %v3111 = vand.u32 %v3110, 4294901760
    %3112 = vmatpush1.msra.mxu0 %v3111
    %3113 = vmatprep.subr.mxu0 0.0
    %3114 = vmatpush2.msra.mxu0 0.0
    %3115 = vmatprep.subr.mxu0 0.0
    %3116 = vmatpush2.msra.mxu0 0.0
    %3117 = vmatprep.subr.mxu0 0.0
    %3118 = vmatpush2.msra.mxu0 0.0
    %3119 = vmatprep.subr.mxu0 0.0
    %3120 = vmatpush2.msra.mxu0 0.0
    %3121 = vmatprep.subr.mxu0 0.0
    %3122 = vmatpush2.msra.mxu0 0.0
    %3123 = vmatprep.subr.mxu0 0.0
    %3124 = vmatpush2.msra.mxu0 0.0
    %3125 = vmatprep.subr.mxu0 0.0
    %3126 = vmatpush2.msra.mxu0 0.0
    %3127 = vmatprep.subr.mxu0 0.0
    %3128 = vmatpush2.msra.mxu0 0.0
    %3129 = vmatprep.subr.mxu0 0.0
    %3130 = vmatpush2.msra.mxu0 0.0
    %3131 = vmatprep.subr.mxu0 0.0
    %3132 = vmatpush2.msra.mxu0 0.0
    %3133 = vmatprep.subr.mxu0 0.0
    %3134 = vmatpush2.msra.mxu0 0.0
    %3135 = vmatprep.subr.mxu0 0.0
    %3136 = vmatpush2.msra.mxu0 0.0
    %3137 = vmatprep.subr.mxu0 0.0
    %3138 = vmatpush2.msra.mxu0 0.0
    %3139 = vmatprep.subr.mxu0 0.0
    %3140 = vmatpush2.msra.mxu0 0.0
    %3141 = vmatprep.subr.mxu0 0.0
    %3142 = vmatpush2.msra.mxu0 0.0
    %3143 = vmatprep.subr.mxu0 0.0
    %3144 = vmatpush2.msra.mxu0 0.0
    %3145 = vmatprep.mubr.f32.mxu0 0.0
    %v3146 = vand.u32 %v2968, 4294901760
    %3147 = vmatmul.mubr.f32.gmra.mxu0 %v3146
    %v3148 = vpop.f32.mrf.mxu0
    %v3149 = vadd.f32 %v3048, %v3148
    %v3150 = vpop.f32.mrf.mxu0
    %3151 = vmatprep.mubr.f32.mxu0 0.0
    %v3152 = vand.u32 %v2970, 4294901760
    %3153 = vmatmul.mubr.f32.gmra.mxu0 %v3152
    %v3154 = vpop.f32.mrf.mxu0
    %v3155 = vadd.f32 %v3058, %v3154
    %v3156 = vpop.f32.mrf.mxu0
    %3157 = vdwg.mxu0
    %3158 = vmatprep.subr.mxu0 0.0
    %3159 = vmatpush1.msra.mxu0 0.0
    %3160 = vmatprep.subr.mxu0 0.0
    %3161 = vmatpush1.msra.mxu0 0.0
    %3162 = vmatprep.subr.mxu0 0.0
    %3163 = vmatpush1.msra.mxu0 0.0
    %3164 = vmatprep.subr.mxu0 0.0
    %3165 = vmatpush1.msra.mxu0 0.0
    %3166 = vmatprep.subr.mxu0 0.0
    %3167 = vmatpush1.msra.mxu0 0.0
    %3168 = vmatprep.subr.mxu0 0.0
    %3169 = vmatpush1.msra.mxu0 0.0
    %3170 = vmatprep.subr.mxu0 0.0
    %3171 = vmatpush1.msra.mxu0 0.0
    %3172 = vmatprep.subr.mxu0 0.0
    %3173 = vmatpush1.msra.mxu0 0.0
    %3174 = vmatprep.subr.mxu0 0.0
    %3175 = vmatpush1.msra.mxu0 0.0
    %3176 = vmatprep.subr.mxu0 0.0
    %3177 = vmatpush1.msra.mxu0 0.0
    %3178 = vmatprep.subr.mxu0 0.0
    %3179 = vmatpush1.msra.mxu0 0.0
    %3180 = vmatprep.subr.mxu0 0.0
    %3181 = vmatpush1.msra.mxu0 0.0
    %3182 = vmatprep.subr.mxu0 0.0
    %v3183 = vand.u32 %v2363, 4294901760
    %v3184 = vsub.f32 %v2363, %v3183
    %3185 = vmatpush1.msra.mxu0 %v3184
    %3186 = vmatprep.subr.mxu0 0.0
    %v3187 = vand.u32 %v2362, 4294901760
    %v3188 = vsub.f32 %v2362, %v3187
    %3189 = vmatpush1.msra.mxu0 %v3188
    %3190 = vmatprep.subr.mxu0 0.0
    %v3191 = vand.u32 %v2361, 4294901760
    %v3192 = vsub.f32 %v2361, %v3191
    %3193 = vmatpush1.msra.mxu0 %v3192
    %3194 = vmatprep.subr.mxu0 0.0
    %v3195 = vand.u32 %v2360, 4294901760
    %v3196 = vsub.f32 %v2360, %v3195
    %3197 = vmatpush1.msra.mxu0 %v3196
    %3198 = vmatprep.subr.mxu0 0.0
    %3199 = vmatpush2.msra.mxu0 0.0
    %3200 = vmatprep.subr.mxu0 0.0
    %3201 = vmatpush2.msra.mxu0 0.0
    %3202 = vmatprep.subr.mxu0 0.0
    %3203 = vmatpush2.msra.mxu0 0.0
    %3204 = vmatprep.subr.mxu0 0.0
    %3205 = vmatpush2.msra.mxu0 0.0
    %3206 = vmatprep.subr.mxu0 0.0
    %3207 = vmatpush2.msra.mxu0 0.0
    %3208 = vmatprep.subr.mxu0 0.0
    %3209 = vmatpush2.msra.mxu0 0.0
    %3210 = vmatprep.subr.mxu0 0.0
    %3211 = vmatpush2.msra.mxu0 0.0
    %3212 = vmatprep.subr.mxu0 0.0
    %3213 = vmatpush2.msra.mxu0 0.0
    %3214 = vmatprep.subr.mxu0 0.0
    %3215 = vmatpush2.msra.mxu0 0.0
    %3216 = vmatprep.subr.mxu0 0.0
    %3217 = vmatpush2.msra.mxu0 0.0
    %3218 = vmatprep.subr.mxu0 0.0
    %3219 = vmatpush2.msra.mxu0 0.0
    %3220 = vmatprep.subr.mxu0 0.0
    %3221 = vmatpush2.msra.mxu0 0.0
    %3222 = vmatprep.subr.mxu0 0.0
    %3223 = vmatpush2.msra.mxu0 0.0
    %3224 = vmatprep.subr.mxu0 0.0
    %3225 = vmatpush2.msra.mxu0 0.0
    %3226 = vmatprep.subr.mxu0 0.0
    %3227 = vmatpush2.msra.mxu0 0.0
    %3228 = vmatprep.subr.mxu0 0.0
    %3229 = vmatpush2.msra.mxu0 0.0
    %3230 = vmatprep.mubr.f32.mxu0 0.0
    %v3231 = vand.u32 %v2968, 4294901760
    %v3232 = vsub.f32 %v2968, %v3231
    %3233 = vmatmul.mubr.f32.gmra.mxu0 %v3232
    %v3234 = vpop.f32.mrf.mxu0
    %v3235 = vadd.f32 %v3149, %v3234
    %v3236 = vpop.f32.mrf.mxu0
    %3237 = vmatprep.mubr.f32.mxu0 0.0
    %v3238 = vand.u32 %v2970, 4294901760
    %v3239 = vsub.f32 %v2970, %v3238
    %3240 = vmatmul.mubr.f32.gmra.mxu0 %v3239
    %v3241 = vpop.f32.mrf.mxu0
    %v3242 = vadd.f32 %v3155, %v3241
    %v3243 = vpop.f32.mrf.mxu0
    %3244 = vdwg.mxu0
    %3245 = vmatprep.subr.mxu0 0.0
    %3246 = vmatpush1.msra.mxu0 0.0
    %3247 = vmatprep.subr.mxu0 0.0
    %3248 = vmatpush1.msra.mxu0 0.0
    %3249 = vmatprep.subr.mxu0 0.0
    %3250 = vmatpush1.msra.mxu0 0.0
    %3251 = vmatprep.subr.mxu0 0.0
    %3252 = vmatpush1.msra.mxu0 0.0
    %3253 = vmatprep.subr.mxu0 0.0
    %3254 = vmatpush1.msra.mxu0 0.0
    %3255 = vmatprep.subr.mxu0 0.0
    %3256 = vmatpush1.msra.mxu0 0.0
    %3257 = vmatprep.subr.mxu0 0.0
    %3258 = vmatpush1.msra.mxu0 0.0
    %3259 = vmatprep.subr.mxu0 0.0
    %3260 = vmatpush1.msra.mxu0 0.0
    %3261 = vmatprep.subr.mxu0 0.0
    %3262 = vmatpush1.msra.mxu0 0.0
    %3263 = vmatprep.subr.mxu0 0.0
    %3264 = vmatpush1.msra.mxu0 0.0
    %3265 = vmatprep.subr.mxu0 0.0
    %3266 = vmatpush1.msra.mxu0 0.0
    %3267 = vmatprep.subr.mxu0 0.0
    %3268 = vmatpush1.msra.mxu0 0.0
    %3269 = vmatprep.subr.mxu0 0.0
    %v3270 = vand.u32 %v2363, 4294901760
    %3271 = vmatpush1.msra.mxu0 %v3270
    %3272 = vmatprep.subr.mxu0 0.0
    %v3273 = vand.u32 %v2362, 4294901760
    %3274 = vmatpush1.msra.mxu0 %v3273
    %3275 = vmatprep.subr.mxu0 0.0
    %v3276 = vand.u32 %v2361, 4294901760
    %3277 = vmatpush1.msra.mxu0 %v3276
    %3278 = vmatprep.subr.mxu0 0.0
    %v3279 = vand.u32 %v2360, 4294901760
    %3280 = vmatpush1.msra.mxu0 %v3279
    %3281 = vmatprep.subr.mxu0 0.0
    %3282 = vmatpush2.msra.mxu0 0.0
    %3283 = vmatprep.subr.mxu0 0.0
    %3284 = vmatpush2.msra.mxu0 0.0
    %3285 = vmatprep.subr.mxu0 0.0
    %3286 = vmatpush2.msra.mxu0 0.0
    %3287 = vmatprep.subr.mxu0 0.0
    %3288 = vmatpush2.msra.mxu0 0.0
    %3289 = vmatprep.subr.mxu0 0.0
    %3290 = vmatpush2.msra.mxu0 0.0
    %3291 = vmatprep.subr.mxu0 0.0
    %3292 = vmatpush2.msra.mxu0 0.0
    %3293 = vmatprep.subr.mxu0 0.0
    %3294 = vmatpush2.msra.mxu0 0.0
    %3295 = vmatprep.subr.mxu0 0.0
    %3296 = vmatpush2.msra.mxu0 0.0
    %3297 = vmatprep.subr.mxu0 0.0
    %3298 = vmatpush2.msra.mxu0 0.0
    %3299 = vmatprep.subr.mxu0 0.0
    %3300 = vmatpush2.msra.mxu0 0.0
    %3301 = vmatprep.subr.mxu0 0.0
    %3302 = vmatpush2.msra.mxu0 0.0
    %3303 = vmatprep.subr.mxu0 0.0
    %3304 = vmatpush2.msra.mxu0 0.0
    %3305 = vmatprep.subr.mxu0 0.0
    %3306 = vmatpush2.msra.mxu0 0.0
    %3307 = vmatprep.subr.mxu0 0.0
    %3308 = vmatpush2.msra.mxu0 0.0
    %3309 = vmatprep.subr.mxu0 0.0
    %3310 = vmatpush2.msra.mxu0 0.0
    %3311 = vmatprep.subr.mxu0 0.0
    %3312 = vmatpush2.msra.mxu0 0.0
    %3313 = vmatprep.mubr.f32.mxu0 0.0
    %v3314 = vand.u32 %v2968, 4294901760
    %v3315 = vsub.f32 %v2968, %v3314
    %v3316 = vand.u32 %v3315, 4294901760
    %3317 = vmatmul.mubr.f32.gmra.mxu0 %v3316
    %v3318 = vpop.f32.mrf.mxu0
    %v3319 = vadd.f32 %v3235, %v3318
    %v3320 = vpop.f32.mrf.mxu0
    %3321 = vmatprep.mubr.f32.mxu0 0.0
    %v3322 = vand.u32 %v2970, 4294901760
    %v3323 = vsub.f32 %v2970, %v3322
    %v3324 = vand.u32 %v3323, 4294901760
    %3325 = vmatmul.mubr.f32.gmra.mxu0 %v3324
    %v3326 = vpop.f32.mrf.mxu0
    %v3327 = vadd.f32 %v3242, %v3326
    %v3328 = vpop.f32.mrf.mxu0
    %3329 = vdwg.mxu0
    %3330 = vmatprep.subr.mxu0 0.0
    %3331 = vmatpush1.msra.mxu0 0.0
    %3332 = vmatprep.subr.mxu0 0.0
    %3333 = vmatpush1.msra.mxu0 0.0
    %3334 = vmatprep.subr.mxu0 0.0
    %3335 = vmatpush1.msra.mxu0 0.0
    %3336 = vmatprep.subr.mxu0 0.0
    %3337 = vmatpush1.msra.mxu0 0.0
    %3338 = vmatprep.subr.mxu0 0.0
    %3339 = vmatpush1.msra.mxu0 0.0
    %3340 = vmatprep.subr.mxu0 0.0
    %3341 = vmatpush1.msra.mxu0 0.0
    %3342 = vmatprep.subr.mxu0 0.0
    %3343 = vmatpush1.msra.mxu0 0.0
    %3344 = vmatprep.subr.mxu0 0.0
    %3345 = vmatpush1.msra.mxu0 0.0
    %3346 = vmatprep.subr.mxu0 0.0
    %3347 = vmatpush1.msra.mxu0 0.0
    %3348 = vmatprep.subr.mxu0 0.0
    %3349 = vmatpush1.msra.mxu0 0.0
    %3350 = vmatprep.subr.mxu0 0.0
    %3351 = vmatpush1.msra.mxu0 0.0
    %3352 = vmatprep.subr.mxu0 0.0
    %3353 = vmatpush1.msra.mxu0 0.0
    %3354 = vmatprep.subr.mxu0 0.0
    %v3355 = vand.u32 %v2363, 4294901760
    %v3356 = vsub.f32 %v2363, %v3355
    %v3357 = vand.u32 %v3356, 4294901760
    %3358 = vmatpush1.msra.mxu0 %v3357
    %3359 = vmatprep.subr.mxu0 0.0
    %v3360 = vand.u32 %v2362, 4294901760
    %v3361 = vsub.f32 %v2362, %v3360
    %v3362 = vand.u32 %v3361, 4294901760
    %3363 = vmatpush1.msra.mxu0 %v3362
    %3364 = vmatprep.subr.mxu0 0.0
    %v3365 = vand.u32 %v2361, 4294901760
    %v3366 = vsub.f32 %v2361, %v3365
    %v3367 = vand.u32 %v3366, 4294901760
    %3368 = vmatpush1.msra.mxu0 %v3367
    %3369 = vmatprep.subr.mxu0 0.0
    %v3370 = vand.u32 %v2360, 4294901760
    %v3371 = vsub.f32 %v2360, %v3370
    %v3372 = vand.u32 %v3371, 4294901760
    %3373 = vmatpush1.msra.mxu0 %v3372
    %3374 = vmatprep.subr.mxu0 0.0
    %3375 = vmatpush2.msra.mxu0 0.0
    %3376 = vmatprep.subr.mxu0 0.0
    %3377 = vmatpush2.msra.mxu0 0.0
    %3378 = vmatprep.subr.mxu0 0.0
    %3379 = vmatpush2.msra.mxu0 0.0
    %3380 = vmatprep.subr.mxu0 0.0
    %3381 = vmatpush2.msra.mxu0 0.0
    %3382 = vmatprep.subr.mxu0 0.0
    %3383 = vmatpush2.msra.mxu0 0.0
    %3384 = vmatprep.subr.mxu0 0.0
    %3385 = vmatpush2.msra.mxu0 0.0
    %3386 = vmatprep.subr.mxu0 0.0
    %3387 = vmatpush2.msra.mxu0 0.0
    %3388 = vmatprep.subr.mxu0 0.0
    %3389 = vmatpush2.msra.mxu0 0.0
    %3390 = vmatprep.subr.mxu0 0.0
    %3391 = vmatpush2.msra.mxu0 0.0
    %3392 = vmatprep.subr.mxu0 0.0
    %3393 = vmatpush2.msra.mxu0 0.0
    %3394 = vmatprep.subr.mxu0 0.0
    %3395 = vmatpush2.msra.mxu0 0.0
    %3396 = vmatprep.subr.mxu0 0.0
    %3397 = vmatpush2.msra.mxu0 0.0
    %3398 = vmatprep.subr.mxu0 0.0
    %3399 = vmatpush2.msra.mxu0 0.0
    %3400 = vmatprep.subr.mxu0 0.0
    %3401 = vmatpush2.msra.mxu0 0.0
    %3402 = vmatprep.subr.mxu0 0.0
    %3403 = vmatpush2.msra.mxu0 0.0
    %3404 = vmatprep.subr.mxu0 0.0
    %3405 = vmatpush2.msra.mxu0 0.0
    %3406 = vmatprep.mubr.f32.mxu0 0.0
    %v3407 = vand.u32 %v2968, 4294901760
    %3408 = vmatmul.mubr.f32.gmra.mxu0 %v3407
    %v3409 = vpop.f32.mrf.mxu0
    %v3410 = vadd.f32 %v3319, %v3409
    %v3411 = vpop.f32.mrf.mxu0
    %3412 = vmatprep.mubr.f32.mxu0 0.0
    %v3413 = vand.u32 %v2970, 4294901760
    %3414 = vmatmul.mubr.f32.gmra.mxu0 %v3413
    %v3415 = vpop.f32.mrf.mxu0
    %v3416 = vadd.f32 %v3327, %v3415
    %v3417 = vpop.f32.mrf.mxu0
    %3418 = vdwg.mxu0
    %3419 = vmatprep.subr.mxu0 0.0
    %3420 = vmatpush1.msra.mxu0 0.0
    %3421 = vmatprep.subr.mxu0 0.0
    %3422 = vmatpush1.msra.mxu0 0.0
    %3423 = vmatprep.subr.mxu0 0.0
    %3424 = vmatpush1.msra.mxu0 0.0
    %3425 = vmatprep.subr.mxu0 0.0
    %3426 = vmatpush1.msra.mxu0 0.0
    %3427 = vmatprep.subr.mxu0 0.0
    %3428 = vmatpush1.msra.mxu0 0.0
    %3429 = vmatprep.subr.mxu0 0.0
    %3430 = vmatpush1.msra.mxu0 0.0
    %3431 = vmatprep.subr.mxu0 0.0
    %3432 = vmatpush1.msra.mxu0 0.0
    %3433 = vmatprep.subr.mxu0 0.0
    %3434 = vmatpush1.msra.mxu0 0.0
    %3435 = vmatprep.subr.mxu0 0.0
    %3436 = vmatpush1.msra.mxu0 0.0
    %3437 = vmatprep.subr.mxu0 0.0
    %3438 = vmatpush1.msra.mxu0 0.0
    %3439 = vmatprep.subr.mxu0 0.0
    %3440 = vmatpush1.msra.mxu0 0.0
    %3441 = vmatprep.subr.mxu0 0.0
    %3442 = vmatpush1.msra.mxu0 0.0
    %3443 = vmatprep.subr.mxu0 0.0
    %v3444 = vand.u32 %v2363, 4294901760
    %3445 = vmatpush1.msra.mxu0 %v3444
    %3446 = vmatprep.subr.mxu0 0.0
    %v3447 = vand.u32 %v2362, 4294901760
    %3448 = vmatpush1.msra.mxu0 %v3447
    %3449 = vmatprep.subr.mxu0 0.0
    %v3450 = vand.u32 %v2361, 4294901760
    %3451 = vmatpush1.msra.mxu0 %v3450
    %3452 = vmatprep.subr.mxu0 0.0
    %v3453 = vand.u32 %v2360, 4294901760
    %3454 = vmatpush1.msra.mxu0 %v3453
    %3455 = vmatprep.subr.mxu0 0.0
    %3456 = vmatpush2.msra.mxu0 0.0
    %3457 = vmatprep.subr.mxu0 0.0
    %3458 = vmatpush2.msra.mxu0 0.0
    %3459 = vmatprep.subr.mxu0 0.0
    %3460 = vmatpush2.msra.mxu0 0.0
    %3461 = vmatprep.subr.mxu0 0.0
    %3462 = vmatpush2.msra.mxu0 0.0
    %3463 = vmatprep.subr.mxu0 0.0
    %3464 = vmatpush2.msra.mxu0 0.0
    %3465 = vmatprep.subr.mxu0 0.0
    %3466 = vmatpush2.msra.mxu0 0.0
    %3467 = vmatprep.subr.mxu0 0.0
    %3468 = vmatpush2.msra.mxu0 0.0
    %3469 = vmatprep.subr.mxu0 0.0
    %3470 = vmatpush2.msra.mxu0 0.0
    %3471 = vmatprep.subr.mxu0 0.0
    %3472 = vmatpush2.msra.mxu0 0.0
    %3473 = vmatprep.subr.mxu0 0.0
    %3474 = vmatpush2.msra.mxu0 0.0
    %3475 = vmatprep.subr.mxu0 0.0
    %3476 = vmatpush2.msra.mxu0 0.0
    %3477 = vmatprep.subr.mxu0 0.0
    %3478 = vmatpush2.msra.mxu0 0.0
    %3479 = vmatprep.subr.mxu0 0.0
    %3480 = vmatpush2.msra.mxu0 0.0
    %3481 = vmatprep.subr.mxu0 0.0
    %3482 = vmatpush2.msra.mxu0 0.0
    %3483 = vmatprep.subr.mxu0 0.0
    %3484 = vmatpush2.msra.mxu0 0.0
    %3485 = vmatprep.subr.mxu0 0.0
    %3486 = vmatpush2.msra.mxu0 0.0
    %3487 = vmatprep.mubr.f32.mxu0 0.0
    %v3488 = vand.u32 %v2968, 4294901760
    %3489 = vmatmul.mubr.f32.gmra.mxu0 %v3488
    %v3490 = vpop.f32.mrf.mxu0
    %v3491 = vadd.f32 %v3410, %v3490
    %v3492 = vpop.f32.mrf.mxu0
    %3493 = vmatprep.mubr.f32.mxu0 0.0
    %v3494 = vand.u32 %v2970, 4294901760
    %3495 = vmatmul.mubr.f32.gmra.mxu0 %v3494
    %v3496 = vpop.f32.mrf.mxu0
    %v3497 = vadd.f32 %v3416, %v3496
    %v3498 = vpop.f32.mrf.mxu0
    %3499 = vdwg.mxu0
    %v3500 = vadd.f32 %v2366, %v3491
    %v3501 = vadd.f32 %v2367, %v3497
    %v3502 = vxor.u32 %v3500, 2147483648
    %v3503 = vxor.u32 %v3501, 2147483648
    %v3504 = vmul.f32 %v3502, 1.442695
    %v3505 = vpow.pop %v3504
    %v3506 = vmul.f32 %v3503, 1.442695
    %v3507 = vpow.pop %v3506
    %v3508 = vadd.f32 %v3505, 1.0
    %v3509 = vadd.f32 %v3507, 1.0
    %v3510 = vrcp.pop %v3508
    %v3511 = vmul.f32 1.0, %v3510
    %v3512 = vrcp.pop %v3509
    %v3513 = vmul.f32 1.0, %v3512
    %v3514 = vtanh.pop %v3500
    %v3515 = vtanh.pop %v3501
    %v3516 = vmul.f32 %v3511, %v2948
    %v3517 = vmul.f32 %v3513, %v2949
    %3520 = vrot.lane.b32.xlu0 %v3514, 32
    %v3521 = vpop.permute.xlu0 %3520
    %3522 = vrot.lane.b32.xlu0 %v3515, 32
    %v3523 = vpop.permute.xlu0 %3522
    %v3526 = vmul.f32 %v3511, %v3521
    %v3527 = vmul.f32 %v3513, %v3523
    %3530 = vrot.lane.b32.xlu0 %v3526, 32
    %v3531 = vpop.permute.xlu0 %3530
    %3532 = vrot.lane.b32.xlu0 %v3527, 32
    %v3533 = vpop.permute.xlu0 %3532
    %v3536 = vadd.f32 %v3516, %v3531
    %v3537 = vadd.f32 %v3517, %v3533
    %v3538 = vtanh.pop %v3536
    %v3539 = vtanh.pop %v3537
    %3542 = vrot.lane.b32.xlu0 %v3538, 32
    %v3543 = vpop.permute.xlu0 %3542
    %3544 = vrot.lane.b32.xlu0 %v3539, 32
    %v3545 = vpop.permute.xlu0 %3544
    %v3548 = vmul.f32 %v3511, %v3543
    %v3549 = vmul.f32 %v3513, %v3545
    %3552 = vrot.lane.b32.xlu0 %v3548, 64
    %v3553 = vpop.permute.xlu0 %3552
    %3554 = vrot.lane.b32.xlu0 %v3549, 64
    %v3555 = vpop.permute.xlu0 %3554
    %v3556 = vsel %vm2380, %v3553, 0
    %v3558 = vsel %vm2380, %v3555, 0
    %3560 = vmatprep.subr.mxu0 0.0
    %3561 = vmatpush1.msra.mxu0 0.0
    %3562 = vmatprep.subr.mxu0 0.0
    %3563 = vmatpush1.msra.mxu0 0.0
    %3564 = vmatprep.subr.mxu0 0.0
    %3565 = vmatpush1.msra.mxu0 0.0
    %3566 = vmatprep.subr.mxu0 0.0
    %3567 = vmatpush1.msra.mxu0 0.0
    %3568 = vmatprep.subr.mxu0 0.0
    %3569 = vmatpush1.msra.mxu0 0.0
    %3570 = vmatprep.subr.mxu0 0.0
    %3571 = vmatpush1.msra.mxu0 0.0
    %3572 = vmatprep.subr.mxu0 0.0
    %3573 = vmatpush1.msra.mxu0 0.0
    %3574 = vmatprep.subr.mxu0 0.0
    %3575 = vmatpush1.msra.mxu0 0.0
    %3576 = vmatprep.subr.mxu0 0.0
    %3577 = vmatpush1.msra.mxu0 0.0
    %3578 = vmatprep.subr.mxu0 0.0
    %3579 = vmatpush1.msra.mxu0 0.0
    %3580 = vmatprep.subr.mxu0 0.0
    %3581 = vmatpush1.msra.mxu0 0.0
    %3582 = vmatprep.subr.mxu0 0.0
    %3583 = vmatpush1.msra.mxu0 0.0
    %3584 = vmatprep.subr.mxu0 0.0
    %v3585 = vand.u32 %v2363, 4294901760
    %3586 = vmatpush1.msra.mxu0 %v3585
    %3587 = vmatprep.subr.mxu0 0.0
    %v3588 = vand.u32 %v2362, 4294901760
    %3589 = vmatpush1.msra.mxu0 %v3588
    %3590 = vmatprep.subr.mxu0 0.0
    %v3591 = vand.u32 %v2361, 4294901760
    %3592 = vmatpush1.msra.mxu0 %v3591
    %3593 = vmatprep.subr.mxu0 0.0
    %v3594 = vand.u32 %v2360, 4294901760
    %3595 = vmatpush1.msra.mxu0 %v3594
    %3596 = vmatprep.subr.mxu0 0.0
    %3597 = vmatpush2.msra.mxu0 0.0
    %3598 = vmatprep.subr.mxu0 0.0
    %3599 = vmatpush2.msra.mxu0 0.0
    %3600 = vmatprep.subr.mxu0 0.0
    %3601 = vmatpush2.msra.mxu0 0.0
    %3602 = vmatprep.subr.mxu0 0.0
    %3603 = vmatpush2.msra.mxu0 0.0
    %3604 = vmatprep.subr.mxu0 0.0
    %3605 = vmatpush2.msra.mxu0 0.0
    %3606 = vmatprep.subr.mxu0 0.0
    %3607 = vmatpush2.msra.mxu0 0.0
    %3608 = vmatprep.subr.mxu0 0.0
    %3609 = vmatpush2.msra.mxu0 0.0
    %3610 = vmatprep.subr.mxu0 0.0
    %3611 = vmatpush2.msra.mxu0 0.0
    %3612 = vmatprep.subr.mxu0 0.0
    %3613 = vmatpush2.msra.mxu0 0.0
    %3614 = vmatprep.subr.mxu0 0.0
    %3615 = vmatpush2.msra.mxu0 0.0
    %3616 = vmatprep.subr.mxu0 0.0
    %3617 = vmatpush2.msra.mxu0 0.0
    %3618 = vmatprep.subr.mxu0 0.0
    %3619 = vmatpush2.msra.mxu0 0.0
    %3620 = vmatprep.subr.mxu0 0.0
    %3621 = vmatpush2.msra.mxu0 0.0
    %3622 = vmatprep.subr.mxu0 0.0
    %3623 = vmatpush2.msra.mxu0 0.0
    %3624 = vmatprep.subr.mxu0 0.0
    %3625 = vmatpush2.msra.mxu0 0.0
    %3626 = vmatprep.subr.mxu0 0.0
    %3627 = vmatpush2.msra.mxu0 0.0
    %3628 = vmatprep.mubr.f32.mxu0 0.0
    %v3629 = vand.u32 %v3556, 4294901760
    %v3630 = vsub.f32 %v3556, %v3629
    %v3631 = vand.u32 %v3630, 4294901760
    %v3632 = vsub.f32 %v3630, %v3631
    %v3633 = vand.u32 %v3632, 4294901760
    %3634 = vmatmul.mubr.f32.gmra.mxu0 %v3633
    %v3635 = vpop.f32.mrf.mxu0
    %v3636 = vadd.f32 0.0, %v3635
    %v3637 = vpop.f32.mrf.mxu0
    %3638 = vmatprep.mubr.f32.mxu0 0.0
    %v3639 = vand.u32 %v3558, 4294901760
    %v3640 = vsub.f32 %v3558, %v3639
    %v3641 = vand.u32 %v3640, 4294901760
    %v3642 = vsub.f32 %v3640, %v3641
    %v3643 = vand.u32 %v3642, 4294901760
    %3644 = vmatmul.mubr.f32.gmra.mxu0 %v3643
    %v3645 = vpop.f32.mrf.mxu0
    %v3646 = vadd.f32 0.0, %v3645
    %v3647 = vpop.f32.mrf.mxu0
    %3648 = vdwg.mxu0
    %3649 = vmatprep.subr.mxu0 0.0
    %3650 = vmatpush1.msra.mxu0 0.0
    %3651 = vmatprep.subr.mxu0 0.0
    %3652 = vmatpush1.msra.mxu0 0.0
    %3653 = vmatprep.subr.mxu0 0.0
    %3654 = vmatpush1.msra.mxu0 0.0
    %3655 = vmatprep.subr.mxu0 0.0
    %3656 = vmatpush1.msra.mxu0 0.0
    %3657 = vmatprep.subr.mxu0 0.0
    %3658 = vmatpush1.msra.mxu0 0.0
    %3659 = vmatprep.subr.mxu0 0.0
    %3660 = vmatpush1.msra.mxu0 0.0
    %3661 = vmatprep.subr.mxu0 0.0
    %3662 = vmatpush1.msra.mxu0 0.0
    %3663 = vmatprep.subr.mxu0 0.0
    %3664 = vmatpush1.msra.mxu0 0.0
    %3665 = vmatprep.subr.mxu0 0.0
    %3666 = vmatpush1.msra.mxu0 0.0
    %3667 = vmatprep.subr.mxu0 0.0
    %3668 = vmatpush1.msra.mxu0 0.0
    %3669 = vmatprep.subr.mxu0 0.0
    %3670 = vmatpush1.msra.mxu0 0.0
    %3671 = vmatprep.subr.mxu0 0.0
    %3672 = vmatpush1.msra.mxu0 0.0
    %3673 = vmatprep.subr.mxu0 0.0
    %v3674 = vand.u32 %v2363, 4294901760
    %v3675 = vsub.f32 %v2363, %v3674
    %v3676 = vand.u32 %v3675, 4294901760
    %v3677 = vsub.f32 %v3675, %v3676
    %v3678 = vand.u32 %v3677, 4294901760
    %3679 = vmatpush1.msra.mxu0 %v3678
    %3680 = vmatprep.subr.mxu0 0.0
    %v3681 = vand.u32 %v2362, 4294901760
    %v3682 = vsub.f32 %v2362, %v3681
    %v3683 = vand.u32 %v3682, 4294901760
    %v3684 = vsub.f32 %v3682, %v3683
    %v3685 = vand.u32 %v3684, 4294901760
    %3686 = vmatpush1.msra.mxu0 %v3685
    %3687 = vmatprep.subr.mxu0 0.0
    %v3688 = vand.u32 %v2361, 4294901760
    %v3689 = vsub.f32 %v2361, %v3688
    %v3690 = vand.u32 %v3689, 4294901760
    %v3691 = vsub.f32 %v3689, %v3690
    %v3692 = vand.u32 %v3691, 4294901760
    %3693 = vmatpush1.msra.mxu0 %v3692
    %3694 = vmatprep.subr.mxu0 0.0
    %v3695 = vand.u32 %v2360, 4294901760
    %v3696 = vsub.f32 %v2360, %v3695
    %v3697 = vand.u32 %v3696, 4294901760
    %v3698 = vsub.f32 %v3696, %v3697
    %v3699 = vand.u32 %v3698, 4294901760
    %3700 = vmatpush1.msra.mxu0 %v3699
    %3701 = vmatprep.subr.mxu0 0.0
    %3702 = vmatpush2.msra.mxu0 0.0
    %3703 = vmatprep.subr.mxu0 0.0
    %3704 = vmatpush2.msra.mxu0 0.0
    %3705 = vmatprep.subr.mxu0 0.0
    %3706 = vmatpush2.msra.mxu0 0.0
    %3707 = vmatprep.subr.mxu0 0.0
    %3708 = vmatpush2.msra.mxu0 0.0
    %3709 = vmatprep.subr.mxu0 0.0
    %3710 = vmatpush2.msra.mxu0 0.0
    %3711 = vmatprep.subr.mxu0 0.0
    %3712 = vmatpush2.msra.mxu0 0.0
    %3713 = vmatprep.subr.mxu0 0.0
    %3714 = vmatpush2.msra.mxu0 0.0
    %3715 = vmatprep.subr.mxu0 0.0
    %3716 = vmatpush2.msra.mxu0 0.0
    %3717 = vmatprep.subr.mxu0 0.0
    %3718 = vmatpush2.msra.mxu0 0.0
    %3719 = vmatprep.subr.mxu0 0.0
    %3720 = vmatpush2.msra.mxu0 0.0
    %3721 = vmatprep.subr.mxu0 0.0
    %3722 = vmatpush2.msra.mxu0 0.0
    %3723 = vmatprep.subr.mxu0 0.0
    %3724 = vmatpush2.msra.mxu0 0.0
    %3725 = vmatprep.subr.mxu0 0.0
    %3726 = vmatpush2.msra.mxu0 0.0
    %3727 = vmatprep.subr.mxu0 0.0
    %3728 = vmatpush2.msra.mxu0 0.0
    %3729 = vmatprep.subr.mxu0 0.0
    %3730 = vmatpush2.msra.mxu0 0.0
    %3731 = vmatprep.subr.mxu0 0.0
    %3732 = vmatpush2.msra.mxu0 0.0
    %3733 = vmatprep.mubr.f32.mxu0 0.0
    %v3734 = vand.u32 %v3556, 4294901760
    %3735 = vmatmul.mubr.f32.gmra.mxu0 %v3734
    %v3736 = vpop.f32.mrf.mxu0
    %v3737 = vadd.f32 %v3636, %v3736
    %v3738 = vpop.f32.mrf.mxu0
    %3739 = vmatprep.mubr.f32.mxu0 0.0
    %v3740 = vand.u32 %v3558, 4294901760
    %3741 = vmatmul.mubr.f32.gmra.mxu0 %v3740
    %v3742 = vpop.f32.mrf.mxu0
    %v3743 = vadd.f32 %v3646, %v3742
    %v3744 = vpop.f32.mrf.mxu0
    %3745 = vdwg.mxu0
    %3746 = vmatprep.subr.mxu0 0.0
    %3747 = vmatpush1.msra.mxu0 0.0
    %3748 = vmatprep.subr.mxu0 0.0
    %3749 = vmatpush1.msra.mxu0 0.0
    %3750 = vmatprep.subr.mxu0 0.0
    %3751 = vmatpush1.msra.mxu0 0.0
    %3752 = vmatprep.subr.mxu0 0.0
    %3753 = vmatpush1.msra.mxu0 0.0
    %3754 = vmatprep.subr.mxu0 0.0
    %3755 = vmatpush1.msra.mxu0 0.0
    %3756 = vmatprep.subr.mxu0 0.0
    %3757 = vmatpush1.msra.mxu0 0.0
    %3758 = vmatprep.subr.mxu0 0.0
    %3759 = vmatpush1.msra.mxu0 0.0
    %3760 = vmatprep.subr.mxu0 0.0
    %3761 = vmatpush1.msra.mxu0 0.0
    %3762 = vmatprep.subr.mxu0 0.0
    %3763 = vmatpush1.msra.mxu0 0.0
    %3764 = vmatprep.subr.mxu0 0.0
    %3765 = vmatpush1.msra.mxu0 0.0
    %3766 = vmatprep.subr.mxu0 0.0
    %3767 = vmatpush1.msra.mxu0 0.0
    %3768 = vmatprep.subr.mxu0 0.0
    %3769 = vmatpush1.msra.mxu0 0.0
    %3770 = vmatprep.subr.mxu0 0.0
    %v3771 = vand.u32 %v2363, 4294901760
    %v3772 = vsub.f32 %v2363, %v3771
    %3773 = vmatpush1.msra.mxu0 %v3772
    %3774 = vmatprep.subr.mxu0 0.0
    %v3775 = vand.u32 %v2362, 4294901760
    %v3776 = vsub.f32 %v2362, %v3775
    %3777 = vmatpush1.msra.mxu0 %v3776
    %3778 = vmatprep.subr.mxu0 0.0
    %v3779 = vand.u32 %v2361, 4294901760
    %v3780 = vsub.f32 %v2361, %v3779
    %3781 = vmatpush1.msra.mxu0 %v3780
    %3782 = vmatprep.subr.mxu0 0.0
    %v3783 = vand.u32 %v2360, 4294901760
    %v3784 = vsub.f32 %v2360, %v3783
    %3785 = vmatpush1.msra.mxu0 %v3784
    %3786 = vmatprep.subr.mxu0 0.0
    %3787 = vmatpush2.msra.mxu0 0.0
    %3788 = vmatprep.subr.mxu0 0.0
    %3789 = vmatpush2.msra.mxu0 0.0
    %3790 = vmatprep.subr.mxu0 0.0
    %3791 = vmatpush2.msra.mxu0 0.0
    %3792 = vmatprep.subr.mxu0 0.0
    %3793 = vmatpush2.msra.mxu0 0.0
    %3794 = vmatprep.subr.mxu0 0.0
    %3795 = vmatpush2.msra.mxu0 0.0
    %3796 = vmatprep.subr.mxu0 0.0
    %3797 = vmatpush2.msra.mxu0 0.0
    %3798 = vmatprep.subr.mxu0 0.0
    %3799 = vmatpush2.msra.mxu0 0.0
    %3800 = vmatprep.subr.mxu0 0.0
    %3801 = vmatpush2.msra.mxu0 0.0
    %3802 = vmatprep.subr.mxu0 0.0
    %3803 = vmatpush2.msra.mxu0 0.0
    %3804 = vmatprep.subr.mxu0 0.0
    %3805 = vmatpush2.msra.mxu0 0.0
    %3806 = vmatprep.subr.mxu0 0.0
    %3807 = vmatpush2.msra.mxu0 0.0
    %3808 = vmatprep.subr.mxu0 0.0
    %3809 = vmatpush2.msra.mxu0 0.0
    %3810 = vmatprep.subr.mxu0 0.0
    %3811 = vmatpush2.msra.mxu0 0.0
    %3812 = vmatprep.subr.mxu0 0.0
    %3813 = vmatpush2.msra.mxu0 0.0
    %3814 = vmatprep.subr.mxu0 0.0
    %3815 = vmatpush2.msra.mxu0 0.0
    %3816 = vmatprep.subr.mxu0 0.0
    %3817 = vmatpush2.msra.mxu0 0.0
    %3818 = vmatprep.mubr.f32.mxu0 0.0
    %v3819 = vand.u32 %v3556, 4294901760
    %v3820 = vsub.f32 %v3556, %v3819
    %3821 = vmatmul.mubr.f32.gmra.mxu0 %v3820
    %v3822 = vpop.f32.mrf.mxu0
    %v3823 = vadd.f32 %v3737, %v3822
    %v3824 = vpop.f32.mrf.mxu0
    %3825 = vmatprep.mubr.f32.mxu0 0.0
    %v3826 = vand.u32 %v3558, 4294901760
    %v3827 = vsub.f32 %v3558, %v3826
    %3828 = vmatmul.mubr.f32.gmra.mxu0 %v3827
    %v3829 = vpop.f32.mrf.mxu0
    %v3830 = vadd.f32 %v3743, %v3829
    %v3831 = vpop.f32.mrf.mxu0
    %3832 = vdwg.mxu0
    %3833 = vmatprep.subr.mxu0 0.0
    %3834 = vmatpush1.msra.mxu0 0.0
    %3835 = vmatprep.subr.mxu0 0.0
    %3836 = vmatpush1.msra.mxu0 0.0
    %3837 = vmatprep.subr.mxu0 0.0
    %3838 = vmatpush1.msra.mxu0 0.0
    %3839 = vmatprep.subr.mxu0 0.0
    %3840 = vmatpush1.msra.mxu0 0.0
    %3841 = vmatprep.subr.mxu0 0.0
    %3842 = vmatpush1.msra.mxu0 0.0
    %3843 = vmatprep.subr.mxu0 0.0
    %3844 = vmatpush1.msra.mxu0 0.0
    %3845 = vmatprep.subr.mxu0 0.0
    %3846 = vmatpush1.msra.mxu0 0.0
    %3847 = vmatprep.subr.mxu0 0.0
    %3848 = vmatpush1.msra.mxu0 0.0
    %3849 = vmatprep.subr.mxu0 0.0
    %3850 = vmatpush1.msra.mxu0 0.0
    %3851 = vmatprep.subr.mxu0 0.0
    %3852 = vmatpush1.msra.mxu0 0.0
    %3853 = vmatprep.subr.mxu0 0.0
    %3854 = vmatpush1.msra.mxu0 0.0
    %3855 = vmatprep.subr.mxu0 0.0
    %3856 = vmatpush1.msra.mxu0 0.0
    %3857 = vmatprep.subr.mxu0 0.0
    %v3858 = vand.u32 %v2363, 4294901760
    %3859 = vmatpush1.msra.mxu0 %v3858
    %3860 = vmatprep.subr.mxu0 0.0
    %v3861 = vand.u32 %v2362, 4294901760
    %3862 = vmatpush1.msra.mxu0 %v3861
    %3863 = vmatprep.subr.mxu0 0.0
    %v3864 = vand.u32 %v2361, 4294901760
    %3865 = vmatpush1.msra.mxu0 %v3864
    %3866 = vmatprep.subr.mxu0 0.0
    %v3867 = vand.u32 %v2360, 4294901760
    %3868 = vmatpush1.msra.mxu0 %v3867
    %3869 = vmatprep.subr.mxu0 0.0
    %3870 = vmatpush2.msra.mxu0 0.0
    %3871 = vmatprep.subr.mxu0 0.0
    %3872 = vmatpush2.msra.mxu0 0.0
    %3873 = vmatprep.subr.mxu0 0.0
    %3874 = vmatpush2.msra.mxu0 0.0
    %3875 = vmatprep.subr.mxu0 0.0
    %3876 = vmatpush2.msra.mxu0 0.0
    %3877 = vmatprep.subr.mxu0 0.0
    %3878 = vmatpush2.msra.mxu0 0.0
    %3879 = vmatprep.subr.mxu0 0.0
    %3880 = vmatpush2.msra.mxu0 0.0
    %3881 = vmatprep.subr.mxu0 0.0
    %3882 = vmatpush2.msra.mxu0 0.0
    %3883 = vmatprep.subr.mxu0 0.0
    %3884 = vmatpush2.msra.mxu0 0.0
    %3885 = vmatprep.subr.mxu0 0.0
    %3886 = vmatpush2.msra.mxu0 0.0
    %3887 = vmatprep.subr.mxu0 0.0
    %3888 = vmatpush2.msra.mxu0 0.0
    %3889 = vmatprep.subr.mxu0 0.0
    %3890 = vmatpush2.msra.mxu0 0.0
    %3891 = vmatprep.subr.mxu0 0.0
    %3892 = vmatpush2.msra.mxu0 0.0
    %3893 = vmatprep.subr.mxu0 0.0
    %3894 = vmatpush2.msra.mxu0 0.0
    %3895 = vmatprep.subr.mxu0 0.0
    %3896 = vmatpush2.msra.mxu0 0.0
    %3897 = vmatprep.subr.mxu0 0.0
    %3898 = vmatpush2.msra.mxu0 0.0
    %3899 = vmatprep.subr.mxu0 0.0
    %3900 = vmatpush2.msra.mxu0 0.0
    %3901 = vmatprep.mubr.f32.mxu0 0.0
    %v3902 = vand.u32 %v3556, 4294901760
    %v3903 = vsub.f32 %v3556, %v3902
    %v3904 = vand.u32 %v3903, 4294901760
    %3905 = vmatmul.mubr.f32.gmra.mxu0 %v3904
    %v3906 = vpop.f32.mrf.mxu0
    %v3907 = vadd.f32 %v3823, %v3906
    %v3908 = vpop.f32.mrf.mxu0
    %3909 = vmatprep.mubr.f32.mxu0 0.0
    %v3910 = vand.u32 %v3558, 4294901760
    %v3911 = vsub.f32 %v3558, %v3910
    %v3912 = vand.u32 %v3911, 4294901760
    %3913 = vmatmul.mubr.f32.gmra.mxu0 %v3912
    %v3914 = vpop.f32.mrf.mxu0
    %v3915 = vadd.f32 %v3830, %v3914
    %v3916 = vpop.f32.mrf.mxu0
    %3917 = vdwg.mxu0
    %3918 = vmatprep.subr.mxu0 0.0
    %3919 = vmatpush1.msra.mxu0 0.0
    %3920 = vmatprep.subr.mxu0 0.0
    %3921 = vmatpush1.msra.mxu0 0.0
    %3922 = vmatprep.subr.mxu0 0.0
    %3923 = vmatpush1.msra.mxu0 0.0
    %3924 = vmatprep.subr.mxu0 0.0
    %3925 = vmatpush1.msra.mxu0 0.0
    %3926 = vmatprep.subr.mxu0 0.0
    %3927 = vmatpush1.msra.mxu0 0.0
    %3928 = vmatprep.subr.mxu0 0.0
    %3929 = vmatpush1.msra.mxu0 0.0
    %3930 = vmatprep.subr.mxu0 0.0
    %3931 = vmatpush1.msra.mxu0 0.0
    %3932 = vmatprep.subr.mxu0 0.0
    %3933 = vmatpush1.msra.mxu0 0.0
    %3934 = vmatprep.subr.mxu0 0.0
    %3935 = vmatpush1.msra.mxu0 0.0
    %3936 = vmatprep.subr.mxu0 0.0
    %3937 = vmatpush1.msra.mxu0 0.0
    %3938 = vmatprep.subr.mxu0 0.0
    %3939 = vmatpush1.msra.mxu0 0.0
    %3940 = vmatprep.subr.mxu0 0.0
    %3941 = vmatpush1.msra.mxu0 0.0
    %3942 = vmatprep.subr.mxu0 0.0
    %v3943 = vand.u32 %v2363, 4294901760
    %v3944 = vsub.f32 %v2363, %v3943
    %v3945 = vand.u32 %v3944, 4294901760
    %3946 = vmatpush1.msra.mxu0 %v3945
    %3947 = vmatprep.subr.mxu0 0.0
    %v3948 = vand.u32 %v2362, 4294901760
    %v3949 = vsub.f32 %v2362, %v3948
    %v3950 = vand.u32 %v3949, 4294901760
    %3951 = vmatpush1.msra.mxu0 %v3950
    %3952 = vmatprep.subr.mxu0 0.0
    %v3953 = vand.u32 %v2361, 4294901760
    %v3954 = vsub.f32 %v2361, %v3953
    %v3955 = vand.u32 %v3954, 4294901760
    %3956 = vmatpush1.msra.mxu0 %v3955
    %3957 = vmatprep.subr.mxu0 0.0
    %v3958 = vand.u32 %v2360, 4294901760
    %v3959 = vsub.f32 %v2360, %v3958
    %v3960 = vand.u32 %v3959, 4294901760
    %3961 = vmatpush1.msra.mxu0 %v3960
    %3962 = vmatprep.subr.mxu0 0.0
    %3963 = vmatpush2.msra.mxu0 0.0
    %3964 = vmatprep.subr.mxu0 0.0
    %3965 = vmatpush2.msra.mxu0 0.0
    %3966 = vmatprep.subr.mxu0 0.0
    %3967 = vmatpush2.msra.mxu0 0.0
    %3968 = vmatprep.subr.mxu0 0.0
    %3969 = vmatpush2.msra.mxu0 0.0
    %3970 = vmatprep.subr.mxu0 0.0
    %3971 = vmatpush2.msra.mxu0 0.0
    %3972 = vmatprep.subr.mxu0 0.0
    %3973 = vmatpush2.msra.mxu0 0.0
    %3974 = vmatprep.subr.mxu0 0.0
    %3975 = vmatpush2.msra.mxu0 0.0
    %3976 = vmatprep.subr.mxu0 0.0
    %3977 = vmatpush2.msra.mxu0 0.0
    %3978 = vmatprep.subr.mxu0 0.0
    %3979 = vmatpush2.msra.mxu0 0.0
    %3980 = vmatprep.subr.mxu0 0.0
    %3981 = vmatpush2.msra.mxu0 0.0
    %3982 = vmatprep.subr.mxu0 0.0
    %3983 = vmatpush2.msra.mxu0 0.0
    %3984 = vmatprep.subr.mxu0 0.0
    %3985 = vmatpush2.msra.mxu0 0.0
    %3986 = vmatprep.subr.mxu0 0.0
    %3987 = vmatpush2.msra.mxu0 0.0
    %3988 = vmatprep.subr.mxu0 0.0
    %3989 = vmatpush2.msra.mxu0 0.0
    %3990 = vmatprep.subr.mxu0 0.0
    %3991 = vmatpush2.msra.mxu0 0.0
    %3992 = vmatprep.subr.mxu0 0.0
    %3993 = vmatpush2.msra.mxu0 0.0
    %3994 = vmatprep.mubr.f32.mxu0 0.0
    %v3995 = vand.u32 %v3556, 4294901760
    %3996 = vmatmul.mubr.f32.gmra.mxu0 %v3995
    %v3997 = vpop.f32.mrf.mxu0
    %v3998 = vadd.f32 %v3907, %v3997
    %v3999 = vpop.f32.mrf.mxu0
    %4000 = vmatprep.mubr.f32.mxu0 0.0
    %v4001 = vand.u32 %v3558, 4294901760
    %4002 = vmatmul.mubr.f32.gmra.mxu0 %v4001
    %v4003 = vpop.f32.mrf.mxu0
    %v4004 = vadd.f32 %v3915, %v4003
    %v4005 = vpop.f32.mrf.mxu0
    %4006 = vdwg.mxu0
    %4007 = vmatprep.subr.mxu0 0.0
    %4008 = vmatpush1.msra.mxu0 0.0
    %4009 = vmatprep.subr.mxu0 0.0
    %4010 = vmatpush1.msra.mxu0 0.0
    %4011 = vmatprep.subr.mxu0 0.0
    %4012 = vmatpush1.msra.mxu0 0.0
    %4013 = vmatprep.subr.mxu0 0.0
    %4014 = vmatpush1.msra.mxu0 0.0
    %4015 = vmatprep.subr.mxu0 0.0
    %4016 = vmatpush1.msra.mxu0 0.0
    %4017 = vmatprep.subr.mxu0 0.0
    %4018 = vmatpush1.msra.mxu0 0.0
    %4019 = vmatprep.subr.mxu0 0.0
    %4020 = vmatpush1.msra.mxu0 0.0
    %4021 = vmatprep.subr.mxu0 0.0
    %4022 = vmatpush1.msra.mxu0 0.0
    %4023 = vmatprep.subr.mxu0 0.0
    %4024 = vmatpush1.msra.mxu0 0.0
    %4025 = vmatprep.subr.mxu0 0.0
    %4026 = vmatpush1.msra.mxu0 0.0
    %4027 = vmatprep.subr.mxu0 0.0
    %4028 = vmatpush1.msra.mxu0 0.0
    %4029 = vmatprep.subr.mxu0 0.0
    %4030 = vmatpush1.msra.mxu0 0.0
    %4031 = vmatprep.subr.mxu0 0.0
    %v4032 = vand.u32 %v2363, 4294901760
    %4033 = vmatpush1.msra.mxu0 %v4032
    %4034 = vmatprep.subr.mxu0 0.0
    %v4035 = vand.u32 %v2362, 4294901760
    %4036 = vmatpush1.msra.mxu0 %v4035
    %4037 = vmatprep.subr.mxu0 0.0
    %v4038 = vand.u32 %v2361, 4294901760
    %4039 = vmatpush1.msra.mxu0 %v4038
    %4040 = vmatprep.subr.mxu0 0.0
    %v4041 = vand.u32 %v2360, 4294901760
    %4042 = vmatpush1.msra.mxu0 %v4041
    %4043 = vmatprep.subr.mxu0 0.0
    %4044 = vmatpush2.msra.mxu0 0.0
    %4045 = vmatprep.subr.mxu0 0.0
    %4046 = vmatpush2.msra.mxu0 0.0
    %4047 = vmatprep.subr.mxu0 0.0
    %4048 = vmatpush2.msra.mxu0 0.0
    %4049 = vmatprep.subr.mxu0 0.0
    %4050 = vmatpush2.msra.mxu0 0.0
    %4051 = vmatprep.subr.mxu0 0.0
    %4052 = vmatpush2.msra.mxu0 0.0
    %4053 = vmatprep.subr.mxu0 0.0
    %4054 = vmatpush2.msra.mxu0 0.0
    %4055 = vmatprep.subr.mxu0 0.0
    %4056 = vmatpush2.msra.mxu0 0.0
    %4057 = vmatprep.subr.mxu0 0.0
    %4058 = vmatpush2.msra.mxu0 0.0
    %4059 = vmatprep.subr.mxu0 0.0
    %4060 = vmatpush2.msra.mxu0 0.0
    %4061 = vmatprep.subr.mxu0 0.0
    %4062 = vmatpush2.msra.mxu0 0.0
    %4063 = vmatprep.subr.mxu0 0.0
    %4064 = vmatpush2.msra.mxu0 0.0
    %4065 = vmatprep.subr.mxu0 0.0
    %4066 = vmatpush2.msra.mxu0 0.0
    %4067 = vmatprep.subr.mxu0 0.0
    %4068 = vmatpush2.msra.mxu0 0.0
    %4069 = vmatprep.subr.mxu0 0.0
    %4070 = vmatpush2.msra.mxu0 0.0
    %4071 = vmatprep.subr.mxu0 0.0
    %4072 = vmatpush2.msra.mxu0 0.0
    %4073 = vmatprep.subr.mxu0 0.0
    %4074 = vmatpush2.msra.mxu0 0.0
    %4075 = vmatprep.mubr.f32.mxu0 0.0
    %v4076 = vand.u32 %v3556, 4294901760
    %4077 = vmatmul.mubr.f32.gmra.mxu0 %v4076
    %v4078 = vpop.f32.mrf.mxu0
    %v4079 = vadd.f32 %v3998, %v4078
    %v4080 = vpop.f32.mrf.mxu0
    %4081 = vmatprep.mubr.f32.mxu0 0.0
    %v4082 = vand.u32 %v3558, 4294901760
    %4083 = vmatmul.mubr.f32.gmra.mxu0 %v4082
    %v4084 = vpop.f32.mrf.mxu0
    %v4085 = vadd.f32 %v4004, %v4084
    %v4086 = vpop.f32.mrf.mxu0
    %4087 = vdwg.mxu0
    %v4088 = vadd.f32 %v2368, %v4079
    %v4089 = vadd.f32 %v2369, %v4085
    %v4090 = vxor.u32 %v4088, 2147483648
    %v4091 = vxor.u32 %v4089, 2147483648
    %v4092 = vmul.f32 %v4090, 1.442695
    %v4093 = vpow.pop %v4092
    %v4094 = vmul.f32 %v4091, 1.442695
    %v4095 = vpow.pop %v4094
    %v4096 = vadd.f32 %v4093, 1.0
    %v4097 = vadd.f32 %v4095, 1.0
    %v4098 = vrcp.pop %v4096
    %v4099 = vmul.f32 1.0, %v4098
    %v4100 = vrcp.pop %v4097
    %v4101 = vmul.f32 1.0, %v4100
    %v4102 = vtanh.pop %v4088
    %v4103 = vtanh.pop %v4089
    %v4104 = vmul.f32 %v4099, %v3536
    %v4105 = vmul.f32 %v4101, %v3537
    %4108 = vrot.lane.b32.xlu0 %v4102, 32
    %v4109 = vpop.permute.xlu0 %4108
    %4110 = vrot.lane.b32.xlu0 %v4103, 32
    %v4111 = vpop.permute.xlu0 %4110
    %v4114 = vmul.f32 %v4099, %v4109
    %v4115 = vmul.f32 %v4101, %v4111
    %4118 = vrot.lane.b32.xlu0 %v4114, 32
    %v4119 = vpop.permute.xlu0 %4118
    %4120 = vrot.lane.b32.xlu0 %v4115, 32
    %v4121 = vpop.permute.xlu0 %4120
    %v4124 = vadd.f32 %v4104, %v4119
    %v4125 = vadd.f32 %v4105, %v4121
    %v4126 = vtanh.pop %v4124
    %v4127 = vtanh.pop %v4125
    %4130 = vrot.lane.b32.xlu0 %v4126, 32
    %v4131 = vpop.permute.xlu0 %4130
    %4132 = vrot.lane.b32.xlu0 %v4127, 32
    %v4133 = vpop.permute.xlu0 %4132
    %v4136 = vmul.f32 %v4099, %v4131
    %v4137 = vmul.f32 %v4101, %v4133
    %4140 = vrot.lane.b32.xlu0 %v4136, 64
    %v4141 = vpop.permute.xlu0 %4140
    %4142 = vrot.lane.b32.xlu0 %v4137, 64
    %v4143 = vpop.permute.xlu0 %4142
    %v4144 = vsel %vm2380, %v4141, 0
    %v4146 = vsel %vm2380, %v4143, 0
    %4148 = vmatprep.subr.mxu0 0.0
    %4149 = vmatpush1.msra.mxu0 0.0
    %4150 = vmatprep.subr.mxu0 0.0
    %4151 = vmatpush1.msra.mxu0 0.0
    %4152 = vmatprep.subr.mxu0 0.0
    %4153 = vmatpush1.msra.mxu0 0.0
    %4154 = vmatprep.subr.mxu0 0.0
    %4155 = vmatpush1.msra.mxu0 0.0
    %4156 = vmatprep.subr.mxu0 0.0
    %4157 = vmatpush1.msra.mxu0 0.0
    %4158 = vmatprep.subr.mxu0 0.0
    %4159 = vmatpush1.msra.mxu0 0.0
    %4160 = vmatprep.subr.mxu0 0.0
    %4161 = vmatpush1.msra.mxu0 0.0
    %4162 = vmatprep.subr.mxu0 0.0
    %4163 = vmatpush1.msra.mxu0 0.0
    %4164 = vmatprep.subr.mxu0 0.0
    %4165 = vmatpush1.msra.mxu0 0.0
    %4166 = vmatprep.subr.mxu0 0.0
    %4167 = vmatpush1.msra.mxu0 0.0
    %4168 = vmatprep.subr.mxu0 0.0
    %4169 = vmatpush1.msra.mxu0 0.0
    %4170 = vmatprep.subr.mxu0 0.0
    %4171 = vmatpush1.msra.mxu0 0.0
    %4172 = vmatprep.subr.mxu0 0.0
    %v4173 = vand.u32 %v2363, 4294901760
    %4174 = vmatpush1.msra.mxu0 %v4173
    %4175 = vmatprep.subr.mxu0 0.0
    %v4176 = vand.u32 %v2362, 4294901760
    %4177 = vmatpush1.msra.mxu0 %v4176
    %4178 = vmatprep.subr.mxu0 0.0
    %v4179 = vand.u32 %v2361, 4294901760
    %4180 = vmatpush1.msra.mxu0 %v4179
    %4181 = vmatprep.subr.mxu0 0.0
    %v4182 = vand.u32 %v2360, 4294901760
    %4183 = vmatpush1.msra.mxu0 %v4182
    %4184 = vmatprep.subr.mxu0 0.0
    %4185 = vmatpush2.msra.mxu0 0.0
    %4186 = vmatprep.subr.mxu0 0.0
    %4187 = vmatpush2.msra.mxu0 0.0
    %4188 = vmatprep.subr.mxu0 0.0
    %4189 = vmatpush2.msra.mxu0 0.0
    %4190 = vmatprep.subr.mxu0 0.0
    %4191 = vmatpush2.msra.mxu0 0.0
    %4192 = vmatprep.subr.mxu0 0.0
    %4193 = vmatpush2.msra.mxu0 0.0
    %4194 = vmatprep.subr.mxu0 0.0
    %4195 = vmatpush2.msra.mxu0 0.0
    %4196 = vmatprep.subr.mxu0 0.0
    %4197 = vmatpush2.msra.mxu0 0.0
    %4198 = vmatprep.subr.mxu0 0.0
    %4199 = vmatpush2.msra.mxu0 0.0
    %4200 = vmatprep.subr.mxu0 0.0
    %4201 = vmatpush2.msra.mxu0 0.0
    %4202 = vmatprep.subr.mxu0 0.0
    %4203 = vmatpush2.msra.mxu0 0.0
    %4204 = vmatprep.subr.mxu0 0.0
    %4205 = vmatpush2.msra.mxu0 0.0
    %4206 = vmatprep.subr.mxu0 0.0
    %4207 = vmatpush2.msra.mxu0 0.0
    %4208 = vmatprep.subr.mxu0 0.0
    %4209 = vmatpush2.msra.mxu0 0.0
    %4210 = vmatprep.subr.mxu0 0.0
    %4211 = vmatpush2.msra.mxu0 0.0
    %4212 = vmatprep.subr.mxu0 0.0
    %4213 = vmatpush2.msra.mxu0 0.0
    %4214 = vmatprep.subr.mxu0 0.0
    %4215 = vmatpush2.msra.mxu0 0.0
    %4216 = vmatprep.mubr.f32.mxu0 0.0
    %v4217 = vand.u32 %v4144, 4294901760
    %v4218 = vsub.f32 %v4144, %v4217
    %v4219 = vand.u32 %v4218, 4294901760
    %v4220 = vsub.f32 %v4218, %v4219
    %v4221 = vand.u32 %v4220, 4294901760
    %4222 = vmatmul.mubr.f32.gmra.mxu0 %v4221
    %v4223 = vpop.f32.mrf.mxu0
    %v4224 = vadd.f32 0.0, %v4223
    %v4225 = vpop.f32.mrf.mxu0
    %4226 = vmatprep.mubr.f32.mxu0 0.0
    %v4227 = vand.u32 %v4146, 4294901760
    %v4228 = vsub.f32 %v4146, %v4227
    %v4229 = vand.u32 %v4228, 4294901760
    %v4230 = vsub.f32 %v4228, %v4229
    %v4231 = vand.u32 %v4230, 4294901760
    %4232 = vmatmul.mubr.f32.gmra.mxu0 %v4231
    %v4233 = vpop.f32.mrf.mxu0
    %v4234 = vadd.f32 0.0, %v4233
    %v4235 = vpop.f32.mrf.mxu0
    %4236 = vdwg.mxu0
    %4237 = vmatprep.subr.mxu0 0.0
    %4238 = vmatpush1.msra.mxu0 0.0
    %4239 = vmatprep.subr.mxu0 0.0
    %4240 = vmatpush1.msra.mxu0 0.0
    %4241 = vmatprep.subr.mxu0 0.0
    %4242 = vmatpush1.msra.mxu0 0.0
    %4243 = vmatprep.subr.mxu0 0.0
    %4244 = vmatpush1.msra.mxu0 0.0
    %4245 = vmatprep.subr.mxu0 0.0
    %4246 = vmatpush1.msra.mxu0 0.0
    %4247 = vmatprep.subr.mxu0 0.0
    %4248 = vmatpush1.msra.mxu0 0.0
    %4249 = vmatprep.subr.mxu0 0.0
    %4250 = vmatpush1.msra.mxu0 0.0
    %4251 = vmatprep.subr.mxu0 0.0
    %4252 = vmatpush1.msra.mxu0 0.0
    %4253 = vmatprep.subr.mxu0 0.0
    %4254 = vmatpush1.msra.mxu0 0.0
    %4255 = vmatprep.subr.mxu0 0.0
    %4256 = vmatpush1.msra.mxu0 0.0
    %4257 = vmatprep.subr.mxu0 0.0
    %4258 = vmatpush1.msra.mxu0 0.0
    %4259 = vmatprep.subr.mxu0 0.0
    %4260 = vmatpush1.msra.mxu0 0.0
    %4261 = vmatprep.subr.mxu0 0.0
    %v4262 = vand.u32 %v2363, 4294901760
    %v4263 = vsub.f32 %v2363, %v4262
    %v4264 = vand.u32 %v4263, 4294901760
    %v4265 = vsub.f32 %v4263, %v4264
    %v4266 = vand.u32 %v4265, 4294901760
    %4267 = vmatpush1.msra.mxu0 %v4266
    %4268 = vmatprep.subr.mxu0 0.0
    %v4269 = vand.u32 %v2362, 4294901760
    %v4270 = vsub.f32 %v2362, %v4269
    %v4271 = vand.u32 %v4270, 4294901760
    %v4272 = vsub.f32 %v4270, %v4271
    %v4273 = vand.u32 %v4272, 4294901760
    %4274 = vmatpush1.msra.mxu0 %v4273
    %4275 = vmatprep.subr.mxu0 0.0
    %v4276 = vand.u32 %v2361, 4294901760
    %v4277 = vsub.f32 %v2361, %v4276
    %v4278 = vand.u32 %v4277, 4294901760
    %v4279 = vsub.f32 %v4277, %v4278
    %v4280 = vand.u32 %v4279, 4294901760
    %4281 = vmatpush1.msra.mxu0 %v4280
    %4282 = vmatprep.subr.mxu0 0.0
    %v4283 = vand.u32 %v2360, 4294901760
    %v4284 = vsub.f32 %v2360, %v4283
    %v4285 = vand.u32 %v4284, 4294901760
    %v4286 = vsub.f32 %v4284, %v4285
    %v4287 = vand.u32 %v4286, 4294901760
    %4288 = vmatpush1.msra.mxu0 %v4287
    %4289 = vmatprep.subr.mxu0 0.0
    %4290 = vmatpush2.msra.mxu0 0.0
    %4291 = vmatprep.subr.mxu0 0.0
    %4292 = vmatpush2.msra.mxu0 0.0
    %4293 = vmatprep.subr.mxu0 0.0
    %4294 = vmatpush2.msra.mxu0 0.0
    %4295 = vmatprep.subr.mxu0 0.0
    %4296 = vmatpush2.msra.mxu0 0.0
    %4297 = vmatprep.subr.mxu0 0.0
    %4298 = vmatpush2.msra.mxu0 0.0
    %4299 = vmatprep.subr.mxu0 0.0
    %4300 = vmatpush2.msra.mxu0 0.0
    %4301 = vmatprep.subr.mxu0 0.0
    %4302 = vmatpush2.msra.mxu0 0.0
    %4303 = vmatprep.subr.mxu0 0.0
    %4304 = vmatpush2.msra.mxu0 0.0
    %4305 = vmatprep.subr.mxu0 0.0
    %4306 = vmatpush2.msra.mxu0 0.0
    %4307 = vmatprep.subr.mxu0 0.0
    %4308 = vmatpush2.msra.mxu0 0.0
    %4309 = vmatprep.subr.mxu0 0.0
    %4310 = vmatpush2.msra.mxu0 0.0
    %4311 = vmatprep.subr.mxu0 0.0
    %4312 = vmatpush2.msra.mxu0 0.0
    %4313 = vmatprep.subr.mxu0 0.0
    %4314 = vmatpush2.msra.mxu0 0.0
    %4315 = vmatprep.subr.mxu0 0.0
    %4316 = vmatpush2.msra.mxu0 0.0
    %4317 = vmatprep.subr.mxu0 0.0
    %4318 = vmatpush2.msra.mxu0 0.0
    %4319 = vmatprep.subr.mxu0 0.0
    %4320 = vmatpush2.msra.mxu0 0.0
    %4321 = vmatprep.mubr.f32.mxu0 0.0
    %v4322 = vand.u32 %v4144, 4294901760
    %4323 = vmatmul.mubr.f32.gmra.mxu0 %v4322
    %v4324 = vpop.f32.mrf.mxu0
    %v4325 = vadd.f32 %v4224, %v4324
    %v4326 = vpop.f32.mrf.mxu0
    %4327 = vmatprep.mubr.f32.mxu0 0.0
    %v4328 = vand.u32 %v4146, 4294901760
    %4329 = vmatmul.mubr.f32.gmra.mxu0 %v4328
    %v4330 = vpop.f32.mrf.mxu0
    %v4331 = vadd.f32 %v4234, %v4330
    %v4332 = vpop.f32.mrf.mxu0
    %4333 = vdwg.mxu0
    %4334 = vmatprep.subr.mxu0 0.0
    %4335 = vmatpush1.msra.mxu0 0.0
    %4336 = vmatprep.subr.mxu0 0.0
    %4337 = vmatpush1.msra.mxu0 0.0
    %4338 = vmatprep.subr.mxu0 0.0
    %4339 = vmatpush1.msra.mxu0 0.0
    %4340 = vmatprep.subr.mxu0 0.0
    %4341 = vmatpush1.msra.mxu0 0.0
    %4342 = vmatprep.subr.mxu0 0.0
    %4343 = vmatpush1.msra.mxu0 0.0
    %4344 = vmatprep.subr.mxu0 0.0
    %4345 = vmatpush1.msra.mxu0 0.0
    %4346 = vmatprep.subr.mxu0 0.0
    %4347 = vmatpush1.msra.mxu0 0.0
    %4348 = vmatprep.subr.mxu0 0.0
    %4349 = vmatpush1.msra.mxu0 0.0
    %4350 = vmatprep.subr.mxu0 0.0
    %4351 = vmatpush1.msra.mxu0 0.0
    %4352 = vmatprep.subr.mxu0 0.0
    %4353 = vmatpush1.msra.mxu0 0.0
    %4354 = vmatprep.subr.mxu0 0.0
    %4355 = vmatpush1.msra.mxu0 0.0
    %4356 = vmatprep.subr.mxu0 0.0
    %4357 = vmatpush1.msra.mxu0 0.0
    %4358 = vmatprep.subr.mxu0 0.0
    %v4359 = vand.u32 %v2363, 4294901760
    %v4360 = vsub.f32 %v2363, %v4359
    %4361 = vmatpush1.msra.mxu0 %v4360
    %4362 = vmatprep.subr.mxu0 0.0
    %v4363 = vand.u32 %v2362, 4294901760
    %v4364 = vsub.f32 %v2362, %v4363
    %4365 = vmatpush1.msra.mxu0 %v4364
    %4366 = vmatprep.subr.mxu0 0.0
    %v4367 = vand.u32 %v2361, 4294901760
    %v4368 = vsub.f32 %v2361, %v4367
    %4369 = vmatpush1.msra.mxu0 %v4368
    %4370 = vmatprep.subr.mxu0 0.0
    %v4371 = vand.u32 %v2360, 4294901760
    %v4372 = vsub.f32 %v2360, %v4371
    %4373 = vmatpush1.msra.mxu0 %v4372
    %4374 = vmatprep.subr.mxu0 0.0
    %4375 = vmatpush2.msra.mxu0 0.0
    %4376 = vmatprep.subr.mxu0 0.0
    %4377 = vmatpush2.msra.mxu0 0.0
    %4378 = vmatprep.subr.mxu0 0.0
    %4379 = vmatpush2.msra.mxu0 0.0
    %4380 = vmatprep.subr.mxu0 0.0
    %4381 = vmatpush2.msra.mxu0 0.0
    %4382 = vmatprep.subr.mxu0 0.0
    %4383 = vmatpush2.msra.mxu0 0.0
    %4384 = vmatprep.subr.mxu0 0.0
    %4385 = vmatpush2.msra.mxu0 0.0
    %4386 = vmatprep.subr.mxu0 0.0
    %4387 = vmatpush2.msra.mxu0 0.0
    %4388 = vmatprep.subr.mxu0 0.0
    %4389 = vmatpush2.msra.mxu0 0.0
    %4390 = vmatprep.subr.mxu0 0.0
    %4391 = vmatpush2.msra.mxu0 0.0
    %4392 = vmatprep.subr.mxu0 0.0
    %4393 = vmatpush2.msra.mxu0 0.0
    %4394 = vmatprep.subr.mxu0 0.0
    %4395 = vmatpush2.msra.mxu0 0.0
    %4396 = vmatprep.subr.mxu0 0.0
    %4397 = vmatpush2.msra.mxu0 0.0
    %4398 = vmatprep.subr.mxu0 0.0
    %4399 = vmatpush2.msra.mxu0 0.0
    %4400 = vmatprep.subr.mxu0 0.0
    %4401 = vmatpush2.msra.mxu0 0.0
    %4402 = vmatprep.subr.mxu0 0.0
    %4403 = vmatpush2.msra.mxu0 0.0
    %4404 = vmatprep.subr.mxu0 0.0
    %4405 = vmatpush2.msra.mxu0 0.0
    %4406 = vmatprep.mubr.f32.mxu0 0.0
    %v4407 = vand.u32 %v4144, 4294901760
    %v4408 = vsub.f32 %v4144, %v4407
    %4409 = vmatmul.mubr.f32.gmra.mxu0 %v4408
    %v4410 = vpop.f32.mrf.mxu0
    %v4411 = vadd.f32 %v4325, %v4410
    %v4412 = vpop.f32.mrf.mxu0
    %4413 = vmatprep.mubr.f32.mxu0 0.0
    %v4414 = vand.u32 %v4146, 4294901760
    %v4415 = vsub.f32 %v4146, %v4414
    %4416 = vmatmul.mubr.f32.gmra.mxu0 %v4415
    %v4417 = vpop.f32.mrf.mxu0
    %v4418 = vadd.f32 %v4331, %v4417
    %v4419 = vpop.f32.mrf.mxu0
    %4420 = vdwg.mxu0
    %4421 = vmatprep.subr.mxu0 0.0
    %4422 = vmatpush1.msra.mxu0 0.0
    %4423 = vmatprep.subr.mxu0 0.0
    %4424 = vmatpush1.msra.mxu0 0.0
    %4425 = vmatprep.subr.mxu0 0.0
    %4426 = vmatpush1.msra.mxu0 0.0
    %4427 = vmatprep.subr.mxu0 0.0
    %4428 = vmatpush1.msra.mxu0 0.0
    %4429 = vmatprep.subr.mxu0 0.0
    %4430 = vmatpush1.msra.mxu0 0.0
    %4431 = vmatprep.subr.mxu0 0.0
    %4432 = vmatpush1.msra.mxu0 0.0
    %4433 = vmatprep.subr.mxu0 0.0
    %4434 = vmatpush1.msra.mxu0 0.0
    %4435 = vmatprep.subr.mxu0 0.0
    %4436 = vmatpush1.msra.mxu0 0.0
    %4437 = vmatprep.subr.mxu0 0.0
    %4438 = vmatpush1.msra.mxu0 0.0
    %4439 = vmatprep.subr.mxu0 0.0
    %4440 = vmatpush1.msra.mxu0 0.0
    %4441 = vmatprep.subr.mxu0 0.0
    %4442 = vmatpush1.msra.mxu0 0.0
    %4443 = vmatprep.subr.mxu0 0.0
    %4444 = vmatpush1.msra.mxu0 0.0
    %4445 = vmatprep.subr.mxu0 0.0
    %v4446 = vand.u32 %v2363, 4294901760
    %4447 = vmatpush1.msra.mxu0 %v4446
    %4448 = vmatprep.subr.mxu0 0.0
    %v4449 = vand.u32 %v2362, 4294901760
    %4450 = vmatpush1.msra.mxu0 %v4449
    %4451 = vmatprep.subr.mxu0 0.0
    %v4452 = vand.u32 %v2361, 4294901760
    %4453 = vmatpush1.msra.mxu0 %v4452
    %4454 = vmatprep.subr.mxu0 0.0
    %v4455 = vand.u32 %v2360, 4294901760
    %4456 = vmatpush1.msra.mxu0 %v4455
    %4457 = vmatprep.subr.mxu0 0.0
    %4458 = vmatpush2.msra.mxu0 0.0
    %4459 = vmatprep.subr.mxu0 0.0
    %4460 = vmatpush2.msra.mxu0 0.0
    %4461 = vmatprep.subr.mxu0 0.0
    %4462 = vmatpush2.msra.mxu0 0.0
    %4463 = vmatprep.subr.mxu0 0.0
    %4464 = vmatpush2.msra.mxu0 0.0
    %4465 = vmatprep.subr.mxu0 0.0
    %4466 = vmatpush2.msra.mxu0 0.0
    %4467 = vmatprep.subr.mxu0 0.0
    %4468 = vmatpush2.msra.mxu0 0.0
    %4469 = vmatprep.subr.mxu0 0.0
    %4470 = vmatpush2.msra.mxu0 0.0
    %4471 = vmatprep.subr.mxu0 0.0
    %4472 = vmatpush2.msra.mxu0 0.0
    %4473 = vmatprep.subr.mxu0 0.0
    %4474 = vmatpush2.msra.mxu0 0.0
    %4475 = vmatprep.subr.mxu0 0.0
    %4476 = vmatpush2.msra.mxu0 0.0
    %4477 = vmatprep.subr.mxu0 0.0
    %4478 = vmatpush2.msra.mxu0 0.0
    %4479 = vmatprep.subr.mxu0 0.0
    %4480 = vmatpush2.msra.mxu0 0.0
    %4481 = vmatprep.subr.mxu0 0.0
    %4482 = vmatpush2.msra.mxu0 0.0
    %4483 = vmatprep.subr.mxu0 0.0
    %4484 = vmatpush2.msra.mxu0 0.0
    %4485 = vmatprep.subr.mxu0 0.0
    %4486 = vmatpush2.msra.mxu0 0.0
    %4487 = vmatprep.subr.mxu0 0.0
    %4488 = vmatpush2.msra.mxu0 0.0
    %4489 = vmatprep.mubr.f32.mxu0 0.0
    %v4490 = vand.u32 %v4144, 4294901760
    %v4491 = vsub.f32 %v4144, %v4490
    %v4492 = vand.u32 %v4491, 4294901760
    %4493 = vmatmul.mubr.f32.gmra.mxu0 %v4492
    %v4494 = vpop.f32.mrf.mxu0
    %v4495 = vadd.f32 %v4411, %v4494
    %v4496 = vpop.f32.mrf.mxu0
    %4497 = vmatprep.mubr.f32.mxu0 0.0
    %v4498 = vand.u32 %v4146, 4294901760
    %v4499 = vsub.f32 %v4146, %v4498
    %v4500 = vand.u32 %v4499, 4294901760
    %4501 = vmatmul.mubr.f32.gmra.mxu0 %v4500
    %v4502 = vpop.f32.mrf.mxu0
    %v4503 = vadd.f32 %v4418, %v4502
    %v4504 = vpop.f32.mrf.mxu0
    %4505 = vdwg.mxu0
    %4506 = vmatprep.subr.mxu0 0.0
    %4507 = vmatpush1.msra.mxu0 0.0
    %4508 = vmatprep.subr.mxu0 0.0
    %4509 = vmatpush1.msra.mxu0 0.0
    %4510 = vmatprep.subr.mxu0 0.0
    %4511 = vmatpush1.msra.mxu0 0.0
    %4512 = vmatprep.subr.mxu0 0.0
    %4513 = vmatpush1.msra.mxu0 0.0
    %4514 = vmatprep.subr.mxu0 0.0
    %4515 = vmatpush1.msra.mxu0 0.0
    %4516 = vmatprep.subr.mxu0 0.0
    %4517 = vmatpush1.msra.mxu0 0.0
    %4518 = vmatprep.subr.mxu0 0.0
    %4519 = vmatpush1.msra.mxu0 0.0
    %4520 = vmatprep.subr.mxu0 0.0
    %4521 = vmatpush1.msra.mxu0 0.0
    %4522 = vmatprep.subr.mxu0 0.0
    %4523 = vmatpush1.msra.mxu0 0.0
    %4524 = vmatprep.subr.mxu0 0.0
    %4525 = vmatpush1.msra.mxu0 0.0
    %4526 = vmatprep.subr.mxu0 0.0
    %4527 = vmatpush1.msra.mxu0 0.0
    %4528 = vmatprep.subr.mxu0 0.0
    %4529 = vmatpush1.msra.mxu0 0.0
    %4530 = vmatprep.subr.mxu0 0.0
    %v4531 = vand.u32 %v2363, 4294901760
    %v4532 = vsub.f32 %v2363, %v4531
    %v4533 = vand.u32 %v4532, 4294901760
    %4534 = vmatpush1.msra.mxu0 %v4533
    %4535 = vmatprep.subr.mxu0 0.0
    %v4536 = vand.u32 %v2362, 4294901760
    %v4537 = vsub.f32 %v2362, %v4536
    %v4538 = vand.u32 %v4537, 4294901760
    %4539 = vmatpush1.msra.mxu0 %v4538
    %4540 = vmatprep.subr.mxu0 0.0
    %v4541 = vand.u32 %v2361, 4294901760
    %v4542 = vsub.f32 %v2361, %v4541
    %v4543 = vand.u32 %v4542, 4294901760
    %4544 = vmatpush1.msra.mxu0 %v4543
    %4545 = vmatprep.subr.mxu0 0.0
    %v4546 = vand.u32 %v2360, 4294901760
    %v4547 = vsub.f32 %v2360, %v4546
    %v4548 = vand.u32 %v4547, 4294901760
    %4549 = vmatpush1.msra.mxu0 %v4548
    %4550 = vmatprep.subr.mxu0 0.0
    %4551 = vmatpush2.msra.mxu0 0.0
    %4552 = vmatprep.subr.mxu0 0.0
    %4553 = vmatpush2.msra.mxu0 0.0
    %4554 = vmatprep.subr.mxu0 0.0
    %4555 = vmatpush2.msra.mxu0 0.0
    %4556 = vmatprep.subr.mxu0 0.0
    %4557 = vmatpush2.msra.mxu0 0.0
    %4558 = vmatprep.subr.mxu0 0.0
    %4559 = vmatpush2.msra.mxu0 0.0
    %4560 = vmatprep.subr.mxu0 0.0
    %4561 = vmatpush2.msra.mxu0 0.0
    %4562 = vmatprep.subr.mxu0 0.0
    %4563 = vmatpush2.msra.mxu0 0.0
    %4564 = vmatprep.subr.mxu0 0.0
    %4565 = vmatpush2.msra.mxu0 0.0
    %4566 = vmatprep.subr.mxu0 0.0
    %4567 = vmatpush2.msra.mxu0 0.0
    %4568 = vmatprep.subr.mxu0 0.0
    %4569 = vmatpush2.msra.mxu0 0.0
    %4570 = vmatprep.subr.mxu0 0.0
    %4571 = vmatpush2.msra.mxu0 0.0
    %4572 = vmatprep.subr.mxu0 0.0
    %4573 = vmatpush2.msra.mxu0 0.0
    %4574 = vmatprep.subr.mxu0 0.0
    %4575 = vmatpush2.msra.mxu0 0.0
    %4576 = vmatprep.subr.mxu0 0.0
    %4577 = vmatpush2.msra.mxu0 0.0
    %4578 = vmatprep.subr.mxu0 0.0
    %4579 = vmatpush2.msra.mxu0 0.0
    %4580 = vmatprep.subr.mxu0 0.0
    %4581 = vmatpush2.msra.mxu0 0.0
    %4582 = vmatprep.mubr.f32.mxu0 0.0
    %v4583 = vand.u32 %v4144, 4294901760
    %4584 = vmatmul.mubr.f32.gmra.mxu0 %v4583
    %v4585 = vpop.f32.mrf.mxu0
    %v4586 = vadd.f32 %v4495, %v4585
    %v4587 = vpop.f32.mrf.mxu0
    %4588 = vmatprep.mubr.f32.mxu0 0.0
    %v4589 = vand.u32 %v4146, 4294901760
    %4590 = vmatmul.mubr.f32.gmra.mxu0 %v4589
    %v4591 = vpop.f32.mrf.mxu0
    %v4592 = vadd.f32 %v4503, %v4591
    %v4593 = vpop.f32.mrf.mxu0
    %4594 = vdwg.mxu0
    %4595 = vmatprep.subr.mxu0 0.0
    %4596 = vmatpush1.msra.mxu0 0.0
    %4597 = vmatprep.subr.mxu0 0.0
    %4598 = vmatpush1.msra.mxu0 0.0
    %4599 = vmatprep.subr.mxu0 0.0
    %4600 = vmatpush1.msra.mxu0 0.0
    %4601 = vmatprep.subr.mxu0 0.0
    %4602 = vmatpush1.msra.mxu0 0.0
    %4603 = vmatprep.subr.mxu0 0.0
    %4604 = vmatpush1.msra.mxu0 0.0
    %4605 = vmatprep.subr.mxu0 0.0
    %4606 = vmatpush1.msra.mxu0 0.0
    %4607 = vmatprep.subr.mxu0 0.0
    %4608 = vmatpush1.msra.mxu0 0.0
    %4609 = vmatprep.subr.mxu0 0.0
    %4610 = vmatpush1.msra.mxu0 0.0
    %4611 = vmatprep.subr.mxu0 0.0
    %4612 = vmatpush1.msra.mxu0 0.0
    %4613 = vmatprep.subr.mxu0 0.0
    %4614 = vmatpush1.msra.mxu0 0.0
    %4615 = vmatprep.subr.mxu0 0.0
    %4616 = vmatpush1.msra.mxu0 0.0
    %4617 = vmatprep.subr.mxu0 0.0
    %4618 = vmatpush1.msra.mxu0 0.0
    %4619 = vmatprep.subr.mxu0 0.0
    %v4620 = vand.u32 %v2363, 4294901760
    %4621 = vmatpush1.msra.mxu0 %v4620
    %4622 = vmatprep.subr.mxu0 0.0
    %v4623 = vand.u32 %v2362, 4294901760
    %4624 = vmatpush1.msra.mxu0 %v4623
    %4625 = vmatprep.subr.mxu0 0.0
    %v4626 = vand.u32 %v2361, 4294901760
    %4627 = vmatpush1.msra.mxu0 %v4626
    %4628 = vmatprep.subr.mxu0 0.0
    %v4629 = vand.u32 %v2360, 4294901760
    %4630 = vmatpush1.msra.mxu0 %v4629
    %4631 = vmatprep.subr.mxu0 0.0
    %4632 = vmatpush2.msra.mxu0 0.0
    %4633 = vmatprep.subr.mxu0 0.0
    %4634 = vmatpush2.msra.mxu0 0.0
    %4635 = vmatprep.subr.mxu0 0.0
    %4636 = vmatpush2.msra.mxu0 0.0
    %4637 = vmatprep.subr.mxu0 0.0
    %4638 = vmatpush2.msra.mxu0 0.0
    %4639 = vmatprep.subr.mxu0 0.0
    %4640 = vmatpush2.msra.mxu0 0.0
    %4641 = vmatprep.subr.mxu0 0.0
    %4642 = vmatpush2.msra.mxu0 0.0
    %4643 = vmatprep.subr.mxu0 0.0
    %4644 = vmatpush2.msra.mxu0 0.0
    %4645 = vmatprep.subr.mxu0 0.0
    %4646 = vmatpush2.msra.mxu0 0.0
    %4647 = vmatprep.subr.mxu0 0.0
    %4648 = vmatpush2.msra.mxu0 0.0
    %4649 = vmatprep.subr.mxu0 0.0
    %4650 = vmatpush2.msra.mxu0 0.0
    %4651 = vmatprep.subr.mxu0 0.0
    %4652 = vmatpush2.msra.mxu0 0.0
    %4653 = vmatprep.subr.mxu0 0.0
    %4654 = vmatpush2.msra.mxu0 0.0
    %4655 = vmatprep.subr.mxu0 0.0
    %4656 = vmatpush2.msra.mxu0 0.0
    %4657 = vmatprep.subr.mxu0 0.0
    %4658 = vmatpush2.msra.mxu0 0.0
    %4659 = vmatprep.subr.mxu0 0.0
    %4660 = vmatpush2.msra.mxu0 0.0
    %4661 = vmatprep.subr.mxu0 0.0
    %4662 = vmatpush2.msra.mxu0 0.0
    %4663 = vmatprep.mubr.f32.mxu0 0.0
    %v4664 = vand.u32 %v4144, 4294901760
    %4665 = vmatmul.mubr.f32.gmra.mxu0 %v4664
    %v4666 = vpop.f32.mrf.mxu0
    %v4667 = vadd.f32 %v4586, %v4666
    %v4668 = vpop.f32.mrf.mxu0
    %4669 = vmatprep.mubr.f32.mxu0 0.0
    %v4670 = vand.u32 %v4146, 4294901760
    %4671 = vmatmul.mubr.f32.gmra.mxu0 %v4670
    %v4672 = vpop.f32.mrf.mxu0
    %v4673 = vadd.f32 %v4592, %v4672
    %v4674 = vpop.f32.mrf.mxu0
    %4675 = vdwg.mxu0
    %v4676 = vadd.f32 %v2370, %v4667
    %v4677 = vadd.f32 %v2371, %v4673
    %v4678 = vxor.u32 %v4676, 2147483648
    %v4679 = vxor.u32 %v4677, 2147483648
    %v4680 = vmul.f32 %v4678, 1.442695
    %v4681 = vpow.pop %v4680
    %v4682 = vmul.f32 %v4679, 1.442695
    %v4683 = vpow.pop %v4682
    %v4684 = vadd.f32 %v4681, 1.0
    %v4685 = vadd.f32 %v4683, 1.0
    %v4686 = vrcp.pop %v4684
    %v4687 = vmul.f32 1.0, %v4686
    %v4688 = vrcp.pop %v4685
    %v4689 = vmul.f32 1.0, %v4688
    %v4690 = vtanh.pop %v4676
    %v4691 = vtanh.pop %v4677
    %v4692 = vmul.f32 %v4687, %v4124
    %v4693 = vmul.f32 %v4689, %v4125
    %4696 = vrot.lane.b32.xlu0 %v4690, 32
    %v4697 = vpop.permute.xlu0 %4696
    %4698 = vrot.lane.b32.xlu0 %v4691, 32
    %v4699 = vpop.permute.xlu0 %4698
    %v4702 = vmul.f32 %v4687, %v4697
    %v4703 = vmul.f32 %v4689, %v4699
    %4706 = vrot.lane.b32.xlu0 %v4702, 32
    %v4707 = vpop.permute.xlu0 %4706
    %4708 = vrot.lane.b32.xlu0 %v4703, 32
    %v4709 = vpop.permute.xlu0 %4708
    %v4712 = vadd.f32 %v4692, %v4707
    %v4713 = vadd.f32 %v4693, %v4709
    %v4714 = vtanh.pop %v4712
    %v4715 = vtanh.pop %v4713
    %4718 = vrot.lane.b32.xlu0 %v4714, 32
    %v4719 = vpop.permute.xlu0 %4718
    %4720 = vrot.lane.b32.xlu0 %v4715, 32
    %v4721 = vpop.permute.xlu0 %4720
    %v4724 = vmul.f32 %v4687, %v4719
    %v4725 = vmul.f32 %v4689, %v4721
    %4728 = vrot.lane.b32.xlu0 %v4724, 64
    %v4729 = vpop.permute.xlu0 %4728
    %4730 = vrot.lane.b32.xlu0 %v4725, 64
    %v4731 = vpop.permute.xlu0 %4730
    %v4732 = vsel %vm2380, %v4729, 0
    %v4734 = vsel %vm2380, %v4731, 0
    %4736 = vmatprep.subr.mxu0 0.0
    %4737 = vmatpush1.msra.mxu0 0.0
    %4738 = vmatprep.subr.mxu0 0.0
    %4739 = vmatpush1.msra.mxu0 0.0
    %4740 = vmatprep.subr.mxu0 0.0
    %4741 = vmatpush1.msra.mxu0 0.0
    %4742 = vmatprep.subr.mxu0 0.0
    %4743 = vmatpush1.msra.mxu0 0.0
    %4744 = vmatprep.subr.mxu0 0.0
    %4745 = vmatpush1.msra.mxu0 0.0
    %4746 = vmatprep.subr.mxu0 0.0
    %4747 = vmatpush1.msra.mxu0 0.0
    %4748 = vmatprep.subr.mxu0 0.0
    %4749 = vmatpush1.msra.mxu0 0.0
    %4750 = vmatprep.subr.mxu0 0.0
    %4751 = vmatpush1.msra.mxu0 0.0
    %4752 = vmatprep.subr.mxu0 0.0
    %4753 = vmatpush1.msra.mxu0 0.0
    %4754 = vmatprep.subr.mxu0 0.0
    %4755 = vmatpush1.msra.mxu0 0.0
    %4756 = vmatprep.subr.mxu0 0.0
    %4757 = vmatpush1.msra.mxu0 0.0
    %4758 = vmatprep.subr.mxu0 0.0
    %4759 = vmatpush1.msra.mxu0 0.0
    %4760 = vmatprep.subr.mxu0 0.0
    %v4761 = vand.u32 %v2363, 4294901760
    %4762 = vmatpush1.msra.mxu0 %v4761
    %4763 = vmatprep.subr.mxu0 0.0
    %v4764 = vand.u32 %v2362, 4294901760
    %4765 = vmatpush1.msra.mxu0 %v4764
    %4766 = vmatprep.subr.mxu0 0.0
    %v4767 = vand.u32 %v2361, 4294901760
    %4768 = vmatpush1.msra.mxu0 %v4767
    %4769 = vmatprep.subr.mxu0 0.0
    %v4770 = vand.u32 %v2360, 4294901760
    %4771 = vmatpush1.msra.mxu0 %v4770
    %4772 = vmatprep.subr.mxu0 0.0
    %4773 = vmatpush2.msra.mxu0 0.0
    %4774 = vmatprep.subr.mxu0 0.0
    %4775 = vmatpush2.msra.mxu0 0.0
    %4776 = vmatprep.subr.mxu0 0.0
    %4777 = vmatpush2.msra.mxu0 0.0
    %4778 = vmatprep.subr.mxu0 0.0
    %4779 = vmatpush2.msra.mxu0 0.0
    %4780 = vmatprep.subr.mxu0 0.0
    %4781 = vmatpush2.msra.mxu0 0.0
    %4782 = vmatprep.subr.mxu0 0.0
    %4783 = vmatpush2.msra.mxu0 0.0
    %4784 = vmatprep.subr.mxu0 0.0
    %4785 = vmatpush2.msra.mxu0 0.0
    %4786 = vmatprep.subr.mxu0 0.0
    %4787 = vmatpush2.msra.mxu0 0.0
    %4788 = vmatprep.subr.mxu0 0.0
    %4789 = vmatpush2.msra.mxu0 0.0
    %4790 = vmatprep.subr.mxu0 0.0
    %4791 = vmatpush2.msra.mxu0 0.0
    %4792 = vmatprep.subr.mxu0 0.0
    %4793 = vmatpush2.msra.mxu0 0.0
    %4794 = vmatprep.subr.mxu0 0.0
    %4795 = vmatpush2.msra.mxu0 0.0
    %4796 = vmatprep.subr.mxu0 0.0
    %4797 = vmatpush2.msra.mxu0 0.0
    %4798 = vmatprep.subr.mxu0 0.0
    %4799 = vmatpush2.msra.mxu0 0.0
    %4800 = vmatprep.subr.mxu0 0.0
    %4801 = vmatpush2.msra.mxu0 0.0
    %4802 = vmatprep.subr.mxu0 0.0
    %4803 = vmatpush2.msra.mxu0 0.0
    %4804 = vmatprep.mubr.f32.mxu0 0.0
    %v4805 = vand.u32 %v4732, 4294901760
    %v4806 = vsub.f32 %v4732, %v4805
    %v4807 = vand.u32 %v4806, 4294901760
    %v4808 = vsub.f32 %v4806, %v4807
    %v4809 = vand.u32 %v4808, 4294901760
    %4810 = vmatmul.mubr.f32.gmra.mxu0 %v4809
    %v4811 = vpop.f32.mrf.mxu0
    %v4812 = vadd.f32 0.0, %v4811
    %v4813 = vpop.f32.mrf.mxu0
    %4814 = vmatprep.mubr.f32.mxu0 0.0
    %v4815 = vand.u32 %v4734, 4294901760
    %v4816 = vsub.f32 %v4734, %v4815
    %v4817 = vand.u32 %v4816, 4294901760
    %v4818 = vsub.f32 %v4816, %v4817
    %v4819 = vand.u32 %v4818, 4294901760
    %4820 = vmatmul.mubr.f32.gmra.mxu0 %v4819
    %v4821 = vpop.f32.mrf.mxu0
    %v4822 = vadd.f32 0.0, %v4821
    %v4823 = vpop.f32.mrf.mxu0
    %4824 = vdwg.mxu0
    %4825 = vmatprep.subr.mxu0 0.0
    %4826 = vmatpush1.msra.mxu0 0.0
    %4827 = vmatprep.subr.mxu0 0.0
    %4828 = vmatpush1.msra.mxu0 0.0
    %4829 = vmatprep.subr.mxu0 0.0
    %4830 = vmatpush1.msra.mxu0 0.0
    %4831 = vmatprep.subr.mxu0 0.0
    %4832 = vmatpush1.msra.mxu0 0.0
    %4833 = vmatprep.subr.mxu0 0.0
    %4834 = vmatpush1.msra.mxu0 0.0
    %4835 = vmatprep.subr.mxu0 0.0
    %4836 = vmatpush1.msra.mxu0 0.0
    %4837 = vmatprep.subr.mxu0 0.0
    %4838 = vmatpush1.msra.mxu0 0.0
    %4839 = vmatprep.subr.mxu0 0.0
    %4840 = vmatpush1.msra.mxu0 0.0
    %4841 = vmatprep.subr.mxu0 0.0
    %4842 = vmatpush1.msra.mxu0 0.0
    %4843 = vmatprep.subr.mxu0 0.0
    %4844 = vmatpush1.msra.mxu0 0.0
    %4845 = vmatprep.subr.mxu0 0.0
    %4846 = vmatpush1.msra.mxu0 0.0
    %4847 = vmatprep.subr.mxu0 0.0
    %4848 = vmatpush1.msra.mxu0 0.0
    %4849 = vmatprep.subr.mxu0 0.0
    %v4850 = vand.u32 %v2363, 4294901760
    %v4851 = vsub.f32 %v2363, %v4850
    %v4852 = vand.u32 %v4851, 4294901760
    %v4853 = vsub.f32 %v4851, %v4852
    %v4854 = vand.u32 %v4853, 4294901760
    %4855 = vmatpush1.msra.mxu0 %v4854
    %4856 = vmatprep.subr.mxu0 0.0
    %v4857 = vand.u32 %v2362, 4294901760
    %v4858 = vsub.f32 %v2362, %v4857
    %v4859 = vand.u32 %v4858, 4294901760
    %v4860 = vsub.f32 %v4858, %v4859
    %v4861 = vand.u32 %v4860, 4294901760
    %4862 = vmatpush1.msra.mxu0 %v4861
    %4863 = vmatprep.subr.mxu0 0.0
    %v4864 = vand.u32 %v2361, 4294901760
    %v4865 = vsub.f32 %v2361, %v4864
    %v4866 = vand.u32 %v4865, 4294901760
    %v4867 = vsub.f32 %v4865, %v4866
    %v4868 = vand.u32 %v4867, 4294901760
    %4869 = vmatpush1.msra.mxu0 %v4868
    %4870 = vmatprep.subr.mxu0 0.0
    %v4871 = vand.u32 %v2360, 4294901760
    %v4872 = vsub.f32 %v2360, %v4871
    %v4873 = vand.u32 %v4872, 4294901760
    %v4874 = vsub.f32 %v4872, %v4873
    %v4875 = vand.u32 %v4874, 4294901760
    %4876 = vmatpush1.msra.mxu0 %v4875
    %4877 = vmatprep.subr.mxu0 0.0
    %4878 = vmatpush2.msra.mxu0 0.0
    %4879 = vmatprep.subr.mxu0 0.0
    %4880 = vmatpush2.msra.mxu0 0.0
    %4881 = vmatprep.subr.mxu0 0.0
    %4882 = vmatpush2.msra.mxu0 0.0
    %4883 = vmatprep.subr.mxu0 0.0
    %4884 = vmatpush2.msra.mxu0 0.0
    %4885 = vmatprep.subr.mxu0 0.0
    %4886 = vmatpush2.msra.mxu0 0.0
    %4887 = vmatprep.subr.mxu0 0.0
    %4888 = vmatpush2.msra.mxu0 0.0
    %4889 = vmatprep.subr.mxu0 0.0
    %4890 = vmatpush2.msra.mxu0 0.0
    %4891 = vmatprep.subr.mxu0 0.0
    %4892 = vmatpush2.msra.mxu0 0.0
    %4893 = vmatprep.subr.mxu0 0.0
    %4894 = vmatpush2.msra.mxu0 0.0
    %4895 = vmatprep.subr.mxu0 0.0
    %4896 = vmatpush2.msra.mxu0 0.0
    %4897 = vmatprep.subr.mxu0 0.0
    %4898 = vmatpush2.msra.mxu0 0.0
    %4899 = vmatprep.subr.mxu0 0.0
    %4900 = vmatpush2.msra.mxu0 0.0
    %4901 = vmatprep.subr.mxu0 0.0
    %4902 = vmatpush2.msra.mxu0 0.0
    %4903 = vmatprep.subr.mxu0 0.0
    %4904 = vmatpush2.msra.mxu0 0.0
    %4905 = vmatprep.subr.mxu0 0.0
    %4906 = vmatpush2.msra.mxu0 0.0
    %4907 = vmatprep.subr.mxu0 0.0
    %4908 = vmatpush2.msra.mxu0 0.0
    %4909 = vmatprep.mubr.f32.mxu0 0.0
    %v4910 = vand.u32 %v4732, 4294901760
    %4911 = vmatmul.mubr.f32.gmra.mxu0 %v4910
    %v4912 = vpop.f32.mrf.mxu0
    %v4913 = vadd.f32 %v4812, %v4912
    %v4914 = vpop.f32.mrf.mxu0
    %4915 = vmatprep.mubr.f32.mxu0 0.0
    %v4916 = vand.u32 %v4734, 4294901760
    %4917 = vmatmul.mubr.f32.gmra.mxu0 %v4916
    %v4918 = vpop.f32.mrf.mxu0
    %v4919 = vadd.f32 %v4822, %v4918
    %v4920 = vpop.f32.mrf.mxu0
    %4921 = vdwg.mxu0
    %4922 = vmatprep.subr.mxu0 0.0
    %4923 = vmatpush1.msra.mxu0 0.0
    %4924 = vmatprep.subr.mxu0 0.0
    %4925 = vmatpush1.msra.mxu0 0.0
    %4926 = vmatprep.subr.mxu0 0.0
    %4927 = vmatpush1.msra.mxu0 0.0
    %4928 = vmatprep.subr.mxu0 0.0
    %4929 = vmatpush1.msra.mxu0 0.0
    %4930 = vmatprep.subr.mxu0 0.0
    %4931 = vmatpush1.msra.mxu0 0.0
    %4932 = vmatprep.subr.mxu0 0.0
    %4933 = vmatpush1.msra.mxu0 0.0
    %4934 = vmatprep.subr.mxu0 0.0
    %4935 = vmatpush1.msra.mxu0 0.0
    %4936 = vmatprep.subr.mxu0 0.0
    %4937 = vmatpush1.msra.mxu0 0.0
    %4938 = vmatprep.subr.mxu0 0.0
    %4939 = vmatpush1.msra.mxu0 0.0
    %4940 = vmatprep.subr.mxu0 0.0
    %4941 = vmatpush1.msra.mxu0 0.0
    %4942 = vmatprep.subr.mxu0 0.0
    %4943 = vmatpush1.msra.mxu0 0.0
    %4944 = vmatprep.subr.mxu0 0.0
    %4945 = vmatpush1.msra.mxu0 0.0
    %4946 = vmatprep.subr.mxu0 0.0
    %v4947 = vand.u32 %v2363, 4294901760
    %v4948 = vsub.f32 %v2363, %v4947
    %4949 = vmatpush1.msra.mxu0 %v4948
    %4950 = vmatprep.subr.mxu0 0.0
    %v4951 = vand.u32 %v2362, 4294901760
    %v4952 = vsub.f32 %v2362, %v4951
    %4953 = vmatpush1.msra.mxu0 %v4952
    %4954 = vmatprep.subr.mxu0 0.0
    %v4955 = vand.u32 %v2361, 4294901760
    %v4956 = vsub.f32 %v2361, %v4955
    %4957 = vmatpush1.msra.mxu0 %v4956
    %4958 = vmatprep.subr.mxu0 0.0
    %v4959 = vand.u32 %v2360, 4294901760
    %v4960 = vsub.f32 %v2360, %v4959
    %4961 = vmatpush1.msra.mxu0 %v4960
    %4962 = vmatprep.subr.mxu0 0.0
    %4963 = vmatpush2.msra.mxu0 0.0
    %4964 = vmatprep.subr.mxu0 0.0
    %4965 = vmatpush2.msra.mxu0 0.0
    %4966 = vmatprep.subr.mxu0 0.0
    %4967 = vmatpush2.msra.mxu0 0.0
    %4968 = vmatprep.subr.mxu0 0.0
    %4969 = vmatpush2.msra.mxu0 0.0
    %4970 = vmatprep.subr.mxu0 0.0
    %4971 = vmatpush2.msra.mxu0 0.0
    %4972 = vmatprep.subr.mxu0 0.0
    %4973 = vmatpush2.msra.mxu0 0.0
    %4974 = vmatprep.subr.mxu0 0.0
    %4975 = vmatpush2.msra.mxu0 0.0
    %4976 = vmatprep.subr.mxu0 0.0
    %4977 = vmatpush2.msra.mxu0 0.0
    %4978 = vmatprep.subr.mxu0 0.0
    %4979 = vmatpush2.msra.mxu0 0.0
    %4980 = vmatprep.subr.mxu0 0.0
    %4981 = vmatpush2.msra.mxu0 0.0
    %4982 = vmatprep.subr.mxu0 0.0
    %4983 = vmatpush2.msra.mxu0 0.0
    %4984 = vmatprep.subr.mxu0 0.0
    %4985 = vmatpush2.msra.mxu0 0.0
    %4986 = vmatprep.subr.mxu0 0.0
    %4987 = vmatpush2.msra.mxu0 0.0
    %4988 = vmatprep.subr.mxu0 0.0
    %4989 = vmatpush2.msra.mxu0 0.0
    %4990 = vmatprep.subr.mxu0 0.0
    %4991 = vmatpush2.msra.mxu0 0.0
    %4992 = vmatprep.subr.mxu0 0.0
    %4993 = vmatpush2.msra.mxu0 0.0
    %4994 = vmatprep.mubr.f32.mxu0 0.0
    %v4995 = vand.u32 %v4732, 4294901760
    %v4996 = vsub.f32 %v4732, %v4995
    %4997 = vmatmul.mubr.f32.gmra.mxu0 %v4996
    %v4998 = vpop.f32.mrf.mxu0
    %v4999 = vadd.f32 %v4913, %v4998
    %v5000 = vpop.f32.mrf.mxu0
    %5001 = vmatprep.mubr.f32.mxu0 0.0
    %v5002 = vand.u32 %v4734, 4294901760
    %v5003 = vsub.f32 %v4734, %v5002
    %5004 = vmatmul.mubr.f32.gmra.mxu0 %v5003
    %v5005 = vpop.f32.mrf.mxu0
    %v5006 = vadd.f32 %v4919, %v5005
    %v5007 = vpop.f32.mrf.mxu0
    %5008 = vdwg.mxu0
    %5009 = vmatprep.subr.mxu0 0.0
    %5010 = vmatpush1.msra.mxu0 0.0
    %5011 = vmatprep.subr.mxu0 0.0
    %5012 = vmatpush1.msra.mxu0 0.0
    %5013 = vmatprep.subr.mxu0 0.0
    %5014 = vmatpush1.msra.mxu0 0.0
    %5015 = vmatprep.subr.mxu0 0.0
    %5016 = vmatpush1.msra.mxu0 0.0
    %5017 = vmatprep.subr.mxu0 0.0
    %5018 = vmatpush1.msra.mxu0 0.0
    %5019 = vmatprep.subr.mxu0 0.0
    %5020 = vmatpush1.msra.mxu0 0.0
    %5021 = vmatprep.subr.mxu0 0.0
    %5022 = vmatpush1.msra.mxu0 0.0
    %5023 = vmatprep.subr.mxu0 0.0
    %5024 = vmatpush1.msra.mxu0 0.0
    %5025 = vmatprep.subr.mxu0 0.0
    %5026 = vmatpush1.msra.mxu0 0.0
    %5027 = vmatprep.subr.mxu0 0.0
    %5028 = vmatpush1.msra.mxu0 0.0
    %5029 = vmatprep.subr.mxu0 0.0
    %5030 = vmatpush1.msra.mxu0 0.0
    %5031 = vmatprep.subr.mxu0 0.0
    %5032 = vmatpush1.msra.mxu0 0.0
    %5033 = vmatprep.subr.mxu0 0.0
    %v5034 = vand.u32 %v2363, 4294901760
    %5035 = vmatpush1.msra.mxu0 %v5034
    %5036 = vmatprep.subr.mxu0 0.0
    %v5037 = vand.u32 %v2362, 4294901760
    %5038 = vmatpush1.msra.mxu0 %v5037
    %5039 = vmatprep.subr.mxu0 0.0
    %v5040 = vand.u32 %v2361, 4294901760
    %5041 = vmatpush1.msra.mxu0 %v5040
    %5042 = vmatprep.subr.mxu0 0.0
    %v5043 = vand.u32 %v2360, 4294901760
    %5044 = vmatpush1.msra.mxu0 %v5043
    %5045 = vmatprep.subr.mxu0 0.0
    %5046 = vmatpush2.msra.mxu0 0.0
    %5047 = vmatprep.subr.mxu0 0.0
    %5048 = vmatpush2.msra.mxu0 0.0
    %5049 = vmatprep.subr.mxu0 0.0
    %5050 = vmatpush2.msra.mxu0 0.0
    %5051 = vmatprep.subr.mxu0 0.0
    %5052 = vmatpush2.msra.mxu0 0.0
    %5053 = vmatprep.subr.mxu0 0.0
    %5054 = vmatpush2.msra.mxu0 0.0
    %5055 = vmatprep.subr.mxu0 0.0
    %5056 = vmatpush2.msra.mxu0 0.0
    %5057 = vmatprep.subr.mxu0 0.0
    %5058 = vmatpush2.msra.mxu0 0.0
    %5059 = vmatprep.subr.mxu0 0.0
    %5060 = vmatpush2.msra.mxu0 0.0
    %5061 = vmatprep.subr.mxu0 0.0
    %5062 = vmatpush2.msra.mxu0 0.0
    %5063 = vmatprep.subr.mxu0 0.0
    %5064 = vmatpush2.msra.mxu0 0.0
    %5065 = vmatprep.subr.mxu0 0.0
    %5066 = vmatpush2.msra.mxu0 0.0
    %5067 = vmatprep.subr.mxu0 0.0
    %5068 = vmatpush2.msra.mxu0 0.0
    %5069 = vmatprep.subr.mxu0 0.0
    %5070 = vmatpush2.msra.mxu0 0.0
    %5071 = vmatprep.subr.mxu0 0.0
    %5072 = vmatpush2.msra.mxu0 0.0
    %5073 = vmatprep.subr.mxu0 0.0
    %5074 = vmatpush2.msra.mxu0 0.0
    %5075 = vmatprep.subr.mxu0 0.0
    %5076 = vmatpush2.msra.mxu0 0.0
    %5077 = vmatprep.mubr.f32.mxu0 0.0
    %v5078 = vand.u32 %v4732, 4294901760
    %v5079 = vsub.f32 %v4732, %v5078
    %v5080 = vand.u32 %v5079, 4294901760
    %5081 = vmatmul.mubr.f32.gmra.mxu0 %v5080
    %v5082 = vpop.f32.mrf.mxu0
    %v5083 = vadd.f32 %v4999, %v5082
    %v5084 = vpop.f32.mrf.mxu0
    %5085 = vmatprep.mubr.f32.mxu0 0.0
    %v5086 = vand.u32 %v4734, 4294901760
    %v5087 = vsub.f32 %v4734, %v5086
    %v5088 = vand.u32 %v5087, 4294901760
    %5089 = vmatmul.mubr.f32.gmra.mxu0 %v5088
    %v5090 = vpop.f32.mrf.mxu0
    %v5091 = vadd.f32 %v5006, %v5090
    %v5092 = vpop.f32.mrf.mxu0
    %5093 = vdwg.mxu0
    %5094 = vmatprep.subr.mxu0 0.0
    %5095 = vmatpush1.msra.mxu0 0.0
    %5096 = vmatprep.subr.mxu0 0.0
    %5097 = vmatpush1.msra.mxu0 0.0
    %5098 = vmatprep.subr.mxu0 0.0
    %5099 = vmatpush1.msra.mxu0 0.0
    %5100 = vmatprep.subr.mxu0 0.0
    %5101 = vmatpush1.msra.mxu0 0.0
    %5102 = vmatprep.subr.mxu0 0.0
    %5103 = vmatpush1.msra.mxu0 0.0
    %5104 = vmatprep.subr.mxu0 0.0
    %5105 = vmatpush1.msra.mxu0 0.0
    %5106 = vmatprep.subr.mxu0 0.0
    %5107 = vmatpush1.msra.mxu0 0.0
    %5108 = vmatprep.subr.mxu0 0.0
    %5109 = vmatpush1.msra.mxu0 0.0
    %5110 = vmatprep.subr.mxu0 0.0
    %5111 = vmatpush1.msra.mxu0 0.0
    %5112 = vmatprep.subr.mxu0 0.0
    %5113 = vmatpush1.msra.mxu0 0.0
    %5114 = vmatprep.subr.mxu0 0.0
    %5115 = vmatpush1.msra.mxu0 0.0
    %5116 = vmatprep.subr.mxu0 0.0
    %5117 = vmatpush1.msra.mxu0 0.0
    %5118 = vmatprep.subr.mxu0 0.0
    %v5119 = vand.u32 %v2363, 4294901760
    %v5120 = vsub.f32 %v2363, %v5119
    %v5121 = vand.u32 %v5120, 4294901760
    %5122 = vmatpush1.msra.mxu0 %v5121
    %5123 = vmatprep.subr.mxu0 0.0
    %v5124 = vand.u32 %v2362, 4294901760
    %v5125 = vsub.f32 %v2362, %v5124
    %v5126 = vand.u32 %v5125, 4294901760
    %5127 = vmatpush1.msra.mxu0 %v5126
    %5128 = vmatprep.subr.mxu0 0.0
    %v5129 = vand.u32 %v2361, 4294901760
    %v5130 = vsub.f32 %v2361, %v5129
    %v5131 = vand.u32 %v5130, 4294901760
    %5132 = vmatpush1.msra.mxu0 %v5131
    %5133 = vmatprep.subr.mxu0 0.0
    %v5134 = vand.u32 %v2360, 4294901760
    %v5135 = vsub.f32 %v2360, %v5134
    %v5136 = vand.u32 %v5135, 4294901760
    %5137 = vmatpush1.msra.mxu0 %v5136
    %5138 = vmatprep.subr.mxu0 0.0
    %5139 = vmatpush2.msra.mxu0 0.0
    %5140 = vmatprep.subr.mxu0 0.0
    %5141 = vmatpush2.msra.mxu0 0.0
    %5142 = vmatprep.subr.mxu0 0.0
    %5143 = vmatpush2.msra.mxu0 0.0
    %5144 = vmatprep.subr.mxu0 0.0
    %5145 = vmatpush2.msra.mxu0 0.0
    %5146 = vmatprep.subr.mxu0 0.0
    %5147 = vmatpush2.msra.mxu0 0.0
    %5148 = vmatprep.subr.mxu0 0.0
    %5149 = vmatpush2.msra.mxu0 0.0
    %5150 = vmatprep.subr.mxu0 0.0
    %5151 = vmatpush2.msra.mxu0 0.0
    %5152 = vmatprep.subr.mxu0 0.0
    %5153 = vmatpush2.msra.mxu0 0.0
    %5154 = vmatprep.subr.mxu0 0.0
    %5155 = vmatpush2.msra.mxu0 0.0
    %5156 = vmatprep.subr.mxu0 0.0
    %5157 = vmatpush2.msra.mxu0 0.0
    %5158 = vmatprep.subr.mxu0 0.0
    %5159 = vmatpush2.msra.mxu0 0.0
    %5160 = vmatprep.subr.mxu0 0.0
    %5161 = vmatpush2.msra.mxu0 0.0
    %5162 = vmatprep.subr.mxu0 0.0
    %5163 = vmatpush2.msra.mxu0 0.0
    %5164 = vmatprep.subr.mxu0 0.0
    %5165 = vmatpush2.msra.mxu0 0.0
    %5166 = vmatprep.subr.mxu0 0.0
    %5167 = vmatpush2.msra.mxu0 0.0
    %5168 = vmatprep.subr.mxu0 0.0
    %5169 = vmatpush2.msra.mxu0 0.0
    %5170 = vmatprep.mubr.f32.mxu0 0.0
    %v5171 = vand.u32 %v4732, 4294901760
    %5172 = vmatmul.mubr.f32.gmra.mxu0 %v5171
    %v5173 = vpop.f32.mrf.mxu0
    %v5174 = vadd.f32 %v5083, %v5173
    %v5175 = vpop.f32.mrf.mxu0
    %5176 = vmatprep.mubr.f32.mxu0 0.0
    %v5177 = vand.u32 %v4734, 4294901760
    %5178 = vmatmul.mubr.f32.gmra.mxu0 %v5177
    %v5179 = vpop.f32.mrf.mxu0
    %v5180 = vadd.f32 %v5091, %v5179
    %v5181 = vpop.f32.mrf.mxu0
    %5182 = vdwg.mxu0
    %5183 = vmatprep.subr.mxu0 0.0
    %5184 = vmatpush1.msra.mxu0 0.0
    %5185 = vmatprep.subr.mxu0 0.0
    %5186 = vmatpush1.msra.mxu0 0.0
    %5187 = vmatprep.subr.mxu0 0.0
    %5188 = vmatpush1.msra.mxu0 0.0
    %5189 = vmatprep.subr.mxu0 0.0
    %5190 = vmatpush1.msra.mxu0 0.0
    %5191 = vmatprep.subr.mxu0 0.0
    %5192 = vmatpush1.msra.mxu0 0.0
    %5193 = vmatprep.subr.mxu0 0.0
    %5194 = vmatpush1.msra.mxu0 0.0
    %5195 = vmatprep.subr.mxu0 0.0
    %5196 = vmatpush1.msra.mxu0 0.0
    %5197 = vmatprep.subr.mxu0 0.0
    %5198 = vmatpush1.msra.mxu0 0.0
    %5199 = vmatprep.subr.mxu0 0.0
    %5200 = vmatpush1.msra.mxu0 0.0
    %5201 = vmatprep.subr.mxu0 0.0
    %5202 = vmatpush1.msra.mxu0 0.0
    %5203 = vmatprep.subr.mxu0 0.0
    %5204 = vmatpush1.msra.mxu0 0.0
    %5205 = vmatprep.subr.mxu0 0.0
    %5206 = vmatpush1.msra.mxu0 0.0
    %5207 = vmatprep.subr.mxu0 0.0
    %v5208 = vand.u32 %v2363, 4294901760
    %5209 = vmatpush1.msra.mxu0 %v5208
    %5210 = vmatprep.subr.mxu0 0.0
    %v5211 = vand.u32 %v2362, 4294901760
    %5212 = vmatpush1.msra.mxu0 %v5211
    %5213 = vmatprep.subr.mxu0 0.0
    %v5214 = vand.u32 %v2361, 4294901760
    %5215 = vmatpush1.msra.mxu0 %v5214
    %5216 = vmatprep.subr.mxu0 0.0
    %v5217 = vand.u32 %v2360, 4294901760
    %5218 = vmatpush1.msra.mxu0 %v5217
    %5219 = vmatprep.subr.mxu0 0.0
    %5220 = vmatpush2.msra.mxu0 0.0
    %5221 = vmatprep.subr.mxu0 0.0
    %5222 = vmatpush2.msra.mxu0 0.0
    %5223 = vmatprep.subr.mxu0 0.0
    %5224 = vmatpush2.msra.mxu0 0.0
    %5225 = vmatprep.subr.mxu0 0.0
    %5226 = vmatpush2.msra.mxu0 0.0
    %5227 = vmatprep.subr.mxu0 0.0
    %5228 = vmatpush2.msra.mxu0 0.0
    %5229 = vmatprep.subr.mxu0 0.0
    %5230 = vmatpush2.msra.mxu0 0.0
    %5231 = vmatprep.subr.mxu0 0.0
    %5232 = vmatpush2.msra.mxu0 0.0
    %5233 = vmatprep.subr.mxu0 0.0
    %5234 = vmatpush2.msra.mxu0 0.0
    %5235 = vmatprep.subr.mxu0 0.0
    %5236 = vmatpush2.msra.mxu0 0.0
    %5237 = vmatprep.subr.mxu0 0.0
    %5238 = vmatpush2.msra.mxu0 0.0
    %5239 = vmatprep.subr.mxu0 0.0
    %5240 = vmatpush2.msra.mxu0 0.0
    %5241 = vmatprep.subr.mxu0 0.0
    %5242 = vmatpush2.msra.mxu0 0.0
    %5243 = vmatprep.subr.mxu0 0.0
    %5244 = vmatpush2.msra.mxu0 0.0
    %5245 = vmatprep.subr.mxu0 0.0
    %5246 = vmatpush2.msra.mxu0 0.0
    %5247 = vmatprep.subr.mxu0 0.0
    %5248 = vmatpush2.msra.mxu0 0.0
    %5249 = vmatprep.subr.mxu0 0.0
    %5250 = vmatpush2.msra.mxu0 0.0
    %5251 = vmatprep.mubr.f32.mxu0 0.0
    %v5252 = vand.u32 %v4732, 4294901760
    %5253 = vmatmul.mubr.f32.gmra.mxu0 %v5252
    %v5254 = vpop.f32.mrf.mxu0
    %v5255 = vadd.f32 %v5174, %v5254
    %v5256 = vpop.f32.mrf.mxu0
    %5257 = vmatprep.mubr.f32.mxu0 0.0
    %v5258 = vand.u32 %v4734, 4294901760
    %5259 = vmatmul.mubr.f32.gmra.mxu0 %v5258
    %v5260 = vpop.f32.mrf.mxu0
    %v5261 = vadd.f32 %v5180, %v5260
    %v5262 = vpop.f32.mrf.mxu0
    %5263 = vdwg.mxu0
    %v5264 = vadd.f32 %v2372, %v5255
    %v5265 = vadd.f32 %v2373, %v5261
    %v5266 = vxor.u32 %v5264, 2147483648
    %v5267 = vxor.u32 %v5265, 2147483648
    %v5268 = vmul.f32 %v5266, 1.442695
    %v5269 = vpow.pop %v5268
    %v5270 = vmul.f32 %v5267, 1.442695
    %v5271 = vpow.pop %v5270
    %v5272 = vadd.f32 %v5269, 1.0
    %v5273 = vadd.f32 %v5271, 1.0
    %v5274 = vrcp.pop %v5272
    %v5275 = vmul.f32 1.0, %v5274
    %v5276 = vrcp.pop %v5273
    %v5277 = vmul.f32 1.0, %v5276
    %v5278 = vtanh.pop %v5264
    %v5279 = vtanh.pop %v5265
    %v5280 = vmul.f32 %v5275, %v4712
    %v5281 = vmul.f32 %v5277, %v4713
    %5284 = vrot.lane.b32.xlu0 %v5278, 32
    %v5285 = vpop.permute.xlu0 %5284
    %5286 = vrot.lane.b32.xlu0 %v5279, 32
    %v5287 = vpop.permute.xlu0 %5286
    %v5290 = vmul.f32 %v5275, %v5285
    %v5291 = vmul.f32 %v5277, %v5287
    %5294 = vrot.lane.b32.xlu0 %v5290, 32
    %v5295 = vpop.permute.xlu0 %5294
    %5296 = vrot.lane.b32.xlu0 %v5291, 32
    %v5297 = vpop.permute.xlu0 %5296
    %v5300 = vadd.f32 %v5280, %v5295
    %v5301 = vadd.f32 %v5281, %v5297
    %v5302 = vtanh.pop %v5300
    %v5303 = vtanh.pop %v5301
    %5306 = vrot.lane.b32.xlu0 %v5302, 32
    %v5307 = vpop.permute.xlu0 %5306
    %5308 = vrot.lane.b32.xlu0 %v5303, 32
    %v5309 = vpop.permute.xlu0 %5308
    %v5312 = vmul.f32 %v5275, %v5307
    %v5313 = vmul.f32 %v5277, %v5309
    %5316 = vrot.lane.b32.xlu0 %v5312, 64
    %v5317 = vpop.permute.xlu0 %5316
    %5318 = vrot.lane.b32.xlu0 %v5313, 64
    %v5319 = vpop.permute.xlu0 %5318
    %v5320 = vsel %vm2380, %v5317, 0
    %v5322 = vsel %vm2380, %v5319, 0
    %5324 = vmatprep.subr.mxu0 0.0
    %5325 = vmatpush1.msra.mxu0 0.0
    %5326 = vmatprep.subr.mxu0 0.0
    %5327 = vmatpush1.msra.mxu0 0.0
    %5328 = vmatprep.subr.mxu0 0.0
    %5329 = vmatpush1.msra.mxu0 0.0
    %5330 = vmatprep.subr.mxu0 0.0
    %5331 = vmatpush1.msra.mxu0 0.0
    %5332 = vmatprep.subr.mxu0 0.0
    %5333 = vmatpush1.msra.mxu0 0.0
    %5334 = vmatprep.subr.mxu0 0.0
    %5335 = vmatpush1.msra.mxu0 0.0
    %5336 = vmatprep.subr.mxu0 0.0
    %5337 = vmatpush1.msra.mxu0 0.0
    %5338 = vmatprep.subr.mxu0 0.0
    %5339 = vmatpush1.msra.mxu0 0.0
    %5340 = vmatprep.subr.mxu0 0.0
    %5341 = vmatpush1.msra.mxu0 0.0
    %5342 = vmatprep.subr.mxu0 0.0
    %5343 = vmatpush1.msra.mxu0 0.0
    %5344 = vmatprep.subr.mxu0 0.0
    %5345 = vmatpush1.msra.mxu0 0.0
    %5346 = vmatprep.subr.mxu0 0.0
    %5347 = vmatpush1.msra.mxu0 0.0
    %5348 = vmatprep.subr.mxu0 0.0
    %v5349 = vand.u32 %v2363, 4294901760
    %5350 = vmatpush1.msra.mxu0 %v5349
    %5351 = vmatprep.subr.mxu0 0.0
    %v5352 = vand.u32 %v2362, 4294901760
    %5353 = vmatpush1.msra.mxu0 %v5352
    %5354 = vmatprep.subr.mxu0 0.0
    %v5355 = vand.u32 %v2361, 4294901760
    %5356 = vmatpush1.msra.mxu0 %v5355
    %5357 = vmatprep.subr.mxu0 0.0
    %v5358 = vand.u32 %v2360, 4294901760
    %5359 = vmatpush1.msra.mxu0 %v5358
    %5360 = vmatprep.subr.mxu0 0.0
    %5361 = vmatpush2.msra.mxu0 0.0
    %5362 = vmatprep.subr.mxu0 0.0
    %5363 = vmatpush2.msra.mxu0 0.0
    %5364 = vmatprep.subr.mxu0 0.0
    %5365 = vmatpush2.msra.mxu0 0.0
    %5366 = vmatprep.subr.mxu0 0.0
    %5367 = vmatpush2.msra.mxu0 0.0
    %5368 = vmatprep.subr.mxu0 0.0
    %5369 = vmatpush2.msra.mxu0 0.0
    %5370 = vmatprep.subr.mxu0 0.0
    %5371 = vmatpush2.msra.mxu0 0.0
    %5372 = vmatprep.subr.mxu0 0.0
    %5373 = vmatpush2.msra.mxu0 0.0
    %5374 = vmatprep.subr.mxu0 0.0
    %5375 = vmatpush2.msra.mxu0 0.0
    %5376 = vmatprep.subr.mxu0 0.0
    %5377 = vmatpush2.msra.mxu0 0.0
    %5378 = vmatprep.subr.mxu0 0.0
    %5379 = vmatpush2.msra.mxu0 0.0
    %5380 = vmatprep.subr.mxu0 0.0
    %5381 = vmatpush2.msra.mxu0 0.0
    %5382 = vmatprep.subr.mxu0 0.0
    %5383 = vmatpush2.msra.mxu0 0.0
    %5384 = vmatprep.subr.mxu0 0.0
    %5385 = vmatpush2.msra.mxu0 0.0
    %5386 = vmatprep.subr.mxu0 0.0
    %5387 = vmatpush2.msra.mxu0 0.0
    %5388 = vmatprep.subr.mxu0 0.0
    %5389 = vmatpush2.msra.mxu0 0.0
    %5390 = vmatprep.subr.mxu0 0.0
    %5391 = vmatpush2.msra.mxu0 0.0
    %5392 = vmatprep.mubr.f32.mxu0 0.0
    %v5393 = vand.u32 %v5320, 4294901760
    %v5394 = vsub.f32 %v5320, %v5393
    %v5395 = vand.u32 %v5394, 4294901760
    %v5396 = vsub.f32 %v5394, %v5395
    %v5397 = vand.u32 %v5396, 4294901760
    %5398 = vmatmul.mubr.f32.gmra.mxu0 %v5397
    %v5399 = vpop.f32.mrf.mxu0
    %v5400 = vadd.f32 0.0, %v5399
    %v5401 = vpop.f32.mrf.mxu0
    %5402 = vmatprep.mubr.f32.mxu0 0.0
    %v5403 = vand.u32 %v5322, 4294901760
    %v5404 = vsub.f32 %v5322, %v5403
    %v5405 = vand.u32 %v5404, 4294901760
    %v5406 = vsub.f32 %v5404, %v5405
    %v5407 = vand.u32 %v5406, 4294901760
    %5408 = vmatmul.mubr.f32.gmra.mxu0 %v5407
    %v5409 = vpop.f32.mrf.mxu0
    %v5410 = vadd.f32 0.0, %v5409
    %v5411 = vpop.f32.mrf.mxu0
    %5412 = vdwg.mxu0
    %5413 = vmatprep.subr.mxu0 0.0
    %5414 = vmatpush1.msra.mxu0 0.0
    %5415 = vmatprep.subr.mxu0 0.0
    %5416 = vmatpush1.msra.mxu0 0.0
    %5417 = vmatprep.subr.mxu0 0.0
    %5418 = vmatpush1.msra.mxu0 0.0
    %5419 = vmatprep.subr.mxu0 0.0
    %5420 = vmatpush1.msra.mxu0 0.0
    %5421 = vmatprep.subr.mxu0 0.0
    %5422 = vmatpush1.msra.mxu0 0.0
    %5423 = vmatprep.subr.mxu0 0.0
    %5424 = vmatpush1.msra.mxu0 0.0
    %5425 = vmatprep.subr.mxu0 0.0
    %5426 = vmatpush1.msra.mxu0 0.0
    %5427 = vmatprep.subr.mxu0 0.0
    %5428 = vmatpush1.msra.mxu0 0.0
    %5429 = vmatprep.subr.mxu0 0.0
    %5430 = vmatpush1.msra.mxu0 0.0
    %5431 = vmatprep.subr.mxu0 0.0
    %5432 = vmatpush1.msra.mxu0 0.0
    %5433 = vmatprep.subr.mxu0 0.0
    %5434 = vmatpush1.msra.mxu0 0.0
    %5435 = vmatprep.subr.mxu0 0.0
    %5436 = vmatpush1.msra.mxu0 0.0
    %5437 = vmatprep.subr.mxu0 0.0
    %v5438 = vand.u32 %v2363, 4294901760
    %v5439 = vsub.f32 %v2363, %v5438
    %v5440 = vand.u32 %v5439, 4294901760
    %v5441 = vsub.f32 %v5439, %v5440
    %v5442 = vand.u32 %v5441, 4294901760
    %5443 = vmatpush1.msra.mxu0 %v5442
    %5444 = vmatprep.subr.mxu0 0.0
    %v5445 = vand.u32 %v2362, 4294901760
    %v5446 = vsub.f32 %v2362, %v5445
    %v5447 = vand.u32 %v5446, 4294901760
    %v5448 = vsub.f32 %v5446, %v5447
    %v5449 = vand.u32 %v5448, 4294901760
    %5450 = vmatpush1.msra.mxu0 %v5449
    %5451 = vmatprep.subr.mxu0 0.0
    %v5452 = vand.u32 %v2361, 4294901760
    %v5453 = vsub.f32 %v2361, %v5452
    %v5454 = vand.u32 %v5453, 4294901760
    %v5455 = vsub.f32 %v5453, %v5454
    %v5456 = vand.u32 %v5455, 4294901760
    %5457 = vmatpush1.msra.mxu0 %v5456
    %5458 = vmatprep.subr.mxu0 0.0
    %v5459 = vand.u32 %v2360, 4294901760
    %v5460 = vsub.f32 %v2360, %v5459
    %v5461 = vand.u32 %v5460, 4294901760
    %v5462 = vsub.f32 %v5460, %v5461
    %v5463 = vand.u32 %v5462, 4294901760
    %5464 = vmatpush1.msra.mxu0 %v5463
    %5465 = vmatprep.subr.mxu0 0.0
    %5466 = vmatpush2.msra.mxu0 0.0
    %5467 = vmatprep.subr.mxu0 0.0
    %5468 = vmatpush2.msra.mxu0 0.0
    %5469 = vmatprep.subr.mxu0 0.0
    %5470 = vmatpush2.msra.mxu0 0.0
    %5471 = vmatprep.subr.mxu0 0.0
    %5472 = vmatpush2.msra.mxu0 0.0
    %5473 = vmatprep.subr.mxu0 0.0
    %5474 = vmatpush2.msra.mxu0 0.0
    %5475 = vmatprep.subr.mxu0 0.0
    %5476 = vmatpush2.msra.mxu0 0.0
    %5477 = vmatprep.subr.mxu0 0.0
    %5478 = vmatpush2.msra.mxu0 0.0
    %5479 = vmatprep.subr.mxu0 0.0
    %5480 = vmatpush2.msra.mxu0 0.0
    %5481 = vmatprep.subr.mxu0 0.0
    %5482 = vmatpush2.msra.mxu0 0.0
    %5483 = vmatprep.subr.mxu0 0.0
    %5484 = vmatpush2.msra.mxu0 0.0
    %5485 = vmatprep.subr.mxu0 0.0
    %5486 = vmatpush2.msra.mxu0 0.0
    %5487 = vmatprep.subr.mxu0 0.0
    %5488 = vmatpush2.msra.mxu0 0.0
    %5489 = vmatprep.subr.mxu0 0.0
    %5490 = vmatpush2.msra.mxu0 0.0
    %5491 = vmatprep.subr.mxu0 0.0
    %5492 = vmatpush2.msra.mxu0 0.0
    %5493 = vmatprep.subr.mxu0 0.0
    %5494 = vmatpush2.msra.mxu0 0.0
    %5495 = vmatprep.subr.mxu0 0.0
    %5496 = vmatpush2.msra.mxu0 0.0
    %5497 = vmatprep.mubr.f32.mxu0 0.0
    %v5498 = vand.u32 %v5320, 4294901760
    %5499 = vmatmul.mubr.f32.gmra.mxu0 %v5498
    %v5500 = vpop.f32.mrf.mxu0
    %v5501 = vadd.f32 %v5400, %v5500
    %v5502 = vpop.f32.mrf.mxu0
    %5503 = vmatprep.mubr.f32.mxu0 0.0
    %v5504 = vand.u32 %v5322, 4294901760
    %5505 = vmatmul.mubr.f32.gmra.mxu0 %v5504
    %v5506 = vpop.f32.mrf.mxu0
    %v5507 = vadd.f32 %v5410, %v5506
    %v5508 = vpop.f32.mrf.mxu0
    %5509 = vdwg.mxu0
    %5510 = vmatprep.subr.mxu0 0.0
    %5511 = vmatpush1.msra.mxu0 0.0
    %5512 = vmatprep.subr.mxu0 0.0
    %5513 = vmatpush1.msra.mxu0 0.0
    %5514 = vmatprep.subr.mxu0 0.0
    %5515 = vmatpush1.msra.mxu0 0.0
    %5516 = vmatprep.subr.mxu0 0.0
    %5517 = vmatpush1.msra.mxu0 0.0
    %5518 = vmatprep.subr.mxu0 0.0
    %5519 = vmatpush1.msra.mxu0 0.0
    %5520 = vmatprep.subr.mxu0 0.0
    %5521 = vmatpush1.msra.mxu0 0.0
    %5522 = vmatprep.subr.mxu0 0.0
    %5523 = vmatpush1.msra.mxu0 0.0
    %5524 = vmatprep.subr.mxu0 0.0
    %5525 = vmatpush1.msra.mxu0 0.0
    %5526 = vmatprep.subr.mxu0 0.0
    %5527 = vmatpush1.msra.mxu0 0.0
    %5528 = vmatprep.subr.mxu0 0.0
    %5529 = vmatpush1.msra.mxu0 0.0
    %5530 = vmatprep.subr.mxu0 0.0
    %5531 = vmatpush1.msra.mxu0 0.0
    %5532 = vmatprep.subr.mxu0 0.0
    %5533 = vmatpush1.msra.mxu0 0.0
    %5534 = vmatprep.subr.mxu0 0.0
    %v5535 = vand.u32 %v2363, 4294901760
    %v5536 = vsub.f32 %v2363, %v5535
    %5537 = vmatpush1.msra.mxu0 %v5536
    %5538 = vmatprep.subr.mxu0 0.0
    %v5539 = vand.u32 %v2362, 4294901760
    %v5540 = vsub.f32 %v2362, %v5539
    %5541 = vmatpush1.msra.mxu0 %v5540
    %5542 = vmatprep.subr.mxu0 0.0
    %v5543 = vand.u32 %v2361, 4294901760
    %v5544 = vsub.f32 %v2361, %v5543
    %5545 = vmatpush1.msra.mxu0 %v5544
    %5546 = vmatprep.subr.mxu0 0.0
    %v5547 = vand.u32 %v2360, 4294901760
    %v5548 = vsub.f32 %v2360, %v5547
    %5549 = vmatpush1.msra.mxu0 %v5548
    %5550 = vmatprep.subr.mxu0 0.0
    %5551 = vmatpush2.msra.mxu0 0.0
    %5552 = vmatprep.subr.mxu0 0.0
    %5553 = vmatpush2.msra.mxu0 0.0
    %5554 = vmatprep.subr.mxu0 0.0
    %5555 = vmatpush2.msra.mxu0 0.0
    %5556 = vmatprep.subr.mxu0 0.0
    %5557 = vmatpush2.msra.mxu0 0.0
    %5558 = vmatprep.subr.mxu0 0.0
    %5559 = vmatpush2.msra.mxu0 0.0
    %5560 = vmatprep.subr.mxu0 0.0
    %5561 = vmatpush2.msra.mxu0 0.0
    %5562 = vmatprep.subr.mxu0 0.0
    %5563 = vmatpush2.msra.mxu0 0.0
    %5564 = vmatprep.subr.mxu0 0.0
    %5565 = vmatpush2.msra.mxu0 0.0
    %5566 = vmatprep.subr.mxu0 0.0
    %5567 = vmatpush2.msra.mxu0 0.0
    %5568 = vmatprep.subr.mxu0 0.0
    %5569 = vmatpush2.msra.mxu0 0.0
    %5570 = vmatprep.subr.mxu0 0.0
    %5571 = vmatpush2.msra.mxu0 0.0
    %5572 = vmatprep.subr.mxu0 0.0
    %5573 = vmatpush2.msra.mxu0 0.0
    %5574 = vmatprep.subr.mxu0 0.0
    %5575 = vmatpush2.msra.mxu0 0.0
    %5576 = vmatprep.subr.mxu0 0.0
    %5577 = vmatpush2.msra.mxu0 0.0
    %5578 = vmatprep.subr.mxu0 0.0
    %5579 = vmatpush2.msra.mxu0 0.0
    %5580 = vmatprep.subr.mxu0 0.0
    %5581 = vmatpush2.msra.mxu0 0.0
    %5582 = vmatprep.mubr.f32.mxu0 0.0
    %v5583 = vand.u32 %v5320, 4294901760
    %v5584 = vsub.f32 %v5320, %v5583
    %5585 = vmatmul.mubr.f32.gmra.mxu0 %v5584
    %v5586 = vpop.f32.mrf.mxu0
    %v5587 = vadd.f32 %v5501, %v5586
    %v5588 = vpop.f32.mrf.mxu0
    %5589 = vmatprep.mubr.f32.mxu0 0.0
    %v5590 = vand.u32 %v5322, 4294901760
    %v5591 = vsub.f32 %v5322, %v5590
    %5592 = vmatmul.mubr.f32.gmra.mxu0 %v5591
    %v5593 = vpop.f32.mrf.mxu0
    %v5594 = vadd.f32 %v5507, %v5593
    %v5595 = vpop.f32.mrf.mxu0
    %5596 = vdwg.mxu0
    %5597 = vmatprep.subr.mxu0 0.0
    %5598 = vmatpush1.msra.mxu0 0.0
    %5599 = vmatprep.subr.mxu0 0.0
    %5600 = vmatpush1.msra.mxu0 0.0
    %5601 = vmatprep.subr.mxu0 0.0
    %5602 = vmatpush1.msra.mxu0 0.0
    %5603 = vmatprep.subr.mxu0 0.0
    %5604 = vmatpush1.msra.mxu0 0.0
    %5605 = vmatprep.subr.mxu0 0.0
    %5606 = vmatpush1.msra.mxu0 0.0
    %5607 = vmatprep.subr.mxu0 0.0
    %5608 = vmatpush1.msra.mxu0 0.0
    %5609 = vmatprep.subr.mxu0 0.0
    %5610 = vmatpush1.msra.mxu0 0.0
    %5611 = vmatprep.subr.mxu0 0.0
    %5612 = vmatpush1.msra.mxu0 0.0
    %5613 = vmatprep.subr.mxu0 0.0
    %5614 = vmatpush1.msra.mxu0 0.0
    %5615 = vmatprep.subr.mxu0 0.0
    %5616 = vmatpush1.msra.mxu0 0.0
    %5617 = vmatprep.subr.mxu0 0.0
    %5618 = vmatpush1.msra.mxu0 0.0
    %5619 = vmatprep.subr.mxu0 0.0
    %5620 = vmatpush1.msra.mxu0 0.0
    %5621 = vmatprep.subr.mxu0 0.0
    %v5622 = vand.u32 %v2363, 4294901760
    %5623 = vmatpush1.msra.mxu0 %v5622
    %5624 = vmatprep.subr.mxu0 0.0
    %v5625 = vand.u32 %v2362, 4294901760
    %5626 = vmatpush1.msra.mxu0 %v5625
    %5627 = vmatprep.subr.mxu0 0.0
    %v5628 = vand.u32 %v2361, 4294901760
    %5629 = vmatpush1.msra.mxu0 %v5628
    %5630 = vmatprep.subr.mxu0 0.0
    %v5631 = vand.u32 %v2360, 4294901760
    %5632 = vmatpush1.msra.mxu0 %v5631
    %5633 = vmatprep.subr.mxu0 0.0
    %5634 = vmatpush2.msra.mxu0 0.0
    %5635 = vmatprep.subr.mxu0 0.0
    %5636 = vmatpush2.msra.mxu0 0.0
    %5637 = vmatprep.subr.mxu0 0.0
    %5638 = vmatpush2.msra.mxu0 0.0
    %5639 = vmatprep.subr.mxu0 0.0
    %5640 = vmatpush2.msra.mxu0 0.0
    %5641 = vmatprep.subr.mxu0 0.0
    %5642 = vmatpush2.msra.mxu0 0.0
    %5643 = vmatprep.subr.mxu0 0.0
    %5644 = vmatpush2.msra.mxu0 0.0
    %5645 = vmatprep.subr.mxu0 0.0
    %5646 = vmatpush2.msra.mxu0 0.0
    %5647 = vmatprep.subr.mxu0 0.0
    %5648 = vmatpush2.msra.mxu0 0.0
    %5649 = vmatprep.subr.mxu0 0.0
    %5650 = vmatpush2.msra.mxu0 0.0
    %5651 = vmatprep.subr.mxu0 0.0
    %5652 = vmatpush2.msra.mxu0 0.0
    %5653 = vmatprep.subr.mxu0 0.0
    %5654 = vmatpush2.msra.mxu0 0.0
    %5655 = vmatprep.subr.mxu0 0.0
    %5656 = vmatpush2.msra.mxu0 0.0
    %5657 = vmatprep.subr.mxu0 0.0
    %5658 = vmatpush2.msra.mxu0 0.0
    %5659 = vmatprep.subr.mxu0 0.0
    %5660 = vmatpush2.msra.mxu0 0.0
    %5661 = vmatprep.subr.mxu0 0.0
    %5662 = vmatpush2.msra.mxu0 0.0
    %5663 = vmatprep.subr.mxu0 0.0
    %5664 = vmatpush2.msra.mxu0 0.0
    %5665 = vmatprep.mubr.f32.mxu0 0.0
    %v5666 = vand.u32 %v5320, 4294901760
    %v5667 = vsub.f32 %v5320, %v5666
    %v5668 = vand.u32 %v5667, 4294901760
    %5669 = vmatmul.mubr.f32.gmra.mxu0 %v5668
    %v5670 = vpop.f32.mrf.mxu0
    %v5671 = vadd.f32 %v5587, %v5670
    %v5672 = vpop.f32.mrf.mxu0
    %5673 = vmatprep.mubr.f32.mxu0 0.0
    %v5674 = vand.u32 %v5322, 4294901760
    %v5675 = vsub.f32 %v5322, %v5674
    %v5676 = vand.u32 %v5675, 4294901760
    %5677 = vmatmul.mubr.f32.gmra.mxu0 %v5676
    %v5678 = vpop.f32.mrf.mxu0
    %v5679 = vadd.f32 %v5594, %v5678
    %v5680 = vpop.f32.mrf.mxu0
    %5681 = vdwg.mxu0
    %5682 = vmatprep.subr.mxu0 0.0
    %5683 = vmatpush1.msra.mxu0 0.0
    %5684 = vmatprep.subr.mxu0 0.0
    %5685 = vmatpush1.msra.mxu0 0.0
    %5686 = vmatprep.subr.mxu0 0.0
    %5687 = vmatpush1.msra.mxu0 0.0
    %5688 = vmatprep.subr.mxu0 0.0
    %5689 = vmatpush1.msra.mxu0 0.0
    %5690 = vmatprep.subr.mxu0 0.0
    %5691 = vmatpush1.msra.mxu0 0.0
    %5692 = vmatprep.subr.mxu0 0.0
    %5693 = vmatpush1.msra.mxu0 0.0
    %5694 = vmatprep.subr.mxu0 0.0
    %5695 = vmatpush1.msra.mxu0 0.0
    %5696 = vmatprep.subr.mxu0 0.0
    %5697 = vmatpush1.msra.mxu0 0.0
    %5698 = vmatprep.subr.mxu0 0.0
    %5699 = vmatpush1.msra.mxu0 0.0
    %5700 = vmatprep.subr.mxu0 0.0
    %5701 = vmatpush1.msra.mxu0 0.0
    %5702 = vmatprep.subr.mxu0 0.0
    %5703 = vmatpush1.msra.mxu0 0.0
    %5704 = vmatprep.subr.mxu0 0.0
    %5705 = vmatpush1.msra.mxu0 0.0
    %5706 = vmatprep.subr.mxu0 0.0
    %v5707 = vand.u32 %v2363, 4294901760
    %v5708 = vsub.f32 %v2363, %v5707
    %v5709 = vand.u32 %v5708, 4294901760
    %5710 = vmatpush1.msra.mxu0 %v5709
    %5711 = vmatprep.subr.mxu0 0.0
    %v5712 = vand.u32 %v2362, 4294901760
    %v5713 = vsub.f32 %v2362, %v5712
    %v5714 = vand.u32 %v5713, 4294901760
    %5715 = vmatpush1.msra.mxu0 %v5714
    %5716 = vmatprep.subr.mxu0 0.0
    %v5717 = vand.u32 %v2361, 4294901760
    %v5718 = vsub.f32 %v2361, %v5717
    %v5719 = vand.u32 %v5718, 4294901760
    %5720 = vmatpush1.msra.mxu0 %v5719
    %5721 = vmatprep.subr.mxu0 0.0
    %v5722 = vand.u32 %v2360, 4294901760
    %v5723 = vsub.f32 %v2360, %v5722
    %v5724 = vand.u32 %v5723, 4294901760
    %5725 = vmatpush1.msra.mxu0 %v5724
    %5726 = vmatprep.subr.mxu0 0.0
    %5727 = vmatpush2.msra.mxu0 0.0
    %5728 = vmatprep.subr.mxu0 0.0
    %5729 = vmatpush2.msra.mxu0 0.0
    %5730 = vmatprep.subr.mxu0 0.0
    %5731 = vmatpush2.msra.mxu0 0.0
    %5732 = vmatprep.subr.mxu0 0.0
    %5733 = vmatpush2.msra.mxu0 0.0
    %5734 = vmatprep.subr.mxu0 0.0
    %5735 = vmatpush2.msra.mxu0 0.0
    %5736 = vmatprep.subr.mxu0 0.0
    %5737 = vmatpush2.msra.mxu0 0.0
    %5738 = vmatprep.subr.mxu0 0.0
    %5739 = vmatpush2.msra.mxu0 0.0
    %5740 = vmatprep.subr.mxu0 0.0
    %5741 = vmatpush2.msra.mxu0 0.0
    %5742 = vmatprep.subr.mxu0 0.0
    %5743 = vmatpush2.msra.mxu0 0.0
    %5744 = vmatprep.subr.mxu0 0.0
    %5745 = vmatpush2.msra.mxu0 0.0
    %5746 = vmatprep.subr.mxu0 0.0
    %5747 = vmatpush2.msra.mxu0 0.0
    %5748 = vmatprep.subr.mxu0 0.0
    %5749 = vmatpush2.msra.mxu0 0.0
    %5750 = vmatprep.subr.mxu0 0.0
    %5751 = vmatpush2.msra.mxu0 0.0
    %5752 = vmatprep.subr.mxu0 0.0
    %5753 = vmatpush2.msra.mxu0 0.0
    %5754 = vmatprep.subr.mxu0 0.0
    %5755 = vmatpush2.msra.mxu0 0.0
    %5756 = vmatprep.subr.mxu0 0.0
    %5757 = vmatpush2.msra.mxu0 0.0
    %5758 = vmatprep.mubr.f32.mxu0 0.0
    %v5759 = vand.u32 %v5320, 4294901760
    %5760 = vmatmul.mubr.f32.gmra.mxu0 %v5759
    %v5761 = vpop.f32.mrf.mxu0
    %v5762 = vadd.f32 %v5671, %v5761
    %v5763 = vpop.f32.mrf.mxu0
    %5764 = vmatprep.mubr.f32.mxu0 0.0
    %v5765 = vand.u32 %v5322, 4294901760
    %5766 = vmatmul.mubr.f32.gmra.mxu0 %v5765
    %v5767 = vpop.f32.mrf.mxu0
    %v5768 = vadd.f32 %v5679, %v5767
    %v5769 = vpop.f32.mrf.mxu0
    %5770 = vdwg.mxu0
    %5771 = vmatprep.subr.mxu0 0.0
    %5772 = vmatpush1.msra.mxu0 0.0
    %5773 = vmatprep.subr.mxu0 0.0
    %5774 = vmatpush1.msra.mxu0 0.0
    %5775 = vmatprep.subr.mxu0 0.0
    %5776 = vmatpush1.msra.mxu0 0.0
    %5777 = vmatprep.subr.mxu0 0.0
    %5778 = vmatpush1.msra.mxu0 0.0
    %5779 = vmatprep.subr.mxu0 0.0
    %5780 = vmatpush1.msra.mxu0 0.0
    %5781 = vmatprep.subr.mxu0 0.0
    %5782 = vmatpush1.msra.mxu0 0.0
    %5783 = vmatprep.subr.mxu0 0.0
    %5784 = vmatpush1.msra.mxu0 0.0
    %5785 = vmatprep.subr.mxu0 0.0
    %5786 = vmatpush1.msra.mxu0 0.0
    %5787 = vmatprep.subr.mxu0 0.0
    %5788 = vmatpush1.msra.mxu0 0.0
    %5789 = vmatprep.subr.mxu0 0.0
    %5790 = vmatpush1.msra.mxu0 0.0
    %5791 = vmatprep.subr.mxu0 0.0
    %5792 = vmatpush1.msra.mxu0 0.0
    %5793 = vmatprep.subr.mxu0 0.0
    %5794 = vmatpush1.msra.mxu0 0.0
    %5795 = vmatprep.subr.mxu0 0.0
    %v5796 = vand.u32 %v2363, 4294901760
    %5797 = vmatpush1.msra.mxu0 %v5796
    %5798 = vmatprep.subr.mxu0 0.0
    %v5799 = vand.u32 %v2362, 4294901760
    %5800 = vmatpush1.msra.mxu0 %v5799
    %5801 = vmatprep.subr.mxu0 0.0
    %v5802 = vand.u32 %v2361, 4294901760
    %5803 = vmatpush1.msra.mxu0 %v5802
    %5804 = vmatprep.subr.mxu0 0.0
    %v5805 = vand.u32 %v2360, 4294901760
    %5806 = vmatpush1.msra.mxu0 %v5805
    %5807 = vmatprep.subr.mxu0 0.0
    %5808 = vmatpush2.msra.mxu0 0.0
    %5809 = vmatprep.subr.mxu0 0.0
    %5810 = vmatpush2.msra.mxu0 0.0
    %5811 = vmatprep.subr.mxu0 0.0
    %5812 = vmatpush2.msra.mxu0 0.0
    %5813 = vmatprep.subr.mxu0 0.0
    %5814 = vmatpush2.msra.mxu0 0.0
    %5815 = vmatprep.subr.mxu0 0.0
    %5816 = vmatpush2.msra.mxu0 0.0
    %5817 = vmatprep.subr.mxu0 0.0
    %5818 = vmatpush2.msra.mxu0 0.0
    %5819 = vmatprep.subr.mxu0 0.0
    %5820 = vmatpush2.msra.mxu0 0.0
    %5821 = vmatprep.subr.mxu0 0.0
    %5822 = vmatpush2.msra.mxu0 0.0
    %5823 = vmatprep.subr.mxu0 0.0
    %5824 = vmatpush2.msra.mxu0 0.0
    %5825 = vmatprep.subr.mxu0 0.0
    %5826 = vmatpush2.msra.mxu0 0.0
    %5827 = vmatprep.subr.mxu0 0.0
    %5828 = vmatpush2.msra.mxu0 0.0
    %5829 = vmatprep.subr.mxu0 0.0
    %5830 = vmatpush2.msra.mxu0 0.0
    %5831 = vmatprep.subr.mxu0 0.0
    %5832 = vmatpush2.msra.mxu0 0.0
    %5833 = vmatprep.subr.mxu0 0.0
    %5834 = vmatpush2.msra.mxu0 0.0
    %5835 = vmatprep.subr.mxu0 0.0
    %5836 = vmatpush2.msra.mxu0 0.0
    %5837 = vmatprep.subr.mxu0 0.0
    %5838 = vmatpush2.msra.mxu0 0.0
    %5839 = vmatprep.mubr.f32.mxu0 0.0
    %v5840 = vand.u32 %v5320, 4294901760
    %5841 = vmatmul.mubr.f32.gmra.mxu0 %v5840
    %v5842 = vpop.f32.mrf.mxu0
    %v5843 = vadd.f32 %v5762, %v5842
    %v5844 = vpop.f32.mrf.mxu0
    %5845 = vmatprep.mubr.f32.mxu0 0.0
    %v5846 = vand.u32 %v5322, 4294901760
    %5847 = vmatmul.mubr.f32.gmra.mxu0 %v5846
    %v5848 = vpop.f32.mrf.mxu0
    %v5849 = vadd.f32 %v5768, %v5848
    %v5850 = vpop.f32.mrf.mxu0
    %5851 = vdwg.mxu0
    %v5852 = vadd.f32 %v2374, %v5843
    %v5853 = vadd.f32 %v2375, %v5849
    %v5854 = vxor.u32 %v5852, 2147483648
    %v5855 = vxor.u32 %v5853, 2147483648
    %v5856 = vmul.f32 %v5854, 1.442695
    %v5857 = vpow.pop %v5856
    %v5858 = vmul.f32 %v5855, 1.442695
    %v5859 = vpow.pop %v5858
    %v5860 = vadd.f32 %v5857, 1.0
    %v5861 = vadd.f32 %v5859, 1.0
    %v5862 = vrcp.pop %v5860
    %v5863 = vmul.f32 1.0, %v5862
    %v5864 = vrcp.pop %v5861
    %v5865 = vmul.f32 1.0, %v5864
    %v5866 = vtanh.pop %v5852
    %v5867 = vtanh.pop %v5853
    %v5868 = vmul.f32 %v5863, %v5300
    %v5869 = vmul.f32 %v5865, %v5301
    %5872 = vrot.lane.b32.xlu0 %v5866, 32
    %v5873 = vpop.permute.xlu0 %5872
    %5874 = vrot.lane.b32.xlu0 %v5867, 32
    %v5875 = vpop.permute.xlu0 %5874
    %v5878 = vmul.f32 %v5863, %v5873
    %v5879 = vmul.f32 %v5865, %v5875
    %5882 = vrot.lane.b32.xlu0 %v5878, 32
    %v5883 = vpop.permute.xlu0 %5882
    %5884 = vrot.lane.b32.xlu0 %v5879, 32
    %v5885 = vpop.permute.xlu0 %5884
    %v5888 = vadd.f32 %v5868, %v5883
    %v5889 = vadd.f32 %v5869, %v5885
    %v5890 = vtanh.pop %v5888
    %v5891 = vtanh.pop %v5889
    %5894 = vrot.lane.b32.xlu0 %v5890, 32
    %v5895 = vpop.permute.xlu0 %5894
    %5896 = vrot.lane.b32.xlu0 %v5891, 32
    %v5897 = vpop.permute.xlu0 %5896
    %v5900 = vmul.f32 %v5863, %v5895
    %v5901 = vmul.f32 %v5865, %v5897
    %5904 = vrot.lane.b32.xlu0 %v5900, 64
    %v5905 = vpop.permute.xlu0 %5904
    %5906 = vrot.lane.b32.xlu0 %v5901, 64
    %v5907 = vpop.permute.xlu0 %5906
    %v5908 = vsel %vm2380, %v5905, 0
    %v5910 = vsel %vm2380, %v5907, 0
    %5912 = vmatprep.subr.mxu0 0.0
    %5913 = vmatpush1.msra.mxu0 0.0
    %5914 = vmatprep.subr.mxu0 0.0
    %5915 = vmatpush1.msra.mxu0 0.0
    %5916 = vmatprep.subr.mxu0 0.0
    %5917 = vmatpush1.msra.mxu0 0.0
    %5918 = vmatprep.subr.mxu0 0.0
    %5919 = vmatpush1.msra.mxu0 0.0
    %5920 = vmatprep.subr.mxu0 0.0
    %5921 = vmatpush1.msra.mxu0 0.0
    %5922 = vmatprep.subr.mxu0 0.0
    %5923 = vmatpush1.msra.mxu0 0.0
    %5924 = vmatprep.subr.mxu0 0.0
    %5925 = vmatpush1.msra.mxu0 0.0
    %5926 = vmatprep.subr.mxu0 0.0
    %5927 = vmatpush1.msra.mxu0 0.0
    %5928 = vmatprep.subr.mxu0 0.0
    %5929 = vmatpush1.msra.mxu0 0.0
    %5930 = vmatprep.subr.mxu0 0.0
    %5931 = vmatpush1.msra.mxu0 0.0
    %5932 = vmatprep.subr.mxu0 0.0
    %5933 = vmatpush1.msra.mxu0 0.0
    %5934 = vmatprep.subr.mxu0 0.0
    %5935 = vmatpush1.msra.mxu0 0.0
    %5936 = vmatprep.subr.mxu0 0.0
    %v5937 = vand.u32 %v2363, 4294901760
    %5938 = vmatpush1.msra.mxu0 %v5937
    %5939 = vmatprep.subr.mxu0 0.0
    %v5940 = vand.u32 %v2362, 4294901760
    %5941 = vmatpush1.msra.mxu0 %v5940
    %5942 = vmatprep.subr.mxu0 0.0
    %v5943 = vand.u32 %v2361, 4294901760
    %5944 = vmatpush1.msra.mxu0 %v5943
    %5945 = vmatprep.subr.mxu0 0.0
    %v5946 = vand.u32 %v2360, 4294901760
    %5947 = vmatpush1.msra.mxu0 %v5946
    %5948 = vmatprep.subr.mxu0 0.0
    %5949 = vmatpush2.msra.mxu0 0.0
    %5950 = vmatprep.subr.mxu0 0.0
    %5951 = vmatpush2.msra.mxu0 0.0
    %5952 = vmatprep.subr.mxu0 0.0
    %5953 = vmatpush2.msra.mxu0 0.0
    %5954 = vmatprep.subr.mxu0 0.0
    %5955 = vmatpush2.msra.mxu0 0.0
    %5956 = vmatprep.subr.mxu0 0.0
    %5957 = vmatpush2.msra.mxu0 0.0
    %5958 = vmatprep.subr.mxu0 0.0
    %5959 = vmatpush2.msra.mxu0 0.0
    %5960 = vmatprep.subr.mxu0 0.0
    %5961 = vmatpush2.msra.mxu0 0.0
    %5962 = vmatprep.subr.mxu0 0.0
    %5963 = vmatpush2.msra.mxu0 0.0
    %5964 = vmatprep.subr.mxu0 0.0
    %5965 = vmatpush2.msra.mxu0 0.0
    %5966 = vmatprep.subr.mxu0 0.0
    %5967 = vmatpush2.msra.mxu0 0.0
    %5968 = vmatprep.subr.mxu0 0.0
    %5969 = vmatpush2.msra.mxu0 0.0
    %5970 = vmatprep.subr.mxu0 0.0
    %5971 = vmatpush2.msra.mxu0 0.0
    %5972 = vmatprep.subr.mxu0 0.0
    %5973 = vmatpush2.msra.mxu0 0.0
    %5974 = vmatprep.subr.mxu0 0.0
    %5975 = vmatpush2.msra.mxu0 0.0
    %5976 = vmatprep.subr.mxu0 0.0
    %5977 = vmatpush2.msra.mxu0 0.0
    %5978 = vmatprep.subr.mxu0 0.0
    %5979 = vmatpush2.msra.mxu0 0.0
    %5980 = vmatprep.mubr.f32.mxu0 0.0
    %v5981 = vand.u32 %v5908, 4294901760
    %v5982 = vsub.f32 %v5908, %v5981
    %v5983 = vand.u32 %v5982, 4294901760
    %v5984 = vsub.f32 %v5982, %v5983
    %v5985 = vand.u32 %v5984, 4294901760
    %5986 = vmatmul.mubr.f32.gmra.mxu0 %v5985
    %v5987 = vpop.f32.mrf.mxu0
    %v5988 = vadd.f32 0.0, %v5987
    %v5989 = vpop.f32.mrf.mxu0
    %5990 = vmatprep.mubr.f32.mxu0 0.0
    %v5991 = vand.u32 %v5910, 4294901760
    %v5992 = vsub.f32 %v5910, %v5991
    %v5993 = vand.u32 %v5992, 4294901760
    %v5994 = vsub.f32 %v5992, %v5993
    %v5995 = vand.u32 %v5994, 4294901760
    %5996 = vmatmul.mubr.f32.gmra.mxu0 %v5995
    %v5997 = vpop.f32.mrf.mxu0
    %v5998 = vadd.f32 0.0, %v5997
    %v5999 = vpop.f32.mrf.mxu0
    %6000 = vdwg.mxu0
    %6001 = vmatprep.subr.mxu0 0.0
    %6002 = vmatpush1.msra.mxu0 0.0
    %6003 = vmatprep.subr.mxu0 0.0
    %6004 = vmatpush1.msra.mxu0 0.0
    %6005 = vmatprep.subr.mxu0 0.0
    %6006 = vmatpush1.msra.mxu0 0.0
    %6007 = vmatprep.subr.mxu0 0.0
    %6008 = vmatpush1.msra.mxu0 0.0
    %6009 = vmatprep.subr.mxu0 0.0
    %6010 = vmatpush1.msra.mxu0 0.0
    %6011 = vmatprep.subr.mxu0 0.0
    %6012 = vmatpush1.msra.mxu0 0.0
    %6013 = vmatprep.subr.mxu0 0.0
    %6014 = vmatpush1.msra.mxu0 0.0
    %6015 = vmatprep.subr.mxu0 0.0
    %6016 = vmatpush1.msra.mxu0 0.0
    %6017 = vmatprep.subr.mxu0 0.0
    %6018 = vmatpush1.msra.mxu0 0.0
    %6019 = vmatprep.subr.mxu0 0.0
    %6020 = vmatpush1.msra.mxu0 0.0
    %6021 = vmatprep.subr.mxu0 0.0
    %6022 = vmatpush1.msra.mxu0 0.0
    %6023 = vmatprep.subr.mxu0 0.0
    %6024 = vmatpush1.msra.mxu0 0.0
    %6025 = vmatprep.subr.mxu0 0.0
    %v6026 = vand.u32 %v2363, 4294901760
    %v6027 = vsub.f32 %v2363, %v6026
    %v6028 = vand.u32 %v6027, 4294901760
    %v6029 = vsub.f32 %v6027, %v6028
    %v6030 = vand.u32 %v6029, 4294901760
    %6031 = vmatpush1.msra.mxu0 %v6030
    %6032 = vmatprep.subr.mxu0 0.0
    %v6033 = vand.u32 %v2362, 4294901760
    %v6034 = vsub.f32 %v2362, %v6033
    %v6035 = vand.u32 %v6034, 4294901760
    %v6036 = vsub.f32 %v6034, %v6035
    %v6037 = vand.u32 %v6036, 4294901760
    %6038 = vmatpush1.msra.mxu0 %v6037
    %6039 = vmatprep.subr.mxu0 0.0
    %v6040 = vand.u32 %v2361, 4294901760
    %v6041 = vsub.f32 %v2361, %v6040
    %v6042 = vand.u32 %v6041, 4294901760
    %v6043 = vsub.f32 %v6041, %v6042
    %v6044 = vand.u32 %v6043, 4294901760
    %6045 = vmatpush1.msra.mxu0 %v6044
    %6046 = vmatprep.subr.mxu0 0.0
    %v6047 = vand.u32 %v2360, 4294901760
    %v6048 = vsub.f32 %v2360, %v6047
    %v6049 = vand.u32 %v6048, 4294901760
    %v6050 = vsub.f32 %v6048, %v6049
    %v6051 = vand.u32 %v6050, 4294901760
    %6052 = vmatpush1.msra.mxu0 %v6051
    %6053 = vmatprep.subr.mxu0 0.0
    %6054 = vmatpush2.msra.mxu0 0.0
    %6055 = vmatprep.subr.mxu0 0.0
    %6056 = vmatpush2.msra.mxu0 0.0
    %6057 = vmatprep.subr.mxu0 0.0
    %6058 = vmatpush2.msra.mxu0 0.0
    %6059 = vmatprep.subr.mxu0 0.0
    %6060 = vmatpush2.msra.mxu0 0.0
    %6061 = vmatprep.subr.mxu0 0.0
    %6062 = vmatpush2.msra.mxu0 0.0
    %6063 = vmatprep.subr.mxu0 0.0
    %6064 = vmatpush2.msra.mxu0 0.0
    %6065 = vmatprep.subr.mxu0 0.0
    %6066 = vmatpush2.msra.mxu0 0.0
    %6067 = vmatprep.subr.mxu0 0.0
    %6068 = vmatpush2.msra.mxu0 0.0
    %6069 = vmatprep.subr.mxu0 0.0
    %6070 = vmatpush2.msra.mxu0 0.0
    %6071 = vmatprep.subr.mxu0 0.0
    %6072 = vmatpush2.msra.mxu0 0.0
    %6073 = vmatprep.subr.mxu0 0.0
    %6074 = vmatpush2.msra.mxu0 0.0
    %6075 = vmatprep.subr.mxu0 0.0
    %6076 = vmatpush2.msra.mxu0 0.0
    %6077 = vmatprep.subr.mxu0 0.0
    %6078 = vmatpush2.msra.mxu0 0.0
    %6079 = vmatprep.subr.mxu0 0.0
    %6080 = vmatpush2.msra.mxu0 0.0
    %6081 = vmatprep.subr.mxu0 0.0
    %6082 = vmatpush2.msra.mxu0 0.0
    %6083 = vmatprep.subr.mxu0 0.0
    %6084 = vmatpush2.msra.mxu0 0.0
    %6085 = vmatprep.mubr.f32.mxu0 0.0
    %v6086 = vand.u32 %v5908, 4294901760
    %6087 = vmatmul.mubr.f32.gmra.mxu0 %v6086
    %v6088 = vpop.f32.mrf.mxu0
    %v6089 = vadd.f32 %v5988, %v6088
    %v6090 = vpop.f32.mrf.mxu0
    %6091 = vmatprep.mubr.f32.mxu0 0.0
    %v6092 = vand.u32 %v5910, 4294901760
    %6093 = vmatmul.mubr.f32.gmra.mxu0 %v6092
    %v6094 = vpop.f32.mrf.mxu0
    %v6095 = vadd.f32 %v5998, %v6094
    %v6096 = vpop.f32.mrf.mxu0
    %6097 = vdwg.mxu0
    %6098 = vmatprep.subr.mxu0 0.0
    %6099 = vmatpush1.msra.mxu0 0.0
    %6100 = vmatprep.subr.mxu0 0.0
    %6101 = vmatpush1.msra.mxu0 0.0
    %6102 = vmatprep.subr.mxu0 0.0
    %6103 = vmatpush1.msra.mxu0 0.0
    %6104 = vmatprep.subr.mxu0 0.0
    %6105 = vmatpush1.msra.mxu0 0.0
    %6106 = vmatprep.subr.mxu0 0.0
    %6107 = vmatpush1.msra.mxu0 0.0
    %6108 = vmatprep.subr.mxu0 0.0
    %6109 = vmatpush1.msra.mxu0 0.0
    %6110 = vmatprep.subr.mxu0 0.0
    %6111 = vmatpush1.msra.mxu0 0.0
    %6112 = vmatprep.subr.mxu0 0.0
    %6113 = vmatpush1.msra.mxu0 0.0
    %6114 = vmatprep.subr.mxu0 0.0
    %6115 = vmatpush1.msra.mxu0 0.0
    %6116 = vmatprep.subr.mxu0 0.0
    %6117 = vmatpush1.msra.mxu0 0.0
    %6118 = vmatprep.subr.mxu0 0.0
    %6119 = vmatpush1.msra.mxu0 0.0
    %6120 = vmatprep.subr.mxu0 0.0
    %6121 = vmatpush1.msra.mxu0 0.0
    %6122 = vmatprep.subr.mxu0 0.0
    %v6123 = vand.u32 %v2363, 4294901760
    %v6124 = vsub.f32 %v2363, %v6123
    %6125 = vmatpush1.msra.mxu0 %v6124
    %6126 = vmatprep.subr.mxu0 0.0
    %v6127 = vand.u32 %v2362, 4294901760
    %v6128 = vsub.f32 %v2362, %v6127
    %6129 = vmatpush1.msra.mxu0 %v6128
    %6130 = vmatprep.subr.mxu0 0.0
    %v6131 = vand.u32 %v2361, 4294901760
    %v6132 = vsub.f32 %v2361, %v6131
    %6133 = vmatpush1.msra.mxu0 %v6132
    %6134 = vmatprep.subr.mxu0 0.0
    %v6135 = vand.u32 %v2360, 4294901760
    %v6136 = vsub.f32 %v2360, %v6135
    %6137 = vmatpush1.msra.mxu0 %v6136
    %6138 = vmatprep.subr.mxu0 0.0
    %6139 = vmatpush2.msra.mxu0 0.0
    %6140 = vmatprep.subr.mxu0 0.0
    %6141 = vmatpush2.msra.mxu0 0.0
    %6142 = vmatprep.subr.mxu0 0.0
    %6143 = vmatpush2.msra.mxu0 0.0
    %6144 = vmatprep.subr.mxu0 0.0
    %6145 = vmatpush2.msra.mxu0 0.0
    %6146 = vmatprep.subr.mxu0 0.0
    %6147 = vmatpush2.msra.mxu0 0.0
    %6148 = vmatprep.subr.mxu0 0.0
    %6149 = vmatpush2.msra.mxu0 0.0
    %6150 = vmatprep.subr.mxu0 0.0
    %6151 = vmatpush2.msra.mxu0 0.0
    %6152 = vmatprep.subr.mxu0 0.0
    %6153 = vmatpush2.msra.mxu0 0.0
    %6154 = vmatprep.subr.mxu0 0.0
    %6155 = vmatpush2.msra.mxu0 0.0
    %6156 = vmatprep.subr.mxu0 0.0
    %6157 = vmatpush2.msra.mxu0 0.0
    %6158 = vmatprep.subr.mxu0 0.0
    %6159 = vmatpush2.msra.mxu0 0.0
    %6160 = vmatprep.subr.mxu0 0.0
    %6161 = vmatpush2.msra.mxu0 0.0
    %6162 = vmatprep.subr.mxu0 0.0
    %6163 = vmatpush2.msra.mxu0 0.0
    %6164 = vmatprep.subr.mxu0 0.0
    %6165 = vmatpush2.msra.mxu0 0.0
    %6166 = vmatprep.subr.mxu0 0.0
    %6167 = vmatpush2.msra.mxu0 0.0
    %6168 = vmatprep.subr.mxu0 0.0
    %6169 = vmatpush2.msra.mxu0 0.0
    %6170 = vmatprep.mubr.f32.mxu0 0.0
    %v6171 = vand.u32 %v5908, 4294901760
    %v6172 = vsub.f32 %v5908, %v6171
    %6173 = vmatmul.mubr.f32.gmra.mxu0 %v6172
    %v6174 = vpop.f32.mrf.mxu0
    %v6175 = vadd.f32 %v6089, %v6174
    %v6176 = vpop.f32.mrf.mxu0
    %6177 = vmatprep.mubr.f32.mxu0 0.0
    %v6178 = vand.u32 %v5910, 4294901760
    %v6179 = vsub.f32 %v5910, %v6178
    %6180 = vmatmul.mubr.f32.gmra.mxu0 %v6179
    %v6181 = vpop.f32.mrf.mxu0
    %v6182 = vadd.f32 %v6095, %v6181
    %v6183 = vpop.f32.mrf.mxu0
    %6184 = vdwg.mxu0
    %6185 = vmatprep.subr.mxu0 0.0
    %6186 = vmatpush1.msra.mxu0 0.0
    %6187 = vmatprep.subr.mxu0 0.0
    %6188 = vmatpush1.msra.mxu0 0.0
    %6189 = vmatprep.subr.mxu0 0.0
    %6190 = vmatpush1.msra.mxu0 0.0
    %6191 = vmatprep.subr.mxu0 0.0
    %6192 = vmatpush1.msra.mxu0 0.0
    %6193 = vmatprep.subr.mxu0 0.0
    %6194 = vmatpush1.msra.mxu0 0.0
    %6195 = vmatprep.subr.mxu0 0.0
    %6196 = vmatpush1.msra.mxu0 0.0
    %6197 = vmatprep.subr.mxu0 0.0
    %6198 = vmatpush1.msra.mxu0 0.0
    %6199 = vmatprep.subr.mxu0 0.0
    %6200 = vmatpush1.msra.mxu0 0.0
    %6201 = vmatprep.subr.mxu0 0.0
    %6202 = vmatpush1.msra.mxu0 0.0
    %6203 = vmatprep.subr.mxu0 0.0
    %6204 = vmatpush1.msra.mxu0 0.0
    %6205 = vmatprep.subr.mxu0 0.0
    %6206 = vmatpush1.msra.mxu0 0.0
    %6207 = vmatprep.subr.mxu0 0.0
    %6208 = vmatpush1.msra.mxu0 0.0
    %6209 = vmatprep.subr.mxu0 0.0
    %v6210 = vand.u32 %v2363, 4294901760
    %6211 = vmatpush1.msra.mxu0 %v6210
    %6212 = vmatprep.subr.mxu0 0.0
    %v6213 = vand.u32 %v2362, 4294901760
    %6214 = vmatpush1.msra.mxu0 %v6213
    %6215 = vmatprep.subr.mxu0 0.0
    %v6216 = vand.u32 %v2361, 4294901760
    %6217 = vmatpush1.msra.mxu0 %v6216
    %6218 = vmatprep.subr.mxu0 0.0
    %v6219 = vand.u32 %v2360, 4294901760
    %6220 = vmatpush1.msra.mxu0 %v6219
    %6221 = vmatprep.subr.mxu0 0.0
    %6222 = vmatpush2.msra.mxu0 0.0
    %6223 = vmatprep.subr.mxu0 0.0
    %6224 = vmatpush2.msra.mxu0 0.0
    %6225 = vmatprep.subr.mxu0 0.0
    %6226 = vmatpush2.msra.mxu0 0.0
    %6227 = vmatprep.subr.mxu0 0.0
    %6228 = vmatpush2.msra.mxu0 0.0
    %6229 = vmatprep.subr.mxu0 0.0
    %6230 = vmatpush2.msra.mxu0 0.0
    %6231 = vmatprep.subr.mxu0 0.0
    %6232 = vmatpush2.msra.mxu0 0.0
    %6233 = vmatprep.subr.mxu0 0.0
    %6234 = vmatpush2.msra.mxu0 0.0
    %6235 = vmatprep.subr.mxu0 0.0
    %6236 = vmatpush2.msra.mxu0 0.0
    %6237 = vmatprep.subr.mxu0 0.0
    %6238 = vmatpush2.msra.mxu0 0.0
    %6239 = vmatprep.subr.mxu0 0.0
    %6240 = vmatpush2.msra.mxu0 0.0
    %6241 = vmatprep.subr.mxu0 0.0
    %6242 = vmatpush2.msra.mxu0 0.0
    %6243 = vmatprep.subr.mxu0 0.0
    %6244 = vmatpush2.msra.mxu0 0.0
    %6245 = vmatprep.subr.mxu0 0.0
    %6246 = vmatpush2.msra.mxu0 0.0
    %6247 = vmatprep.subr.mxu0 0.0
    %6248 = vmatpush2.msra.mxu0 0.0
    %6249 = vmatprep.subr.mxu0 0.0
    %6250 = vmatpush2.msra.mxu0 0.0
    %6251 = vmatprep.subr.mxu0 0.0
    %6252 = vmatpush2.msra.mxu0 0.0
    %6253 = vmatprep.mubr.f32.mxu0 0.0
    %v6254 = vand.u32 %v5908, 4294901760
    %v6255 = vsub.f32 %v5908, %v6254
    %v6256 = vand.u32 %v6255, 4294901760
    %6257 = vmatmul.mubr.f32.gmra.mxu0 %v6256
    %v6258 = vpop.f32.mrf.mxu0
    %v6259 = vadd.f32 %v6175, %v6258
    %v6260 = vpop.f32.mrf.mxu0
    %6261 = vmatprep.mubr.f32.mxu0 0.0
    %v6262 = vand.u32 %v5910, 4294901760
    %v6263 = vsub.f32 %v5910, %v6262
    %v6264 = vand.u32 %v6263, 4294901760
    %6265 = vmatmul.mubr.f32.gmra.mxu0 %v6264
    %v6266 = vpop.f32.mrf.mxu0
    %v6267 = vadd.f32 %v6182, %v6266
    %v6268 = vpop.f32.mrf.mxu0
    %6269 = vdwg.mxu0
    %6270 = vmatprep.subr.mxu0 0.0
    %6271 = vmatpush1.msra.mxu0 0.0
    %6272 = vmatprep.subr.mxu0 0.0
    %6273 = vmatpush1.msra.mxu0 0.0
    %6274 = vmatprep.subr.mxu0 0.0
    %6275 = vmatpush1.msra.mxu0 0.0
    %6276 = vmatprep.subr.mxu0 0.0
    %6277 = vmatpush1.msra.mxu0 0.0
    %6278 = vmatprep.subr.mxu0 0.0
    %6279 = vmatpush1.msra.mxu0 0.0
    %6280 = vmatprep.subr.mxu0 0.0
    %6281 = vmatpush1.msra.mxu0 0.0
    %6282 = vmatprep.subr.mxu0 0.0
    %6283 = vmatpush1.msra.mxu0 0.0
    %6284 = vmatprep.subr.mxu0 0.0
    %6285 = vmatpush1.msra.mxu0 0.0
    %6286 = vmatprep.subr.mxu0 0.0
    %6287 = vmatpush1.msra.mxu0 0.0
    %6288 = vmatprep.subr.mxu0 0.0
    %6289 = vmatpush1.msra.mxu0 0.0
    %6290 = vmatprep.subr.mxu0 0.0
    %6291 = vmatpush1.msra.mxu0 0.0
    %6292 = vmatprep.subr.mxu0 0.0
    %6293 = vmatpush1.msra.mxu0 0.0
    %6294 = vmatprep.subr.mxu0 0.0
    %v6295 = vand.u32 %v2363, 4294901760
    %v6296 = vsub.f32 %v2363, %v6295
    %v6297 = vand.u32 %v6296, 4294901760
    %6298 = vmatpush1.msra.mxu0 %v6297
    %6299 = vmatprep.subr.mxu0 0.0
    %v6300 = vand.u32 %v2362, 4294901760
    %v6301 = vsub.f32 %v2362, %v6300
    %v6302 = vand.u32 %v6301, 4294901760
    %6303 = vmatpush1.msra.mxu0 %v6302
    %6304 = vmatprep.subr.mxu0 0.0
    %v6305 = vand.u32 %v2361, 4294901760
    %v6306 = vsub.f32 %v2361, %v6305
    %v6307 = vand.u32 %v6306, 4294901760
    %6308 = vmatpush1.msra.mxu0 %v6307
    %6309 = vmatprep.subr.mxu0 0.0
    %v6310 = vand.u32 %v2360, 4294901760
    %v6311 = vsub.f32 %v2360, %v6310
    %v6312 = vand.u32 %v6311, 4294901760
    %6313 = vmatpush1.msra.mxu0 %v6312
    %6314 = vmatprep.subr.mxu0 0.0
    %6315 = vmatpush2.msra.mxu0 0.0
    %6316 = vmatprep.subr.mxu0 0.0
    %6317 = vmatpush2.msra.mxu0 0.0
    %6318 = vmatprep.subr.mxu0 0.0
    %6319 = vmatpush2.msra.mxu0 0.0
    %6320 = vmatprep.subr.mxu0 0.0
    %6321 = vmatpush2.msra.mxu0 0.0
    %6322 = vmatprep.subr.mxu0 0.0
    %6323 = vmatpush2.msra.mxu0 0.0
    %6324 = vmatprep.subr.mxu0 0.0
    %6325 = vmatpush2.msra.mxu0 0.0
    %6326 = vmatprep.subr.mxu0 0.0
    %6327 = vmatpush2.msra.mxu0 0.0
    %6328 = vmatprep.subr.mxu0 0.0
    %6329 = vmatpush2.msra.mxu0 0.0
    %6330 = vmatprep.subr.mxu0 0.0
    %6331 = vmatpush2.msra.mxu0 0.0
    %6332 = vmatprep.subr.mxu0 0.0
    %6333 = vmatpush2.msra.mxu0 0.0
    %6334 = vmatprep.subr.mxu0 0.0
    %6335 = vmatpush2.msra.mxu0 0.0
    %6336 = vmatprep.subr.mxu0 0.0
    %6337 = vmatpush2.msra.mxu0 0.0
    %6338 = vmatprep.subr.mxu0 0.0
    %6339 = vmatpush2.msra.mxu0 0.0
    %6340 = vmatprep.subr.mxu0 0.0
    %6341 = vmatpush2.msra.mxu0 0.0
    %6342 = vmatprep.subr.mxu0 0.0
    %6343 = vmatpush2.msra.mxu0 0.0
    %6344 = vmatprep.subr.mxu0 0.0
    %6345 = vmatpush2.msra.mxu0 0.0
    %6346 = vmatprep.mubr.f32.mxu0 0.0
    %v6347 = vand.u32 %v5908, 4294901760
    %6348 = vmatmul.mubr.f32.gmra.mxu0 %v6347
    %v6349 = vpop.f32.mrf.mxu0
    %v6350 = vadd.f32 %v6259, %v6349
    %v6351 = vpop.f32.mrf.mxu0
    %6352 = vmatprep.mubr.f32.mxu0 0.0
    %v6353 = vand.u32 %v5910, 4294901760
    %6354 = vmatmul.mubr.f32.gmra.mxu0 %v6353
    %v6355 = vpop.f32.mrf.mxu0
    %v6356 = vadd.f32 %v6267, %v6355
    %v6357 = vpop.f32.mrf.mxu0
    %6358 = vdwg.mxu0
    %6359 = vmatprep.subr.mxu0 0.0
    %6360 = vmatpush1.msra.mxu0 0.0
    %6361 = vmatprep.subr.mxu0 0.0
    %6362 = vmatpush1.msra.mxu0 0.0
    %6363 = vmatprep.subr.mxu0 0.0
    %6364 = vmatpush1.msra.mxu0 0.0
    %6365 = vmatprep.subr.mxu0 0.0
    %6366 = vmatpush1.msra.mxu0 0.0
    %6367 = vmatprep.subr.mxu0 0.0
    %6368 = vmatpush1.msra.mxu0 0.0
    %6369 = vmatprep.subr.mxu0 0.0
    %6370 = vmatpush1.msra.mxu0 0.0
    %6371 = vmatprep.subr.mxu0 0.0
    %6372 = vmatpush1.msra.mxu0 0.0
    %6373 = vmatprep.subr.mxu0 0.0
    %6374 = vmatpush1.msra.mxu0 0.0
    %6375 = vmatprep.subr.mxu0 0.0
    %6376 = vmatpush1.msra.mxu0 0.0
    %6377 = vmatprep.subr.mxu0 0.0
    %6378 = vmatpush1.msra.mxu0 0.0
    %6379 = vmatprep.subr.mxu0 0.0
    %6380 = vmatpush1.msra.mxu0 0.0
    %6381 = vmatprep.subr.mxu0 0.0
    %6382 = vmatpush1.msra.mxu0 0.0
    %6383 = vmatprep.subr.mxu0 0.0
    %v6384 = vand.u32 %v2363, 4294901760
    %6385 = vmatpush1.msra.mxu0 %v6384
    %6386 = vmatprep.subr.mxu0 0.0
    %v6387 = vand.u32 %v2362, 4294901760
    %6388 = vmatpush1.msra.mxu0 %v6387
    %6389 = vmatprep.subr.mxu0 0.0
    %v6390 = vand.u32 %v2361, 4294901760
    %6391 = vmatpush1.msra.mxu0 %v6390
    %6392 = vmatprep.subr.mxu0 0.0
    %v6393 = vand.u32 %v2360, 4294901760
    %6394 = vmatpush1.msra.mxu0 %v6393
    %6395 = vmatprep.subr.mxu0 0.0
    %6396 = vmatpush2.msra.mxu0 0.0
    %6397 = vmatprep.subr.mxu0 0.0
    %6398 = vmatpush2.msra.mxu0 0.0
    %6399 = vmatprep.subr.mxu0 0.0
    %6400 = vmatpush2.msra.mxu0 0.0
    %6401 = vmatprep.subr.mxu0 0.0
    %6402 = vmatpush2.msra.mxu0 0.0
    %6403 = vmatprep.subr.mxu0 0.0
    %6404 = vmatpush2.msra.mxu0 0.0
    %6405 = vmatprep.subr.mxu0 0.0
    %6406 = vmatpush2.msra.mxu0 0.0
    %6407 = vmatprep.subr.mxu0 0.0
    %6408 = vmatpush2.msra.mxu0 0.0
    %6409 = vmatprep.subr.mxu0 0.0
    %6410 = vmatpush2.msra.mxu0 0.0
    %6411 = vmatprep.subr.mxu0 0.0
    %6412 = vmatpush2.msra.mxu0 0.0
    %6413 = vmatprep.subr.mxu0 0.0
    %6414 = vmatpush2.msra.mxu0 0.0
    %6415 = vmatprep.subr.mxu0 0.0
    %6416 = vmatpush2.msra.mxu0 0.0
    %6417 = vmatprep.subr.mxu0 0.0
    %6418 = vmatpush2.msra.mxu0 0.0
    %6419 = vmatprep.subr.mxu0 0.0
    %6420 = vmatpush2.msra.mxu0 0.0
    %6421 = vmatprep.subr.mxu0 0.0
    %6422 = vmatpush2.msra.mxu0 0.0
    %6423 = vmatprep.subr.mxu0 0.0
    %6424 = vmatpush2.msra.mxu0 0.0
    %6425 = vmatprep.subr.mxu0 0.0
    %6426 = vmatpush2.msra.mxu0 0.0
    %6427 = vmatprep.mubr.f32.mxu0 0.0
    %v6428 = vand.u32 %v5908, 4294901760
    %6429 = vmatmul.mubr.f32.gmra.mxu0 %v6428
    %v6430 = vpop.f32.mrf.mxu0
    %v6431 = vadd.f32 %v6350, %v6430
    %v6432 = vpop.f32.mrf.mxu0
    %6433 = vmatprep.mubr.f32.mxu0 0.0
    %v6434 = vand.u32 %v5910, 4294901760
    %6435 = vmatmul.mubr.f32.gmra.mxu0 %v6434
    %v6436 = vpop.f32.mrf.mxu0
    %v6437 = vadd.f32 %v6356, %v6436
    %v6438 = vpop.f32.mrf.mxu0
    %6439 = vdwg.mxu0
    %v6440 = vadd.f32 %v2376, %v6431
    %v6441 = vadd.f32 %v2377, %v6437
    %v6442 = vxor.u32 %v6440, 2147483648
    %v6443 = vxor.u32 %v6441, 2147483648
    %v6444 = vmul.f32 %v6442, 1.442695
    %v6445 = vpow.pop %v6444
    %v6446 = vmul.f32 %v6443, 1.442695
    %v6447 = vpow.pop %v6446
    %v6448 = vadd.f32 %v6445, 1.0
    %v6449 = vadd.f32 %v6447, 1.0
    %v6450 = vrcp.pop %v6448
    %v6451 = vmul.f32 1.0, %v6450
    %v6452 = vrcp.pop %v6449
    %v6453 = vmul.f32 1.0, %v6452
    %v6454 = vtanh.pop %v6440
    %v6455 = vtanh.pop %v6441
    %v6456 = vmul.f32 %v6451, %v5888
    %v6457 = vmul.f32 %v6453, %v5889
    %6460 = vrot.lane.b32.xlu0 %v6454, 32
    %v6461 = vpop.permute.xlu0 %6460
    %6462 = vrot.lane.b32.xlu0 %v6455, 32
    %v6463 = vpop.permute.xlu0 %6462
    %v6466 = vmul.f32 %v6451, %v6461
    %v6467 = vmul.f32 %v6453, %v6463
    %6470 = vrot.lane.b32.xlu0 %v6466, 32
    %v6471 = vpop.permute.xlu0 %6470
    %6472 = vrot.lane.b32.xlu0 %v6467, 32
    %v6473 = vpop.permute.xlu0 %6472
    %v6476 = vadd.f32 %v6456, %v6471
    %v6477 = vadd.f32 %v6457, %v6473
    %v6478 = vtanh.pop %v6476
    %v6479 = vtanh.pop %v6477
    %6482 = vrot.lane.b32.xlu0 %v6478, 32
    %v6483 = vpop.permute.xlu0 %6482
    %6484 = vrot.lane.b32.xlu0 %v6479, 32
    %v6485 = vpop.permute.xlu0 %6484
    %v6488 = vmul.f32 %v6451, %v6483
    %v6489 = vmul.f32 %v6453, %v6485
    %6492 = vrot.lane.b32.xlu0 %v6488, 64
    %v6493 = vpop.permute.xlu0 %6492
    %6494 = vrot.lane.b32.xlu0 %v6489, 64
    %v6495 = vpop.permute.xlu0 %6494
    %v6496 = vsel %vm2380, %v6493, 0
    %v6498 = vsel %vm2380, %v6495, 0
    %6500 = vmatprep.subr.mxu0 0.0
    %6501 = vmatpush1.msra.mxu0 0.0
    %6502 = vmatprep.subr.mxu0 0.0
    %6503 = vmatpush1.msra.mxu0 0.0
    %6504 = vmatprep.subr.mxu0 0.0
    %6505 = vmatpush1.msra.mxu0 0.0
    %6506 = vmatprep.subr.mxu0 0.0
    %6507 = vmatpush1.msra.mxu0 0.0
    %6508 = vmatprep.subr.mxu0 0.0
    %6509 = vmatpush1.msra.mxu0 0.0
    %6510 = vmatprep.subr.mxu0 0.0
    %6511 = vmatpush1.msra.mxu0 0.0
    %6512 = vmatprep.subr.mxu0 0.0
    %6513 = vmatpush1.msra.mxu0 0.0
    %6514 = vmatprep.subr.mxu0 0.0
    %6515 = vmatpush1.msra.mxu0 0.0
    %6516 = vmatprep.subr.mxu0 0.0
    %6517 = vmatpush1.msra.mxu0 0.0
    %6518 = vmatprep.subr.mxu0 0.0
    %6519 = vmatpush1.msra.mxu0 0.0
    %6520 = vmatprep.subr.mxu0 0.0
    %6521 = vmatpush1.msra.mxu0 0.0
    %6522 = vmatprep.subr.mxu0 0.0
    %6523 = vmatpush1.msra.mxu0 0.0
    %6524 = vmatprep.subr.mxu0 0.0
    %v6525 = vand.u32 %v2363, 4294901760
    %6526 = vmatpush1.msra.mxu0 %v6525
    %6527 = vmatprep.subr.mxu0 0.0
    %v6528 = vand.u32 %v2362, 4294901760
    %6529 = vmatpush1.msra.mxu0 %v6528
    %6530 = vmatprep.subr.mxu0 0.0
    %v6531 = vand.u32 %v2361, 4294901760
    %6532 = vmatpush1.msra.mxu0 %v6531
    %6533 = vmatprep.subr.mxu0 0.0
    %v6534 = vand.u32 %v2360, 4294901760
    %6535 = vmatpush1.msra.mxu0 %v6534
    %6536 = vmatprep.subr.mxu0 0.0
    %6537 = vmatpush2.msra.mxu0 0.0
    %6538 = vmatprep.subr.mxu0 0.0
    %6539 = vmatpush2.msra.mxu0 0.0
    %6540 = vmatprep.subr.mxu0 0.0
    %6541 = vmatpush2.msra.mxu0 0.0
    %6542 = vmatprep.subr.mxu0 0.0
    %6543 = vmatpush2.msra.mxu0 0.0
    %6544 = vmatprep.subr.mxu0 0.0
    %6545 = vmatpush2.msra.mxu0 0.0
    %6546 = vmatprep.subr.mxu0 0.0
    %6547 = vmatpush2.msra.mxu0 0.0
    %6548 = vmatprep.subr.mxu0 0.0
    %6549 = vmatpush2.msra.mxu0 0.0
    %6550 = vmatprep.subr.mxu0 0.0
    %6551 = vmatpush2.msra.mxu0 0.0
    %6552 = vmatprep.subr.mxu0 0.0
    %6553 = vmatpush2.msra.mxu0 0.0
    %6554 = vmatprep.subr.mxu0 0.0
    %6555 = vmatpush2.msra.mxu0 0.0
    %6556 = vmatprep.subr.mxu0 0.0
    %6557 = vmatpush2.msra.mxu0 0.0
    %6558 = vmatprep.subr.mxu0 0.0
    %6559 = vmatpush2.msra.mxu0 0.0
    %6560 = vmatprep.subr.mxu0 0.0
    %6561 = vmatpush2.msra.mxu0 0.0
    %6562 = vmatprep.subr.mxu0 0.0
    %6563 = vmatpush2.msra.mxu0 0.0
    %6564 = vmatprep.subr.mxu0 0.0
    %6565 = vmatpush2.msra.mxu0 0.0
    %6566 = vmatprep.subr.mxu0 0.0
    %6567 = vmatpush2.msra.mxu0 0.0
    %6568 = vmatprep.mubr.f32.mxu0 0.0
    %v6569 = vand.u32 %v6496, 4294901760
    %v6570 = vsub.f32 %v6496, %v6569
    %v6571 = vand.u32 %v6570, 4294901760
    %v6572 = vsub.f32 %v6570, %v6571
    %v6573 = vand.u32 %v6572, 4294901760
    %6574 = vmatmul.mubr.f32.gmra.mxu0 %v6573
    %v6575 = vpop.f32.mrf.mxu0
    %v6576 = vadd.f32 0.0, %v6575
    %v6577 = vpop.f32.mrf.mxu0
    %6578 = vmatprep.mubr.f32.mxu0 0.0
    %v6579 = vand.u32 %v6498, 4294901760
    %v6580 = vsub.f32 %v6498, %v6579
    %v6581 = vand.u32 %v6580, 4294901760
    %v6582 = vsub.f32 %v6580, %v6581
    %v6583 = vand.u32 %v6582, 4294901760
    %6584 = vmatmul.mubr.f32.gmra.mxu0 %v6583
    %v6585 = vpop.f32.mrf.mxu0
    %v6586 = vadd.f32 0.0, %v6585
    %v6587 = vpop.f32.mrf.mxu0
    %6588 = vdwg.mxu0
    %6589 = vmatprep.subr.mxu0 0.0
    %6590 = vmatpush1.msra.mxu0 0.0
    %6591 = vmatprep.subr.mxu0 0.0
    %6592 = vmatpush1.msra.mxu0 0.0
    %6593 = vmatprep.subr.mxu0 0.0
    %6594 = vmatpush1.msra.mxu0 0.0
    %6595 = vmatprep.subr.mxu0 0.0
    %6596 = vmatpush1.msra.mxu0 0.0
    %6597 = vmatprep.subr.mxu0 0.0
    %6598 = vmatpush1.msra.mxu0 0.0
    %6599 = vmatprep.subr.mxu0 0.0
    %6600 = vmatpush1.msra.mxu0 0.0
    %6601 = vmatprep.subr.mxu0 0.0
    %6602 = vmatpush1.msra.mxu0 0.0
    %6603 = vmatprep.subr.mxu0 0.0
    %6604 = vmatpush1.msra.mxu0 0.0
    %6605 = vmatprep.subr.mxu0 0.0
    %6606 = vmatpush1.msra.mxu0 0.0
    %6607 = vmatprep.subr.mxu0 0.0
    %6608 = vmatpush1.msra.mxu0 0.0
    %6609 = vmatprep.subr.mxu0 0.0
    %6610 = vmatpush1.msra.mxu0 0.0
    %6611 = vmatprep.subr.mxu0 0.0
    %6612 = vmatpush1.msra.mxu0 0.0
    %6613 = vmatprep.subr.mxu0 0.0
    %v6614 = vand.u32 %v2363, 4294901760
    %v6615 = vsub.f32 %v2363, %v6614
    %v6616 = vand.u32 %v6615, 4294901760
    %v6617 = vsub.f32 %v6615, %v6616
    %v6618 = vand.u32 %v6617, 4294901760
    %6619 = vmatpush1.msra.mxu0 %v6618
    %6620 = vmatprep.subr.mxu0 0.0
    %v6621 = vand.u32 %v2362, 4294901760
    %v6622 = vsub.f32 %v2362, %v6621
    %v6623 = vand.u32 %v6622, 4294901760
    %v6624 = vsub.f32 %v6622, %v6623
    %v6625 = vand.u32 %v6624, 4294901760
    %6626 = vmatpush1.msra.mxu0 %v6625
    %6627 = vmatprep.subr.mxu0 0.0
    %v6628 = vand.u32 %v2361, 4294901760
    %v6629 = vsub.f32 %v2361, %v6628
    %v6630 = vand.u32 %v6629, 4294901760
    %v6631 = vsub.f32 %v6629, %v6630
    %v6632 = vand.u32 %v6631, 4294901760
    %6633 = vmatpush1.msra.mxu0 %v6632
    %6634 = vmatprep.subr.mxu0 0.0
    %v6635 = vand.u32 %v2360, 4294901760
    %v6636 = vsub.f32 %v2360, %v6635
    %v6637 = vand.u32 %v6636, 4294901760
    %v6638 = vsub.f32 %v6636, %v6637
    %v6639 = vand.u32 %v6638, 4294901760
    %6640 = vmatpush1.msra.mxu0 %v6639
    %6641 = vmatprep.subr.mxu0 0.0
    %6642 = vmatpush2.msra.mxu0 0.0
    %6643 = vmatprep.subr.mxu0 0.0
    %6644 = vmatpush2.msra.mxu0 0.0
    %6645 = vmatprep.subr.mxu0 0.0
    %6646 = vmatpush2.msra.mxu0 0.0
    %6647 = vmatprep.subr.mxu0 0.0
    %6648 = vmatpush2.msra.mxu0 0.0
    %6649 = vmatprep.subr.mxu0 0.0
    %6650 = vmatpush2.msra.mxu0 0.0
    %6651 = vmatprep.subr.mxu0 0.0
    %6652 = vmatpush2.msra.mxu0 0.0
    %6653 = vmatprep.subr.mxu0 0.0
    %6654 = vmatpush2.msra.mxu0 0.0
    %6655 = vmatprep.subr.mxu0 0.0
    %6656 = vmatpush2.msra.mxu0 0.0
    %6657 = vmatprep.subr.mxu0 0.0
    %6658 = vmatpush2.msra.mxu0 0.0
    %6659 = vmatprep.subr.mxu0 0.0
    %6660 = vmatpush2.msra.mxu0 0.0
    %6661 = vmatprep.subr.mxu0 0.0
    %6662 = vmatpush2.msra.mxu0 0.0
    %6663 = vmatprep.subr.mxu0 0.0
    %6664 = vmatpush2.msra.mxu0 0.0
    %6665 = vmatprep.subr.mxu0 0.0
    %6666 = vmatpush2.msra.mxu0 0.0
    %6667 = vmatprep.subr.mxu0 0.0
    %6668 = vmatpush2.msra.mxu0 0.0
    %6669 = vmatprep.subr.mxu0 0.0
    %6670 = vmatpush2.msra.mxu0 0.0
    %6671 = vmatprep.subr.mxu0 0.0
    %6672 = vmatpush2.msra.mxu0 0.0
    %6673 = vmatprep.mubr.f32.mxu0 0.0
    %v6674 = vand.u32 %v6496, 4294901760
    %6675 = vmatmul.mubr.f32.gmra.mxu0 %v6674
    %v6676 = vpop.f32.mrf.mxu0
    %v6677 = vadd.f32 %v6576, %v6676
    %v6678 = vpop.f32.mrf.mxu0
    %6679 = vmatprep.mubr.f32.mxu0 0.0
    %v6680 = vand.u32 %v6498, 4294901760
    %6681 = vmatmul.mubr.f32.gmra.mxu0 %v6680
    %v6682 = vpop.f32.mrf.mxu0
    %v6683 = vadd.f32 %v6586, %v6682
    %v6684 = vpop.f32.mrf.mxu0
    %6685 = vdwg.mxu0
    %6686 = vmatprep.subr.mxu0 0.0
    %6687 = vmatpush1.msra.mxu0 0.0
    %6688 = vmatprep.subr.mxu0 0.0
    %6689 = vmatpush1.msra.mxu0 0.0
    %6690 = vmatprep.subr.mxu0 0.0
    %6691 = vmatpush1.msra.mxu0 0.0
    %6692 = vmatprep.subr.mxu0 0.0
    %6693 = vmatpush1.msra.mxu0 0.0
    %6694 = vmatprep.subr.mxu0 0.0
    %6695 = vmatpush1.msra.mxu0 0.0
    %6696 = vmatprep.subr.mxu0 0.0
    %6697 = vmatpush1.msra.mxu0 0.0
    %6698 = vmatprep.subr.mxu0 0.0
    %6699 = vmatpush1.msra.mxu0 0.0
    %6700 = vmatprep.subr.mxu0 0.0
    %6701 = vmatpush1.msra.mxu0 0.0
    %6702 = vmatprep.subr.mxu0 0.0
    %6703 = vmatpush1.msra.mxu0 0.0
    %6704 = vmatprep.subr.mxu0 0.0
    %6705 = vmatpush1.msra.mxu0 0.0
    %6706 = vmatprep.subr.mxu0 0.0
    %6707 = vmatpush1.msra.mxu0 0.0
    %6708 = vmatprep.subr.mxu0 0.0
    %6709 = vmatpush1.msra.mxu0 0.0
    %6710 = vmatprep.subr.mxu0 0.0
    %v6711 = vand.u32 %v2363, 4294901760
    %v6712 = vsub.f32 %v2363, %v6711
    %6713 = vmatpush1.msra.mxu0 %v6712
    %6714 = vmatprep.subr.mxu0 0.0
    %v6715 = vand.u32 %v2362, 4294901760
    %v6716 = vsub.f32 %v2362, %v6715
    %6717 = vmatpush1.msra.mxu0 %v6716
    %6718 = vmatprep.subr.mxu0 0.0
    %v6719 = vand.u32 %v2361, 4294901760
    %v6720 = vsub.f32 %v2361, %v6719
    %6721 = vmatpush1.msra.mxu0 %v6720
    %6722 = vmatprep.subr.mxu0 0.0
    %v6723 = vand.u32 %v2360, 4294901760
    %v6724 = vsub.f32 %v2360, %v6723
    %6725 = vmatpush1.msra.mxu0 %v6724
    %6726 = vmatprep.subr.mxu0 0.0
    %6727 = vmatpush2.msra.mxu0 0.0
    %6728 = vmatprep.subr.mxu0 0.0
    %6729 = vmatpush2.msra.mxu0 0.0
    %6730 = vmatprep.subr.mxu0 0.0
    %6731 = vmatpush2.msra.mxu0 0.0
    %6732 = vmatprep.subr.mxu0 0.0
    %6733 = vmatpush2.msra.mxu0 0.0
    %6734 = vmatprep.subr.mxu0 0.0
    %6735 = vmatpush2.msra.mxu0 0.0
    %6736 = vmatprep.subr.mxu0 0.0
    %6737 = vmatpush2.msra.mxu0 0.0
    %6738 = vmatprep.subr.mxu0 0.0
    %6739 = vmatpush2.msra.mxu0 0.0
    %6740 = vmatprep.subr.mxu0 0.0
    %6741 = vmatpush2.msra.mxu0 0.0
    %6742 = vmatprep.subr.mxu0 0.0
    %6743 = vmatpush2.msra.mxu0 0.0
    %6744 = vmatprep.subr.mxu0 0.0
    %6745 = vmatpush2.msra.mxu0 0.0
    %6746 = vmatprep.subr.mxu0 0.0
    %6747 = vmatpush2.msra.mxu0 0.0
    %6748 = vmatprep.subr.mxu0 0.0
    %6749 = vmatpush2.msra.mxu0 0.0
    %6750 = vmatprep.subr.mxu0 0.0
    %6751 = vmatpush2.msra.mxu0 0.0
    %6752 = vmatprep.subr.mxu0 0.0
    %6753 = vmatpush2.msra.mxu0 0.0
    %6754 = vmatprep.subr.mxu0 0.0
    %6755 = vmatpush2.msra.mxu0 0.0
    %6756 = vmatprep.subr.mxu0 0.0
    %6757 = vmatpush2.msra.mxu0 0.0
    %6758 = vmatprep.mubr.f32.mxu0 0.0
    %v6759 = vand.u32 %v6496, 4294901760
    %v6760 = vsub.f32 %v6496, %v6759
    %6761 = vmatmul.mubr.f32.gmra.mxu0 %v6760
    %v6762 = vpop.f32.mrf.mxu0
    %v6763 = vadd.f32 %v6677, %v6762
    %v6764 = vpop.f32.mrf.mxu0
    %6765 = vmatprep.mubr.f32.mxu0 0.0
    %v6766 = vand.u32 %v6498, 4294901760
    %v6767 = vsub.f32 %v6498, %v6766
    %6768 = vmatmul.mubr.f32.gmra.mxu0 %v6767
    %v6769 = vpop.f32.mrf.mxu0
    %v6770 = vadd.f32 %v6683, %v6769
    %v6771 = vpop.f32.mrf.mxu0
    %6772 = vdwg.mxu0
    %6773 = vmatprep.subr.mxu0 0.0
    %6774 = vmatpush1.msra.mxu0 0.0
    %6775 = vmatprep.subr.mxu0 0.0
    %6776 = vmatpush1.msra.mxu0 0.0
    %6777 = vmatprep.subr.mxu0 0.0
    %6778 = vmatpush1.msra.mxu0 0.0
    %6779 = vmatprep.subr.mxu0 0.0
    %6780 = vmatpush1.msra.mxu0 0.0
    %6781 = vmatprep.subr.mxu0 0.0
    %6782 = vmatpush1.msra.mxu0 0.0
    %6783 = vmatprep.subr.mxu0 0.0
    %6784 = vmatpush1.msra.mxu0 0.0
    %6785 = vmatprep.subr.mxu0 0.0
    %6786 = vmatpush1.msra.mxu0 0.0
    %6787 = vmatprep.subr.mxu0 0.0
    %6788 = vmatpush1.msra.mxu0 0.0
    %6789 = vmatprep.subr.mxu0 0.0
    %6790 = vmatpush1.msra.mxu0 0.0
    %6791 = vmatprep.subr.mxu0 0.0
    %6792 = vmatpush1.msra.mxu0 0.0
    %6793 = vmatprep.subr.mxu0 0.0
    %6794 = vmatpush1.msra.mxu0 0.0
    %6795 = vmatprep.subr.mxu0 0.0
    %6796 = vmatpush1.msra.mxu0 0.0
    %6797 = vmatprep.subr.mxu0 0.0
    %v6798 = vand.u32 %v2363, 4294901760
    %6799 = vmatpush1.msra.mxu0 %v6798
    %6800 = vmatprep.subr.mxu0 0.0
    %v6801 = vand.u32 %v2362, 4294901760
    %6802 = vmatpush1.msra.mxu0 %v6801
    %6803 = vmatprep.subr.mxu0 0.0
    %v6804 = vand.u32 %v2361, 4294901760
    %6805 = vmatpush1.msra.mxu0 %v6804
    %6806 = vmatprep.subr.mxu0 0.0
    %v6807 = vand.u32 %v2360, 4294901760
    %6808 = vmatpush1.msra.mxu0 %v6807
    %6809 = vmatprep.subr.mxu0 0.0
    %6810 = vmatpush2.msra.mxu0 0.0
    %6811 = vmatprep.subr.mxu0 0.0
    %6812 = vmatpush2.msra.mxu0 0.0
    %6813 = vmatprep.subr.mxu0 0.0
    %6814 = vmatpush2.msra.mxu0 0.0
    %6815 = vmatprep.subr.mxu0 0.0
    %6816 = vmatpush2.msra.mxu0 0.0
    %6817 = vmatprep.subr.mxu0 0.0
    %6818 = vmatpush2.msra.mxu0 0.0
    %6819 = vmatprep.subr.mxu0 0.0
    %6820 = vmatpush2.msra.mxu0 0.0
    %6821 = vmatprep.subr.mxu0 0.0
    %6822 = vmatpush2.msra.mxu0 0.0
    %6823 = vmatprep.subr.mxu0 0.0
    %6824 = vmatpush2.msra.mxu0 0.0
    %6825 = vmatprep.subr.mxu0 0.0
    %6826 = vmatpush2.msra.mxu0 0.0
    %6827 = vmatprep.subr.mxu0 0.0
    %6828 = vmatpush2.msra.mxu0 0.0
    %6829 = vmatprep.subr.mxu0 0.0
    %6830 = vmatpush2.msra.mxu0 0.0
    %6831 = vmatprep.subr.mxu0 0.0
    %6832 = vmatpush2.msra.mxu0 0.0
    %6833 = vmatprep.subr.mxu0 0.0
    %6834 = vmatpush2.msra.mxu0 0.0
    %6835 = vmatprep.subr.mxu0 0.0
    %6836 = vmatpush2.msra.mxu0 0.0
    %6837 = vmatprep.subr.mxu0 0.0
    %6838 = vmatpush2.msra.mxu0 0.0
    %6839 = vmatprep.subr.mxu0 0.0
    %6840 = vmatpush2.msra.mxu0 0.0
    %6841 = vmatprep.mubr.f32.mxu0 0.0
    %v6842 = vand.u32 %v6496, 4294901760
    %v6843 = vsub.f32 %v6496, %v6842
    %v6844 = vand.u32 %v6843, 4294901760
    %6845 = vmatmul.mubr.f32.gmra.mxu0 %v6844
    %v6846 = vpop.f32.mrf.mxu0
    %v6847 = vadd.f32 %v6763, %v6846
    %v6848 = vpop.f32.mrf.mxu0
    %6849 = vmatprep.mubr.f32.mxu0 0.0
    %v6850 = vand.u32 %v6498, 4294901760
    %v6851 = vsub.f32 %v6498, %v6850
    %v6852 = vand.u32 %v6851, 4294901760
    %6853 = vmatmul.mubr.f32.gmra.mxu0 %v6852
    %v6854 = vpop.f32.mrf.mxu0
    %v6855 = vadd.f32 %v6770, %v6854
    %v6856 = vpop.f32.mrf.mxu0
    %6857 = vdwg.mxu0
    %6858 = vmatprep.subr.mxu0 0.0
    %6859 = vmatpush1.msra.mxu0 0.0
    %6860 = vmatprep.subr.mxu0 0.0
    %6861 = vmatpush1.msra.mxu0 0.0
    %6862 = vmatprep.subr.mxu0 0.0
    %6863 = vmatpush1.msra.mxu0 0.0
    %6864 = vmatprep.subr.mxu0 0.0
    %6865 = vmatpush1.msra.mxu0 0.0
    %6866 = vmatprep.subr.mxu0 0.0
    %6867 = vmatpush1.msra.mxu0 0.0
    %6868 = vmatprep.subr.mxu0 0.0
    %6869 = vmatpush1.msra.mxu0 0.0
    %6870 = vmatprep.subr.mxu0 0.0
    %6871 = vmatpush1.msra.mxu0 0.0
    %6872 = vmatprep.subr.mxu0 0.0
    %6873 = vmatpush1.msra.mxu0 0.0
    %6874 = vmatprep.subr.mxu0 0.0
    %6875 = vmatpush1.msra.mxu0 0.0
    %6876 = vmatprep.subr.mxu0 0.0
    %6877 = vmatpush1.msra.mxu0 0.0
    %6878 = vmatprep.subr.mxu0 0.0
    %6879 = vmatpush1.msra.mxu0 0.0
    %6880 = vmatprep.subr.mxu0 0.0
    %6881 = vmatpush1.msra.mxu0 0.0
    %6882 = vmatprep.subr.mxu0 0.0
    %v6883 = vand.u32 %v2363, 4294901760
    %v6884 = vsub.f32 %v2363, %v6883
    %v6885 = vand.u32 %v6884, 4294901760
    %6886 = vmatpush1.msra.mxu0 %v6885
    %6887 = vmatprep.subr.mxu0 0.0
    %v6888 = vand.u32 %v2362, 4294901760
    %v6889 = vsub.f32 %v2362, %v6888
    %v6890 = vand.u32 %v6889, 4294901760
    %6891 = vmatpush1.msra.mxu0 %v6890
    %6892 = vmatprep.subr.mxu0 0.0
    %v6893 = vand.u32 %v2361, 4294901760
    %v6894 = vsub.f32 %v2361, %v6893
    %v6895 = vand.u32 %v6894, 4294901760
    %6896 = vmatpush1.msra.mxu0 %v6895
    %6897 = vmatprep.subr.mxu0 0.0
    %v6898 = vand.u32 %v2360, 4294901760
    %v6899 = vsub.f32 %v2360, %v6898
    %v6900 = vand.u32 %v6899, 4294901760
    %6901 = vmatpush1.msra.mxu0 %v6900
    %6902 = vmatprep.subr.mxu0 0.0
    %6903 = vmatpush2.msra.mxu0 0.0
    %6904 = vmatprep.subr.mxu0 0.0
    %6905 = vmatpush2.msra.mxu0 0.0
    %6906 = vmatprep.subr.mxu0 0.0
    %6907 = vmatpush2.msra.mxu0 0.0
    %6908 = vmatprep.subr.mxu0 0.0
    %6909 = vmatpush2.msra.mxu0 0.0
    %6910 = vmatprep.subr.mxu0 0.0
    %6911 = vmatpush2.msra.mxu0 0.0
    %6912 = vmatprep.subr.mxu0 0.0
    %6913 = vmatpush2.msra.mxu0 0.0
    %6914 = vmatprep.subr.mxu0 0.0
    %6915 = vmatpush2.msra.mxu0 0.0
    %6916 = vmatprep.subr.mxu0 0.0
    %6917 = vmatpush2.msra.mxu0 0.0
    %6918 = vmatprep.subr.mxu0 0.0
    %6919 = vmatpush2.msra.mxu0 0.0
    %6920 = vmatprep.subr.mxu0 0.0
    %6921 = vmatpush2.msra.mxu0 0.0
    %6922 = vmatprep.subr.mxu0 0.0
    %6923 = vmatpush2.msra.mxu0 0.0
    %6924 = vmatprep.subr.mxu0 0.0
    %6925 = vmatpush2.msra.mxu0 0.0
    %6926 = vmatprep.subr.mxu0 0.0
    %6927 = vmatpush2.msra.mxu0 0.0
    %6928 = vmatprep.subr.mxu0 0.0
    %6929 = vmatpush2.msra.mxu0 0.0
    %6930 = vmatprep.subr.mxu0 0.0
    %6931 = vmatpush2.msra.mxu0 0.0
    %6932 = vmatprep.subr.mxu0 0.0
    %6933 = vmatpush2.msra.mxu0 0.0
    %6934 = vmatprep.mubr.f32.mxu0 0.0
    %v6935 = vand.u32 %v6496, 4294901760
    %6936 = vmatmul.mubr.f32.gmra.mxu0 %v6935
    %v6937 = vpop.f32.mrf.mxu0
    %v6938 = vadd.f32 %v6847, %v6937
    %v6939 = vpop.f32.mrf.mxu0
    %6940 = vmatprep.mubr.f32.mxu0 0.0
    %v6941 = vand.u32 %v6498, 4294901760
    %6942 = vmatmul.mubr.f32.gmra.mxu0 %v6941
    %v6943 = vpop.f32.mrf.mxu0
    %v6944 = vadd.f32 %v6855, %v6943
    %v6945 = vpop.f32.mrf.mxu0
    %6946 = vdwg.mxu0
    %6947 = vmatprep.subr.mxu0 0.0
    %6948 = vmatpush1.msra.mxu0 0.0
    %6949 = vmatprep.subr.mxu0 0.0
    %6950 = vmatpush1.msra.mxu0 0.0
    %6951 = vmatprep.subr.mxu0 0.0
    %6952 = vmatpush1.msra.mxu0 0.0
    %6953 = vmatprep.subr.mxu0 0.0
    %6954 = vmatpush1.msra.mxu0 0.0
    %6955 = vmatprep.subr.mxu0 0.0
    %6956 = vmatpush1.msra.mxu0 0.0
    %6957 = vmatprep.subr.mxu0 0.0
    %6958 = vmatpush1.msra.mxu0 0.0
    %6959 = vmatprep.subr.mxu0 0.0
    %6960 = vmatpush1.msra.mxu0 0.0
    %6961 = vmatprep.subr.mxu0 0.0
    %6962 = vmatpush1.msra.mxu0 0.0
    %6963 = vmatprep.subr.mxu0 0.0
    %6964 = vmatpush1.msra.mxu0 0.0
    %6965 = vmatprep.subr.mxu0 0.0
    %6966 = vmatpush1.msra.mxu0 0.0
    %6967 = vmatprep.subr.mxu0 0.0
    %6968 = vmatpush1.msra.mxu0 0.0
    %6969 = vmatprep.subr.mxu0 0.0
    %6970 = vmatpush1.msra.mxu0 0.0
    %6971 = vmatprep.subr.mxu0 0.0
    %v6972 = vand.u32 %v2363, 4294901760
    %6973 = vmatpush1.msra.mxu0 %v6972
    %6974 = vmatprep.subr.mxu0 0.0
    %v6975 = vand.u32 %v2362, 4294901760
    %6976 = vmatpush1.msra.mxu0 %v6975
    %6977 = vmatprep.subr.mxu0 0.0
    %v6978 = vand.u32 %v2361, 4294901760
    %6979 = vmatpush1.msra.mxu0 %v6978
    %6980 = vmatprep.subr.mxu0 0.0
    %v6981 = vand.u32 %v2360, 4294901760
    %6982 = vmatpush1.msra.mxu0 %v6981
    %6983 = vmatprep.subr.mxu0 0.0
    %6984 = vmatpush2.msra.mxu0 0.0
    %6985 = vmatprep.subr.mxu0 0.0
    %6986 = vmatpush2.msra.mxu0 0.0
    %6987 = vmatprep.subr.mxu0 0.0
    %6988 = vmatpush2.msra.mxu0 0.0
    %6989 = vmatprep.subr.mxu0 0.0
    %6990 = vmatpush2.msra.mxu0 0.0
    %6991 = vmatprep.subr.mxu0 0.0
    %6992 = vmatpush2.msra.mxu0 0.0
    %6993 = vmatprep.subr.mxu0 0.0
    %6994 = vmatpush2.msra.mxu0 0.0
    %6995 = vmatprep.subr.mxu0 0.0
    %6996 = vmatpush2.msra.mxu0 0.0
    %6997 = vmatprep.subr.mxu0 0.0
    %6998 = vmatpush2.msra.mxu0 0.0
    %6999 = vmatprep.subr.mxu0 0.0
    %7000 = vmatpush2.msra.mxu0 0.0
    %7001 = vmatprep.subr.mxu0 0.0
    %7002 = vmatpush2.msra.mxu0 0.0
    %7003 = vmatprep.subr.mxu0 0.0
    %7004 = vmatpush2.msra.mxu0 0.0
    %7005 = vmatprep.subr.mxu0 0.0
    %7006 = vmatpush2.msra.mxu0 0.0
    %7007 = vmatprep.subr.mxu0 0.0
    %7008 = vmatpush2.msra.mxu0 0.0
    %7009 = vmatprep.subr.mxu0 0.0
    %7010 = vmatpush2.msra.mxu0 0.0
    %7011 = vmatprep.subr.mxu0 0.0
    %7012 = vmatpush2.msra.mxu0 0.0
    %7013 = vmatprep.subr.mxu0 0.0
    %7014 = vmatpush2.msra.mxu0 0.0
    %7015 = vmatprep.mubr.f32.mxu0 0.0
    %v7016 = vand.u32 %v6496, 4294901760
    %7017 = vmatmul.mubr.f32.gmra.mxu0 %v7016
    %v7018 = vpop.f32.mrf.mxu0
    %v7019 = vadd.f32 %v6938, %v7018
    %v7020 = vpop.f32.mrf.mxu0
    %7021 = vmatprep.mubr.f32.mxu0 0.0
    %v7022 = vand.u32 %v6498, 4294901760
    %7023 = vmatmul.mubr.f32.gmra.mxu0 %v7022
    %v7024 = vpop.f32.mrf.mxu0
    %v7025 = vadd.f32 %v6944, %v7024
    %v7026 = vpop.f32.mrf.mxu0
    %7027 = vdwg.mxu0
    %v7028 = vadd.f32 %v2378, %v7019
    %v7029 = vadd.f32 %v2379, %v7025
    %v7030 = vxor.u32 %v7028, 2147483648
    %v7031 = vxor.u32 %v7029, 2147483648
    %v7032 = vmul.f32 %v7030, 1.442695
    %v7033 = vpow.pop %v7032
    %v7034 = vmul.f32 %v7031, 1.442695
    %v7035 = vpow.pop %v7034
    %v7036 = vadd.f32 %v7033, 1.0
    %v7037 = vadd.f32 %v7035, 1.0
    %v7038 = vrcp.pop %v7036
    %v7039 = vmul.f32 1.0, %v7038
    %v7040 = vrcp.pop %v7037
    %v7041 = vmul.f32 1.0, %v7040
    %v7042 = vtanh.pop %v7028
    %v7043 = vtanh.pop %v7029
    %v7044 = vmul.f32 %v7039, %v6476
    %v7045 = vmul.f32 %v7041, %v6477
    %7048 = vrot.lane.b32.xlu0 %v7042, 32
    %v7049 = vpop.permute.xlu0 %7048
    %7050 = vrot.lane.b32.xlu0 %v7043, 32
    %v7051 = vpop.permute.xlu0 %7050
    %v7054 = vmul.f32 %v7039, %v7049
    %v7055 = vmul.f32 %v7041, %v7051
    %7058 = vrot.lane.b32.xlu0 %v7054, 32
    %v7059 = vpop.permute.xlu0 %7058
    %7060 = vrot.lane.b32.xlu0 %v7055, 32
    %v7061 = vpop.permute.xlu0 %7060
    %v7064 = vadd.f32 %v7044, %v7059
    %v7065 = vadd.f32 %v7045, %v7061
    %v7066 = vtanh.pop %v7064
    %v7067 = vtanh.pop %v7065
    %7070 = vrot.lane.b32.xlu0 %v7066, 32
    %v7071 = vpop.permute.xlu0 %7070
    %7072 = vrot.lane.b32.xlu0 %v7067, 32
    %v7073 = vpop.permute.xlu0 %7072
    %v7076 = vmul.f32 %v7039, %v7071
    %v7077 = vmul.f32 %v7041, %v7073
    %7080 = vrot.lane.b32.xlu0 %v7076, 64
    %v7081 = vpop.permute.xlu0 %7080
    %7082 = vrot.lane.b32.xlu0 %v7077, 64
    %v7083 = vpop.permute.xlu0 %7082
    %7086 = vst.msk [vmem:[#allocation10] sm:$0xff] %vm2380, %v7081
    %7087 = vst.msk [vmem:[#allocation10 + $0x8] sm:$0xff] %vm2380, %v7083
    // Predicated region
    $region38: #{tpu_custom_call.1} parent=1 // pred_check
      _
    $region39: #{tpu_custom_call.1} parent=1 // pred_check_branch
      %7089 = sbr.rel (0) target = $region41
    $region40: #{tpu_custom_call.1} parent=1 // pred_region
      %s7091 = ssub.s32 256, 256
      %7092 = vsyncadd [#allocation4], %s7091
      %s7093 = sshll.u32 [#allocation10], 4
      %s7094 = int_to_ptr.vmem [resolvable:$true] %s7093
      %7099 = dma.vmem_to_hbm [thread:$0]  %s7094, 256, %s5, [#allocation4], 128, 128, 8
    $region41: #{tpu_custom_call.1} parent=1 // pred_fallthru
      _
    // Predicated region
    $region42: #{tpu_custom_call.1} parent=1 // pred_check
      _
    $region43: #{tpu_custom_call.1} parent=1 // pred_check_branch
      %7101 = sbr.rel (0) target = $region45
    $region44: #{tpu_custom_call.1} parent=1 // pred_region
      %7102 = dma.done [#allocation4], 256
    $region45: #{tpu_custom_call.1} parent=1 // pred_fallthru
      _
    %7103 = vsyncpa [#allocation3], 1
    %7104 = vsyncpa [#allocation6], 1
    %7105 = vsyncpa [#allocation9], 1
    %7106 = vsyncpa [#allocation4], 1

</llo_original>
